<compile_context>
chip_gen: v5e
topology: v5e:2x2
jax: 0.10.0
libtpu: 0.0.40
codegen_flags: <defaults>
</compile_context>

<pallas_src>
import jax
import jax.numpy as jnp
from jax import lax
from jax.experimental import pallas as pl
from jax.experimental.pallas import tpu as pltpu


# --------------------------------- fused kernel ---------------------------------

def _lenet_kernel(p1_ref, w1_ref, b1_ref, w2_ref, b2_ref,
                  fw1_ref, fb1_ref, fw2_ref, fb2_ref, fw3_ref, fb3_ref,
                  o_ref):
    Bt = p1_ref.shape[0]

    # conv1 + relu: one im2col matmul (patches built in the wrapper).
    p1 = p1_ref[...].reshape(Bt * 784, 75)
    h = jnp.dot(p1, w1_ref[...], preferred_element_type=jnp.float32) + b1_ref[...]
    h = jnp.maximum(h, 0.0)                                   # (Bt*784, 6)

    # pool1: 2x2 / stride 2 (minor-dim-preserving reshapes + max).
    h = h.reshape(Bt, 28, 28, 6)
    h = h.reshape(Bt, 14, 2, 28, 6).max(axis=2)
    h = h.reshape(Bt, 14, 14, 2, 6).max(axis=3)               # (Bt, 14, 14, 6)

    # conv2 + relu: in-kernel im2col (lane concat of 25 shifted windows), one matmul.
    p2 = jnp.concatenate(
        [h[:, kh:kh + 10, kw:kw + 10, :] for kh in range(5) for kw in range(5)],
        axis=-1)                                              # (Bt, 10, 10, 150)
    p2 = p2.reshape(Bt * 100, 150)
    g = jnp.dot(p2, w2_ref[...], preferred_element_type=jnp.float32) + b2_ref[...]
    g = jnp.maximum(g, 0.0)                                   # (Bt*100, 16)

    # pool2.
    g = g.reshape(Bt, 10, 10, 16)
    g = g.reshape(Bt, 5, 2, 10, 16).max(axis=2)
    g = g.reshape(Bt, 5, 5, 2, 16).max(axis=3)                # (Bt, 5, 5, 16)

    # flatten to (Bt, 400) in (y, x, c) order; fc1 weight rows were permuted in the
    # wrapper to match PyTorch's (c, y, x) flatten, so no in-kernel transpose.
    flat = jnp.concatenate(
        [g[:, y, x, :] for y in range(5) for x in range(5)], axis=-1)  # (Bt, 400)

    # classifier: fc1/relu/fc2/relu/fc3 with 128-lane-padded weights -> lane-dense store.
    z = jnp.dot(flat, fw1_ref[...], preferred_element_type=jnp.float32) + fb1_ref[...]
    z = jnp.maximum(z, 0.0)
    z = jnp.dot(z, fw2_ref[...], preferred_element_type=jnp.float32) + fb2_ref[...]
    z = jnp.maximum(z, 0.0)
    o_ref[...] = jnp.dot(z, fw3_ref[...], preferred_element_type=jnp.float32) + fb3_ref[...]


# ----------------------------------- wrapper ------------------------------------

def _pad2d(a, rows, cols):
    return jnp.pad(a, ((0, rows - a.shape[0]), (0, cols - a.shape[1])))


def lenet_forward(x_nchw, params):
    (w1, b1, w2, b2, fw1, fb1, fw2, fb2, fw3, fb3) = params
    B = x_nchw.shape[0]
    classes = fw3.shape[0]

    # batch tile: whole batch for small B, else 8-sample tiles (multiple of 8 keeps the
    # (8,128) block rule satisfied and lane-padded intermediates well under scoped VMEM
    # on v5e/v6e/v7x).
    if B <= 8 or B % 8 != 0:
        Bt = B
    else:
        Bt = 8

    # ---- layout plumbing only (no compute hoisted out of the kernel) ----
    # conv1 im2col patches, column order (kh, kw, cin).
    x_nhwc = jnp.transpose(x_nchw, (0, 2, 3, 1))              # (B, 32, 32, 3)
    p1 = jnp.concatenate(
        [x_nhwc[:, kh:kh + 28, kw:kw + 28, :] for kh in range(5) for kw in range(5)],
        axis=-1).reshape(B, 28 * 28, 75)

    # conv weights -> im2col layout (K, Cout), same (kh, kw, cin) row order.
    w1c = jnp.transpose(w1, (2, 3, 1, 0)).reshape(75, 6)
    w2c = jnp.transpose(w2, (2, 3, 1, 0)).reshape(150, 16)
    b1r = b1.reshape(1, 6)
    b2r = b2.reshape(1, 16)

    # fc weights as (in, out); fc1 rows permuted from PyTorch (c, y, x) flatten order to
    # the kernel's (y, x, c) order; every lane dim padded to 128 (zero pads are inert).
    fw1t = jnp.transpose(fw1).reshape(16, 5, 5, 120).transpose(1, 2, 0, 3).reshape(400, 120)
    fw1p = _pad2d(fw1t, 400, 128)
    fb1p = _pad2d(fb1.reshape(1, -1), 1, 128)
    fw2p = _pad2d(jnp.transpose(fw2), 128, 128)
    fb2p = _pad2d(fb2.reshape(1, -1), 1, 128)
    fw3p = _pad2d(jnp.transpose(fw3), 128, 128)
    fb3p = _pad2d(fb3.reshape(1, -1), 1, 128)

    const = lambda shape: pl.BlockSpec(shape, lambda i: (0,) * len(shape))
    out_p = pl.pallas_call(
        _lenet_kernel,
        out_shape=jax.ShapeDtypeStruct((B, 128), jnp.float32),
        grid=(B // Bt,),
        in_specs=[
            pl.BlockSpec((Bt, 784, 75), lambda i: (i, 0, 0)),
            const((75, 6)), const((1, 6)),
            const((150, 16)), const((1, 16)),
            const((400, 128)), const((1, 128)),
            const((128, 128)), const((1, 128)),
            const((128, 128)), const((1, 128)),
        ],
        out_specs=pl.BlockSpec((Bt, 128), lambda i: (i, 0)),
        compiler_params=pltpu.CompilerParams(dimension_semantics=("parallel",)),
    )(p1, w1c, b1r, w2c, b2r, fw1p, fb1p, fw2p, fb2p, fw3p, fb3p)

    return out_p[:, :classes]


# ------------------------------ pure-JAX reference --------------------------------

def reference_forward(x, params):
    (w1, b1, w2, b2, fw1, fb1, fw2, fb2, fw3, fb3) = params
    dn = ("NCHW", "OIHW", "NCHW")

    def pool(y):
        return lax.reduce_window(y, -jnp.inf, lax.max, (1, 1, 2, 2), (1, 1, 2, 2), "VALID")

    y = lax.conv_general_dilated(x, w1, (1, 1), "VALID", dimension_numbers=dn)
    y = pool(jnp.maximum(y + b1[None, :, None, None], 0.0))
    y = lax.conv_general_dilated(y, w2, (1, 1), "VALID", dimension_numbers=dn)
    y = pool(jnp.maximum(y + b2[None, :, None, None], 0.0))
    y = y.reshape(x.shape[0], -1)
    y = jnp.maximum(y @ fw1.T + fb1, 0.0)
    y = jnp.maximum(y @ fw2.T + fb2, 0.0)
    return y @ fw3.T + fb3


# -------------------------------------- main ---------------------------------------

if __name__ == "__main__":
    B, classes = 2, 10
    key = jax.random.PRNGKey(0)
    ks = jax.random.split(key, 11)

    def uinit(k, shape, fan_in):
        bound = 1.0 / (fan_in ** 0.5)
        return jax.random.uniform(k, shape, jnp.float32, -bound, bound)

    x = jax.random.normal(ks[0], (B, 3, 32, 32), jnp.float32)
    params = (
        uinit(ks[1], (6, 3, 5, 5), 3 * 25),   uinit(ks[2], (6,), 3 * 25),       # conv1
        uinit(ks[3], (16, 6, 5, 5), 6 * 25),  uinit(ks[4], (16,), 6 * 25),      # conv2
        uinit(ks[5], (120, 400), 400),        uinit(ks[6], (120,), 400),        # fc1
        uinit(ks[7], (84, 120), 120),         uinit(ks[8], (84,), 120),         # fc2
        uinit(ks[9], (classes, 84), 84),      uinit(ks[10], (classes,), 84),    # fc3
    )

    fwd = jax.jit(lenet_forward)
    out = jax.block_until_ready(fwd(x, params))
    assert out.shape == (B, classes) and out.dtype == jnp.float32
    ref = jax.block_until_ready(reference_forward(x, params))
    assert bool(jnp.allclose(out, ref, atol=2e-3, rtol=2e-3)), "mismatch vs reference"
    print("KERNEL_OK")
</pallas_src>

<mosaic_0001>
module attributes {stable_mosaic.version = 11 : i64} {
  func.func @_lenet_kernel(%arg0: i32, %arg1: memref<2x784x75xf32, #tpu.memory_space<vmem>>, %arg2: memref<75x6xf32, #tpu.memory_space<vmem>>, %arg3: memref<1x6xf32, #tpu.memory_space<vmem>>, %arg4: memref<150x16xf32, #tpu.memory_space<vmem>>, %arg5: memref<1x16xf32, #tpu.memory_space<vmem>>, %arg6: memref<400x128xf32, #tpu.memory_space<vmem>>, %arg7: memref<1x128xf32, #tpu.memory_space<vmem>>, %arg8: memref<128x128xf32, #tpu.memory_space<vmem>>, %arg9: memref<1x128xf32, #tpu.memory_space<vmem>>, %arg10: memref<128x128xf32, #tpu.memory_space<vmem>>, %arg11: memref<1x128xf32, #tpu.memory_space<vmem>>, %arg12: memref<2x128xf32, #tpu.memory_space<vmem>>) attributes {dimension_semantics = [#tpu.dimension_semantics<parallel>], iteration_bounds = array<i64: 1>, scalar_prefetch = 0 : i64, scratch_operands = 0 : i64, tpu.core_type = #tpu.core_type<tc>, window_params = [{transform_indices = @transform_0, window_bounds = array<i64: 2, 784, 75>}, {pipeline_mode = #tpu.pipeline_mode<synchronous>, transform_indices = @transform_1, window_bounds = array<i64: 75, 6>}, {pipeline_mode = #tpu.pipeline_mode<synchronous>, transform_indices = @transform_2, window_bounds = array<i64: 1, 6>}, {pipeline_mode = #tpu.pipeline_mode<synchronous>, transform_indices = @transform_3, window_bounds = array<i64: 150, 16>}, {pipeline_mode = #tpu.pipeline_mode<synchronous>, transform_indices = @transform_4, window_bounds = array<i64: 1, 16>}, {pipeline_mode = #tpu.pipeline_mode<synchronous>, transform_indices = @transform_5, window_bounds = array<i64: 400, 128>}, {pipeline_mode = #tpu.pipeline_mode<synchronous>, transform_indices = @transform_6, window_bounds = array<i64: 1, 128>}, {pipeline_mode = #tpu.pipeline_mode<synchronous>, transform_indices = @transform_7, window_bounds = array<i64: 128, 128>}, {pipeline_mode = #tpu.pipeline_mode<synchronous>, transform_indices = @transform_8, window_bounds = array<i64: 1, 128>}, {pipeline_mode = #tpu.pipeline_mode<synchronous>, transform_indices = @transform_9, window_bounds = array<i64: 128, 128>}, {pipeline_mode = #tpu.pipeline_mode<synchronous>, transform_indices = @transform_10, window_bounds = array<i64: 1, 128>}, {transform_indices = @transform_11, window_bounds = array<i64: 2, 128>}]} {
    %c0 = arith.constant 0 : index
    %c0_0 = arith.constant 0 : index
    %c0_1 = arith.constant 0 : index
    %0 = vector.load %arg1[%c0, %c0_0, %c0_1] : memref<2x784x75xf32, #tpu.memory_space<vmem>>, vector<2x784x75xf32>
    %1 = vector.shape_cast %0 : vector<2x784x75xf32> to vector<1568x75xf32>
    %c0_2 = arith.constant 0 : index
    %c0_3 = arith.constant 0 : index
    %2 = vector.load %arg2[%c0_2, %c0_3] : memref<75x6xf32, #tpu.memory_space<vmem>>, vector<75x6xf32>
    %cst = arith.constant dense<0.000000e+00> : vector<1568x6xf32>
    %3 = tpu.matmul %1, %2, %cst {dimension_numbers = #tpu.dot_dimension_numbers<[1], [0], [0], [1], [0, 0, 1, 1], [], []>} : vector<1568x75xf32>, vector<75x6xf32>, vector<1568x6xf32> -> vector<1568x6xf32>
    %c0_4 = arith.constant 0 : index
    %c0_5 = arith.constant 0 : index
    %4 = vector.load %arg3[%c0_4, %c0_5] : memref<1x6xf32, #tpu.memory_space<vmem>>, vector<1x6xf32>
    %5 = vector.broadcast %4 : vector<1x6xf32> to vector<1568x6xf32>
    %6 = arith.addf %3, %5 : vector<1568x6xf32>
    %cst_6 = arith.constant 0.000000e+00 : f32
    %7 = vector.broadcast %cst_6 : f32 to vector<1568x6xf32>
    %8 = arith.maximumf %6, %7 : vector<1568x6xf32>
    %9 = vector.shape_cast %8 : vector<1568x6xf32> to vector<2x28x28x6xf32>
    %10 = vector.shape_cast %9 : vector<2x28x28x6xf32> to vector<2x14x2x28x6xf32>
    %cst_7 = arith.constant dense<0xFF800000> : vector<2x14x28x6xf32>
    %11 = vector.multi_reduction <maximumf>, %10, %cst_7 [2] : vector<2x14x2x28x6xf32> to vector<2x14x28x6xf32>
    %12 = vector.shape_cast %11 : vector<2x14x28x6xf32> to vector<2x14x14x2x6xf32>
    %cst_8 = arith.constant dense<0xFF800000> : vector<2x14x14x6xf32>
    %13 = vector.multi_reduction <maximumf>, %12, %cst_8 [3] : vector<2x14x14x2x6xf32> to vector<2x14x14x6xf32>
    %14 = vector.extract_strided_slice %13 {offsets = [0, 0, 0, 0], sizes = [2, 10, 10, 6], strides = [1, 1, 1, 1]} : vector<2x14x14x6xf32> to vector<2x10x10x6xf32>
    %15 = vector.extract_strided_slice %13 {offsets = [0, 0, 1, 0], sizes = [2, 10, 10, 6], strides = [1, 1, 1, 1]} : vector<2x14x14x6xf32> to vector<2x10x10x6xf32>
    %16 = vector.extract_strided_slice %13 {offsets = [0, 0, 2, 0], sizes = [2, 10, 10, 6], strides = [1, 1, 1, 1]} : vector<2x14x14x6xf32> to vector<2x10x10x6xf32>
    %17 = vector.extract_strided_slice %13 {offsets = [0, 0, 3, 0], sizes = [2, 10, 10, 6], strides = [1, 1, 1, 1]} : vector<2x14x14x6xf32> to vector<2x10x10x6xf32>
    %18 = vector.extract_strided_slice %13 {offsets = [0, 0, 4, 0], sizes = [2, 10, 10, 6], strides = [1, 1, 1, 1]} : vector<2x14x14x6xf32> to vector<2x10x10x6xf32>
    %19 = vector.extract_strided_slice %13 {offsets = [0, 1, 0, 0], sizes = [2, 10, 10, 6], strides = [1, 1, 1, 1]} : vector<2x14x14x6xf32> to vector<2x10x10x6xf32>
    %20 = vector.extract_strided_slice %13 {offsets = [0, 1, 1, 0], sizes = [2, 10, 10, 6], strides = [1, 1, 1, 1]} : vector<2x14x14x6xf32> to vector<2x10x10x6xf32>
    %21 = vector.extract_strided_slice %13 {offsets = [0, 1, 2, 0], sizes = [2, 10, 10, 6], strides = [1, 1, 1, 1]} : vector<2x14x14x6xf32> to vector<2x10x10x6xf32>
    %22 = vector.extract_strided_slice %13 {offsets = [0, 1, 3, 0], sizes = [2, 10, 10, 6], strides = [1, 1, 1, 1]} : vector<2x14x14x6xf32> to vector<2x10x10x6xf32>
    %23 = vector.extract_strided_slice %13 {offsets = [0, 1, 4, 0], sizes = [2, 10, 10, 6], strides = [1, 1, 1, 1]} : vector<2x14x14x6xf32> to vector<2x10x10x6xf32>
    %24 = vector.extract_strided_slice %13 {offsets = [0, 2, 0, 0], sizes = [2, 10, 10, 6], strides = [1, 1, 1, 1]} : vector<2x14x14x6xf32> to vector<2x10x10x6xf32>
    %25 = vector.extract_strided_slice %13 {offsets = [0, 2, 1, 0], sizes = [2, 10, 10, 6], strides = [1, 1, 1, 1]} : vector<2x14x14x6xf32> to vector<2x10x10x6xf32>
    %26 = vector.extract_strided_slice %13 {offsets = [0, 2, 2, 0], sizes = [2, 10, 10, 6], strides = [1, 1, 1, 1]} : vector<2x14x14x6xf32> to vector<2x10x10x6xf32>
    %27 = vector.extract_strided_slice %13 {offsets = [0, 2, 3, 0], sizes = [2, 10, 10, 6], strides = [1, 1, 1, 1]} : vector<2x14x14x6xf32> to vector<2x10x10x6xf32>
    %28 = vector.extract_strided_slice %13 {offsets = [0, 2, 4, 0], sizes = [2, 10, 10, 6], strides = [1, 1, 1, 1]} : vector<2x14x14x6xf32> to vector<2x10x10x6xf32>
    %29 = vector.extract_strided_slice %13 {offsets = [0, 3, 0, 0], sizes = [2, 10, 10, 6], strides = [1, 1, 1, 1]} : vector<2x14x14x6xf32> to vector<2x10x10x6xf32>
    %30 = vector.extract_strided_slice %13 {offsets = [0, 3, 1, 0], sizes = [2, 10, 10, 6], strides = [1, 1, 1, 1]} : vector<2x14x14x6xf32> to vector<2x10x10x6xf32>
    %31 = vector.extract_strided_slice %13 {offsets = [0, 3, 2, 0], sizes = [2, 10, 10, 6], strides = [1, 1, 1, 1]} : vector<2x14x14x6xf32> to vector<2x10x10x6xf32>
    %32 = vector.extract_strided_slice %13 {offsets = [0, 3, 3, 0], sizes = [2, 10, 10, 6], strides = [1, 1, 1, 1]} : vector<2x14x14x6xf32> to vector<2x10x10x6xf32>
    %33 = vector.extract_strided_slice %13 {offsets = [0, 3, 4, 0], sizes = [2, 10, 10, 6], strides = [1, 1, 1, 1]} : vector<2x14x14x6xf32> to vector<2x10x10x6xf32>
    %34 = vector.extract_strided_slice %13 {offsets = [0, 4, 0, 0], sizes = [2, 10, 10, 6], strides = [1, 1, 1, 1]} : vector<2x14x14x6xf32> to vector<2x10x10x6xf32>
    %35 = vector.extract_strided_slice %13 {offsets = [0, 4, 1, 0], sizes = [2, 10, 10, 6], strides = [1, 1, 1, 1]} : vector<2x14x14x6xf32> to vector<2x10x10x6xf32>
    %36 = vector.extract_strided_slice %13 {offsets = [0, 4, 2, 0], sizes = [2, 10, 10, 6], strides = [1, 1, 1, 1]} : vector<2x14x14x6xf32> to vector<2x10x10x6xf32>
    %37 = vector.extract_strided_slice %13 {offsets = [0, 4, 3, 0], sizes = [2, 10, 10, 6], strides = [1, 1, 1, 1]} : vector<2x14x14x6xf32> to vector<2x10x10x6xf32>
    %38 = vector.extract_strided_slice %13 {offsets = [0, 4, 4, 0], sizes = [2, 10, 10, 6], strides = [1, 1, 1, 1]} : vector<2x14x14x6xf32> to vector<2x10x10x6xf32>
    %39 = tpu.concatenate %14, %15, %16, %17, %18, %19, %20, %21, %22, %23, %24, %25, %26, %27, %28, %29 in 3 : vector<2x10x10x6xf32>, vector<2x10x10x6xf32>, vector<2x10x10x6xf32>, vector<2x10x10x6xf32>, vector<2x10x10x6xf32>, vector<2x10x10x6xf32>, vector<2x10x10x6xf32>, vector<2x10x10x6xf32>, vector<2x10x10x6xf32>, vector<2x10x10x6xf32>, vector<2x10x10x6xf32>, vector<2x10x10x6xf32>, vector<2x10x10x6xf32>, vector<2x10x10x6xf32>, vector<2x10x10x6xf32>, vector<2x10x10x6xf32> -> vector<2x10x10x96xf32>
    %40 = tpu.concatenate %30, %31, %32, %33, %34, %35, %36, %37, %38 in 3 : vector<2x10x10x6xf32>, vector<2x10x10x6xf32>, vector<2x10x10x6xf32>, vector<2x10x10x6xf32>, vector<2x10x10x6xf32>, vector<2x10x10x6xf32>, vector<2x10x10x6xf32>, vector<2x10x10x6xf32>, vector<2x10x10x6xf32> -> vector<2x10x10x54xf32>
    %41 = tpu.concatenate %39, %40 in 3 : vector<2x10x10x96xf32>, vector<2x10x10x54xf32> -> vector<2x10x10x150xf32>
    %42 = vector.shape_cast %41 : vector<2x10x10x150xf32> to vector<200x150xf32>
    %c0_9 = arith.constant 0 : index
    %c0_10 = arith.constant 0 : index
    %43 = vector.load %arg4[%c0_9, %c0_10] : memref<150x16xf32, #tpu.memory_space<vmem>>, vector<150x16xf32>
    %cst_11 = arith.constant dense<0.000000e+00> : vector<200x16xf32>
    %44 = tpu.matmul %42, %43, %cst_11 {dimension_numbers = #tpu.dot_dimension_numbers<[1], [0], [0], [1], [0, 0, 1, 1], [], []>} : vector<200x150xf32>, vector<150x16xf32>, vector<200x16xf32> -> vector<200x16xf32>
    %c0_12 = arith.constant 0 : index
    %c0_13 = arith.constant 0 : index
    %45 = vector.load %arg5[%c0_12, %c0_13] : memref<1x16xf32, #tpu.memory_space<vmem>>, vector<1x16xf32>
    %46 = vector.broadcast %45 : vector<1x16xf32> to vector<200x16xf32>
    %47 = arith.addf %44, %46 : vector<200x16xf32>
    %cst_14 = arith.constant 0.000000e+00 : f32
    %48 = vector.broadcast %cst_14 : f32 to vector<200x16xf32>
    %49 = arith.maximumf %47, %48 : vector<200x16xf32>
    %50 = vector.shape_cast %49 : vector<200x16xf32> to vector<2x10x10x16xf32>
    %51 = vector.shape_cast %50 : vector<2x10x10x16xf32> to vector<2x5x2x10x16xf32>
    %cst_15 = arith.constant dense<0xFF800000> : vector<2x5x10x16xf32>
    %52 = vector.multi_reduction <maximumf>, %51, %cst_15 [2] : vector<2x5x2x10x16xf32> to vector<2x5x10x16xf32>
    %53 = vector.shape_cast %52 : vector<2x5x10x16xf32> to vector<2x5x5x2x16xf32>
    %cst_16 = arith.constant dense<0xFF800000> : vector<2x5x5x16xf32>
    %54 = vector.multi_reduction <maximumf>, %53, %cst_16 [3] : vector<2x5x5x2x16xf32> to vector<2x5x5x16xf32>
    %55 = vector.extract_strided_slice %54 {offsets = [0, 0, 0, 0], sizes = [2, 1, 1, 16], strides = [1, 1, 1, 1]} : vector<2x5x5x16xf32> to vector<2x1x1x16xf32>
    %56 = vector.shape_cast %55 : vector<2x1x1x16xf32> to vector<2x16xf32>
    %57 = vector.extract_strided_slice %54 {offsets = [0, 0, 1, 0], sizes = [2, 1, 1, 16], strides = [1, 1, 1, 1]} : vector<2x5x5x16xf32> to vector<2x1x1x16xf32>
    %58 = vector.shape_cast %57 : vector<2x1x1x16xf32> to vector<2x16xf32>
    %59 = vector.extract_strided_slice %54 {offsets = [0, 0, 2, 0], sizes = [2, 1, 1, 16], strides = [1, 1, 1, 1]} : vector<2x5x5x16xf32> to vector<2x1x1x16xf32>
    %60 = vector.shape_cast %59 : vector<2x1x1x16xf32> to vector<2x16xf32>
    %61 = vector.extract_strided_slice %54 {offsets = [0, 0, 3, 0], sizes = [2, 1, 1, 16], strides = [1, 1, 1, 1]} : vector<2x5x5x16xf32> to vector<2x1x1x16xf32>
    %62 = vector.shape_cast %61 : vector<2x1x1x16xf32> to vector<2x16xf32>
    %63 = vector.extract_strided_slice %54 {offsets = [0, 0, 4, 0], sizes = [2, 1, 1, 16], strides = [1, 1, 1, 1]} : vector<2x5x5x16xf32> to vector<2x1x1x16xf32>
    %64 = vector.shape_cast %63 : vector<2x1x1x16xf32> to vector<2x16xf32>
    %65 = vector.extract_strided_slice %54 {offsets = [0, 1, 0, 0], sizes = [2, 1, 1, 16], strides = [1, 1, 1, 1]} : vector<2x5x5x16xf32> to vector<2x1x1x16xf32>
    %66 = vector.shape_cast %65 : vector<2x1x1x16xf32> to vector<2x16xf32>
    %67 = vector.extract_strided_slice %54 {offsets = [0, 1, 1, 0], sizes = [2, 1, 1, 16], strides = [1, 1, 1, 1]} : vector<2x5x5x16xf32> to vector<2x1x1x16xf32>
    %68 = vector.shape_cast %67 : vector<2x1x1x16xf32> to vector<2x16xf32>
    %69 = vector.extract_strided_slice %54 {offsets = [0, 1, 2, 0], sizes = [2, 1, 1, 16], strides = [1, 1, 1, 1]} : vector<2x5x5x16xf32> to vector<2x1x1x16xf32>
    %70 = vector.shape_cast %69 : vector<2x1x1x16xf32> to vector<2x16xf32>
    %71 = vector.extract_strided_slice %54 {offsets = [0, 1, 3, 0], sizes = [2, 1, 1, 16], strides = [1, 1, 1, 1]} : vector<2x5x5x16xf32> to vector<2x1x1x16xf32>
    %72 = vector.shape_cast %71 : vector<2x1x1x16xf32> to vector<2x16xf32>
    %73 = vector.extract_strided_slice %54 {offsets = [0, 1, 4, 0], sizes = [2, 1, 1, 16], strides = [1, 1, 1, 1]} : vector<2x5x5x16xf32> to vector<2x1x1x16xf32>
    %74 = vector.shape_cast %73 : vector<2x1x1x16xf32> to vector<2x16xf32>
    %75 = vector.extract_strided_slice %54 {offsets = [0, 2, 0, 0], sizes = [2, 1, 1, 16], strides = [1, 1, 1, 1]} : vector<2x5x5x16xf32> to vector<2x1x1x16xf32>
    %76 = vector.shape_cast %75 : vector<2x1x1x16xf32> to vector<2x16xf32>
    %77 = vector.extract_strided_slice %54 {offsets = [0, 2, 1, 0], sizes = [2, 1, 1, 16], strides = [1, 1, 1, 1]} : vector<2x5x5x16xf32> to vector<2x1x1x16xf32>
    %78 = vector.shape_cast %77 : vector<2x1x1x16xf32> to vector<2x16xf32>
    %79 = vector.extract_strided_slice %54 {offsets = [0, 2, 2, 0], sizes = [2, 1, 1, 16], strides = [1, 1, 1, 1]} : vector<2x5x5x16xf32> to vector<2x1x1x16xf32>
    %80 = vector.shape_cast %79 : vector<2x1x1x16xf32> to vector<2x16xf32>
    %81 = vector.extract_strided_slice %54 {offsets = [0, 2, 3, 0], sizes = [2, 1, 1, 16], strides = [1, 1, 1, 1]} : vector<2x5x5x16xf32> to vector<2x1x1x16xf32>
    %82 = vector.shape_cast %81 : vector<2x1x1x16xf32> to vector<2x16xf32>
    %83 = vector.extract_strided_slice %54 {offsets = [0, 2, 4, 0], sizes = [2, 1, 1, 16], strides = [1, 1, 1, 1]} : vector<2x5x5x16xf32> to vector<2x1x1x16xf32>
    %84 = vector.shape_cast %83 : vector<2x1x1x16xf32> to vector<2x16xf32>
    %85 = vector.extract_strided_slice %54 {offsets = [0, 3, 0, 0], sizes = [2, 1, 1, 16], strides = [1, 1, 1, 1]} : vector<2x5x5x16xf32> to vector<2x1x1x16xf32>
    %86 = vector.shape_cast %85 : vector<2x1x1x16xf32> to vector<2x16xf32>
    %87 = vector.extract_strided_slice %54 {offsets = [0, 3, 1, 0], sizes = [2, 1, 1, 16], strides = [1, 1, 1, 1]} : vector<2x5x5x16xf32> to vector<2x1x1x16xf32>
    %88 = vector.shape_cast %87 : vector<2x1x1x16xf32> to vector<2x16xf32>
    %89 = vector.extract_strided_slice %54 {offsets = [0, 3, 2, 0], sizes = [2, 1, 1, 16], strides = [1, 1, 1, 1]} : vector<2x5x5x16xf32> to vector<2x1x1x16xf32>
    %90 = vector.shape_cast %89 : vector<2x1x1x16xf32> to vector<2x16xf32>
    %91 = vector.extract_strided_slice %54 {offsets = [0, 3, 3, 0], sizes = [2, 1, 1, 16], strides = [1, 1, 1, 1]} : vector<2x5x5x16xf32> to vector<2x1x1x16xf32>
    %92 = vector.shape_cast %91 : vector<2x1x1x16xf32> to vector<2x16xf32>
    %93 = vector.extract_strided_slice %54 {offsets = [0, 3, 4, 0], sizes = [2, 1, 1, 16], strides = [1, 1, 1, 1]} : vector<2x5x5x16xf32> to vector<2x1x1x16xf32>
    %94 = vector.shape_cast %93 : vector<2x1x1x16xf32> to vector<2x16xf32>
    %95 = vector.extract_strided_slice %54 {offsets = [0, 4, 0, 0], sizes = [2, 1, 1, 16], strides = [1, 1, 1, 1]} : vector<2x5x5x16xf32> to vector<2x1x1x16xf32>
    %96 = vector.shape_cast %95 : vector<2x1x1x16xf32> to vector<2x16xf32>
    %97 = vector.extract_strided_slice %54 {offsets = [0, 4, 1, 0], sizes = [2, 1, 1, 16], strides = [1, 1, 1, 1]} : vector<2x5x5x16xf32> to vector<2x1x1x16xf32>
    %98 = vector.shape_cast %97 : vector<2x1x1x16xf32> to vector<2x16xf32>
    %99 = vector.extract_strided_slice %54 {offsets = [0, 4, 2, 0], sizes = [2, 1, 1, 16], strides = [1, 1, 1, 1]} : vector<2x5x5x16xf32> to vector<2x1x1x16xf32>
    %100 = vector.shape_cast %99 : vector<2x1x1x16xf32> to vector<2x16xf32>
    %101 = vector.extract_strided_slice %54 {offsets = [0, 4, 3, 0], sizes = [2, 1, 1, 16], strides = [1, 1, 1, 1]} : vector<2x5x5x16xf32> to vector<2x1x1x16xf32>
    %102 = vector.shape_cast %101 : vector<2x1x1x16xf32> to vector<2x16xf32>
    %103 = vector.extract_strided_slice %54 {offsets = [0, 4, 4, 0], sizes = [2, 1, 1, 16], strides = [1, 1, 1, 1]} : vector<2x5x5x16xf32> to vector<2x1x1x16xf32>
    %104 = vector.shape_cast %103 : vector<2x1x1x16xf32> to vector<2x16xf32>
    %105 = tpu.concatenate %56, %58, %60, %62, %64, %66, %68, %70, %72, %74, %76, %78, %80, %82, %84, %86 in 1 : vector<2x16xf32>, vector<2x16xf32>, vector<2x16xf32>, vector<2x16xf32>, vector<2x16xf32>, vector<2x16xf32>, vector<2x16xf32>, vector<2x16xf32>, vector<2x16xf32>, vector<2x16xf32>, vector<2x16xf32>, vector<2x16xf32>, vector<2x16xf32>, vector<2x16xf32>, vector<2x16xf32>, vector<2x16xf32> -> vector<2x256xf32>
    %106 = tpu.concatenate %88, %90, %92, %94, %96, %98, %100, %102, %104 in 1 : vector<2x16xf32>, vector<2x16xf32>, vector<2x16xf32>, vector<2x16xf32>, vector<2x16xf32>, vector<2x16xf32>, vector<2x16xf32>, vector<2x16xf32>, vector<2x16xf32> -> vector<2x144xf32>
    %107 = tpu.concatenate %105, %106 in 1 : vector<2x256xf32>, vector<2x144xf32> -> vector<2x400xf32>
    %c0_17 = arith.constant 0 : index
    %c0_18 = arith.constant 0 : index
    %108 = vector.load %arg6[%c0_17, %c0_18] : memref<400x128xf32, #tpu.memory_space<vmem>>, vector<400x128xf32>
    %cst_19 = arith.constant dense<0.000000e+00> : vector<2x128xf32>
    %109 = tpu.matmul %107, %108, %cst_19 {dimension_numbers = #tpu.dot_dimension_numbers<[1], [0], [0], [1], [0, 0, 1, 1], [], []>} : vector<2x400xf32>, vector<400x128xf32>, vector<2x128xf32> -> vector<2x128xf32>
    %c0_20 = arith.constant 0 : index
    %c0_21 = arith.constant 0 : index
    %110 = vector.load %arg7[%c0_20, %c0_21] : memref<1x128xf32, #tpu.memory_space<vmem>>, vector<1x128xf32>
    %111 = vector.broadcast %110 : vector<1x128xf32> to vector<2x128xf32>
    %112 = arith.addf %109, %111 : vector<2x128xf32>
    %cst_22 = arith.constant 0.000000e+00 : f32
    %113 = vector.broadcast %cst_22 : f32 to vector<2x128xf32>
    %114 = arith.maximumf %112, %113 : vector<2x128xf32>
    %c0_23 = arith.constant 0 : index
    %c0_24 = arith.constant 0 : index
    %115 = vector.load %arg8[%c0_23, %c0_24] : memref<128x128xf32, #tpu.memory_space<vmem>>, vector<128x128xf32>
    %cst_25 = arith.constant dense<0.000000e+00> : vector<2x128xf32>
    %116 = tpu.matmul %114, %115, %cst_25 {dimension_numbers = #tpu.dot_dimension_numbers<[1], [0], [0], [1], [0, 0, 1, 1], [], []>} : vector<2x128xf32>, vector<128x128xf32>, vector<2x128xf32> -> vector<2x128xf32>
    %c0_26 = arith.constant 0 : index
    %c0_27 = arith.constant 0 : index
    %117 = vector.load %arg9[%c0_26, %c0_27] : memref<1x128xf32, #tpu.memory_space<vmem>>, vector<1x128xf32>
    %118 = vector.broadcast %117 : vector<1x128xf32> to vector<2x128xf32>
    %119 = arith.addf %116, %118 : vector<2x128xf32>
    %cst_28 = arith.constant 0.000000e+00 : f32
    %120 = vector.broadcast %cst_28 : f32 to vector<2x128xf32>
    %121 = arith.maximumf %119, %120 : vector<2x128xf32>
    %c0_29 = arith.constant 0 : index
    %c0_30 = arith.constant 0 : index
    %122 = vector.load %arg10[%c0_29, %c0_30] : memref<128x128xf32, #tpu.memory_space<vmem>>, vector<128x128xf32>
    %cst_31 = arith.constant dense<0.000000e+00> : vector<2x128xf32>
    %123 = tpu.matmul %121, %122, %cst_31 {dimension_numbers = #tpu.dot_dimension_numbers<[1], [0], [0], [1], [0, 0, 1, 1], [], []>} : vector<2x128xf32>, vector<128x128xf32>, vector<2x128xf32> -> vector<2x128xf32>
    %c0_32 = arith.constant 0 : index
    %c0_33 = arith.constant 0 : index
    %124 = vector.load %arg11[%c0_32, %c0_33] : memref<1x128xf32, #tpu.memory_space<vmem>>, vector<1x128xf32>
    %125 = vector.broadcast %124 : vector<1x128xf32> to vector<2x128xf32>
    %126 = arith.addf %123, %125 : vector<2x128xf32>
    %c0_34 = arith.constant 0 : index
    %c0_35 = arith.constant 0 : index
    %127 = vector.load %arg12[%c0_34, %c0_35] : memref<2x128xf32, #tpu.memory_space<vmem>>, vector<2x128xf32>
    tpu.vector_store %arg12[%c0_34, %c0_35], %126 {strides = array<i32>} : memref<2x128xf32, #tpu.memory_space<vmem>>, vector<2x128xf32>,
    return
  }
  func.func @transform_0(%arg0: i32) -> (i32, i32, i32) {
    %c0_i32 = arith.constant 0 : i32
    %c0_i32_0 = arith.constant 0 : i32
    %c0_i32_1 = arith.constant 0 : i32
    return %arg0, %c0_i32, %c0_i32_0 : i32, i32, i32
  }
  func.func @transform_1(%arg0: i32) -> (i32, i32) {
    %c0_i32 = arith.constant 0 : i32
    %c0_i32_0 = arith.constant 0 : i32
    %c0_i32_1 = arith.constant 0 : i32
    return %c0_i32, %c0_i32_0 : i32, i32
  }
  func.func @transform_2(%arg0: i32) -> (i32, i32) {
    %c0_i32 = arith.constant 0 : i32
    %c0_i32_0 = arith.constant 0 : i32
    %c0_i32_1 = arith.constant 0 : i32
    return %c0_i32, %c0_i32_0 : i32, i32
  }
  func.func @transform_3(%arg0: i32) -> (i32, i32) {
    %c0_i32 = arith.constant 0 : i32
    %c0_i32_0 = arith.constant 0 : i32
    %c0_i32_1 = arith.constant 0 : i32
    return %c0_i32, %c0_i32_0 : i32, i32
  }
  func.func @transform_4(%arg0: i32) -> (i32, i32) {
    %c0_i32 = arith.constant 0 : i32
    %c0_i32_0 = arith.constant 0 : i32
    %c0_i32_1 = arith.constant 0 : i32
    return %c0_i32, %c0_i32_0 : i32, i32
  }
  func.func @transform_5(%arg0: i32) -> (i32, i32) {
    %c0_i32 = arith.constant 0 : i32
    %c0_i32_0 = arith.constant 0 : i32
    %c0_i32_1 = arith.constant 0 : i32
    return %c0_i32, %c0_i32_0 : i32, i32
  }
  func.func @transform_6(%arg0: i32) -> (i32, i32) {
    %c0_i32 = arith.constant 0 : i32
    %c0_i32_0 = arith.constant 0 : i32
    %c0_i32_1 = arith.constant 0 : i32
    return %c0_i32, %c0_i32_0 : i32, i32
  }
  func.func @transform_7(%arg0: i32) -> (i32, i32) {
    %c0_i32 = arith.constant 0 : i32
    %c0_i32_0 = arith.constant 0 : i32
    %c0_i32_1 = arith.constant 0 : i32
    return %c0_i32, %c0_i32_0 : i32, i32
  }
  func.func @transform_8(%arg0: i32) -> (i32, i32) {
    %c0_i32 = arith.constant 0 : i32
    %c0_i32_0 = arith.constant 0 : i32
    %c0_i32_1 = arith.constant 0 : i32
    return %c0_i32, %c0_i32_0 : i32, i32
  }
  func.func @transform_9(%arg0: i32) -> (i32, i32) {
    %c0_i32 = arith.constant 0 : i32
    %c0_i32_0 = arith.constant 0 : i32
    %c0_i32_1 = arith.constant 0 : i32
    return %c0_i32, %c0_i32_0 : i32, i32
  }
  func.func @transform_10(%arg0: i32) -> (i32, i32) {
    %c0_i32 = arith.constant 0 : i32
    %c0_i32_0 = arith.constant 0 : i32
    %c0_i32_1 = arith.constant 0 : i32
    return %c0_i32, %c0_i32_0 : i32, i32
  }
  func.func @transform_11(%arg0: i32) -> (i32, i32) {
    %c0_i32 = arith.constant 0 : i32
    %c0_i32_0 = arith.constant 0 : i32
    return %arg0, %c0_i32 : i32, i32
  }
}

</mosaic_0001>

<llo_original>
// kernel: lenet_forward.1
$region0: #{lenet_forward.1}
  #allocation0 [shape = 'u32[]', space=smem, size = 0x4, offset = 0x4, fixed_abs, tag = 'smem constant byte address 0x4 - core index']
  #allocation1 [shape = 'u32[72,128]{1,0:T(1,128)}', space=vmem, size = 0x9000, scoped, tag = 'internal scratch']
  %s0 = inlined_call_operand.vmem [shape: f32[2,784,75], index: 0, kind: input, shape index: {}]
  %s1 = inlined_call_operand.vmem [shape: f32[75,6], index: 1, kind: input, shape index: {}]
  %s2 = inlined_call_operand.vmem [shape: f32[1,6], index: 2, kind: input, shape index: {}]
  %s3 = inlined_call_operand.vmem [shape: f32[150,16], index: 3, kind: input, shape index: {}]
  %s4 = inlined_call_operand.vmem [shape: f32[1,16], index: 4, kind: input, shape index: {}]
  %s5 = inlined_call_operand.vmem [shape: f32[400,128], index: 5, kind: input, shape index: {}]
  %s6 = inlined_call_operand.vmem [shape: f32[1,128], index: 6, kind: input, shape index: {}]
  %s7 = inlined_call_operand.vmem [shape: f32[128,128], index: 7, kind: input, shape index: {}]
  %s8 = inlined_call_operand.vmem [shape: f32[1,128], index: 8, kind: input, shape index: {}]
  %s9 = inlined_call_operand.vmem [shape: f32[128,128], index: 9, kind: input, shape index: {}]
  %s10 = inlined_call_operand.vmem [shape: f32[1,128], index: 10, kind: input, shape index: {}]
  %s11 = inlined_call_operand.hbm [shape: f32[2,128], index: 11, kind: output, shape index: {}]
  %s12 = sld [smem:[#allocation0]]
  $region54: #{lenet_forward.1} parent=0
    _
  %s14 = ssub.s32 1, %s12
  %s15 = scalar_select 0, %s14, %s12
  $region1: #{lenet_forward.1} parent=0
    #allocation2 [shape = 'u8[1024]{0}', space=vmem, size = 0x400, scoped, tag = 'output window, operand 0, single buffered']
    #allocation3 [shape = 's32[1]{0}', space=sflag, size = 0x4, scoped, tag = 'scoped memory for lenet_forward.1']
    %16 = vsyncpa [#allocation3], 0
    // Predicated region
    $region2: #{lenet_forward.1} parent=1 // pred_check
      _
    $region3: #{lenet_forward.1} parent=1 // pred_check_branch
      %18 = sbr.rel (0) target = $region5
    $region4: #{lenet_forward.1} parent=1 // pred_region
      _
    $region5: #{lenet_forward.1} parent=1 // pred_fallthru
      _
    // Predicated region
    $region6: #{lenet_forward.1} parent=1 // pred_check
      _
    $region7: #{lenet_forward.1} parent=1 // pred_check_branch
      %20 = sbr.rel (0) target = $region9
    $region8: #{lenet_forward.1} parent=1 // pred_region
      _
    $region9: #{lenet_forward.1} parent=1 // pred_fallthru
      _
    // Predicated region
    $region10: #{lenet_forward.1} parent=1 // pred_check
      _
    $region11: #{lenet_forward.1} parent=1 // pred_check_branch
      %22 = sbr.rel (0) target = $region13
    $region12: #{lenet_forward.1} parent=1 // pred_region
      _
    $region13: #{lenet_forward.1} parent=1 // pred_fallthru
      _
    // Predicated region
    $region14: #{lenet_forward.1} parent=1 // pred_check
      _
    $region15: #{lenet_forward.1} parent=1 // pred_check_branch
      %24 = sbr.rel (0) target = $region17
    $region16: #{lenet_forward.1} parent=1 // pred_region
      _
    $region17: #{lenet_forward.1} parent=1 // pred_fallthru
      _
    // Predicated region
    $region18: #{lenet_forward.1} parent=1 // pred_check
      _
    $region19: #{lenet_forward.1} parent=1 // pred_check_branch
      %26 = sbr.rel (0) target = $region21
    $region20: #{lenet_forward.1} parent=1 // pred_region
      _
    $region21: #{lenet_forward.1} parent=1 // pred_fallthru
      _
    // Predicated region
    $region22: #{lenet_forward.1} parent=1 // pred_check
      _
    $region23: #{lenet_forward.1} parent=1 // pred_check_branch
      %28 = sbr.rel (0) target = $region25
    $region24: #{lenet_forward.1} parent=1 // pred_region
      _
    $region25: #{lenet_forward.1} parent=1 // pred_fallthru
      _
    // Predicated region
    $region26: #{lenet_forward.1} parent=1 // pred_check
      _
    $region27: #{lenet_forward.1} parent=1 // pred_check_branch
      %30 = sbr.rel (0) target = $region29
    $region28: #{lenet_forward.1} parent=1 // pred_region
      _
    $region29: #{lenet_forward.1} parent=1 // pred_fallthru
      _
    // Predicated region
    $region30: #{lenet_forward.1} parent=1 // pred_check
      _
    $region31: #{lenet_forward.1} parent=1 // pred_check_branch
      %32 = sbr.rel (0) target = $region33
    $region32: #{lenet_forward.1} parent=1 // pred_region
      _
    $region33: #{lenet_forward.1} parent=1 // pred_fallthru
      _
    // Predicated region
    $region34: #{lenet_forward.1} parent=1 // pred_check
      _
    $region35: #{lenet_forward.1} parent=1 // pred_check_branch
      %34 = sbr.rel (0) target = $region37
    $region36: #{lenet_forward.1} parent=1 // pred_region
      _
    $region37: #{lenet_forward.1} parent=1 // pred_fallthru
      _
    // Predicated region
    $region38: #{lenet_forward.1} parent=1 // pred_check
      _
    $region39: #{lenet_forward.1} parent=1 // pred_check_branch
      %36 = sbr.rel (0) target = $region41
    $region40: #{lenet_forward.1} parent=1 // pred_region
      _
    $region41: #{lenet_forward.1} parent=1 // pred_fallthru
      _
    // Predicated region
    $region42: #{lenet_forward.1} parent=1 // pred_check
      _
    $region43: #{lenet_forward.1} parent=1 // pred_check_branch
      %38 = sbr.rel (0) target = $region45
    $region44: #{lenet_forward.1} parent=1 // pred_region
      _
    $region45: #{lenet_forward.1} parent=1 // pred_fallthru
      _
    %v39 = vld [vmem:[%s0] sm:$0xff]
    %v40 = vld [vmem:[%s0 + $0x8] sm:$0xff]
    %v41 = vld [vmem:[%s0 + $0x10] sm:$0xff]
    %v42 = vld [vmem:[%s0 + $0x18] sm:$0xff]
    %v43 = vld [vmem:[%s0 + $0x20] sm:$0xff]
    %v44 = vld [vmem:[%s0 + $0x28] sm:$0xff]
    %v45 = vld [vmem:[%s0 + $0x30] sm:$0xff]
    %v46 = vld [vmem:[%s0 + $0x38] sm:$0xff]
    %v47 = vld [vmem:[%s0 + $0x40] sm:$0xff]
    %v48 = vld [vmem:[%s0 + $0x48] sm:$0xff]
    %v49 = vld [vmem:[%s0 + $0x50] sm:$0xff]
    %v50 = vld [vmem:[%s0 + $0x58] sm:$0xff]
    %v51 = vld [vmem:[%s0 + $0x60] sm:$0xff]
    %v52 = vld [vmem:[%s0 + $0x68] sm:$0xff]
    %v53 = vld [vmem:[%s0 + $0x70] sm:$0xff]
    %v54 = vld [vmem:[%s0 + $0x78] sm:$0xff]
    %v55 = vld [vmem:[%s0 + $0x80] sm:$0xff]
    %v56 = vld [vmem:[%s0 + $0x88] sm:$0xff]
    %v57 = vld [vmem:[%s0 + $0x90] sm:$0xff]
    %v58 = vld [vmem:[%s0 + $0x98] sm:$0xff]
    %v59 = vld [vmem:[%s0 + $0xa0] sm:$0xff]
    %v60 = vld [vmem:[%s0 + $0xa8] sm:$0xff]
    %v61 = vld [vmem:[%s0 + $0xb0] sm:$0xff]
    %v62 = vld [vmem:[%s0 + $0xb8] sm:$0xff]
    %v63 = vld [vmem:[%s0 + $0xc0] sm:$0xff]
    %v64 = vld [vmem:[%s0 + $0xc8] sm:$0xff]
    %v65 = vld [vmem:[%s0 + $0xd0] sm:$0xff]
    %v66 = vld [vmem:[%s0 + $0xd8] sm:$0xff]
    %v67 = vld [vmem:[%s0 + $0xe0] sm:$0xff]
    %v68 = vld [vmem:[%s0 + $0xe8] sm:$0xff]
    %v69 = vld [vmem:[%s0 + $0xf0] sm:$0xff]
    %v70 = vld [vmem:[%s0 + $0xf8] sm:$0xff]
    %v71 = vld [vmem:[%s0 + $0x100] sm:$0xff]
    %v72 = vld [vmem:[%s0 + $0x108] sm:$0xff]
    %v73 = vld [vmem:[%s0 + $0x110] sm:$0xff]
    %v74 = vld [vmem:[%s0 + $0x118] sm:$0xff]
    %v75 = vld [vmem:[%s0 + $0x120] sm:$0xff]
    %v76 = vld [vmem:[%s0 + $0x128] sm:$0xff]
    %v77 = vld [vmem:[%s0 + $0x130] sm:$0xff]
    %v78 = vld [vmem:[%s0 + $0x138] sm:$0xff]
    %v79 = vld [vmem:[%s0 + $0x140] sm:$0xff]
    %v80 = vld [vmem:[%s0 + $0x148] sm:$0xff]
    %v81 = vld [vmem:[%s0 + $0x150] sm:$0xff]
    %v82 = vld [vmem:[%s0 + $0x158] sm:$0xff]
    %v83 = vld [vmem:[%s0 + $0x160] sm:$0xff]
    %v84 = vld [vmem:[%s0 + $0x168] sm:$0xff]
    %v85 = vld [vmem:[%s0 + $0x170] sm:$0xff]
    %v86 = vld [vmem:[%s0 + $0x178] sm:$0xff]
    %v87 = vld [vmem:[%s0 + $0x180] sm:$0xff]
    %v88 = vld [vmem:[%s0 + $0x188] sm:$0xff]
    %v89 = vld [vmem:[%s0 + $0x190] sm:$0xff]
    %v90 = vld [vmem:[%s0 + $0x198] sm:$0xff]
    %v91 = vld [vmem:[%s0 + $0x1a0] sm:$0xff]
    %v92 = vld [vmem:[%s0 + $0x1a8] sm:$0xff]
    %v93 = vld [vmem:[%s0 + $0x1b0] sm:$0xff]
    %v94 = vld [vmem:[%s0 + $0x1b8] sm:$0xff]
    %v95 = vld [vmem:[%s0 + $0x1c0] sm:$0xff]
    %v96 = vld [vmem:[%s0 + $0x1c8] sm:$0xff]
    %v97 = vld [vmem:[%s0 + $0x1d0] sm:$0xff]
    %v98 = vld [vmem:[%s0 + $0x1d8] sm:$0xff]
    %v99 = vld [vmem:[%s0 + $0x1e0] sm:$0xff]
    %v100 = vld [vmem:[%s0 + $0x1e8] sm:$0xff]
    %v101 = vld [vmem:[%s0 + $0x1f0] sm:$0xff]
    %v102 = vld [vmem:[%s0 + $0x1f8] sm:$0xff]
    %v103 = vld [vmem:[%s0 + $0x200] sm:$0xff]
    %v104 = vld [vmem:[%s0 + $0x208] sm:$0xff]
    %v105 = vld [vmem:[%s0 + $0x210] sm:$0xff]
    %v106 = vld [vmem:[%s0 + $0x218] sm:$0xff]
    %v107 = vld [vmem:[%s0 + $0x220] sm:$0xff]
    %v108 = vld [vmem:[%s0 + $0x228] sm:$0xff]
    %v109 = vld [vmem:[%s0 + $0x230] sm:$0xff]
    %v110 = vld [vmem:[%s0 + $0x238] sm:$0xff]
    %v111 = vld [vmem:[%s0 + $0x240] sm:$0xff]
    %v112 = vld [vmem:[%s0 + $0x248] sm:$0xff]
    %v113 = vld [vmem:[%s0 + $0x250] sm:$0xff]
    %v114 = vld [vmem:[%s0 + $0x258] sm:$0xff]
    %v115 = vld [vmem:[%s0 + $0x260] sm:$0xff]
    %v116 = vld [vmem:[%s0 + $0x268] sm:$0xff]
    %v117 = vld [vmem:[%s0 + $0x270] sm:$0xff]
    %v118 = vld [vmem:[%s0 + $0x278] sm:$0xff]
    %v119 = vld [vmem:[%s0 + $0x280] sm:$0xff]
    %v120 = vld [vmem:[%s0 + $0x288] sm:$0xff]
    %v121 = vld [vmem:[%s0 + $0x290] sm:$0xff]
    %v122 = vld [vmem:[%s0 + $0x298] sm:$0xff]
    %v123 = vld [vmem:[%s0 + $0x2a0] sm:$0xff]
    %v124 = vld [vmem:[%s0 + $0x2a8] sm:$0xff]
    %v125 = vld [vmem:[%s0 + $0x2b0] sm:$0xff]
    %v126 = vld [vmem:[%s0 + $0x2b8] sm:$0xff]
    %v127 = vld [vmem:[%s0 + $0x2c0] sm:$0xff]
    %v128 = vld [vmem:[%s0 + $0x2c8] sm:$0xff]
    %v129 = vld [vmem:[%s0 + $0x2d0] sm:$0xff]
    %v130 = vld [vmem:[%s0 + $0x2d8] sm:$0xff]
    %v131 = vld [vmem:[%s0 + $0x2e0] sm:$0xff]
    %v132 = vld [vmem:[%s0 + $0x2e8] sm:$0xff]
    %v133 = vld [vmem:[%s0 + $0x2f0] sm:$0xff]
    %v134 = vld [vmem:[%s0 + $0x2f8] sm:$0xff]
    %v135 = vld [vmem:[%s0 + $0x300] sm:$0xff]
    %v136 = vld [vmem:[%s0 + $0x308] sm:$0xff]
    %v137 = vld [vmem:[%s0 + $0x310] sm:$0xff]
    %v138 = vld [vmem:[%s0 + $0x318] sm:$0xff]
    %v139 = vld [vmem:[%s0 + $0x320] sm:$0xff]
    %v140 = vld [vmem:[%s0 + $0x328] sm:$0xff]
    %v141 = vld [vmem:[%s0 + $0x330] sm:$0xff]
    %v142 = vld [vmem:[%s0 + $0x338] sm:$0xff]
    %v143 = vld [vmem:[%s0 + $0x340] sm:$0xff]
    %v144 = vld [vmem:[%s0 + $0x348] sm:$0xff]
    %v145 = vld [vmem:[%s0 + $0x350] sm:$0xff]
    %v146 = vld [vmem:[%s0 + $0x358] sm:$0xff]
    %v147 = vld [vmem:[%s0 + $0x360] sm:$0xff]
    %v148 = vld [vmem:[%s0 + $0x368] sm:$0xff]
    %v149 = vld [vmem:[%s0 + $0x370] sm:$0xff]
    %v150 = vld [vmem:[%s0 + $0x378] sm:$0xff]
    %v151 = vld [vmem:[%s0 + $0x380] sm:$0xff]
    %v152 = vld [vmem:[%s0 + $0x388] sm:$0xff]
    %v153 = vld [vmem:[%s0 + $0x390] sm:$0xff]
    %v154 = vld [vmem:[%s0 + $0x398] sm:$0xff]
    %v155 = vld [vmem:[%s0 + $0x3a0] sm:$0xff]
    %v156 = vld [vmem:[%s0 + $0x3a8] sm:$0xff]
    %v157 = vld [vmem:[%s0 + $0x3b0] sm:$0xff]
    %v158 = vld [vmem:[%s0 + $0x3b8] sm:$0xff]
    %v159 = vld [vmem:[%s0 + $0x3c0] sm:$0xff]
    %v160 = vld [vmem:[%s0 + $0x3c8] sm:$0xff]
    %v161 = vld [vmem:[%s0 + $0x3d0] sm:$0xff]
    %v162 = vld [vmem:[%s0 + $0x3d8] sm:$0xff]
    %v163 = vld [vmem:[%s0 + $0x3e0] sm:$0xff]
    %v164 = vld [vmem:[%s0 + $0x3e8] sm:$0xff]
    %v165 = vld [vmem:[%s0 + $0x3f0] sm:$0xff]
    %v166 = vld [vmem:[%s0 + $0x3f8] sm:$0xff]
    %v167 = vld [vmem:[%s0 + $0x400] sm:$0xff]
    %v168 = vld [vmem:[%s0 + $0x408] sm:$0xff]
    %v169 = vld [vmem:[%s0 + $0x410] sm:$0xff]
    %v170 = vld [vmem:[%s0 + $0x418] sm:$0xff]
    %v171 = vld [vmem:[%s0 + $0x420] sm:$0xff]
    %v172 = vld [vmem:[%s0 + $0x428] sm:$0xff]
    %v173 = vld [vmem:[%s0 + $0x430] sm:$0xff]
    %v174 = vld [vmem:[%s0 + $0x438] sm:$0xff]
    %v175 = vld [vmem:[%s0 + $0x440] sm:$0xff]
    %v176 = vld [vmem:[%s0 + $0x448] sm:$0xff]
    %v177 = vld [vmem:[%s0 + $0x450] sm:$0xff]
    %v178 = vld [vmem:[%s0 + $0x458] sm:$0xff]
    %v179 = vld [vmem:[%s0 + $0x460] sm:$0xff]
    %v180 = vld [vmem:[%s0 + $0x468] sm:$0xff]
    %v181 = vld [vmem:[%s0 + $0x470] sm:$0xff]
    %v182 = vld [vmem:[%s0 + $0x478] sm:$0xff]
    %v183 = vld [vmem:[%s0 + $0x480] sm:$0xff]
    %v184 = vld [vmem:[%s0 + $0x488] sm:$0xff]
    %v185 = vld [vmem:[%s0 + $0x490] sm:$0xff]
    %v186 = vld [vmem:[%s0 + $0x498] sm:$0xff]
    %v187 = vld [vmem:[%s0 + $0x4a0] sm:$0xff]
    %v188 = vld [vmem:[%s0 + $0x4a8] sm:$0xff]
    %v189 = vld [vmem:[%s0 + $0x4b0] sm:$0xff]
    %v190 = vld [vmem:[%s0 + $0x4b8] sm:$0xff]
    %v191 = vld [vmem:[%s0 + $0x4c0] sm:$0xff]
    %v192 = vld [vmem:[%s0 + $0x4c8] sm:$0xff]
    %v193 = vld [vmem:[%s0 + $0x4d0] sm:$0xff]
    %v194 = vld [vmem:[%s0 + $0x4d8] sm:$0xff]
    %v195 = vld [vmem:[%s0 + $0x4e0] sm:$0xff]
    %v196 = vld [vmem:[%s0 + $0x4e8] sm:$0xff]
    %v197 = vld [vmem:[%s0 + $0x4f0] sm:$0xff]
    %v198 = vld [vmem:[%s0 + $0x4f8] sm:$0xff]
    %v199 = vld [vmem:[%s0 + $0x500] sm:$0xff]
    %v200 = vld [vmem:[%s0 + $0x508] sm:$0xff]
    %v201 = vld [vmem:[%s0 + $0x510] sm:$0xff]
    %v202 = vld [vmem:[%s0 + $0x518] sm:$0xff]
    %v203 = vld [vmem:[%s0 + $0x520] sm:$0xff]
    %v204 = vld [vmem:[%s0 + $0x528] sm:$0xff]
    %v205 = vld [vmem:[%s0 + $0x530] sm:$0xff]
    %v206 = vld [vmem:[%s0 + $0x538] sm:$0xff]
    %v207 = vld [vmem:[%s0 + $0x540] sm:$0xff]
    %v208 = vld [vmem:[%s0 + $0x548] sm:$0xff]
    %v209 = vld [vmem:[%s0 + $0x550] sm:$0xff]
    %v210 = vld [vmem:[%s0 + $0x558] sm:$0xff]
    %v211 = vld [vmem:[%s0 + $0x560] sm:$0xff]
    %v212 = vld [vmem:[%s0 + $0x568] sm:$0xff]
    %v213 = vld [vmem:[%s0 + $0x570] sm:$0xff]
    %v214 = vld [vmem:[%s0 + $0x578] sm:$0xff]
    %v215 = vld [vmem:[%s0 + $0x580] sm:$0xff]
    %v216 = vld [vmem:[%s0 + $0x588] sm:$0xff]
    %v217 = vld [vmem:[%s0 + $0x590] sm:$0xff]
    %v218 = vld [vmem:[%s0 + $0x598] sm:$0xff]
    %v219 = vld [vmem:[%s0 + $0x5a0] sm:$0xff]
    %v220 = vld [vmem:[%s0 + $0x5a8] sm:$0xff]
    %v221 = vld [vmem:[%s0 + $0x5b0] sm:$0xff]
    %v222 = vld [vmem:[%s0 + $0x5b8] sm:$0xff]
    %v223 = vld [vmem:[%s0 + $0x5c0] sm:$0xff]
    %v224 = vld [vmem:[%s0 + $0x5c8] sm:$0xff]
    %v225 = vld [vmem:[%s0 + $0x5d0] sm:$0xff]
    %v226 = vld [vmem:[%s0 + $0x5d8] sm:$0xff]
    %v227 = vld [vmem:[%s0 + $0x5e0] sm:$0xff]
    %v228 = vld [vmem:[%s0 + $0x5e8] sm:$0xff]
    %v229 = vld [vmem:[%s0 + $0x5f0] sm:$0xff]
    %v230 = vld [vmem:[%s0 + $0x5f8] sm:$0xff]
    %v231 = vld [vmem:[%s0 + $0x600] sm:$0xff]
    %v232 = vld [vmem:[%s0 + $0x608] sm:$0xff]
    %v233 = vld [vmem:[%s0 + $0x610] sm:$0xff]
    %v234 = vld [vmem:[%s0 + $0x618] sm:$0xff]
    %v235 = vld [vmem:[%s1] sm:$0xff]
    %v236 = vld [vmem:[%s1 + $0x8] sm:$0xff]
    %v237 = vld [vmem:[%s1 + $0x10] sm:$0xff]
    %v238 = vld [vmem:[%s1 + $0x18] sm:$0xff]
    %v239 = vld [vmem:[%s1 + $0x20] sm:$0xff]
    %v240 = vld [vmem:[%s1 + $0x28] sm:$0xff]
    %v241 = vld [vmem:[%s1 + $0x30] sm:$0xff]
    %v242 = vld [vmem:[%s1 + $0x38] sm:$0xff]
    %v243 = vld [vmem:[%s1 + $0x40] sm:$0xff]
    %v244 = vld [vmem:[%s1 + $0x48] sm:$0x7]
    %v245 = vld [vmem:[%s2] sm:$0x1]
    %v247 = vperm.slane %v245, 0
    %vm249 = vcmask 613376
    %v251 = vsel %vm249, %v39, 0
    %v254 = vsel %vm249, %v40, 0
    %v257 = vsel %vm249, %v41, 0
    %v260 = vsel %vm249, %v42, 0
    %v263 = vsel %vm249, %v43, 0
    %v266 = vsel %vm249, %v44, 0
    %v269 = vsel %vm249, %v45, 0
    %v272 = vsel %vm249, %v46, 0
    %v275 = vsel %vm249, %v47, 0
    %v278 = vsel %vm249, %v48, 0
    %v281 = vsel %vm249, %v49, 0
    %v284 = vsel %vm249, %v50, 0
    %v287 = vsel %vm249, %v51, 0
    %v290 = vsel %vm249, %v52, 0
    %v293 = vsel %vm249, %v53, 0
    %v296 = vsel %vm249, %v54, 0
    %v299 = vsel %vm249, %v55, 0
    %v302 = vsel %vm249, %v56, 0
    %v305 = vsel %vm249, %v57, 0
    %v308 = vsel %vm249, %v58, 0
    %v311 = vsel %vm249, %v59, 0
    %v314 = vsel %vm249, %v60, 0
    %v317 = vsel %vm249, %v61, 0
    %v320 = vsel %vm249, %v62, 0
    %v323 = vsel %vm249, %v63, 0
    %v326 = vsel %vm249, %v64, 0
    %v329 = vsel %vm249, %v65, 0
    %v332 = vsel %vm249, %v66, 0
    %v335 = vsel %vm249, %v67, 0
    %v338 = vsel %vm249, %v68, 0
    %v341 = vsel %vm249, %v69, 0
    %v344 = vsel %vm249, %v70, 0
    %v347 = vsel %vm249, %v71, 0
    %v350 = vsel %vm249, %v72, 0
    %v353 = vsel %vm249, %v73, 0
    %v356 = vsel %vm249, %v74, 0
    %v359 = vsel %vm249, %v75, 0
    %v362 = vsel %vm249, %v76, 0
    %v365 = vsel %vm249, %v77, 0
    %v368 = vsel %vm249, %v78, 0
    %v371 = vsel %vm249, %v79, 0
    %v374 = vsel %vm249, %v80, 0
    %v377 = vsel %vm249, %v81, 0
    %v380 = vsel %vm249, %v82, 0
    %v383 = vsel %vm249, %v83, 0
    %v386 = vsel %vm249, %v84, 0
    %v389 = vsel %vm249, %v85, 0
    %v392 = vsel %vm249, %v86, 0
    %v395 = vsel %vm249, %v87, 0
    %v398 = vsel %vm249, %v88, 0
    %v401 = vsel %vm249, %v89, 0
    %v404 = vsel %vm249, %v90, 0
    %v407 = vsel %vm249, %v91, 0
    %v410 = vsel %vm249, %v92, 0
    %v413 = vsel %vm249, %v93, 0
    %v416 = vsel %vm249, %v94, 0
    %v419 = vsel %vm249, %v95, 0
    %v422 = vsel %vm249, %v96, 0
    %v425 = vsel %vm249, %v97, 0
    %v428 = vsel %vm249, %v98, 0
    %v431 = vsel %vm249, %v99, 0
    %v434 = vsel %vm249, %v100, 0
    %v437 = vsel %vm249, %v101, 0
    %v440 = vsel %vm249, %v102, 0
    %v443 = vsel %vm249, %v103, 0
    %v446 = vsel %vm249, %v104, 0
    %v449 = vsel %vm249, %v105, 0
    %v452 = vsel %vm249, %v106, 0
    %v455 = vsel %vm249, %v107, 0
    %v458 = vsel %vm249, %v108, 0
    %v461 = vsel %vm249, %v109, 0
    %v464 = vsel %vm249, %v110, 0
    %v467 = vsel %vm249, %v111, 0
    %v470 = vsel %vm249, %v112, 0
    %v473 = vsel %vm249, %v113, 0
    %v476 = vsel %vm249, %v114, 0
    %v479 = vsel %vm249, %v115, 0
    %v482 = vsel %vm249, %v116, 0
    %v485 = vsel %vm249, %v117, 0
    %v488 = vsel %vm249, %v118, 0
    %v491 = vsel %vm249, %v119, 0
    %v494 = vsel %vm249, %v120, 0
    %v497 = vsel %vm249, %v121, 0
    %v500 = vsel %vm249, %v122, 0
    %v503 = vsel %vm249, %v123, 0
    %v506 = vsel %vm249, %v124, 0
    %v509 = vsel %vm249, %v125, 0
    %v512 = vsel %vm249, %v126, 0
    %v515 = vsel %vm249, %v127, 0
    %v518 = vsel %vm249, %v128, 0
    %v521 = vsel %vm249, %v129, 0
    %v524 = vsel %vm249, %v130, 0
    %v527 = vsel %vm249, %v131, 0
    %v530 = vsel %vm249, %v132, 0
    %v533 = vsel %vm249, %v133, 0
    %v536 = vsel %vm249, %v134, 0
    %v539 = vsel %vm249, %v135, 0
    %v542 = vsel %vm249, %v136, 0
    %v545 = vsel %vm249, %v137, 0
    %v548 = vsel %vm249, %v138, 0
    %v551 = vsel %vm249, %v139, 0
    %v554 = vsel %vm249, %v140, 0
    %v557 = vsel %vm249, %v141, 0
    %v560 = vsel %vm249, %v142, 0
    %v563 = vsel %vm249, %v143, 0
    %v566 = vsel %vm249, %v144, 0
    %v569 = vsel %vm249, %v145, 0
    %v572 = vsel %vm249, %v146, 0
    %v575 = vsel %vm249, %v147, 0
    %v578 = vsel %vm249, %v148, 0
    %v581 = vsel %vm249, %v149, 0
    %v584 = vsel %vm249, %v150, 0
    %v587 = vsel %vm249, %v151, 0
    %v590 = vsel %vm249, %v152, 0
    %v593 = vsel %vm249, %v153, 0
    %v596 = vsel %vm249, %v154, 0
    %v599 = vsel %vm249, %v155, 0
    %v602 = vsel %vm249, %v156, 0
    %v605 = vsel %vm249, %v157, 0
    %v608 = vsel %vm249, %v158, 0
    %v611 = vsel %vm249, %v159, 0
    %v614 = vsel %vm249, %v160, 0
    %v617 = vsel %vm249, %v161, 0
    %v620 = vsel %vm249, %v162, 0
    %v623 = vsel %vm249, %v163, 0
    %v626 = vsel %vm249, %v164, 0
    %v629 = vsel %vm249, %v165, 0
    %v632 = vsel %vm249, %v166, 0
    %v635 = vsel %vm249, %v167, 0
    %v638 = vsel %vm249, %v168, 0
    %v641 = vsel %vm249, %v169, 0
    %v644 = vsel %vm249, %v170, 0
    %v647 = vsel %vm249, %v171, 0
    %v650 = vsel %vm249, %v172, 0
    %v653 = vsel %vm249, %v173, 0
    %v656 = vsel %vm249, %v174, 0
    %v659 = vsel %vm249, %v175, 0
    %v662 = vsel %vm249, %v176, 0
    %v665 = vsel %vm249, %v177, 0
    %v668 = vsel %vm249, %v178, 0
    %v671 = vsel %vm249, %v179, 0
    %v674 = vsel %vm249, %v180, 0
    %v677 = vsel %vm249, %v181, 0
    %v680 = vsel %vm249, %v182, 0
    %v683 = vsel %vm249, %v183, 0
    %v686 = vsel %vm249, %v184, 0
    %v689 = vsel %vm249, %v185, 0
    %v692 = vsel %vm249, %v186, 0
    %v695 = vsel %vm249, %v187, 0
    %v698 = vsel %vm249, %v188, 0
    %v701 = vsel %vm249, %v189, 0
    %v704 = vsel %vm249, %v190, 0
    %v707 = vsel %vm249, %v191, 0
    %v710 = vsel %vm249, %v192, 0
    %v713 = vsel %vm249, %v193, 0
    %v716 = vsel %vm249, %v194, 0
    %v719 = vsel %vm249, %v195, 0
    %v722 = vsel %vm249, %v196, 0
    %v725 = vsel %vm249, %v197, 0
    %v728 = vsel %vm249, %v198, 0
    %v731 = vsel %vm249, %v199, 0
    %v734 = vsel %vm249, %v200, 0
    %v737 = vsel %vm249, %v201, 0
    %v740 = vsel %vm249, %v202, 0
    %v743 = vsel %vm249, %v203, 0
    %v746 = vsel %vm249, %v204, 0
    %v749 = vsel %vm249, %v205, 0
    %v752 = vsel %vm249, %v206, 0
    %v755 = vsel %vm249, %v207, 0
    %v758 = vsel %vm249, %v208, 0
    %v761 = vsel %vm249, %v209, 0
    %v764 = vsel %vm249, %v210, 0
    %v767 = vsel %vm249, %v211, 0
    %v770 = vsel %vm249, %v212, 0
    %v773 = vsel %vm249, %v213, 0
    %v776 = vsel %vm249, %v214, 0
    %v779 = vsel %vm249, %v215, 0
    %v782 = vsel %vm249, %v216, 0
    %v785 = vsel %vm249, %v217, 0
    %v788 = vsel %vm249, %v218, 0
    %v791 = vsel %vm249, %v219, 0
    %v794 = vsel %vm249, %v220, 0
    %v797 = vsel %vm249, %v221, 0
    %v800 = vsel %vm249, %v222, 0
    %v803 = vsel %vm249, %v223, 0
    %v806 = vsel %vm249, %v224, 0
    %v809 = vsel %vm249, %v225, 0
    %v812 = vsel %vm249, %v226, 0
    %v815 = vsel %vm249, %v227, 0
    %v818 = vsel %vm249, %v228, 0
    %v821 = vsel %vm249, %v229, 0
    %v824 = vsel %vm249, %v230, 0
    %v827 = vsel %vm249, %v231, 0
    %v830 = vsel %vm249, %v232, 0
    %v833 = vsel %vm249, %v233, 0
    %v836 = vsel %vm249, %v234, 0
    %vm838 = vcmask 1042432
    %v840 = vsel %vm838, %v244, 0
    %842 = vmatpush.msra.mxu0 0.0
    %843 = vmatpush.msra.mxu0 0.0
    %844 = vmatpush.msra.mxu0 0.0
    %845 = vmatpush.msra.mxu0 0.0
    %846 = vmatpush.msra.mxu0 0.0
    %847 = vmatpush.msra.mxu0 0.0
    %848 = vmatpush.msra.mxu0 %v840
    %849 = vmatpush.msra.mxu0 %v243
    %850 = vmatpush.msra.mxu0 %v242
    %851 = vmatpush.msra.mxu0 %v241
    %852 = vmatpush.msra.mxu0 %v240
    %853 = vmatpush.msra.mxu0 %v239
    %854 = vmatpush.msra.mxu0 %v238
    %855 = vmatpush.msra.mxu0 %v237
    %856 = vmatpush.msra.mxu0 %v236
    %857 = vmatpush.msra.mxu0 %v235
    %858 = vmatmul.f32.gmra.mxu0 %v251
    %v859 = vpop.f32.mrf.mxu0
    %v860 = vadd.f32 %v247, %v859
    %861 = vmatmul.f32.gmra.mxu0 %v254
    %v862 = vpop.f32.mrf.mxu0
    %v863 = vadd.f32 %v247, %v862
    %864 = vmatmul.f32.gmra.mxu0 %v257
    %v865 = vpop.f32.mrf.mxu0
    %v866 = vadd.f32 %v247, %v865
    %867 = vmatmul.f32.gmra.mxu0 %v260
    %v868 = vpop.f32.mrf.mxu0
    %v869 = vadd.f32 %v247, %v868
    %870 = vmatmul.f32.gmra.mxu0 %v263
    %v871 = vpop.f32.mrf.mxu0
    %v872 = vadd.f32 %v247, %v871
    %873 = vmatmul.f32.gmra.mxu0 %v266
    %v874 = vpop.f32.mrf.mxu0
    %v875 = vadd.f32 %v247, %v874
    %876 = vmatmul.f32.gmra.mxu0 %v269
    %v877 = vpop.f32.mrf.mxu0
    %v878 = vadd.f32 %v247, %v877
    %879 = vmatmul.f32.gmra.mxu0 %v272
    %v880 = vpop.f32.mrf.mxu0
    %v881 = vadd.f32 %v247, %v880
    %882 = vmatmul.f32.gmra.mxu0 %v275
    %v883 = vpop.f32.mrf.mxu0
    %v884 = vadd.f32 %v247, %v883
    %885 = vmatmul.f32.gmra.mxu0 %v278
    %v886 = vpop.f32.mrf.mxu0
    %v887 = vadd.f32 %v247, %v886
    %888 = vmatmul.f32.gmra.mxu0 %v281
    %v889 = vpop.f32.mrf.mxu0
    %v890 = vadd.f32 %v247, %v889
    %891 = vmatmul.f32.gmra.mxu0 %v284
    %v892 = vpop.f32.mrf.mxu0
    %v893 = vadd.f32 %v247, %v892
    %894 = vmatmul.f32.gmra.mxu0 %v287
    %v895 = vpop.f32.mrf.mxu0
    %v896 = vadd.f32 %v247, %v895
    %897 = vmatmul.f32.gmra.mxu0 %v290
    %v898 = vpop.f32.mrf.mxu0
    %v899 = vadd.f32 %v247, %v898
    %900 = vmatmul.f32.gmra.mxu0 %v293
    %v901 = vpop.f32.mrf.mxu0
    %v902 = vadd.f32 %v247, %v901
    %903 = vmatmul.f32.gmra.mxu0 %v296
    %v904 = vpop.f32.mrf.mxu0
    %v905 = vadd.f32 %v247, %v904
    %906 = vmatmul.f32.gmra.mxu0 %v299
    %v907 = vpop.f32.mrf.mxu0
    %v908 = vadd.f32 %v247, %v907
    %909 = vmatmul.f32.gmra.mxu0 %v302
    %v910 = vpop.f32.mrf.mxu0
    %v911 = vadd.f32 %v247, %v910
    %912 = vmatmul.f32.gmra.mxu0 %v305
    %v913 = vpop.f32.mrf.mxu0
    %v914 = vadd.f32 %v247, %v913
    %915 = vmatmul.f32.gmra.mxu0 %v308
    %v916 = vpop.f32.mrf.mxu0
    %v917 = vadd.f32 %v247, %v916
    %918 = vmatmul.f32.gmra.mxu0 %v311
    %v919 = vpop.f32.mrf.mxu0
    %v920 = vadd.f32 %v247, %v919
    %921 = vmatmul.f32.gmra.mxu0 %v314
    %v922 = vpop.f32.mrf.mxu0
    %v923 = vadd.f32 %v247, %v922
    %924 = vmatmul.f32.gmra.mxu0 %v317
    %v925 = vpop.f32.mrf.mxu0
    %v926 = vadd.f32 %v247, %v925
    %927 = vmatmul.f32.gmra.mxu0 %v320
    %v928 = vpop.f32.mrf.mxu0
    %v929 = vadd.f32 %v247, %v928
    %930 = vmatmul.f32.gmra.mxu0 %v323
    %v931 = vpop.f32.mrf.mxu0
    %v932 = vadd.f32 %v247, %v931
    %933 = vmatmul.f32.gmra.mxu0 %v326
    %v934 = vpop.f32.mrf.mxu0
    %v935 = vadd.f32 %v247, %v934
    %936 = vmatmul.f32.gmra.mxu0 %v329
    %v937 = vpop.f32.mrf.mxu0
    %v938 = vadd.f32 %v247, %v937
    %939 = vmatmul.f32.gmra.mxu0 %v332
    %v940 = vpop.f32.mrf.mxu0
    %v941 = vadd.f32 %v247, %v940
    %942 = vmatmul.f32.gmra.mxu0 %v335
    %v943 = vpop.f32.mrf.mxu0
    %v944 = vadd.f32 %v247, %v943
    %945 = vmatmul.f32.gmra.mxu0 %v338
    %v946 = vpop.f32.mrf.mxu0
    %v947 = vadd.f32 %v247, %v946
    %948 = vmatmul.f32.gmra.mxu0 %v341
    %v949 = vpop.f32.mrf.mxu0
    %v950 = vadd.f32 %v247, %v949
    %951 = vmatmul.f32.gmra.mxu0 %v344
    %v952 = vpop.f32.mrf.mxu0
    %v953 = vadd.f32 %v247, %v952
    %954 = vmatmul.f32.gmra.mxu0 %v347
    %v955 = vpop.f32.mrf.mxu0
    %v956 = vadd.f32 %v247, %v955
    %957 = vmatmul.f32.gmra.mxu0 %v350
    %v958 = vpop.f32.mrf.mxu0
    %v959 = vadd.f32 %v247, %v958
    %960 = vmatmul.f32.gmra.mxu0 %v353
    %v961 = vpop.f32.mrf.mxu0
    %v962 = vadd.f32 %v247, %v961
    %963 = vmatmul.f32.gmra.mxu0 %v356
    %v964 = vpop.f32.mrf.mxu0
    %v965 = vadd.f32 %v247, %v964
    %966 = vmatmul.f32.gmra.mxu0 %v359
    %v967 = vpop.f32.mrf.mxu0
    %v968 = vadd.f32 %v247, %v967
    %969 = vmatmul.f32.gmra.mxu0 %v362
    %v970 = vpop.f32.mrf.mxu0
    %v971 = vadd.f32 %v247, %v970
    %972 = vmatmul.f32.gmra.mxu0 %v365
    %v973 = vpop.f32.mrf.mxu0
    %v974 = vadd.f32 %v247, %v973
    %975 = vmatmul.f32.gmra.mxu0 %v368
    %v976 = vpop.f32.mrf.mxu0
    %v977 = vadd.f32 %v247, %v976
    %978 = vmatmul.f32.gmra.mxu0 %v371
    %v979 = vpop.f32.mrf.mxu0
    %v980 = vadd.f32 %v247, %v979
    %981 = vmatmul.f32.gmra.mxu0 %v374
    %v982 = vpop.f32.mrf.mxu0
    %v983 = vadd.f32 %v247, %v982
    %984 = vmatmul.f32.gmra.mxu0 %v377
    %v985 = vpop.f32.mrf.mxu0
    %v986 = vadd.f32 %v247, %v985
    %987 = vmatmul.f32.gmra.mxu0 %v380
    %v988 = vpop.f32.mrf.mxu0
    %v989 = vadd.f32 %v247, %v988
    %990 = vmatmul.f32.gmra.mxu0 %v383
    %v991 = vpop.f32.mrf.mxu0
    %v992 = vadd.f32 %v247, %v991
    %993 = vmatmul.f32.gmra.mxu0 %v386
    %v994 = vpop.f32.mrf.mxu0
    %v995 = vadd.f32 %v247, %v994
    %996 = vmatmul.f32.gmra.mxu0 %v389
    %v997 = vpop.f32.mrf.mxu0
    %v998 = vadd.f32 %v247, %v997
    %999 = vmatmul.f32.gmra.mxu0 %v392
    %v1000 = vpop.f32.mrf.mxu0
    %v1001 = vadd.f32 %v247, %v1000
    %1002 = vmatmul.f32.gmra.mxu0 %v395
    %v1003 = vpop.f32.mrf.mxu0
    %v1004 = vadd.f32 %v247, %v1003
    %1005 = vmatmul.f32.gmra.mxu0 %v398
    %v1006 = vpop.f32.mrf.mxu0
    %v1007 = vadd.f32 %v247, %v1006
    %1008 = vmatmul.f32.gmra.mxu0 %v401
    %v1009 = vpop.f32.mrf.mxu0
    %v1010 = vadd.f32 %v247, %v1009
    %1011 = vmatmul.f32.gmra.mxu0 %v404
    %v1012 = vpop.f32.mrf.mxu0
    %v1013 = vadd.f32 %v247, %v1012
    %1014 = vmatmul.f32.gmra.mxu0 %v407
    %v1015 = vpop.f32.mrf.mxu0
    %v1016 = vadd.f32 %v247, %v1015
    %1017 = vmatmul.f32.gmra.mxu0 %v410
    %v1018 = vpop.f32.mrf.mxu0
    %v1019 = vadd.f32 %v247, %v1018
    %1020 = vmatmul.f32.gmra.mxu0 %v413
    %v1021 = vpop.f32.mrf.mxu0
    %v1022 = vadd.f32 %v247, %v1021
    %1023 = vmatmul.f32.gmra.mxu0 %v416
    %v1024 = vpop.f32.mrf.mxu0
    %v1025 = vadd.f32 %v247, %v1024
    %1026 = vmatmul.f32.gmra.mxu0 %v419
    %v1027 = vpop.f32.mrf.mxu0
    %v1028 = vadd.f32 %v247, %v1027
    %1029 = vmatmul.f32.gmra.mxu0 %v422
    %v1030 = vpop.f32.mrf.mxu0
    %v1031 = vadd.f32 %v247, %v1030
    %1032 = vmatmul.f32.gmra.mxu0 %v425
    %v1033 = vpop.f32.mrf.mxu0
    %v1034 = vadd.f32 %v247, %v1033
    %1035 = vmatmul.f32.gmra.mxu0 %v428
    %v1036 = vpop.f32.mrf.mxu0
    %v1037 = vadd.f32 %v247, %v1036
    %1038 = vmatmul.f32.gmra.mxu0 %v431
    %v1039 = vpop.f32.mrf.mxu0
    %v1040 = vadd.f32 %v247, %v1039
    %1041 = vmatmul.f32.gmra.mxu0 %v434
    %v1042 = vpop.f32.mrf.mxu0
    %v1043 = vadd.f32 %v247, %v1042
    %1044 = vmatmul.f32.gmra.mxu0 %v437
    %v1045 = vpop.f32.mrf.mxu0
    %v1046 = vadd.f32 %v247, %v1045
    %1047 = vmatmul.f32.gmra.mxu0 %v440
    %v1048 = vpop.f32.mrf.mxu0
    %v1049 = vadd.f32 %v247, %v1048
    %1050 = vmatmul.f32.gmra.mxu0 %v443
    %v1051 = vpop.f32.mrf.mxu0
    %v1052 = vadd.f32 %v247, %v1051
    %1053 = vmatmul.f32.gmra.mxu0 %v446
    %v1054 = vpop.f32.mrf.mxu0
    %v1055 = vadd.f32 %v247, %v1054
    %1056 = vmatmul.f32.gmra.mxu0 %v449
    %v1057 = vpop.f32.mrf.mxu0
    %v1058 = vadd.f32 %v247, %v1057
    %1059 = vmatmul.f32.gmra.mxu0 %v452
    %v1060 = vpop.f32.mrf.mxu0
    %v1061 = vadd.f32 %v247, %v1060
    %1062 = vmatmul.f32.gmra.mxu0 %v455
    %v1063 = vpop.f32.mrf.mxu0
    %v1064 = vadd.f32 %v247, %v1063
    %1065 = vmatmul.f32.gmra.mxu0 %v458
    %v1066 = vpop.f32.mrf.mxu0
    %v1067 = vadd.f32 %v247, %v1066
    %1068 = vmatmul.f32.gmra.mxu0 %v461
    %v1069 = vpop.f32.mrf.mxu0
    %v1070 = vadd.f32 %v247, %v1069
    %1071 = vmatmul.f32.gmra.mxu0 %v464
    %v1072 = vpop.f32.mrf.mxu0
    %v1073 = vadd.f32 %v247, %v1072
    %1074 = vmatmul.f32.gmra.mxu0 %v467
    %v1075 = vpop.f32.mrf.mxu0
    %v1076 = vadd.f32 %v247, %v1075
    %1077 = vmatmul.f32.gmra.mxu0 %v470
    %v1078 = vpop.f32.mrf.mxu0
    %v1079 = vadd.f32 %v247, %v1078
    %1080 = vmatmul.f32.gmra.mxu0 %v473
    %v1081 = vpop.f32.mrf.mxu0
    %v1082 = vadd.f32 %v247, %v1081
    %1083 = vmatmul.f32.gmra.mxu0 %v476
    %v1084 = vpop.f32.mrf.mxu0
    %v1085 = vadd.f32 %v247, %v1084
    %1086 = vmatmul.f32.gmra.mxu0 %v479
    %v1087 = vpop.f32.mrf.mxu0
    %v1088 = vadd.f32 %v247, %v1087
    %1089 = vmatmul.f32.gmra.mxu0 %v482
    %v1090 = vpop.f32.mrf.mxu0
    %v1091 = vadd.f32 %v247, %v1090
    %1092 = vmatmul.f32.gmra.mxu0 %v485
    %v1093 = vpop.f32.mrf.mxu0
    %v1094 = vadd.f32 %v247, %v1093
    %1095 = vmatmul.f32.gmra.mxu0 %v488
    %v1096 = vpop.f32.mrf.mxu0
    %v1097 = vadd.f32 %v247, %v1096
    %1098 = vmatmul.f32.gmra.mxu0 %v491
    %v1099 = vpop.f32.mrf.mxu0
    %v1100 = vadd.f32 %v247, %v1099
    %1101 = vmatmul.f32.gmra.mxu0 %v494
    %v1102 = vpop.f32.mrf.mxu0
    %v1103 = vadd.f32 %v247, %v1102
    %1104 = vmatmul.f32.gmra.mxu0 %v497
    %v1105 = vpop.f32.mrf.mxu0
    %v1106 = vadd.f32 %v247, %v1105
    %1107 = vmatmul.f32.gmra.mxu0 %v500
    %v1108 = vpop.f32.mrf.mxu0
    %v1109 = vadd.f32 %v247, %v1108
    %1110 = vmatmul.f32.gmra.mxu0 %v503
    %v1111 = vpop.f32.mrf.mxu0
    %v1112 = vadd.f32 %v247, %v1111
    %1113 = vmatmul.f32.gmra.mxu0 %v506
    %v1114 = vpop.f32.mrf.mxu0
    %v1115 = vadd.f32 %v247, %v1114
    %1116 = vmatmul.f32.gmra.mxu0 %v509
    %v1117 = vpop.f32.mrf.mxu0
    %v1118 = vadd.f32 %v247, %v1117
    %1119 = vmatmul.f32.gmra.mxu0 %v512
    %v1120 = vpop.f32.mrf.mxu0
    %v1121 = vadd.f32 %v247, %v1120
    %1122 = vmatmul.f32.gmra.mxu0 %v515
    %v1123 = vpop.f32.mrf.mxu0
    %v1124 = vadd.f32 %v247, %v1123
    %1125 = vmatmul.f32.gmra.mxu0 %v518
    %v1126 = vpop.f32.mrf.mxu0
    %v1127 = vadd.f32 %v247, %v1126
    %1128 = vmatmul.f32.gmra.mxu0 %v521
    %v1129 = vpop.f32.mrf.mxu0
    %v1130 = vadd.f32 %v247, %v1129
    %1131 = vmatmul.f32.gmra.mxu0 %v524
    %v1132 = vpop.f32.mrf.mxu0
    %v1133 = vadd.f32 %v247, %v1132
    %1134 = vmatmul.f32.gmra.mxu0 %v527
    %v1135 = vpop.f32.mrf.mxu0
    %v1136 = vadd.f32 %v247, %v1135
    %1137 = vmatmul.f32.gmra.mxu0 %v530
    %v1138 = vpop.f32.mrf.mxu0
    %v1139 = vadd.f32 %v247, %v1138
    %1140 = vmatmul.f32.gmra.mxu0 %v533
    %v1141 = vpop.f32.mrf.mxu0
    %v1142 = vadd.f32 %v247, %v1141
    %1143 = vmatmul.f32.gmra.mxu0 %v536
    %v1144 = vpop.f32.mrf.mxu0
    %v1145 = vadd.f32 %v247, %v1144
    %1146 = vmatmul.f32.gmra.mxu0 %v539
    %v1147 = vpop.f32.mrf.mxu0
    %v1148 = vadd.f32 %v247, %v1147
    %1149 = vmatmul.f32.gmra.mxu0 %v542
    %v1150 = vpop.f32.mrf.mxu0
    %v1151 = vadd.f32 %v247, %v1150
    %1152 = vmatmul.f32.gmra.mxu0 %v545
    %v1153 = vpop.f32.mrf.mxu0
    %v1154 = vadd.f32 %v247, %v1153
    %1155 = vmatmul.f32.gmra.mxu0 %v548
    %v1156 = vpop.f32.mrf.mxu0
    %v1157 = vadd.f32 %v247, %v1156
    %1158 = vmatmul.f32.gmra.mxu0 %v551
    %v1159 = vpop.f32.mrf.mxu0
    %v1160 = vadd.f32 %v247, %v1159
    %1161 = vmatmul.f32.gmra.mxu0 %v554
    %v1162 = vpop.f32.mrf.mxu0
    %v1163 = vadd.f32 %v247, %v1162
    %1164 = vmatmul.f32.gmra.mxu0 %v557
    %v1165 = vpop.f32.mrf.mxu0
    %v1166 = vadd.f32 %v247, %v1165
    %1167 = vmatmul.f32.gmra.mxu0 %v560
    %v1168 = vpop.f32.mrf.mxu0
    %v1169 = vadd.f32 %v247, %v1168
    %1170 = vmatmul.f32.gmra.mxu0 %v563
    %v1171 = vpop.f32.mrf.mxu0
    %v1172 = vadd.f32 %v247, %v1171
    %1173 = vmatmul.f32.gmra.mxu0 %v566
    %v1174 = vpop.f32.mrf.mxu0
    %v1175 = vadd.f32 %v247, %v1174
    %1176 = vmatmul.f32.gmra.mxu0 %v569
    %v1177 = vpop.f32.mrf.mxu0
    %v1178 = vadd.f32 %v247, %v1177
    %1179 = vmatmul.f32.gmra.mxu0 %v572
    %v1180 = vpop.f32.mrf.mxu0
    %v1181 = vadd.f32 %v247, %v1180
    %1182 = vmatmul.f32.gmra.mxu0 %v575
    %v1183 = vpop.f32.mrf.mxu0
    %v1184 = vadd.f32 %v247, %v1183
    %1185 = vmatmul.f32.gmra.mxu0 %v578
    %v1186 = vpop.f32.mrf.mxu0
    %v1187 = vadd.f32 %v247, %v1186
    %1188 = vmatmul.f32.gmra.mxu0 %v581
    %v1189 = vpop.f32.mrf.mxu0
    %v1190 = vadd.f32 %v247, %v1189
    %1191 = vmatmul.f32.gmra.mxu0 %v584
    %v1192 = vpop.f32.mrf.mxu0
    %v1193 = vadd.f32 %v247, %v1192
    %1194 = vmatmul.f32.gmra.mxu0 %v587
    %v1195 = vpop.f32.mrf.mxu0
    %v1196 = vadd.f32 %v247, %v1195
    %1197 = vmatmul.f32.gmra.mxu0 %v590
    %v1198 = vpop.f32.mrf.mxu0
    %v1199 = vadd.f32 %v247, %v1198
    %1200 = vmatmul.f32.gmra.mxu0 %v593
    %v1201 = vpop.f32.mrf.mxu0
    %v1202 = vadd.f32 %v247, %v1201
    %1203 = vmatmul.f32.gmra.mxu0 %v596
    %v1204 = vpop.f32.mrf.mxu0
    %v1205 = vadd.f32 %v247, %v1204
    %1206 = vmatmul.f32.gmra.mxu0 %v599
    %v1207 = vpop.f32.mrf.mxu0
    %v1208 = vadd.f32 %v247, %v1207
    %1209 = vmatmul.f32.gmra.mxu0 %v602
    %v1210 = vpop.f32.mrf.mxu0
    %v1211 = vadd.f32 %v247, %v1210
    %1212 = vmatmul.f32.gmra.mxu0 %v605
    %v1213 = vpop.f32.mrf.mxu0
    %v1214 = vadd.f32 %v247, %v1213
    %1215 = vmatmul.f32.gmra.mxu0 %v608
    %v1216 = vpop.f32.mrf.mxu0
    %v1217 = vadd.f32 %v247, %v1216
    %1218 = vmatmul.f32.gmra.mxu0 %v611
    %v1219 = vpop.f32.mrf.mxu0
    %v1220 = vadd.f32 %v247, %v1219
    %1221 = vmatmul.f32.gmra.mxu0 %v614
    %v1222 = vpop.f32.mrf.mxu0
    %v1223 = vadd.f32 %v247, %v1222
    %1224 = vmatmul.f32.gmra.mxu0 %v617
    %v1225 = vpop.f32.mrf.mxu0
    %v1226 = vadd.f32 %v247, %v1225
    %1227 = vmatmul.f32.gmra.mxu0 %v620
    %v1228 = vpop.f32.mrf.mxu0
    %v1229 = vadd.f32 %v247, %v1228
    %1230 = vmatmul.f32.gmra.mxu0 %v623
    %v1231 = vpop.f32.mrf.mxu0
    %v1232 = vadd.f32 %v247, %v1231
    %1233 = vmatmul.f32.gmra.mxu0 %v626
    %v1234 = vpop.f32.mrf.mxu0
    %v1235 = vadd.f32 %v247, %v1234
    %1236 = vmatmul.f32.gmra.mxu0 %v629
    %v1237 = vpop.f32.mrf.mxu0
    %v1238 = vadd.f32 %v247, %v1237
    %1239 = vmatmul.f32.gmra.mxu0 %v632
    %v1240 = vpop.f32.mrf.mxu0
    %v1241 = vadd.f32 %v247, %v1240
    %1242 = vmatmul.f32.gmra.mxu0 %v635
    %v1243 = vpop.f32.mrf.mxu0
    %v1244 = vadd.f32 %v247, %v1243
    %1245 = vmatmul.f32.gmra.mxu0 %v638
    %v1246 = vpop.f32.mrf.mxu0
    %v1247 = vadd.f32 %v247, %v1246
    %1248 = vmatmul.f32.gmra.mxu0 %v641
    %v1249 = vpop.f32.mrf.mxu0
    %v1250 = vadd.f32 %v247, %v1249
    %1251 = vmatmul.f32.gmra.mxu0 %v644
    %v1252 = vpop.f32.mrf.mxu0
    %v1253 = vadd.f32 %v247, %v1252
    %1254 = vmatmul.f32.gmra.mxu0 %v647
    %v1255 = vpop.f32.mrf.mxu0
    %v1256 = vadd.f32 %v247, %v1255
    %1257 = vmatmul.f32.gmra.mxu0 %v650
    %v1258 = vpop.f32.mrf.mxu0
    %v1259 = vadd.f32 %v247, %v1258
    %1260 = vmatmul.f32.gmra.mxu0 %v653
    %v1261 = vpop.f32.mrf.mxu0
    %v1262 = vadd.f32 %v247, %v1261
    %1263 = vmatmul.f32.gmra.mxu0 %v656
    %v1264 = vpop.f32.mrf.mxu0
    %v1265 = vadd.f32 %v247, %v1264
    %1266 = vmatmul.f32.gmra.mxu0 %v659
    %v1267 = vpop.f32.mrf.mxu0
    %v1268 = vadd.f32 %v247, %v1267
    %1269 = vmatmul.f32.gmra.mxu0 %v662
    %v1270 = vpop.f32.mrf.mxu0
    %v1271 = vadd.f32 %v247, %v1270
    %1272 = vmatmul.f32.gmra.mxu0 %v665
    %v1273 = vpop.f32.mrf.mxu0
    %v1274 = vadd.f32 %v247, %v1273
    %1275 = vmatmul.f32.gmra.mxu0 %v668
    %v1276 = vpop.f32.mrf.mxu0
    %v1277 = vadd.f32 %v247, %v1276
    %1278 = vmatmul.f32.gmra.mxu0 %v671
    %v1279 = vpop.f32.mrf.mxu0
    %v1280 = vadd.f32 %v247, %v1279
    %1281 = vmatmul.f32.gmra.mxu0 %v674
    %v1282 = vpop.f32.mrf.mxu0
    %v1283 = vadd.f32 %v247, %v1282
    %1284 = vmatmul.f32.gmra.mxu0 %v677
    %v1285 = vpop.f32.mrf.mxu0
    %v1286 = vadd.f32 %v247, %v1285
    %1287 = vmatmul.f32.gmra.mxu0 %v680
    %v1288 = vpop.f32.mrf.mxu0
    %v1289 = vadd.f32 %v247, %v1288
    %1290 = vmatmul.f32.gmra.mxu0 %v683
    %v1291 = vpop.f32.mrf.mxu0
    %v1292 = vadd.f32 %v247, %v1291
    %1293 = vmatmul.f32.gmra.mxu0 %v686
    %v1294 = vpop.f32.mrf.mxu0
    %v1295 = vadd.f32 %v247, %v1294
    %1296 = vmatmul.f32.gmra.mxu0 %v689
    %v1297 = vpop.f32.mrf.mxu0
    %v1298 = vadd.f32 %v247, %v1297
    %1299 = vmatmul.f32.gmra.mxu0 %v692
    %v1300 = vpop.f32.mrf.mxu0
    %v1301 = vadd.f32 %v247, %v1300
    %1302 = vmatmul.f32.gmra.mxu0 %v695
    %v1303 = vpop.f32.mrf.mxu0
    %v1304 = vadd.f32 %v247, %v1303
    %1305 = vmatmul.f32.gmra.mxu0 %v698
    %v1306 = vpop.f32.mrf.mxu0
    %v1307 = vadd.f32 %v247, %v1306
    %1308 = vmatmul.f32.gmra.mxu0 %v701
    %v1309 = vpop.f32.mrf.mxu0
    %v1310 = vadd.f32 %v247, %v1309
    %1311 = vmatmul.f32.gmra.mxu0 %v704
    %v1312 = vpop.f32.mrf.mxu0
    %v1313 = vadd.f32 %v247, %v1312
    %1314 = vmatmul.f32.gmra.mxu0 %v707
    %v1315 = vpop.f32.mrf.mxu0
    %v1316 = vadd.f32 %v247, %v1315
    %1317 = vmatmul.f32.gmra.mxu0 %v710
    %v1318 = vpop.f32.mrf.mxu0
    %v1319 = vadd.f32 %v247, %v1318
    %1320 = vmatmul.f32.gmra.mxu0 %v713
    %v1321 = vpop.f32.mrf.mxu0
    %v1322 = vadd.f32 %v247, %v1321
    %1323 = vmatmul.f32.gmra.mxu0 %v716
    %v1324 = vpop.f32.mrf.mxu0
    %v1325 = vadd.f32 %v247, %v1324
    %1326 = vmatmul.f32.gmra.mxu0 %v719
    %v1327 = vpop.f32.mrf.mxu0
    %v1328 = vadd.f32 %v247, %v1327
    %1329 = vmatmul.f32.gmra.mxu0 %v722
    %v1330 = vpop.f32.mrf.mxu0
    %v1331 = vadd.f32 %v247, %v1330
    %1332 = vmatmul.f32.gmra.mxu0 %v725
    %v1333 = vpop.f32.mrf.mxu0
    %v1334 = vadd.f32 %v247, %v1333
    %1335 = vmatmul.f32.gmra.mxu0 %v728
    %v1336 = vpop.f32.mrf.mxu0
    %v1337 = vadd.f32 %v247, %v1336
    %1338 = vmatmul.f32.gmra.mxu0 %v731
    %v1339 = vpop.f32.mrf.mxu0
    %v1340 = vadd.f32 %v247, %v1339
    %1341 = vmatmul.f32.gmra.mxu0 %v734
    %v1342 = vpop.f32.mrf.mxu0
    %v1343 = vadd.f32 %v247, %v1342
    %1344 = vmatmul.f32.gmra.mxu0 %v737
    %v1345 = vpop.f32.mrf.mxu0
    %v1346 = vadd.f32 %v247, %v1345
    %1347 = vmatmul.f32.gmra.mxu0 %v740
    %v1348 = vpop.f32.mrf.mxu0
    %v1349 = vadd.f32 %v247, %v1348
    %1350 = vmatmul.f32.gmra.mxu0 %v743
    %v1351 = vpop.f32.mrf.mxu0
    %v1352 = vadd.f32 %v247, %v1351
    %1353 = vmatmul.f32.gmra.mxu0 %v746
    %v1354 = vpop.f32.mrf.mxu0
    %v1355 = vadd.f32 %v247, %v1354
    %1356 = vmatmul.f32.gmra.mxu0 %v749
    %v1357 = vpop.f32.mrf.mxu0
    %v1358 = vadd.f32 %v247, %v1357
    %1359 = vmatmul.f32.gmra.mxu0 %v752
    %v1360 = vpop.f32.mrf.mxu0
    %v1361 = vadd.f32 %v247, %v1360
    %1362 = vmatmul.f32.gmra.mxu0 %v755
    %v1363 = vpop.f32.mrf.mxu0
    %v1364 = vadd.f32 %v247, %v1363
    %1365 = vmatmul.f32.gmra.mxu0 %v758
    %v1366 = vpop.f32.mrf.mxu0
    %v1367 = vadd.f32 %v247, %v1366
    %1368 = vmatmul.f32.gmra.mxu0 %v761
    %v1369 = vpop.f32.mrf.mxu0
    %v1370 = vadd.f32 %v247, %v1369
    %1371 = vmatmul.f32.gmra.mxu0 %v764
    %v1372 = vpop.f32.mrf.mxu0
    %v1373 = vadd.f32 %v247, %v1372
    %1374 = vmatmul.f32.gmra.mxu0 %v767
    %v1375 = vpop.f32.mrf.mxu0
    %v1376 = vadd.f32 %v247, %v1375
    %1377 = vmatmul.f32.gmra.mxu0 %v770
    %v1378 = vpop.f32.mrf.mxu0
    %v1379 = vadd.f32 %v247, %v1378
    %1380 = vmatmul.f32.gmra.mxu0 %v773
    %v1381 = vpop.f32.mrf.mxu0
    %v1382 = vadd.f32 %v247, %v1381
    %1383 = vmatmul.f32.gmra.mxu0 %v776
    %v1384 = vpop.f32.mrf.mxu0
    %v1385 = vadd.f32 %v247, %v1384
    %1386 = vmatmul.f32.gmra.mxu0 %v779
    %v1387 = vpop.f32.mrf.mxu0
    %v1388 = vadd.f32 %v247, %v1387
    %1389 = vmatmul.f32.gmra.mxu0 %v782
    %v1390 = vpop.f32.mrf.mxu0
    %v1391 = vadd.f32 %v247, %v1390
    %1392 = vmatmul.f32.gmra.mxu0 %v785
    %v1393 = vpop.f32.mrf.mxu0
    %v1394 = vadd.f32 %v247, %v1393
    %1395 = vmatmul.f32.gmra.mxu0 %v788
    %v1396 = vpop.f32.mrf.mxu0
    %v1397 = vadd.f32 %v247, %v1396
    %1398 = vmatmul.f32.gmra.mxu0 %v791
    %v1399 = vpop.f32.mrf.mxu0
    %v1400 = vadd.f32 %v247, %v1399
    %1401 = vmatmul.f32.gmra.mxu0 %v794
    %v1402 = vpop.f32.mrf.mxu0
    %v1403 = vadd.f32 %v247, %v1402
    %1404 = vmatmul.f32.gmra.mxu0 %v797
    %v1405 = vpop.f32.mrf.mxu0
    %v1406 = vadd.f32 %v247, %v1405
    %1407 = vmatmul.f32.gmra.mxu0 %v800
    %v1408 = vpop.f32.mrf.mxu0
    %v1409 = vadd.f32 %v247, %v1408
    %1410 = vmatmul.f32.gmra.mxu0 %v803
    %v1411 = vpop.f32.mrf.mxu0
    %v1412 = vadd.f32 %v247, %v1411
    %1413 = vmatmul.f32.gmra.mxu0 %v806
    %v1414 = vpop.f32.mrf.mxu0
    %v1415 = vadd.f32 %v247, %v1414
    %1416 = vmatmul.f32.gmra.mxu0 %v809
    %v1417 = vpop.f32.mrf.mxu0
    %v1418 = vadd.f32 %v247, %v1417
    %1419 = vmatmul.f32.gmra.mxu0 %v812
    %v1420 = vpop.f32.mrf.mxu0
    %v1421 = vadd.f32 %v247, %v1420
    %1422 = vmatmul.f32.gmra.mxu0 %v815
    %v1423 = vpop.f32.mrf.mxu0
    %v1424 = vadd.f32 %v247, %v1423
    %1425 = vmatmul.f32.gmra.mxu0 %v818
    %v1426 = vpop.f32.mrf.mxu0
    %v1427 = vadd.f32 %v247, %v1426
    %1428 = vmatmul.f32.gmra.mxu0 %v821
    %v1429 = vpop.f32.mrf.mxu0
    %v1430 = vadd.f32 %v247, %v1429
    %1431 = vmatmul.f32.gmra.mxu0 %v824
    %v1432 = vpop.f32.mrf.mxu0
    %v1433 = vadd.f32 %v247, %v1432
    %1434 = vmatmul.f32.gmra.mxu0 %v827
    %v1435 = vpop.f32.mrf.mxu0
    %v1436 = vadd.f32 %v247, %v1435
    %1437 = vmatmul.f32.gmra.mxu0 %v830
    %v1438 = vpop.f32.mrf.mxu0
    %v1439 = vadd.f32 %v247, %v1438
    %1440 = vmatmul.f32.gmra.mxu0 %v833
    %v1441 = vpop.f32.mrf.mxu0
    %v1442 = vadd.f32 %v247, %v1441
    %1443 = vmatmul.f32.gmra.mxu0 %v836
    %v1444 = vpop.f32.mrf.mxu0
    %v1445 = vadd.f32 %v247, %v1444
    %1446 = vdwg.mxu0
    %v1447 = vmax.f32 %v860, 0.0
    %v1448 = vmax.f32 %v863, 0.0
    %v1449 = vmax.f32 %v866, 0.0
    %v1450 = vmax.f32 %v869, 0.0
    %v1451 = vmax.f32 %v872, 0.0
    %v1452 = vmax.f32 %v875, 0.0
    %v1453 = vmax.f32 %v878, 0.0
    %v1454 = vmax.f32 %v881, 0.0
    %v1455 = vmax.f32 %v884, 0.0
    %v1456 = vmax.f32 %v887, 0.0
    %v1457 = vmax.f32 %v890, 0.0
    %v1458 = vmax.f32 %v893, 0.0
    %v1459 = vmax.f32 %v896, 0.0
    %v1460 = vmax.f32 %v899, 0.0
    %v1461 = vmax.f32 %v902, 0.0
    %v1462 = vmax.f32 %v905, 0.0
    %v1463 = vmax.f32 %v908, 0.0
    %v1464 = vmax.f32 %v911, 0.0
    %v1465 = vmax.f32 %v914, 0.0
    %v1466 = vmax.f32 %v917, 0.0
    %v1467 = vmax.f32 %v920, 0.0
    %v1468 = vmax.f32 %v923, 0.0
    %v1469 = vmax.f32 %v926, 0.0
    %v1470 = vmax.f32 %v929, 0.0
    %v1471 = vmax.f32 %v932, 0.0
    %v1472 = vmax.f32 %v935, 0.0
    %v1473 = vmax.f32 %v938, 0.0
    %v1474 = vmax.f32 %v941, 0.0
    %v1475 = vmax.f32 %v944, 0.0
    %v1476 = vmax.f32 %v947, 0.0
    %v1477 = vmax.f32 %v950, 0.0
    %v1478 = vmax.f32 %v953, 0.0
    %v1479 = vmax.f32 %v956, 0.0
    %v1480 = vmax.f32 %v959, 0.0
    %v1481 = vmax.f32 %v962, 0.0
    %v1482 = vmax.f32 %v965, 0.0
    %v1483 = vmax.f32 %v968, 0.0
    %v1484 = vmax.f32 %v971, 0.0
    %v1485 = vmax.f32 %v974, 0.0
    %v1486 = vmax.f32 %v977, 0.0
    %v1487 = vmax.f32 %v980, 0.0
    %v1488 = vmax.f32 %v983, 0.0
    %v1489 = vmax.f32 %v986, 0.0
    %v1490 = vmax.f32 %v989, 0.0
    %v1491 = vmax.f32 %v992, 0.0
    %v1492 = vmax.f32 %v995, 0.0
    %v1493 = vmax.f32 %v998, 0.0
    %v1494 = vmax.f32 %v1001, 0.0
    %v1495 = vmax.f32 %v1004, 0.0
    %v1496 = vmax.f32 %v1007, 0.0
    %v1497 = vmax.f32 %v1010, 0.0
    %v1498 = vmax.f32 %v1013, 0.0
    %v1499 = vmax.f32 %v1016, 0.0
    %v1500 = vmax.f32 %v1019, 0.0
    %v1501 = vmax.f32 %v1022, 0.0
    %v1502 = vmax.f32 %v1025, 0.0
    %v1503 = vmax.f32 %v1028, 0.0
    %v1504 = vmax.f32 %v1031, 0.0
    %v1505 = vmax.f32 %v1034, 0.0
    %v1506 = vmax.f32 %v1037, 0.0
    %v1507 = vmax.f32 %v1040, 0.0
    %v1508 = vmax.f32 %v1043, 0.0
    %v1509 = vmax.f32 %v1046, 0.0
    %v1510 = vmax.f32 %v1049, 0.0
    %v1511 = vmax.f32 %v1052, 0.0
    %v1512 = vmax.f32 %v1055, 0.0
    %v1513 = vmax.f32 %v1058, 0.0
    %v1514 = vmax.f32 %v1061, 0.0
    %v1515 = vmax.f32 %v1064, 0.0
    %v1516 = vmax.f32 %v1067, 0.0
    %v1517 = vmax.f32 %v1070, 0.0
    %v1518 = vmax.f32 %v1073, 0.0
    %v1519 = vmax.f32 %v1076, 0.0
    %v1520 = vmax.f32 %v1079, 0.0
    %v1521 = vmax.f32 %v1082, 0.0
    %v1522 = vmax.f32 %v1085, 0.0
    %v1523 = vmax.f32 %v1088, 0.0
    %v1524 = vmax.f32 %v1091, 0.0
    %v1525 = vmax.f32 %v1094, 0.0
    %v1526 = vmax.f32 %v1097, 0.0
    %v1527 = vmax.f32 %v1100, 0.0
    %v1528 = vmax.f32 %v1103, 0.0
    %v1529 = vmax.f32 %v1106, 0.0
    %v1530 = vmax.f32 %v1109, 0.0
    %v1531 = vmax.f32 %v1112, 0.0
    %v1532 = vmax.f32 %v1115, 0.0
    %v1533 = vmax.f32 %v1118, 0.0
    %v1534 = vmax.f32 %v1121, 0.0
    %v1535 = vmax.f32 %v1124, 0.0
    %v1536 = vmax.f32 %v1127, 0.0
    %v1537 = vmax.f32 %v1130, 0.0
    %v1538 = vmax.f32 %v1133, 0.0
    %v1539 = vmax.f32 %v1136, 0.0
    %v1540 = vmax.f32 %v1139, 0.0
    %v1541 = vmax.f32 %v1142, 0.0
    %v1542 = vmax.f32 %v1145, 0.0
    %v1543 = vmax.f32 %v1148, 0.0
    %v1544 = vmax.f32 %v1151, 0.0
    %v1545 = vmax.f32 %v1154, 0.0
    %v1546 = vmax.f32 %v1157, 0.0
    %v1547 = vmax.f32 %v1160, 0.0
    %v1548 = vmax.f32 %v1163, 0.0
    %v1549 = vmax.f32 %v1166, 0.0
    %v1550 = vmax.f32 %v1169, 0.0
    %v1551 = vmax.f32 %v1172, 0.0
    %v1552 = vmax.f32 %v1175, 0.0
    %v1553 = vmax.f32 %v1178, 0.0
    %v1554 = vmax.f32 %v1181, 0.0
    %v1555 = vmax.f32 %v1184, 0.0
    %v1556 = vmax.f32 %v1187, 0.0
    %v1557 = vmax.f32 %v1190, 0.0
    %v1558 = vmax.f32 %v1193, 0.0
    %v1559 = vmax.f32 %v1196, 0.0
    %v1560 = vmax.f32 %v1199, 0.0
    %v1561 = vmax.f32 %v1202, 0.0
    %v1562 = vmax.f32 %v1205, 0.0
    %v1563 = vmax.f32 %v1208, 0.0
    %v1564 = vmax.f32 %v1211, 0.0
    %v1565 = vmax.f32 %v1214, 0.0
    %v1566 = vmax.f32 %v1217, 0.0
    %v1567 = vmax.f32 %v1220, 0.0
    %v1568 = vmax.f32 %v1223, 0.0
    %v1569 = vmax.f32 %v1226, 0.0
    %v1570 = vmax.f32 %v1229, 0.0
    %v1571 = vmax.f32 %v1232, 0.0
    %v1572 = vmax.f32 %v1235, 0.0
    %v1573 = vmax.f32 %v1238, 0.0
    %v1574 = vmax.f32 %v1241, 0.0
    %v1575 = vmax.f32 %v1244, 0.0
    %v1576 = vmax.f32 %v1247, 0.0
    %v1577 = vmax.f32 %v1250, 0.0
    %v1578 = vmax.f32 %v1253, 0.0
    %v1579 = vmax.f32 %v1256, 0.0
    %v1580 = vmax.f32 %v1259, 0.0
    %v1581 = vmax.f32 %v1262, 0.0
    %v1582 = vmax.f32 %v1265, 0.0
    %v1583 = vmax.f32 %v1268, 0.0
    %v1584 = vmax.f32 %v1271, 0.0
    %v1585 = vmax.f32 %v1274, 0.0
    %v1586 = vmax.f32 %v1277, 0.0
    %v1587 = vmax.f32 %v1280, 0.0
    %v1588 = vmax.f32 %v1283, 0.0
    %v1589 = vmax.f32 %v1286, 0.0
    %v1590 = vmax.f32 %v1289, 0.0
    %v1591 = vmax.f32 %v1292, 0.0
    %v1592 = vmax.f32 %v1295, 0.0
    %v1593 = vmax.f32 %v1298, 0.0
    %v1594 = vmax.f32 %v1301, 0.0
    %v1595 = vmax.f32 %v1304, 0.0
    %v1596 = vmax.f32 %v1307, 0.0
    %v1597 = vmax.f32 %v1310, 0.0
    %v1598 = vmax.f32 %v1313, 0.0
    %v1599 = vmax.f32 %v1316, 0.0
    %v1600 = vmax.f32 %v1319, 0.0
    %v1601 = vmax.f32 %v1322, 0.0
    %v1602 = vmax.f32 %v1325, 0.0
    %v1603 = vmax.f32 %v1328, 0.0
    %v1604 = vmax.f32 %v1331, 0.0
    %v1605 = vmax.f32 %v1334, 0.0
    %v1606 = vmax.f32 %v1337, 0.0
    %v1607 = vmax.f32 %v1340, 0.0
    %v1608 = vmax.f32 %v1343, 0.0
    %v1609 = vmax.f32 %v1346, 0.0
    %v1610 = vmax.f32 %v1349, 0.0
    %v1611 = vmax.f32 %v1352, 0.0
    %v1612 = vmax.f32 %v1355, 0.0
    %v1613 = vmax.f32 %v1358, 0.0
    %v1614 = vmax.f32 %v1361, 0.0
    %v1615 = vmax.f32 %v1364, 0.0
    %v1616 = vmax.f32 %v1367, 0.0
    %v1617 = vmax.f32 %v1370, 0.0
    %v1618 = vmax.f32 %v1373, 0.0
    %v1619 = vmax.f32 %v1376, 0.0
    %v1620 = vmax.f32 %v1379, 0.0
    %v1621 = vmax.f32 %v1382, 0.0
    %v1622 = vmax.f32 %v1385, 0.0
    %v1623 = vmax.f32 %v1388, 0.0
    %v1624 = vmax.f32 %v1391, 0.0
    %v1625 = vmax.f32 %v1394, 0.0
    %v1626 = vmax.f32 %v1397, 0.0
    %v1627 = vmax.f32 %v1400, 0.0
    %v1628 = vmax.f32 %v1403, 0.0
    %v1629 = vmax.f32 %v1406, 0.0
    %v1630 = vmax.f32 %v1409, 0.0
    %v1631 = vmax.f32 %v1412, 0.0
    %v1632 = vmax.f32 %v1415, 0.0
    %v1633 = vmax.f32 %v1418, 0.0
    %v1634 = vmax.f32 %v1421, 0.0
    %v1635 = vmax.f32 %v1424, 0.0
    %v1636 = vmax.f32 %v1427, 0.0
    %v1637 = vmax.f32 %v1430, 0.0
    %v1638 = vmax.f32 %v1433, 0.0
    %v1639 = vmax.f32 %v1436, 0.0
    %v1640 = vmax.f32 %v1439, 0.0
    %v1641 = vmax.f32 %v1442, 0.0
    %v1642 = vmax.f32 %v1445, 0.0
    %v1839 = vrot.slane %v1447, 4
    %v1840 = vrot.slane %v1448, 4
    %v1841 = vrot.slane %v1449, 4
    %v1842 = vrot.slane %v1450, 4
    %v1843 = vrot.slane %v1451, 4
    %v1844 = vrot.slane %v1452, 4
    %v1845 = vrot.slane %v1453, 4
    %v1846 = vrot.slane %v1454, 4
    %v1847 = vrot.slane %v1455, 4
    %v1848 = vrot.slane %v1456, 4
    %v1849 = vrot.slane %v1457, 4
    %v1850 = vrot.slane %v1458, 4
    %v1851 = vrot.slane %v1459, 4
    %v1852 = vrot.slane %v1460, 4
    %v1853 = vrot.slane %v1461, 4
    %v1854 = vrot.slane %v1462, 4
    %v1855 = vrot.slane %v1463, 4
    %v1856 = vrot.slane %v1464, 4
    %v1857 = vrot.slane %v1465, 4
    %v1858 = vrot.slane %v1466, 4
    %v1859 = vrot.slane %v1467, 4
    %v1860 = vrot.slane %v1468, 4
    %v1861 = vrot.slane %v1469, 4
    %v1862 = vrot.slane %v1470, 4
    %v1863 = vrot.slane %v1471, 4
    %v1864 = vrot.slane %v1472, 4
    %v1865 = vrot.slane %v1473, 4
    %v1866 = vrot.slane %v1474, 4
    %v1867 = vrot.slane %v1475, 4
    %v1868 = vrot.slane %v1476, 4
    %v1869 = vrot.slane %v1477, 4
    %v1870 = vrot.slane %v1478, 4
    %v1871 = vrot.slane %v1479, 4
    %v1872 = vrot.slane %v1480, 4
    %v1873 = vrot.slane %v1481, 4
    %v1874 = vrot.slane %v1482, 4
    %v1875 = vrot.slane %v1483, 4
    %v1876 = vrot.slane %v1484, 4
    %v1877 = vrot.slane %v1485, 4
    %v1878 = vrot.slane %v1486, 4
    %v1879 = vrot.slane %v1487, 4
    %v1880 = vrot.slane %v1488, 4
    %v1881 = vrot.slane %v1489, 4
    %v1882 = vrot.slane %v1490, 4
    %v1883 = vrot.slane %v1491, 4
    %v1884 = vrot.slane %v1492, 4
    %v1885 = vrot.slane %v1493, 4
    %v1886 = vrot.slane %v1494, 4
    %v1887 = vrot.slane %v1495, 4
    %v1888 = vrot.slane %v1496, 4
    %v1889 = vrot.slane %v1497, 4
    %v1890 = vrot.slane %v1498, 4
    %v1891 = vrot.slane %v1499, 4
    %v1892 = vrot.slane %v1500, 4
    %v1893 = vrot.slane %v1501, 4
    %v1894 = vrot.slane %v1502, 4
    %v1895 = vrot.slane %v1503, 4
    %v1896 = vrot.slane %v1504, 4
    %v1897 = vrot.slane %v1505, 4
    %v1898 = vrot.slane %v1506, 4
    %v1899 = vrot.slane %v1507, 4
    %v1900 = vrot.slane %v1508, 4
    %v1901 = vrot.slane %v1509, 4
    %v1902 = vrot.slane %v1510, 4
    %v1903 = vrot.slane %v1511, 4
    %v1904 = vrot.slane %v1512, 4
    %v1905 = vrot.slane %v1513, 4
    %v1906 = vrot.slane %v1514, 4
    %v1907 = vrot.slane %v1515, 4
    %v1908 = vrot.slane %v1516, 4
    %v1909 = vrot.slane %v1517, 4
    %v1910 = vrot.slane %v1518, 4
    %v1911 = vrot.slane %v1519, 4
    %v1912 = vrot.slane %v1520, 4
    %v1913 = vrot.slane %v1521, 4
    %v1914 = vrot.slane %v1522, 4
    %v1915 = vrot.slane %v1523, 4
    %v1916 = vrot.slane %v1524, 4
    %v1917 = vrot.slane %v1525, 4
    %v1918 = vrot.slane %v1526, 4
    %v1919 = vrot.slane %v1527, 4
    %v1920 = vrot.slane %v1528, 4
    %v1921 = vrot.slane %v1529, 4
    %v1922 = vrot.slane %v1530, 4
    %v1923 = vrot.slane %v1531, 4
    %v1924 = vrot.slane %v1532, 4
    %v1925 = vrot.slane %v1533, 4
    %v1926 = vrot.slane %v1534, 4
    %v1927 = vrot.slane %v1535, 4
    %v1928 = vrot.slane %v1536, 4
    %v1929 = vrot.slane %v1537, 4
    %v1930 = vrot.slane %v1538, 4
    %v1931 = vrot.slane %v1539, 4
    %v1932 = vrot.slane %v1540, 4
    %v1933 = vrot.slane %v1541, 4
    %v1934 = vrot.slane %v1542, 4
    %v1935 = vrot.slane %v1543, 4
    %v1936 = vrot.slane %v1544, 4
    %v1937 = vrot.slane %v1545, 4
    %v1938 = vrot.slane %v1546, 4
    %v1939 = vrot.slane %v1547, 4
    %v1940 = vrot.slane %v1548, 4
    %v1941 = vrot.slane %v1549, 4
    %v1942 = vrot.slane %v1550, 4
    %v1943 = vrot.slane %v1551, 4
    %v1944 = vrot.slane %v1552, 4
    %v1945 = vrot.slane %v1553, 4
    %v1946 = vrot.slane %v1554, 4
    %v1947 = vrot.slane %v1555, 4
    %v1948 = vrot.slane %v1556, 4
    %v1949 = vrot.slane %v1557, 4
    %v1950 = vrot.slane %v1558, 4
    %v1951 = vrot.slane %v1559, 4
    %v1952 = vrot.slane %v1560, 4
    %v1953 = vrot.slane %v1561, 4
    %v1954 = vrot.slane %v1562, 4
    %v1955 = vrot.slane %v1563, 4
    %v1956 = vrot.slane %v1564, 4
    %v1957 = vrot.slane %v1565, 4
    %v1958 = vrot.slane %v1566, 4
    %v1959 = vrot.slane %v1567, 4
    %v1960 = vrot.slane %v1568, 4
    %v1961 = vrot.slane %v1569, 4
    %v1962 = vrot.slane %v1570, 4
    %v1963 = vrot.slane %v1571, 4
    %v1964 = vrot.slane %v1572, 4
    %v1965 = vrot.slane %v1573, 4
    %v1966 = vrot.slane %v1574, 4
    %v1967 = vrot.slane %v1575, 4
    %v1968 = vrot.slane %v1576, 4
    %v1969 = vrot.slane %v1577, 4
    %v1970 = vrot.slane %v1578, 4
    %v1971 = vrot.slane %v1579, 4
    %v1972 = vrot.slane %v1580, 4
    %v1973 = vrot.slane %v1581, 4
    %v1974 = vrot.slane %v1582, 4
    %v1975 = vrot.slane %v1583, 4
    %v1976 = vrot.slane %v1584, 4
    %v1977 = vrot.slane %v1585, 4
    %v1978 = vrot.slane %v1586, 4
    %v1979 = vrot.slane %v1587, 4
    %v1980 = vrot.slane %v1588, 4
    %v1981 = vrot.slane %v1589, 4
    %v1982 = vrot.slane %v1590, 4
    %v1983 = vrot.slane %v1591, 4
    %v1984 = vrot.slane %v1592, 4
    %v1985 = vrot.slane %v1593, 4
    %v1986 = vrot.slane %v1594, 4
    %v1987 = vrot.slane %v1595, 4
    %v1988 = vrot.slane %v1596, 4
    %v1989 = vrot.slane %v1597, 4
    %v1990 = vrot.slane %v1598, 4
    %v1991 = vrot.slane %v1599, 4
    %v1992 = vrot.slane %v1600, 4
    %v1993 = vrot.slane %v1601, 4
    %v1994 = vrot.slane %v1602, 4
    %v1995 = vrot.slane %v1603, 4
    %v1996 = vrot.slane %v1604, 4
    %v1997 = vrot.slane %v1605, 4
    %v1998 = vrot.slane %v1606, 4
    %v1999 = vrot.slane %v1607, 4
    %v2000 = vrot.slane %v1608, 4
    %v2001 = vrot.slane %v1609, 4
    %v2002 = vrot.slane %v1610, 4
    %v2003 = vrot.slane %v1611, 4
    %v2004 = vrot.slane %v1612, 4
    %v2005 = vrot.slane %v1613, 4
    %v2006 = vrot.slane %v1614, 4
    %v2007 = vrot.slane %v1615, 4
    %v2008 = vrot.slane %v1616, 4
    %v2009 = vrot.slane %v1617, 4
    %v2010 = vrot.slane %v1618, 4
    %v2011 = vrot.slane %v1619, 4
    %v2012 = vrot.slane %v1620, 4
    %v2013 = vrot.slane %v1621, 4
    %v2014 = vrot.slane %v1622, 4
    %v2015 = vrot.slane %v1623, 4
    %v2016 = vrot.slane %v1624, 4
    %v2017 = vrot.slane %v1625, 4
    %v2018 = vrot.slane %v1626, 4
    %v2019 = vrot.slane %v1627, 4
    %v2020 = vrot.slane %v1628, 4
    %v2021 = vrot.slane %v1629, 4
    %v2022 = vrot.slane %v1630, 4
    %v2023 = vrot.slane %v1631, 4
    %v2024 = vrot.slane %v1632, 4
    %v2025 = vrot.slane %v1633, 4
    %v2026 = vrot.slane %v1634, 4
    %v2027 = vrot.slane %v1635, 4
    %v2028 = vrot.slane %v1636, 4
    %v2029 = vrot.slane %v1637, 4
    %v2030 = vrot.slane %v1638, 4
    %v2031 = vrot.slane %v1639, 4
    %v2032 = vrot.slane %v1640, 4
    %v2033 = vrot.slane %v1641, 4
    %v2034 = vrot.slane %v1642, 4
    %vm2231 = vcmask 44032
    %v2232 = vsel %vm2231, %v1447, -inf
    %v2233 = vsel %vm2231, %v1842, -inf
    %v2234 = vmax.f32 %v2232, %v2233
    %v2235 = vsel %vm2231, %v1839, -inf
    %v2236 = vsel %vm2231, %v1451, -inf
    %v2237 = vmax.f32 %v2235, %v2236
    %v2238 = vsel %vm2231, %v1448, -inf
    %v2239 = vsel %vm2231, %v1843, -inf
    %v2240 = vmax.f32 %v2238, %v2239
    %v2241 = vsel %vm2231, %v1840, -inf
    %v2242 = vsel %vm2231, %v1452, -inf
    %v2243 = vmax.f32 %v2241, %v2242
    %v2244 = vsel %vm2231, %v1449, -inf
    %v2245 = vsel %vm2231, %v1844, -inf
    %v2246 = vmax.f32 %v2244, %v2245
    %v2247 = vsel %vm2231, %v1841, -inf
    %v2248 = vsel %vm2231, %v1453, -inf
    %v2249 = vmax.f32 %v2247, %v2248
    %v2250 = vsel %vm2231, %v1450, -inf
    %v2251 = vsel %vm2231, %v1845, -inf
    %v2252 = vmax.f32 %v2250, %v2251
    %v2253 = vsel %vm2231, %v1454, -inf
    %v2254 = vsel %vm2231, %v1849, -inf
    %v2255 = vmax.f32 %v2253, %v2254
    %v2256 = vsel %vm2231, %v1846, -inf
    %v2257 = vsel %vm2231, %v1458, -inf
    %v2258 = vmax.f32 %v2256, %v2257
    %v2259 = vsel %vm2231, %v1455, -inf
    %v2260 = vsel %vm2231, %v1850, -inf
    %v2261 = vmax.f32 %v2259, %v2260
    %v2262 = vsel %vm2231, %v1847, -inf
    %v2263 = vsel %vm2231, %v1459, -inf
    %v2264 = vmax.f32 %v2262, %v2263
    %v2265 = vsel %vm2231, %v1456, -inf
    %v2266 = vsel %vm2231, %v1851, -inf
    %v2267 = vmax.f32 %v2265, %v2266
    %v2268 = vsel %vm2231, %v1848, -inf
    %v2269 = vsel %vm2231, %v1460, -inf
    %v2270 = vmax.f32 %v2268, %v2269
    %v2271 = vsel %vm2231, %v1457, -inf
    %v2272 = vsel %vm2231, %v1852, -inf
    %v2273 = vmax.f32 %v2271, %v2272
    %v2274 = vsel %vm2231, %v1461, -inf
    %v2275 = vsel %vm2231, %v1856, -inf
    %v2276 = vmax.f32 %v2274, %v2275
    %v2277 = vsel %vm2231, %v1853, -inf
    %v2278 = vsel %vm2231, %v1465, -inf
    %v2279 = vmax.f32 %v2277, %v2278
    %v2280 = vsel %vm2231, %v1462, -inf
    %v2281 = vsel %vm2231, %v1857, -inf
    %v2282 = vmax.f32 %v2280, %v2281
    %v2283 = vsel %vm2231, %v1854, -inf
    %v2284 = vsel %vm2231, %v1466, -inf
    %v2285 = vmax.f32 %v2283, %v2284
    %v2286 = vsel %vm2231, %v1463, -inf
    %v2287 = vsel %vm2231, %v1858, -inf
    %v2288 = vmax.f32 %v2286, %v2287
    %v2289 = vsel %vm2231, %v1855, -inf
    %v2290 = vsel %vm2231, %v1467, -inf
    %v2291 = vmax.f32 %v2289, %v2290
    %v2292 = vsel %vm2231, %v1464, -inf
    %v2293 = vsel %vm2231, %v1859, -inf
    %v2294 = vmax.f32 %v2292, %v2293
    %v2295 = vsel %vm2231, %v1468, -inf
    %v2296 = vsel %vm2231, %v1863, -inf
    %v2297 = vmax.f32 %v2295, %v2296
    %v2298 = vsel %vm2231, %v1860, -inf
    %v2299 = vsel %vm2231, %v1472, -inf
    %v2300 = vmax.f32 %v2298, %v2299
    %v2301 = vsel %vm2231, %v1469, -inf
    %v2302 = vsel %vm2231, %v1864, -inf
    %v2303 = vmax.f32 %v2301, %v2302
    %v2304 = vsel %vm2231, %v1861, -inf
    %v2305 = vsel %vm2231, %v1473, -inf
    %v2306 = vmax.f32 %v2304, %v2305
    %v2307 = vsel %vm2231, %v1470, -inf
    %v2308 = vsel %vm2231, %v1865, -inf
    %v2309 = vmax.f32 %v2307, %v2308
    %v2310 = vsel %vm2231, %v1862, -inf
    %v2311 = vsel %vm2231, %v1474, -inf
    %v2312 = vmax.f32 %v2310, %v2311
    %v2313 = vsel %vm2231, %v1471, -inf
    %v2314 = vsel %vm2231, %v1866, -inf
    %v2315 = vmax.f32 %v2313, %v2314
    %v2316 = vsel %vm2231, %v1475, -inf
    %v2317 = vsel %vm2231, %v1870, -inf
    %v2318 = vmax.f32 %v2316, %v2317
    %v2319 = vsel %vm2231, %v1867, -inf
    %v2320 = vsel %vm2231, %v1479, -inf
    %v2321 = vmax.f32 %v2319, %v2320
    %v2322 = vsel %vm2231, %v1476, -inf
    %v2323 = vsel %vm2231, %v1871, -inf
    %v2324 = vmax.f32 %v2322, %v2323
    %v2325 = vsel %vm2231, %v1868, -inf
    %v2326 = vsel %vm2231, %v1480, -inf
    %v2327 = vmax.f32 %v2325, %v2326
    %v2328 = vsel %vm2231, %v1477, -inf
    %v2329 = vsel %vm2231, %v1872, -inf
    %v2330 = vmax.f32 %v2328, %v2329
    %v2331 = vsel %vm2231, %v1869, -inf
    %v2332 = vsel %vm2231, %v1481, -inf
    %v2333 = vmax.f32 %v2331, %v2332
    %v2334 = vsel %vm2231, %v1478, -inf
    %v2335 = vsel %vm2231, %v1873, -inf
    %v2336 = vmax.f32 %v2334, %v2335
    %v2337 = vsel %vm2231, %v1482, -inf
    %v2338 = vsel %vm2231, %v1877, -inf
    %v2339 = vmax.f32 %v2337, %v2338
    %v2340 = vsel %vm2231, %v1874, -inf
    %v2341 = vsel %vm2231, %v1486, -inf
    %v2342 = vmax.f32 %v2340, %v2341
    %v2343 = vsel %vm2231, %v1483, -inf
    %v2344 = vsel %vm2231, %v1878, -inf
    %v2345 = vmax.f32 %v2343, %v2344
    %v2346 = vsel %vm2231, %v1875, -inf
    %v2347 = vsel %vm2231, %v1487, -inf
    %v2348 = vmax.f32 %v2346, %v2347
    %v2349 = vsel %vm2231, %v1484, -inf
    %v2350 = vsel %vm2231, %v1879, -inf
    %v2351 = vmax.f32 %v2349, %v2350
    %v2352 = vsel %vm2231, %v1876, -inf
    %v2353 = vsel %vm2231, %v1488, -inf
    %v2354 = vmax.f32 %v2352, %v2353
    %v2355 = vsel %vm2231, %v1485, -inf
    %v2356 = vsel %vm2231, %v1880, -inf
    %v2357 = vmax.f32 %v2355, %v2356
    %v2358 = vsel %vm2231, %v1489, -inf
    %v2359 = vsel %vm2231, %v1884, -inf
    %v2360 = vmax.f32 %v2358, %v2359
    %v2361 = vsel %vm2231, %v1881, -inf
    %v2362 = vsel %vm2231, %v1493, -inf
    %v2363 = vmax.f32 %v2361, %v2362
    %v2364 = vsel %vm2231, %v1490, -inf
    %v2365 = vsel %vm2231, %v1885, -inf
    %v2366 = vmax.f32 %v2364, %v2365
    %v2367 = vsel %vm2231, %v1882, -inf
    %v2368 = vsel %vm2231, %v1494, -inf
    %v2369 = vmax.f32 %v2367, %v2368
    %v2370 = vsel %vm2231, %v1491, -inf
    %v2371 = vsel %vm2231, %v1886, -inf
    %v2372 = vmax.f32 %v2370, %v2371
    %v2373 = vsel %vm2231, %v1883, -inf
    %v2374 = vsel %vm2231, %v1495, -inf
    %v2375 = vmax.f32 %v2373, %v2374
    %v2376 = vsel %vm2231, %v1492, -inf
    %v2377 = vsel %vm2231, %v1887, -inf
    %v2378 = vmax.f32 %v2376, %v2377
    %v2379 = vsel %vm2231, %v1496, -inf
    %v2380 = vsel %vm2231, %v1891, -inf
    %v2381 = vmax.f32 %v2379, %v2380
    %v2382 = vsel %vm2231, %v1888, -inf
    %v2383 = vsel %vm2231, %v1500, -inf
    %v2384 = vmax.f32 %v2382, %v2383
    %v2385 = vsel %vm2231, %v1497, -inf
    %v2386 = vsel %vm2231, %v1892, -inf
    %v2387 = vmax.f32 %v2385, %v2386
    %v2388 = vsel %vm2231, %v1889, -inf
    %v2389 = vsel %vm2231, %v1501, -inf
    %v2390 = vmax.f32 %v2388, %v2389
    %v2391 = vsel %vm2231, %v1498, -inf
    %v2392 = vsel %vm2231, %v1893, -inf
    %v2393 = vmax.f32 %v2391, %v2392
    %v2394 = vsel %vm2231, %v1890, -inf
    %v2395 = vsel %vm2231, %v1502, -inf
    %v2396 = vmax.f32 %v2394, %v2395
    %v2397 = vsel %vm2231, %v1499, -inf
    %v2398 = vsel %vm2231, %v1894, -inf
    %v2399 = vmax.f32 %v2397, %v2398
    %v2400 = vsel %vm2231, %v1503, -inf
    %v2401 = vsel %vm2231, %v1898, -inf
    %v2402 = vmax.f32 %v2400, %v2401
    %v2403 = vsel %vm2231, %v1895, -inf
    %v2404 = vsel %vm2231, %v1507, -inf
    %v2405 = vmax.f32 %v2403, %v2404
    %v2406 = vsel %vm2231, %v1504, -inf
    %v2407 = vsel %vm2231, %v1899, -inf
    %v2408 = vmax.f32 %v2406, %v2407
    %v2409 = vsel %vm2231, %v1896, -inf
    %v2410 = vsel %vm2231, %v1508, -inf
    %v2411 = vmax.f32 %v2409, %v2410
    %v2412 = vsel %vm2231, %v1505, -inf
    %v2413 = vsel %vm2231, %v1900, -inf
    %v2414 = vmax.f32 %v2412, %v2413
    %v2415 = vsel %vm2231, %v1897, -inf
    %v2416 = vsel %vm2231, %v1509, -inf
    %v2417 = vmax.f32 %v2415, %v2416
    %v2418 = vsel %vm2231, %v1506, -inf
    %v2419 = vsel %vm2231, %v1901, -inf
    %v2420 = vmax.f32 %v2418, %v2419
    %v2421 = vsel %vm2231, %v1510, -inf
    %v2422 = vsel %vm2231, %v1905, -inf
    %v2423 = vmax.f32 %v2421, %v2422
    %v2424 = vsel %vm2231, %v1902, -inf
    %v2425 = vsel %vm2231, %v1514, -inf
    %v2426 = vmax.f32 %v2424, %v2425
    %v2427 = vsel %vm2231, %v1511, -inf
    %v2428 = vsel %vm2231, %v1906, -inf
    %v2429 = vmax.f32 %v2427, %v2428
    %v2430 = vsel %vm2231, %v1903, -inf
    %v2431 = vsel %vm2231, %v1515, -inf
    %v2432 = vmax.f32 %v2430, %v2431
    %v2433 = vsel %vm2231, %v1512, -inf
    %v2434 = vsel %vm2231, %v1907, -inf
    %v2435 = vmax.f32 %v2433, %v2434
    %v2436 = vsel %vm2231, %v1904, -inf
    %v2437 = vsel %vm2231, %v1516, -inf
    %v2438 = vmax.f32 %v2436, %v2437
    %v2439 = vsel %vm2231, %v1513, -inf
    %v2440 = vsel %vm2231, %v1908, -inf
    %v2441 = vmax.f32 %v2439, %v2440
    %v2442 = vsel %vm2231, %v1517, -inf
    %v2443 = vsel %vm2231, %v1912, -inf
    %v2444 = vmax.f32 %v2442, %v2443
    %v2445 = vsel %vm2231, %v1909, -inf
    %v2446 = vsel %vm2231, %v1521, -inf
    %v2447 = vmax.f32 %v2445, %v2446
    %v2448 = vsel %vm2231, %v1518, -inf
    %v2449 = vsel %vm2231, %v1913, -inf
    %v2450 = vmax.f32 %v2448, %v2449
    %v2451 = vsel %vm2231, %v1910, -inf
    %v2452 = vsel %vm2231, %v1522, -inf
    %v2453 = vmax.f32 %v2451, %v2452
    %v2454 = vsel %vm2231, %v1519, -inf
    %v2455 = vsel %vm2231, %v1914, -inf
    %v2456 = vmax.f32 %v2454, %v2455
    %v2457 = vsel %vm2231, %v1911, -inf
    %v2458 = vsel %vm2231, %v1523, -inf
    %v2459 = vmax.f32 %v2457, %v2458
    %v2460 = vsel %vm2231, %v1520, -inf
    %v2461 = vsel %vm2231, %v1915, -inf
    %v2462 = vmax.f32 %v2460, %v2461
    %v2463 = vsel %vm2231, %v1524, -inf
    %v2464 = vsel %vm2231, %v1919, -inf
    %v2465 = vmax.f32 %v2463, %v2464
    %v2466 = vsel %vm2231, %v1916, -inf
    %v2467 = vsel %vm2231, %v1528, -inf
    %v2468 = vmax.f32 %v2466, %v2467
    %v2469 = vsel %vm2231, %v1525, -inf
    %v2470 = vsel %vm2231, %v1920, -inf
    %v2471 = vmax.f32 %v2469, %v2470
    %v2472 = vsel %vm2231, %v1917, -inf
    %v2473 = vsel %vm2231, %v1529, -inf
    %v2474 = vmax.f32 %v2472, %v2473
    %v2475 = vsel %vm2231, %v1526, -inf
    %v2476 = vsel %vm2231, %v1921, -inf
    %v2477 = vmax.f32 %v2475, %v2476
    %v2478 = vsel %vm2231, %v1918, -inf
    %v2479 = vsel %vm2231, %v1530, -inf
    %v2480 = vmax.f32 %v2478, %v2479
    %v2481 = vsel %vm2231, %v1527, -inf
    %v2482 = vsel %vm2231, %v1922, -inf
    %v2483 = vmax.f32 %v2481, %v2482
    %v2484 = vsel %vm2231, %v1531, -inf
    %v2485 = vsel %vm2231, %v1926, -inf
    %v2486 = vmax.f32 %v2484, %v2485
    %v2487 = vsel %vm2231, %v1923, -inf
    %v2488 = vsel %vm2231, %v1535, -inf
    %v2489 = vmax.f32 %v2487, %v2488
    %v2490 = vsel %vm2231, %v1532, -inf
    %v2491 = vsel %vm2231, %v1927, -inf
    %v2492 = vmax.f32 %v2490, %v2491
    %v2493 = vsel %vm2231, %v1924, -inf
    %v2494 = vsel %vm2231, %v1536, -inf
    %v2495 = vmax.f32 %v2493, %v2494
    %v2496 = vsel %vm2231, %v1533, -inf
    %v2497 = vsel %vm2231, %v1928, -inf
    %v2498 = vmax.f32 %v2496, %v2497
    %v2499 = vsel %vm2231, %v1925, -inf
    %v2500 = vsel %vm2231, %v1537, -inf
    %v2501 = vmax.f32 %v2499, %v2500
    %v2502 = vsel %vm2231, %v1534, -inf
    %v2503 = vsel %vm2231, %v1929, -inf
    %v2504 = vmax.f32 %v2502, %v2503
    %v2505 = vsel %vm2231, %v1538, -inf
    %v2506 = vsel %vm2231, %v1933, -inf
    %v2507 = vmax.f32 %v2505, %v2506
    %v2508 = vsel %vm2231, %v1930, -inf
    %v2509 = vsel %vm2231, %v1542, -inf
    %v2510 = vmax.f32 %v2508, %v2509
    %v2511 = vsel %vm2231, %v1539, -inf
    %v2512 = vsel %vm2231, %v1934, -inf
    %v2513 = vmax.f32 %v2511, %v2512
    %v2514 = vsel %vm2231, %v1931, -inf
    %v2515 = vsel %vm2231, %v1543, -inf
    %v2516 = vmax.f32 %v2514, %v2515
    %v2517 = vsel %vm2231, %v1540, -inf
    %v2518 = vsel %vm2231, %v1935, -inf
    %v2519 = vmax.f32 %v2517, %v2518
    %v2520 = vsel %vm2231, %v1932, -inf
    %v2521 = vsel %vm2231, %v1544, -inf
    %v2522 = vmax.f32 %v2520, %v2521
    %v2523 = vsel %vm2231, %v1541, -inf
    %v2524 = vsel %vm2231, %v1936, -inf
    %v2525 = vmax.f32 %v2523, %v2524
    %v2526 = vsel %vm2231, %v1545, -inf
    %v2527 = vsel %vm2231, %v1940, -inf
    %v2528 = vmax.f32 %v2526, %v2527
    %v2529 = vsel %vm2231, %v1937, -inf
    %v2530 = vsel %vm2231, %v1549, -inf
    %v2531 = vmax.f32 %v2529, %v2530
    %v2532 = vsel %vm2231, %v1546, -inf
    %v2533 = vsel %vm2231, %v1941, -inf
    %v2534 = vmax.f32 %v2532, %v2533
    %v2535 = vsel %vm2231, %v1938, -inf
    %v2536 = vsel %vm2231, %v1550, -inf
    %v2537 = vmax.f32 %v2535, %v2536
    %v2538 = vsel %vm2231, %v1547, -inf
    %v2539 = vsel %vm2231, %v1942, -inf
    %v2540 = vmax.f32 %v2538, %v2539
    %v2541 = vsel %vm2231, %v1939, -inf
    %v2542 = vsel %vm2231, %v1551, -inf
    %v2543 = vmax.f32 %v2541, %v2542
    %v2544 = vsel %vm2231, %v1548, -inf
    %v2545 = vsel %vm2231, %v1943, -inf
    %v2546 = vmax.f32 %v2544, %v2545
    %v2547 = vsel %vm2231, %v1552, -inf
    %v2548 = vsel %vm2231, %v1947, -inf
    %v2549 = vmax.f32 %v2547, %v2548
    %v2550 = vsel %vm2231, %v1944, -inf
    %v2551 = vsel %vm2231, %v1556, -inf
    %v2552 = vmax.f32 %v2550, %v2551
    %v2553 = vsel %vm2231, %v1553, -inf
    %v2554 = vsel %vm2231, %v1948, -inf
    %v2555 = vmax.f32 %v2553, %v2554
    %v2556 = vsel %vm2231, %v1945, -inf
    %v2557 = vsel %vm2231, %v1557, -inf
    %v2558 = vmax.f32 %v2556, %v2557
    %v2559 = vsel %vm2231, %v1554, -inf
    %v2560 = vsel %vm2231, %v1949, -inf
    %v2561 = vmax.f32 %v2559, %v2560
    %v2562 = vsel %vm2231, %v1946, -inf
    %v2563 = vsel %vm2231, %v1558, -inf
    %v2564 = vmax.f32 %v2562, %v2563
    %v2565 = vsel %vm2231, %v1555, -inf
    %v2566 = vsel %vm2231, %v1950, -inf
    %v2567 = vmax.f32 %v2565, %v2566
    %v2568 = vsel %vm2231, %v1559, -inf
    %v2569 = vsel %vm2231, %v1954, -inf
    %v2570 = vmax.f32 %v2568, %v2569
    %v2571 = vsel %vm2231, %v1951, -inf
    %v2572 = vsel %vm2231, %v1563, -inf
    %v2573 = vmax.f32 %v2571, %v2572
    %v2574 = vsel %vm2231, %v1560, -inf
    %v2575 = vsel %vm2231, %v1955, -inf
    %v2576 = vmax.f32 %v2574, %v2575
    %v2577 = vsel %vm2231, %v1952, -inf
    %v2578 = vsel %vm2231, %v1564, -inf
    %v2579 = vmax.f32 %v2577, %v2578
    %v2580 = vsel %vm2231, %v1561, -inf
    %v2581 = vsel %vm2231, %v1956, -inf
    %v2582 = vmax.f32 %v2580, %v2581
    %v2583 = vsel %vm2231, %v1953, -inf
    %v2584 = vsel %vm2231, %v1565, -inf
    %v2585 = vmax.f32 %v2583, %v2584
    %v2586 = vsel %vm2231, %v1562, -inf
    %v2587 = vsel %vm2231, %v1957, -inf
    %v2588 = vmax.f32 %v2586, %v2587
    %v2589 = vsel %vm2231, %v1566, -inf
    %v2590 = vsel %vm2231, %v1961, -inf
    %v2591 = vmax.f32 %v2589, %v2590
    %v2592 = vsel %vm2231, %v1958, -inf
    %v2593 = vsel %vm2231, %v1570, -inf
    %v2594 = vmax.f32 %v2592, %v2593
    %v2595 = vsel %vm2231, %v1567, -inf
    %v2596 = vsel %vm2231, %v1962, -inf
    %v2597 = vmax.f32 %v2595, %v2596
    %v2598 = vsel %vm2231, %v1959, -inf
    %v2599 = vsel %vm2231, %v1571, -inf
    %v2600 = vmax.f32 %v2598, %v2599
    %v2601 = vsel %vm2231, %v1568, -inf
    %v2602 = vsel %vm2231, %v1963, -inf
    %v2603 = vmax.f32 %v2601, %v2602
    %v2604 = vsel %vm2231, %v1960, -inf
    %v2605 = vsel %vm2231, %v1572, -inf
    %v2606 = vmax.f32 %v2604, %v2605
    %v2607 = vsel %vm2231, %v1569, -inf
    %v2608 = vsel %vm2231, %v1964, -inf
    %v2609 = vmax.f32 %v2607, %v2608
    %v2610 = vsel %vm2231, %v1573, -inf
    %v2611 = vsel %vm2231, %v1968, -inf
    %v2612 = vmax.f32 %v2610, %v2611
    %v2613 = vsel %vm2231, %v1965, -inf
    %v2614 = vsel %vm2231, %v1577, -inf
    %v2615 = vmax.f32 %v2613, %v2614
    %v2616 = vsel %vm2231, %v1574, -inf
    %v2617 = vsel %vm2231, %v1969, -inf
    %v2618 = vmax.f32 %v2616, %v2617
    %v2619 = vsel %vm2231, %v1966, -inf
    %v2620 = vsel %vm2231, %v1578, -inf
    %v2621 = vmax.f32 %v2619, %v2620
    %v2622 = vsel %vm2231, %v1575, -inf
    %v2623 = vsel %vm2231, %v1970, -inf
    %v2624 = vmax.f32 %v2622, %v2623
    %v2625 = vsel %vm2231, %v1967, -inf
    %v2626 = vsel %vm2231, %v1579, -inf
    %v2627 = vmax.f32 %v2625, %v2626
    %v2628 = vsel %vm2231, %v1576, -inf
    %v2629 = vsel %vm2231, %v1971, -inf
    %v2630 = vmax.f32 %v2628, %v2629
    %v2631 = vsel %vm2231, %v1580, -inf
    %v2632 = vsel %vm2231, %v1975, -inf
    %v2633 = vmax.f32 %v2631, %v2632
    %v2634 = vsel %vm2231, %v1972, -inf
    %v2635 = vsel %vm2231, %v1584, -inf
    %v2636 = vmax.f32 %v2634, %v2635
    %v2637 = vsel %vm2231, %v1581, -inf
    %v2638 = vsel %vm2231, %v1976, -inf
    %v2639 = vmax.f32 %v2637, %v2638
    %v2640 = vsel %vm2231, %v1973, -inf
    %v2641 = vsel %vm2231, %v1585, -inf
    %v2642 = vmax.f32 %v2640, %v2641
    %v2643 = vsel %vm2231, %v1582, -inf
    %v2644 = vsel %vm2231, %v1977, -inf
    %v2645 = vmax.f32 %v2643, %v2644
    %v2646 = vsel %vm2231, %v1974, -inf
    %v2647 = vsel %vm2231, %v1586, -inf
    %v2648 = vmax.f32 %v2646, %v2647
    %v2649 = vsel %vm2231, %v1583, -inf
    %v2650 = vsel %vm2231, %v1978, -inf
    %v2651 = vmax.f32 %v2649, %v2650
    %v2652 = vsel %vm2231, %v1587, -inf
    %v2653 = vsel %vm2231, %v1982, -inf
    %v2654 = vmax.f32 %v2652, %v2653
    %v2655 = vsel %vm2231, %v1979, -inf
    %v2656 = vsel %vm2231, %v1591, -inf
    %v2657 = vmax.f32 %v2655, %v2656
    %v2658 = vsel %vm2231, %v1588, -inf
    %v2659 = vsel %vm2231, %v1983, -inf
    %v2660 = vmax.f32 %v2658, %v2659
    %v2661 = vsel %vm2231, %v1980, -inf
    %v2662 = vsel %vm2231, %v1592, -inf
    %v2663 = vmax.f32 %v2661, %v2662
    %v2664 = vsel %vm2231, %v1589, -inf
    %v2665 = vsel %vm2231, %v1984, -inf
    %v2666 = vmax.f32 %v2664, %v2665
    %v2667 = vsel %vm2231, %v1981, -inf
    %v2668 = vsel %vm2231, %v1593, -inf
    %v2669 = vmax.f32 %v2667, %v2668
    %v2670 = vsel %vm2231, %v1590, -inf
    %v2671 = vsel %vm2231, %v1985, -inf
    %v2672 = vmax.f32 %v2670, %v2671
    %v2673 = vsel %vm2231, %v1594, -inf
    %v2674 = vsel %vm2231, %v1989, -inf
    %v2675 = vmax.f32 %v2673, %v2674
    %v2676 = vsel %vm2231, %v1986, -inf
    %v2677 = vsel %vm2231, %v1598, -inf
    %v2678 = vmax.f32 %v2676, %v2677
    %v2679 = vsel %vm2231, %v1595, -inf
    %v2680 = vsel %vm2231, %v1990, -inf
    %v2681 = vmax.f32 %v2679, %v2680
    %v2682 = vsel %vm2231, %v1987, -inf
    %v2683 = vsel %vm2231, %v1599, -inf
    %v2684 = vmax.f32 %v2682, %v2683
    %v2685 = vsel %vm2231, %v1596, -inf
    %v2686 = vsel %vm2231, %v1991, -inf
    %v2687 = vmax.f32 %v2685, %v2686
    %v2688 = vsel %vm2231, %v1988, -inf
    %v2689 = vsel %vm2231, %v1600, -inf
    %v2690 = vmax.f32 %v2688, %v2689
    %v2691 = vsel %vm2231, %v1597, -inf
    %v2692 = vsel %vm2231, %v1992, -inf
    %v2693 = vmax.f32 %v2691, %v2692
    %v2694 = vsel %vm2231, %v1601, -inf
    %v2695 = vsel %vm2231, %v1996, -inf
    %v2696 = vmax.f32 %v2694, %v2695
    %v2697 = vsel %vm2231, %v1993, -inf
    %v2698 = vsel %vm2231, %v1605, -inf
    %v2699 = vmax.f32 %v2697, %v2698
    %v2700 = vsel %vm2231, %v1602, -inf
    %v2701 = vsel %vm2231, %v1997, -inf
    %v2702 = vmax.f32 %v2700, %v2701
    %v2703 = vsel %vm2231, %v1994, -inf
    %v2704 = vsel %vm2231, %v1606, -inf
    %v2705 = vmax.f32 %v2703, %v2704
    %v2706 = vsel %vm2231, %v1603, -inf
    %v2707 = vsel %vm2231, %v1998, -inf
    %v2708 = vmax.f32 %v2706, %v2707
    %v2709 = vsel %vm2231, %v1995, -inf
    %v2710 = vsel %vm2231, %v1607, -inf
    %v2711 = vmax.f32 %v2709, %v2710
    %v2712 = vsel %vm2231, %v1604, -inf
    %v2713 = vsel %vm2231, %v1999, -inf
    %v2714 = vmax.f32 %v2712, %v2713
    %v2715 = vsel %vm2231, %v1608, -inf
    %v2716 = vsel %vm2231, %v2003, -inf
    %v2717 = vmax.f32 %v2715, %v2716
    %v2718 = vsel %vm2231, %v2000, -inf
    %v2719 = vsel %vm2231, %v1612, -inf
    %v2720 = vmax.f32 %v2718, %v2719
    %v2721 = vsel %vm2231, %v1609, -inf
    %v2722 = vsel %vm2231, %v2004, -inf
    %v2723 = vmax.f32 %v2721, %v2722
    %v2724 = vsel %vm2231, %v2001, -inf
    %v2725 = vsel %vm2231, %v1613, -inf
    %v2726 = vmax.f32 %v2724, %v2725
    %v2727 = vsel %vm2231, %v1610, -inf
    %v2728 = vsel %vm2231, %v2005, -inf
    %v2729 = vmax.f32 %v2727, %v2728
    %v2730 = vsel %vm2231, %v2002, -inf
    %v2731 = vsel %vm2231, %v1614, -inf
    %v2732 = vmax.f32 %v2730, %v2731
    %v2733 = vsel %vm2231, %v1611, -inf
    %v2734 = vsel %vm2231, %v2006, -inf
    %v2735 = vmax.f32 %v2733, %v2734
    %v2736 = vsel %vm2231, %v1615, -inf
    %v2737 = vsel %vm2231, %v2010, -inf
    %v2738 = vmax.f32 %v2736, %v2737
    %v2739 = vsel %vm2231, %v2007, -inf
    %v2740 = vsel %vm2231, %v1619, -inf
    %v2741 = vmax.f32 %v2739, %v2740
    %v2742 = vsel %vm2231, %v1616, -inf
    %v2743 = vsel %vm2231, %v2011, -inf
    %v2744 = vmax.f32 %v2742, %v2743
    %v2745 = vsel %vm2231, %v2008, -inf
    %v2746 = vsel %vm2231, %v1620, -inf
    %v2747 = vmax.f32 %v2745, %v2746
    %v2748 = vsel %vm2231, %v1617, -inf
    %v2749 = vsel %vm2231, %v2012, -inf
    %v2750 = vmax.f32 %v2748, %v2749
    %v2751 = vsel %vm2231, %v2009, -inf
    %v2752 = vsel %vm2231, %v1621, -inf
    %v2753 = vmax.f32 %v2751, %v2752
    %v2754 = vsel %vm2231, %v1618, -inf
    %v2755 = vsel %vm2231, %v2013, -inf
    %v2756 = vmax.f32 %v2754, %v2755
    %v2757 = vsel %vm2231, %v1622, -inf
    %v2758 = vsel %vm2231, %v2017, -inf
    %v2759 = vmax.f32 %v2757, %v2758
    %v2760 = vsel %vm2231, %v2014, -inf
    %v2761 = vsel %vm2231, %v1626, -inf
    %v2762 = vmax.f32 %v2760, %v2761
    %v2763 = vsel %vm2231, %v1623, -inf
    %v2764 = vsel %vm2231, %v2018, -inf
    %v2765 = vmax.f32 %v2763, %v2764
    %v2766 = vsel %vm2231, %v2015, -inf
    %v2767 = vsel %vm2231, %v1627, -inf
    %v2768 = vmax.f32 %v2766, %v2767
    %v2769 = vsel %vm2231, %v1624, -inf
    %v2770 = vsel %vm2231, %v2019, -inf
    %v2771 = vmax.f32 %v2769, %v2770
    %v2772 = vsel %vm2231, %v2016, -inf
    %v2773 = vsel %vm2231, %v1628, -inf
    %v2774 = vmax.f32 %v2772, %v2773
    %v2775 = vsel %vm2231, %v1625, -inf
    %v2776 = vsel %vm2231, %v2020, -inf
    %v2777 = vmax.f32 %v2775, %v2776
    %v2778 = vsel %vm2231, %v1629, -inf
    %v2779 = vsel %vm2231, %v2024, -inf
    %v2780 = vmax.f32 %v2778, %v2779
    %v2781 = vsel %vm2231, %v2021, -inf
    %v2782 = vsel %vm2231, %v1633, -inf
    %v2783 = vmax.f32 %v2781, %v2782
    %v2784 = vsel %vm2231, %v1630, -inf
    %v2785 = vsel %vm2231, %v2025, -inf
    %v2786 = vmax.f32 %v2784, %v2785
    %v2787 = vsel %vm2231, %v2022, -inf
    %v2788 = vsel %vm2231, %v1634, -inf
    %v2789 = vmax.f32 %v2787, %v2788
    %v2790 = vsel %vm2231, %v1631, -inf
    %v2791 = vsel %vm2231, %v2026, -inf
    %v2792 = vmax.f32 %v2790, %v2791
    %v2793 = vsel %vm2231, %v2023, -inf
    %v2794 = vsel %vm2231, %v1635, -inf
    %v2795 = vmax.f32 %v2793, %v2794
    %v2796 = vsel %vm2231, %v1632, -inf
    %v2797 = vsel %vm2231, %v2027, -inf
    %v2798 = vmax.f32 %v2796, %v2797
    %v2799 = vsel %vm2231, %v1636, -inf
    %v2800 = vsel %vm2231, %v2031, -inf
    %v2801 = vmax.f32 %v2799, %v2800
    %v2802 = vsel %vm2231, %v2028, -inf
    %v2803 = vsel %vm2231, %v1640, -inf
    %v2804 = vmax.f32 %v2802, %v2803
    %v2805 = vsel %vm2231, %v1637, -inf
    %v2806 = vsel %vm2231, %v2032, -inf
    %v2807 = vmax.f32 %v2805, %v2806
    %v2808 = vsel %vm2231, %v2029, -inf
    %v2809 = vsel %vm2231, %v1641, -inf
    %v2810 = vmax.f32 %v2808, %v2809
    %v2811 = vsel %vm2231, %v1638, -inf
    %v2812 = vsel %vm2231, %v2033, -inf
    %v2813 = vmax.f32 %v2811, %v2812
    %v2814 = vsel %vm2231, %v2030, -inf
    %v2815 = vsel %vm2231, %v1642, -inf
    %v2816 = vmax.f32 %v2814, %v2815
    %v2817 = vsel %vm2231, %v1639, -inf
    %v2818 = vsel %vm2231, %v2034, -inf
    %v2819 = vmax.f32 %v2817, %v2818
    %v3016 = vrot.slane %v2234, 2
    %v3017 = vrot.slane %v2237, 2
    %v3018 = vrot.slane %v2240, 2
    %v3019 = vrot.slane %v2243, 2
    %v3020 = vrot.slane %v2246, 2
    %v3021 = vrot.slane %v2249, 2
    %v3022 = vrot.slane %v2252, 2
    %v3023 = vrot.slane %v2255, 2
    %v3024 = vrot.slane %v2258, 2
    %v3025 = vrot.slane %v2261, 2
    %v3026 = vrot.slane %v2264, 2
    %v3027 = vrot.slane %v2267, 2
    %v3028 = vrot.slane %v2270, 2
    %v3029 = vrot.slane %v2273, 2
    %v3030 = vrot.slane %v2276, 2
    %v3031 = vrot.slane %v2279, 2
    %v3032 = vrot.slane %v2282, 2
    %v3033 = vrot.slane %v2285, 2
    %v3034 = vrot.slane %v2288, 2
    %v3035 = vrot.slane %v2291, 2
    %v3036 = vrot.slane %v2294, 2
    %v3037 = vrot.slane %v2297, 2
    %v3038 = vrot.slane %v2300, 2
    %v3039 = vrot.slane %v2303, 2
    %v3040 = vrot.slane %v2306, 2
    %v3041 = vrot.slane %v2309, 2
    %v3042 = vrot.slane %v2312, 2
    %v3043 = vrot.slane %v2315, 2
    %v3044 = vrot.slane %v2318, 2
    %v3045 = vrot.slane %v2321, 2
    %v3046 = vrot.slane %v2324, 2
    %v3047 = vrot.slane %v2327, 2
    %v3048 = vrot.slane %v2330, 2
    %v3049 = vrot.slane %v2333, 2
    %v3050 = vrot.slane %v2336, 2
    %v3051 = vrot.slane %v2339, 2
    %v3052 = vrot.slane %v2342, 2
    %v3053 = vrot.slane %v2345, 2
    %v3054 = vrot.slane %v2348, 2
    %v3055 = vrot.slane %v2351, 2
    %v3056 = vrot.slane %v2354, 2
    %v3057 = vrot.slane %v2357, 2
    %v3058 = vrot.slane %v2360, 2
    %v3059 = vrot.slane %v2363, 2
    %v3060 = vrot.slane %v2366, 2
    %v3061 = vrot.slane %v2369, 2
    %v3062 = vrot.slane %v2372, 2
    %v3063 = vrot.slane %v2375, 2
    %v3064 = vrot.slane %v2378, 2
    %v3065 = vrot.slane %v2381, 2
    %v3066 = vrot.slane %v2384, 2
    %v3067 = vrot.slane %v2387, 2
    %v3068 = vrot.slane %v2390, 2
    %v3069 = vrot.slane %v2393, 2
    %v3070 = vrot.slane %v2396, 2
    %v3071 = vrot.slane %v2399, 2
    %v3072 = vrot.slane %v2402, 2
    %v3073 = vrot.slane %v2405, 2
    %v3074 = vrot.slane %v2408, 2
    %v3075 = vrot.slane %v2411, 2
    %v3076 = vrot.slane %v2414, 2
    %v3077 = vrot.slane %v2417, 2
    %v3078 = vrot.slane %v2420, 2
    %v3079 = vrot.slane %v2423, 2
    %v3080 = vrot.slane %v2426, 2
    %v3081 = vrot.slane %v2429, 2
    %v3082 = vrot.slane %v2432, 2
    %v3083 = vrot.slane %v2435, 2
    %v3084 = vrot.slane %v2438, 2
    %v3085 = vrot.slane %v2441, 2
    %v3086 = vrot.slane %v2444, 2
    %v3087 = vrot.slane %v2447, 2
    %v3088 = vrot.slane %v2450, 2
    %v3089 = vrot.slane %v2453, 2
    %v3090 = vrot.slane %v2456, 2
    %v3091 = vrot.slane %v2459, 2
    %v3092 = vrot.slane %v2462, 2
    %v3093 = vrot.slane %v2465, 2
    %v3094 = vrot.slane %v2468, 2
    %v3095 = vrot.slane %v2471, 2
    %v3096 = vrot.slane %v2474, 2
    %v3097 = vrot.slane %v2477, 2
    %v3098 = vrot.slane %v2480, 2
    %v3099 = vrot.slane %v2483, 2
    %v3100 = vrot.slane %v2486, 2
    %v3101 = vrot.slane %v2489, 2
    %v3102 = vrot.slane %v2492, 2
    %v3103 = vrot.slane %v2495, 2
    %v3104 = vrot.slane %v2498, 2
    %v3105 = vrot.slane %v2501, 2
    %v3106 = vrot.slane %v2504, 2
    %v3107 = vrot.slane %v2507, 2
    %v3108 = vrot.slane %v2510, 2
    %v3109 = vrot.slane %v2513, 2
    %v3110 = vrot.slane %v2516, 2
    %v3111 = vrot.slane %v2519, 2
    %v3112 = vrot.slane %v2522, 2
    %v3113 = vrot.slane %v2525, 2
    %v3114 = vrot.slane %v2528, 2
    %v3115 = vrot.slane %v2531, 2
    %v3116 = vrot.slane %v2534, 2
    %v3117 = vrot.slane %v2537, 2
    %v3118 = vrot.slane %v2540, 2
    %v3119 = vrot.slane %v2543, 2
    %v3120 = vrot.slane %v2546, 2
    %v3121 = vrot.slane %v2549, 2
    %v3122 = vrot.slane %v2552, 2
    %v3123 = vrot.slane %v2555, 2
    %v3124 = vrot.slane %v2558, 2
    %v3125 = vrot.slane %v2561, 2
    %v3126 = vrot.slane %v2564, 2
    %v3127 = vrot.slane %v2567, 2
    %v3128 = vrot.slane %v2570, 2
    %v3129 = vrot.slane %v2573, 2
    %v3130 = vrot.slane %v2576, 2
    %v3131 = vrot.slane %v2579, 2
    %v3132 = vrot.slane %v2582, 2
    %v3133 = vrot.slane %v2585, 2
    %v3134 = vrot.slane %v2588, 2
    %v3135 = vrot.slane %v2591, 2
    %v3136 = vrot.slane %v2594, 2
    %v3137 = vrot.slane %v2597, 2
    %v3138 = vrot.slane %v2600, 2
    %v3139 = vrot.slane %v2603, 2
    %v3140 = vrot.slane %v2606, 2
    %v3141 = vrot.slane %v2609, 2
    %v3142 = vrot.slane %v2612, 2
    %v3143 = vrot.slane %v2615, 2
    %v3144 = vrot.slane %v2618, 2
    %v3145 = vrot.slane %v2621, 2
    %v3146 = vrot.slane %v2624, 2
    %v3147 = vrot.slane %v2627, 2
    %v3148 = vrot.slane %v2630, 2
    %v3149 = vrot.slane %v2633, 2
    %v3150 = vrot.slane %v2636, 2
    %v3151 = vrot.slane %v2639, 2
    %v3152 = vrot.slane %v2642, 2
    %v3153 = vrot.slane %v2645, 2
    %v3154 = vrot.slane %v2648, 2
    %v3155 = vrot.slane %v2651, 2
    %v3156 = vrot.slane %v2654, 2
    %v3157 = vrot.slane %v2657, 2
    %v3158 = vrot.slane %v2660, 2
    %v3159 = vrot.slane %v2663, 2
    %v3160 = vrot.slane %v2666, 2
    %v3161 = vrot.slane %v2669, 2
    %v3162 = vrot.slane %v2672, 2
    %v3163 = vrot.slane %v2675, 2
    %v3164 = vrot.slane %v2678, 2
    %v3165 = vrot.slane %v2681, 2
    %v3166 = vrot.slane %v2684, 2
    %v3167 = vrot.slane %v2687, 2
    %v3168 = vrot.slane %v2690, 2
    %v3169 = vrot.slane %v2693, 2
    %v3170 = vrot.slane %v2696, 2
    %v3171 = vrot.slane %v2699, 2
    %v3172 = vrot.slane %v2702, 2
    %v3173 = vrot.slane %v2705, 2
    %v3174 = vrot.slane %v2708, 2
    %v3175 = vrot.slane %v2711, 2
    %v3176 = vrot.slane %v2714, 2
    %v3177 = vrot.slane %v2717, 2
    %v3178 = vrot.slane %v2720, 2
    %v3179 = vrot.slane %v2723, 2
    %v3180 = vrot.slane %v2726, 2
    %v3181 = vrot.slane %v2729, 2
    %v3182 = vrot.slane %v2732, 2
    %v3183 = vrot.slane %v2735, 2
    %v3184 = vrot.slane %v2738, 2
    %v3185 = vrot.slane %v2741, 2
    %v3186 = vrot.slane %v2744, 2
    %v3187 = vrot.slane %v2747, 2
    %v3188 = vrot.slane %v2750, 2
    %v3189 = vrot.slane %v2753, 2
    %v3190 = vrot.slane %v2756, 2
    %v3191 = vrot.slane %v2759, 2
    %v3192 = vrot.slane %v2762, 2
    %v3193 = vrot.slane %v2765, 2
    %v3194 = vrot.slane %v2768, 2
    %v3195 = vrot.slane %v2771, 2
    %v3196 = vrot.slane %v2774, 2
    %v3197 = vrot.slane %v2777, 2
    %v3198 = vrot.slane %v2780, 2
    %v3199 = vrot.slane %v2783, 2
    %v3200 = vrot.slane %v2786, 2
    %v3201 = vrot.slane %v2789, 2
    %v3202 = vrot.slane %v2792, 2
    %v3203 = vrot.slane %v2795, 2
    %v3204 = vrot.slane %v2798, 2
    %v3205 = vrot.slane %v2801, 2
    %v3206 = vrot.slane %v2804, 2
    %v3207 = vrot.slane %v2807, 2
    %v3208 = vrot.slane %v2810, 2
    %v3209 = vrot.slane %v2813, 2
    %v3210 = vrot.slane %v2816, 2
    %v3211 = vrot.slane %v2819, 2
    %vm3212 = vcmask 1041408
    %v3213 = vsel %vm3212, %v2234, %v3016
    %vm3214 = vcmask 1043458
    %v3215 = vsel %vm3214, %v2234, %v3016
    %v3216 = vrot.slane %v3215, 2
    %v3217 = vsel %vm3212, %v2237, %v3017
    %v3218 = vsel %vm3214, %v2237, %v3017
    %v3219 = vrot.slane %v3218, 2
    %v3220 = vsel %vm3212, %v2240, %v3018
    %v3221 = vsel %vm3214, %v2240, %v3018
    %v3222 = vrot.slane %v3221, 2
    %v3223 = vsel %vm3212, %v2243, %v3019
    %v3224 = vsel %vm3214, %v2243, %v3019
    %v3225 = vrot.slane %v3224, 2
    %v3226 = vsel %vm3212, %v2246, %v3020
    %v3227 = vsel %vm3214, %v2246, %v3020
    %v3228 = vrot.slane %v3227, 2
    %v3229 = vsel %vm3212, %v2249, %v3021
    %v3230 = vsel %vm3214, %v2249, %v3021
    %v3231 = vrot.slane %v3230, 2
    %v3232 = vsel %vm3212, %v2252, %v3022
    %v3233 = vsel %vm3214, %v2252, %v3022
    %v3234 = vrot.slane %v3233, 2
    %v3235 = vsel %vm3212, %v2255, %v3023
    %v3236 = vsel %vm3214, %v2255, %v3023
    %v3237 = vrot.slane %v3236, 2
    %v3238 = vsel %vm3212, %v2258, %v3024
    %v3239 = vsel %vm3214, %v2258, %v3024
    %v3240 = vrot.slane %v3239, 2
    %v3241 = vsel %vm3212, %v2261, %v3025
    %v3242 = vsel %vm3214, %v2261, %v3025
    %v3243 = vrot.slane %v3242, 2
    %v3244 = vsel %vm3212, %v2264, %v3026
    %v3245 = vsel %vm3214, %v2264, %v3026
    %v3246 = vrot.slane %v3245, 2
    %v3247 = vsel %vm3212, %v2267, %v3027
    %v3248 = vsel %vm3214, %v2267, %v3027
    %v3249 = vrot.slane %v3248, 2
    %v3250 = vsel %vm3212, %v2270, %v3028
    %v3251 = vsel %vm3214, %v2270, %v3028
    %v3252 = vrot.slane %v3251, 2
    %v3253 = vsel %vm3212, %v2273, %v3029
    %v3254 = vsel %vm3214, %v2273, %v3029
    %v3255 = vrot.slane %v3254, 2
    %v3256 = vsel %vm3212, %v2276, %v3030
    %v3257 = vsel %vm3214, %v2276, %v3030
    %v3258 = vrot.slane %v3257, 2
    %v3259 = vsel %vm3212, %v2279, %v3031
    %v3260 = vsel %vm3214, %v2279, %v3031
    %v3261 = vrot.slane %v3260, 2
    %v3262 = vsel %vm3212, %v2282, %v3032
    %v3263 = vsel %vm3214, %v2282, %v3032
    %v3264 = vrot.slane %v3263, 2
    %v3265 = vsel %vm3212, %v2285, %v3033
    %v3266 = vsel %vm3214, %v2285, %v3033
    %v3267 = vrot.slane %v3266, 2
    %v3268 = vsel %vm3212, %v2288, %v3034
    %v3269 = vsel %vm3214, %v2288, %v3034
    %v3270 = vrot.slane %v3269, 2
    %v3271 = vsel %vm3212, %v2291, %v3035
    %v3272 = vsel %vm3214, %v2291, %v3035
    %v3273 = vrot.slane %v3272, 2
    %v3274 = vsel %vm3212, %v2294, %v3036
    %v3275 = vsel %vm3214, %v2294, %v3036
    %v3276 = vrot.slane %v3275, 2
    %v3277 = vsel %vm3212, %v2297, %v3037
    %v3278 = vsel %vm3214, %v2297, %v3037
    %v3279 = vrot.slane %v3278, 2
    %v3280 = vsel %vm3212, %v2300, %v3038
    %v3281 = vsel %vm3214, %v2300, %v3038
    %v3282 = vrot.slane %v3281, 2
    %v3283 = vsel %vm3212, %v2303, %v3039
    %v3284 = vsel %vm3214, %v2303, %v3039
    %v3285 = vrot.slane %v3284, 2
    %v3286 = vsel %vm3212, %v2306, %v3040
    %v3287 = vsel %vm3214, %v2306, %v3040
    %v3288 = vrot.slane %v3287, 2
    %v3289 = vsel %vm3212, %v2309, %v3041
    %v3290 = vsel %vm3214, %v2309, %v3041
    %v3291 = vrot.slane %v3290, 2
    %v3292 = vsel %vm3212, %v2312, %v3042
    %v3293 = vsel %vm3214, %v2312, %v3042
    %v3294 = vrot.slane %v3293, 2
    %v3295 = vsel %vm3212, %v2315, %v3043
    %v3296 = vsel %vm3214, %v2315, %v3043
    %v3297 = vrot.slane %v3296, 2
    %v3298 = vsel %vm3212, %v2318, %v3044
    %v3299 = vsel %vm3214, %v2318, %v3044
    %v3300 = vrot.slane %v3299, 2
    %v3301 = vsel %vm3212, %v2321, %v3045
    %v3302 = vsel %vm3214, %v2321, %v3045
    %v3303 = vrot.slane %v3302, 2
    %v3304 = vsel %vm3212, %v2324, %v3046
    %v3305 = vsel %vm3214, %v2324, %v3046
    %v3306 = vrot.slane %v3305, 2
    %v3307 = vsel %vm3212, %v2327, %v3047
    %v3308 = vsel %vm3214, %v2327, %v3047
    %v3309 = vrot.slane %v3308, 2
    %v3310 = vsel %vm3212, %v2330, %v3048
    %v3311 = vsel %vm3214, %v2330, %v3048
    %v3312 = vrot.slane %v3311, 2
    %v3313 = vsel %vm3212, %v2333, %v3049
    %v3314 = vsel %vm3214, %v2333, %v3049
    %v3315 = vrot.slane %v3314, 2
    %v3316 = vsel %vm3212, %v2336, %v3050
    %v3317 = vsel %vm3214, %v2336, %v3050
    %v3318 = vrot.slane %v3317, 2
    %v3319 = vsel %vm3212, %v2339, %v3051
    %v3320 = vsel %vm3214, %v2339, %v3051
    %v3321 = vrot.slane %v3320, 2
    %v3322 = vsel %vm3212, %v2342, %v3052
    %v3323 = vsel %vm3214, %v2342, %v3052
    %v3324 = vrot.slane %v3323, 2
    %v3325 = vsel %vm3212, %v2345, %v3053
    %v3326 = vsel %vm3214, %v2345, %v3053
    %v3327 = vrot.slane %v3326, 2
    %v3328 = vsel %vm3212, %v2348, %v3054
    %v3329 = vsel %vm3214, %v2348, %v3054
    %v3330 = vrot.slane %v3329, 2
    %v3331 = vsel %vm3212, %v2351, %v3055
    %v3332 = vsel %vm3214, %v2351, %v3055
    %v3333 = vrot.slane %v3332, 2
    %v3334 = vsel %vm3212, %v2354, %v3056
    %v3335 = vsel %vm3214, %v2354, %v3056
    %v3336 = vrot.slane %v3335, 2
    %v3337 = vsel %vm3212, %v2357, %v3057
    %v3338 = vsel %vm3214, %v2357, %v3057
    %v3339 = vrot.slane %v3338, 2
    %v3340 = vsel %vm3212, %v2360, %v3058
    %v3341 = vsel %vm3214, %v2360, %v3058
    %v3342 = vrot.slane %v3341, 2
    %v3343 = vsel %vm3212, %v2363, %v3059
    %v3344 = vsel %vm3214, %v2363, %v3059
    %v3345 = vrot.slane %v3344, 2
    %v3346 = vsel %vm3212, %v2366, %v3060
    %v3347 = vsel %vm3214, %v2366, %v3060
    %v3348 = vrot.slane %v3347, 2
    %v3349 = vsel %vm3212, %v2369, %v3061
    %v3350 = vsel %vm3214, %v2369, %v3061
    %v3351 = vrot.slane %v3350, 2
    %v3352 = vsel %vm3212, %v2372, %v3062
    %v3353 = vsel %vm3214, %v2372, %v3062
    %v3354 = vrot.slane %v3353, 2
    %v3355 = vsel %vm3212, %v2375, %v3063
    %v3356 = vsel %vm3214, %v2375, %v3063
    %v3357 = vrot.slane %v3356, 2
    %v3358 = vsel %vm3212, %v2378, %v3064
    %v3359 = vsel %vm3214, %v2378, %v3064
    %v3360 = vrot.slane %v3359, 2
    %v3361 = vsel %vm3212, %v2381, %v3065
    %v3362 = vsel %vm3214, %v2381, %v3065
    %v3363 = vrot.slane %v3362, 2
    %v3364 = vsel %vm3212, %v2384, %v3066
    %v3365 = vsel %vm3214, %v2384, %v3066
    %v3366 = vrot.slane %v3365, 2
    %v3367 = vsel %vm3212, %v2387, %v3067
    %v3368 = vsel %vm3214, %v2387, %v3067
    %v3369 = vrot.slane %v3368, 2
    %v3370 = vsel %vm3212, %v2390, %v3068
    %v3371 = vsel %vm3214, %v2390, %v3068
    %v3372 = vrot.slane %v3371, 2
    %v3373 = vsel %vm3212, %v2393, %v3069
    %v3374 = vsel %vm3214, %v2393, %v3069
    %v3375 = vrot.slane %v3374, 2
    %v3376 = vsel %vm3212, %v2396, %v3070
    %v3377 = vsel %vm3214, %v2396, %v3070
    %v3378 = vrot.slane %v3377, 2
    %v3379 = vsel %vm3212, %v2399, %v3071
    %v3380 = vsel %vm3214, %v2399, %v3071
    %v3381 = vrot.slane %v3380, 2
    %v3382 = vsel %vm3212, %v2402, %v3072
    %v3383 = vsel %vm3214, %v2402, %v3072
    %v3384 = vrot.slane %v3383, 2
    %v3385 = vsel %vm3212, %v2405, %v3073
    %v3386 = vsel %vm3214, %v2405, %v3073
    %v3387 = vrot.slane %v3386, 2
    %v3388 = vsel %vm3212, %v2408, %v3074
    %v3389 = vsel %vm3214, %v2408, %v3074
    %v3390 = vrot.slane %v3389, 2
    %v3391 = vsel %vm3212, %v2411, %v3075
    %v3392 = vsel %vm3214, %v2411, %v3075
    %v3393 = vrot.slane %v3392, 2
    %v3394 = vsel %vm3212, %v2414, %v3076
    %v3395 = vsel %vm3214, %v2414, %v3076
    %v3396 = vrot.slane %v3395, 2
    %v3397 = vsel %vm3212, %v2417, %v3077
    %v3398 = vsel %vm3214, %v2417, %v3077
    %v3399 = vrot.slane %v3398, 2
    %v3400 = vsel %vm3212, %v2420, %v3078
    %v3401 = vsel %vm3214, %v2420, %v3078
    %v3402 = vrot.slane %v3401, 2
    %v3403 = vsel %vm3212, %v2423, %v3079
    %v3404 = vsel %vm3214, %v2423, %v3079
    %v3405 = vrot.slane %v3404, 2
    %v3406 = vsel %vm3212, %v2426, %v3080
    %v3407 = vsel %vm3214, %v2426, %v3080
    %v3408 = vrot.slane %v3407, 2
    %v3409 = vsel %vm3212, %v2429, %v3081
    %v3410 = vsel %vm3214, %v2429, %v3081
    %v3411 = vrot.slane %v3410, 2
    %v3412 = vsel %vm3212, %v2432, %v3082
    %v3413 = vsel %vm3214, %v2432, %v3082
    %v3414 = vrot.slane %v3413, 2
    %v3415 = vsel %vm3212, %v2435, %v3083
    %v3416 = vsel %vm3214, %v2435, %v3083
    %v3417 = vrot.slane %v3416, 2
    %v3418 = vsel %vm3212, %v2438, %v3084
    %v3419 = vsel %vm3214, %v2438, %v3084
    %v3420 = vrot.slane %v3419, 2
    %v3421 = vsel %vm3212, %v2441, %v3085
    %v3422 = vsel %vm3214, %v2441, %v3085
    %v3423 = vrot.slane %v3422, 2
    %v3424 = vsel %vm3212, %v2444, %v3086
    %v3425 = vsel %vm3214, %v2444, %v3086
    %v3426 = vrot.slane %v3425, 2
    %v3427 = vsel %vm3212, %v2447, %v3087
    %v3428 = vsel %vm3214, %v2447, %v3087
    %v3429 = vrot.slane %v3428, 2
    %v3430 = vsel %vm3212, %v2450, %v3088
    %v3431 = vsel %vm3214, %v2450, %v3088
    %v3432 = vrot.slane %v3431, 2
    %v3433 = vsel %vm3212, %v2453, %v3089
    %v3434 = vsel %vm3214, %v2453, %v3089
    %v3435 = vrot.slane %v3434, 2
    %v3436 = vsel %vm3212, %v2456, %v3090
    %v3437 = vsel %vm3214, %v2456, %v3090
    %v3438 = vrot.slane %v3437, 2
    %v3439 = vsel %vm3212, %v2459, %v3091
    %v3440 = vsel %vm3214, %v2459, %v3091
    %v3441 = vrot.slane %v3440, 2
    %v3442 = vsel %vm3212, %v2462, %v3092
    %v3443 = vsel %vm3214, %v2462, %v3092
    %v3444 = vrot.slane %v3443, 2
    %v3445 = vsel %vm3212, %v2465, %v3093
    %v3446 = vsel %vm3214, %v2465, %v3093
    %v3447 = vrot.slane %v3446, 2
    %v3448 = vsel %vm3212, %v2468, %v3094
    %v3449 = vsel %vm3214, %v2468, %v3094
    %v3450 = vrot.slane %v3449, 2
    %v3451 = vsel %vm3212, %v2471, %v3095
    %v3452 = vsel %vm3214, %v2471, %v3095
    %v3453 = vrot.slane %v3452, 2
    %v3454 = vsel %vm3212, %v2474, %v3096
    %v3455 = vsel %vm3214, %v2474, %v3096
    %v3456 = vrot.slane %v3455, 2
    %v3457 = vsel %vm3212, %v2477, %v3097
    %v3458 = vsel %vm3214, %v2477, %v3097
    %v3459 = vrot.slane %v3458, 2
    %v3460 = vsel %vm3212, %v2480, %v3098
    %v3461 = vsel %vm3214, %v2480, %v3098
    %v3462 = vrot.slane %v3461, 2
    %v3463 = vsel %vm3212, %v2483, %v3099
    %v3464 = vsel %vm3214, %v2483, %v3099
    %v3465 = vrot.slane %v3464, 2
    %v3466 = vsel %vm3212, %v2486, %v3100
    %v3467 = vsel %vm3214, %v2486, %v3100
    %v3468 = vrot.slane %v3467, 2
    %v3469 = vsel %vm3212, %v2489, %v3101
    %v3470 = vsel %vm3214, %v2489, %v3101
    %v3471 = vrot.slane %v3470, 2
    %v3472 = vsel %vm3212, %v2492, %v3102
    %v3473 = vsel %vm3214, %v2492, %v3102
    %v3474 = vrot.slane %v3473, 2
    %v3475 = vsel %vm3212, %v2495, %v3103
    %v3476 = vsel %vm3214, %v2495, %v3103
    %v3477 = vrot.slane %v3476, 2
    %v3478 = vsel %vm3212, %v2498, %v3104
    %v3479 = vsel %vm3214, %v2498, %v3104
    %v3480 = vrot.slane %v3479, 2
    %v3481 = vsel %vm3212, %v2501, %v3105
    %v3482 = vsel %vm3214, %v2501, %v3105
    %v3483 = vrot.slane %v3482, 2
    %v3484 = vsel %vm3212, %v2504, %v3106
    %v3485 = vsel %vm3214, %v2504, %v3106
    %v3486 = vrot.slane %v3485, 2
    %v3487 = vsel %vm3212, %v2507, %v3107
    %v3488 = vsel %vm3214, %v2507, %v3107
    %v3489 = vrot.slane %v3488, 2
    %v3490 = vsel %vm3212, %v2510, %v3108
    %v3491 = vsel %vm3214, %v2510, %v3108
    %v3492 = vrot.slane %v3491, 2
    %v3493 = vsel %vm3212, %v2513, %v3109
    %v3494 = vsel %vm3214, %v2513, %v3109
    %v3495 = vrot.slane %v3494, 2
    %v3496 = vsel %vm3212, %v2516, %v3110
    %v3497 = vsel %vm3214, %v2516, %v3110
    %v3498 = vrot.slane %v3497, 2
    %v3499 = vsel %vm3212, %v2519, %v3111
    %v3500 = vsel %vm3214, %v2519, %v3111
    %v3501 = vrot.slane %v3500, 2
    %v3502 = vsel %vm3212, %v2522, %v3112
    %v3503 = vsel %vm3214, %v2522, %v3112
    %v3504 = vrot.slane %v3503, 2
    %v3505 = vsel %vm3212, %v2525, %v3113
    %v3506 = vsel %vm3214, %v2525, %v3113
    %v3507 = vrot.slane %v3506, 2
    %v3508 = vsel %vm3212, %v2528, %v3114
    %v3509 = vsel %vm3214, %v2528, %v3114
    %v3510 = vrot.slane %v3509, 2
    %v3511 = vsel %vm3212, %v2531, %v3115
    %v3512 = vsel %vm3214, %v2531, %v3115
    %v3513 = vrot.slane %v3512, 2
    %v3514 = vsel %vm3212, %v2534, %v3116
    %v3515 = vsel %vm3214, %v2534, %v3116
    %v3516 = vrot.slane %v3515, 2
    %v3517 = vsel %vm3212, %v2537, %v3117
    %v3518 = vsel %vm3214, %v2537, %v3117
    %v3519 = vrot.slane %v3518, 2
    %v3520 = vsel %vm3212, %v2540, %v3118
    %v3521 = vsel %vm3214, %v2540, %v3118
    %v3522 = vrot.slane %v3521, 2
    %v3523 = vsel %vm3212, %v2543, %v3119
    %v3524 = vsel %vm3214, %v2543, %v3119
    %v3525 = vrot.slane %v3524, 2
    %v3526 = vsel %vm3212, %v2546, %v3120
    %v3527 = vsel %vm3214, %v2546, %v3120
    %v3528 = vrot.slane %v3527, 2
    %v3529 = vsel %vm3212, %v2549, %v3121
    %v3530 = vsel %vm3214, %v2549, %v3121
    %v3531 = vrot.slane %v3530, 2
    %v3532 = vsel %vm3212, %v2552, %v3122
    %v3533 = vsel %vm3214, %v2552, %v3122
    %v3534 = vrot.slane %v3533, 2
    %v3535 = vsel %vm3212, %v2555, %v3123
    %v3536 = vsel %vm3214, %v2555, %v3123
    %v3537 = vrot.slane %v3536, 2
    %v3538 = vsel %vm3212, %v2558, %v3124
    %v3539 = vsel %vm3214, %v2558, %v3124
    %v3540 = vrot.slane %v3539, 2
    %v3541 = vsel %vm3212, %v2561, %v3125
    %v3542 = vsel %vm3214, %v2561, %v3125
    %v3543 = vrot.slane %v3542, 2
    %v3544 = vsel %vm3212, %v2564, %v3126
    %v3545 = vsel %vm3214, %v2564, %v3126
    %v3546 = vrot.slane %v3545, 2
    %v3547 = vsel %vm3212, %v2567, %v3127
    %v3548 = vsel %vm3214, %v2567, %v3127
    %v3549 = vrot.slane %v3548, 2
    %v3550 = vsel %vm3212, %v2570, %v3128
    %v3551 = vsel %vm3214, %v2570, %v3128
    %v3552 = vrot.slane %v3551, 2
    %v3553 = vsel %vm3212, %v2573, %v3129
    %v3554 = vsel %vm3214, %v2573, %v3129
    %v3555 = vrot.slane %v3554, 2
    %v3556 = vsel %vm3212, %v2576, %v3130
    %v3557 = vsel %vm3214, %v2576, %v3130
    %v3558 = vrot.slane %v3557, 2
    %v3559 = vsel %vm3212, %v2579, %v3131
    %v3560 = vsel %vm3214, %v2579, %v3131
    %v3561 = vrot.slane %v3560, 2
    %v3562 = vsel %vm3212, %v2582, %v3132
    %v3563 = vsel %vm3214, %v2582, %v3132
    %v3564 = vrot.slane %v3563, 2
    %v3565 = vsel %vm3212, %v2585, %v3133
    %v3566 = vsel %vm3214, %v2585, %v3133
    %v3567 = vrot.slane %v3566, 2
    %v3568 = vsel %vm3212, %v2588, %v3134
    %v3569 = vsel %vm3214, %v2588, %v3134
    %v3570 = vrot.slane %v3569, 2
    %v3571 = vsel %vm3212, %v2591, %v3135
    %v3572 = vsel %vm3214, %v2591, %v3135
    %v3573 = vrot.slane %v3572, 2
    %v3574 = vsel %vm3212, %v2594, %v3136
    %v3575 = vsel %vm3214, %v2594, %v3136
    %v3576 = vrot.slane %v3575, 2
    %v3577 = vsel %vm3212, %v2597, %v3137
    %v3578 = vsel %vm3214, %v2597, %v3137
    %v3579 = vrot.slane %v3578, 2
    %v3580 = vsel %vm3212, %v2600, %v3138
    %v3581 = vsel %vm3214, %v2600, %v3138
    %v3582 = vrot.slane %v3581, 2
    %v3583 = vsel %vm3212, %v2603, %v3139
    %v3584 = vsel %vm3214, %v2603, %v3139
    %v3585 = vrot.slane %v3584, 2
    %v3586 = vsel %vm3212, %v2606, %v3140
    %v3587 = vsel %vm3214, %v2606, %v3140
    %v3588 = vrot.slane %v3587, 2
    %v3589 = vsel %vm3212, %v2609, %v3141
    %v3590 = vsel %vm3214, %v2609, %v3141
    %v3591 = vrot.slane %v3590, 2
    %v3592 = vsel %vm3212, %v2612, %v3142
    %v3593 = vsel %vm3214, %v2612, %v3142
    %v3594 = vrot.slane %v3593, 2
    %v3595 = vsel %vm3212, %v2615, %v3143
    %v3596 = vsel %vm3214, %v2615, %v3143
    %v3597 = vrot.slane %v3596, 2
    %v3598 = vsel %vm3212, %v2618, %v3144
    %v3599 = vsel %vm3214, %v2618, %v3144
    %v3600 = vrot.slane %v3599, 2
    %v3601 = vsel %vm3212, %v2621, %v3145
    %v3602 = vsel %vm3214, %v2621, %v3145
    %v3603 = vrot.slane %v3602, 2
    %v3604 = vsel %vm3212, %v2624, %v3146
    %v3605 = vsel %vm3214, %v2624, %v3146
    %v3606 = vrot.slane %v3605, 2
    %v3607 = vsel %vm3212, %v2627, %v3147
    %v3608 = vsel %vm3214, %v2627, %v3147
    %v3609 = vrot.slane %v3608, 2
    %v3610 = vsel %vm3212, %v2630, %v3148
    %v3611 = vsel %vm3214, %v2630, %v3148
    %v3612 = vrot.slane %v3611, 2
    %v3613 = vsel %vm3212, %v2633, %v3149
    %v3614 = vsel %vm3214, %v2633, %v3149
    %v3615 = vrot.slane %v3614, 2
    %v3616 = vsel %vm3212, %v2636, %v3150
    %v3617 = vsel %vm3214, %v2636, %v3150
    %v3618 = vrot.slane %v3617, 2
    %v3619 = vsel %vm3212, %v2639, %v3151
    %v3620 = vsel %vm3214, %v2639, %v3151
    %v3621 = vrot.slane %v3620, 2
    %v3622 = vsel %vm3212, %v2642, %v3152
    %v3623 = vsel %vm3214, %v2642, %v3152
    %v3624 = vrot.slane %v3623, 2
    %v3625 = vsel %vm3212, %v2645, %v3153
    %v3626 = vsel %vm3214, %v2645, %v3153
    %v3627 = vrot.slane %v3626, 2
    %v3628 = vsel %vm3212, %v2648, %v3154
    %v3629 = vsel %vm3214, %v2648, %v3154
    %v3630 = vrot.slane %v3629, 2
    %v3631 = vsel %vm3212, %v2651, %v3155
    %v3632 = vsel %vm3214, %v2651, %v3155
    %v3633 = vrot.slane %v3632, 2
    %v3634 = vsel %vm3212, %v2654, %v3156
    %v3635 = vsel %vm3214, %v2654, %v3156
    %v3636 = vrot.slane %v3635, 2
    %v3637 = vsel %vm3212, %v2657, %v3157
    %v3638 = vsel %vm3214, %v2657, %v3157
    %v3639 = vrot.slane %v3638, 2
    %v3640 = vsel %vm3212, %v2660, %v3158
    %v3641 = vsel %vm3214, %v2660, %v3158
    %v3642 = vrot.slane %v3641, 2
    %v3643 = vsel %vm3212, %v2663, %v3159
    %v3644 = vsel %vm3214, %v2663, %v3159
    %v3645 = vrot.slane %v3644, 2
    %v3646 = vsel %vm3212, %v2666, %v3160
    %v3647 = vsel %vm3214, %v2666, %v3160
    %v3648 = vrot.slane %v3647, 2
    %v3649 = vsel %vm3212, %v2669, %v3161
    %v3650 = vsel %vm3214, %v2669, %v3161
    %v3651 = vrot.slane %v3650, 2
    %v3652 = vsel %vm3212, %v2672, %v3162
    %v3653 = vsel %vm3214, %v2672, %v3162
    %v3654 = vrot.slane %v3653, 2
    %v3655 = vsel %vm3212, %v2675, %v3163
    %v3656 = vsel %vm3214, %v2675, %v3163
    %v3657 = vrot.slane %v3656, 2
    %v3658 = vsel %vm3212, %v2678, %v3164
    %v3659 = vsel %vm3214, %v2678, %v3164
    %v3660 = vrot.slane %v3659, 2
    %v3661 = vsel %vm3212, %v2681, %v3165
    %v3662 = vsel %vm3214, %v2681, %v3165
    %v3663 = vrot.slane %v3662, 2
    %v3664 = vsel %vm3212, %v2684, %v3166
    %v3665 = vsel %vm3214, %v2684, %v3166
    %v3666 = vrot.slane %v3665, 2
    %v3667 = vsel %vm3212, %v2687, %v3167
    %v3668 = vsel %vm3214, %v2687, %v3167
    %v3669 = vrot.slane %v3668, 2
    %v3670 = vsel %vm3212, %v2690, %v3168
    %v3671 = vsel %vm3214, %v2690, %v3168
    %v3672 = vrot.slane %v3671, 2
    %v3673 = vsel %vm3212, %v2693, %v3169
    %v3674 = vsel %vm3214, %v2693, %v3169
    %v3675 = vrot.slane %v3674, 2
    %v3676 = vsel %vm3212, %v2696, %v3170
    %v3677 = vsel %vm3214, %v2696, %v3170
    %v3678 = vrot.slane %v3677, 2
    %v3679 = vsel %vm3212, %v2699, %v3171
    %v3680 = vsel %vm3214, %v2699, %v3171
    %v3681 = vrot.slane %v3680, 2
    %v3682 = vsel %vm3212, %v2702, %v3172
    %v3683 = vsel %vm3214, %v2702, %v3172
    %v3684 = vrot.slane %v3683, 2
    %v3685 = vsel %vm3212, %v2705, %v3173
    %v3686 = vsel %vm3214, %v2705, %v3173
    %v3687 = vrot.slane %v3686, 2
    %v3688 = vsel %vm3212, %v2708, %v3174
    %v3689 = vsel %vm3214, %v2708, %v3174
    %v3690 = vrot.slane %v3689, 2
    %v3691 = vsel %vm3212, %v2711, %v3175
    %v3692 = vsel %vm3214, %v2711, %v3175
    %v3693 = vrot.slane %v3692, 2
    %v3694 = vsel %vm3212, %v2714, %v3176
    %v3695 = vsel %vm3214, %v2714, %v3176
    %v3696 = vrot.slane %v3695, 2
    %v3697 = vsel %vm3212, %v2717, %v3177
    %v3698 = vsel %vm3214, %v2717, %v3177
    %v3699 = vrot.slane %v3698, 2
    %v3700 = vsel %vm3212, %v2720, %v3178
    %v3701 = vsel %vm3214, %v2720, %v3178
    %v3702 = vrot.slane %v3701, 2
    %v3703 = vsel %vm3212, %v2723, %v3179
    %v3704 = vsel %vm3214, %v2723, %v3179
    %v3705 = vrot.slane %v3704, 2
    %v3706 = vsel %vm3212, %v2726, %v3180
    %v3707 = vsel %vm3214, %v2726, %v3180
    %v3708 = vrot.slane %v3707, 2
    %v3709 = vsel %vm3212, %v2729, %v3181
    %v3710 = vsel %vm3214, %v2729, %v3181
    %v3711 = vrot.slane %v3710, 2
    %v3712 = vsel %vm3212, %v2732, %v3182
    %v3713 = vsel %vm3214, %v2732, %v3182
    %v3714 = vrot.slane %v3713, 2
    %v3715 = vsel %vm3212, %v2735, %v3183
    %v3716 = vsel %vm3214, %v2735, %v3183
    %v3717 = vrot.slane %v3716, 2
    %v3718 = vsel %vm3212, %v2738, %v3184
    %v3719 = vsel %vm3214, %v2738, %v3184
    %v3720 = vrot.slane %v3719, 2
    %v3721 = vsel %vm3212, %v2741, %v3185
    %v3722 = vsel %vm3214, %v2741, %v3185
    %v3723 = vrot.slane %v3722, 2
    %v3724 = vsel %vm3212, %v2744, %v3186
    %v3725 = vsel %vm3214, %v2744, %v3186
    %v3726 = vrot.slane %v3725, 2
    %v3727 = vsel %vm3212, %v2747, %v3187
    %v3728 = vsel %vm3214, %v2747, %v3187
    %v3729 = vrot.slane %v3728, 2
    %v3730 = vsel %vm3212, %v2750, %v3188
    %v3731 = vsel %vm3214, %v2750, %v3188
    %v3732 = vrot.slane %v3731, 2
    %v3733 = vsel %vm3212, %v2753, %v3189
    %v3734 = vsel %vm3214, %v2753, %v3189
    %v3735 = vrot.slane %v3734, 2
    %v3736 = vsel %vm3212, %v2756, %v3190
    %v3737 = vsel %vm3214, %v2756, %v3190
    %v3738 = vrot.slane %v3737, 2
    %v3739 = vsel %vm3212, %v2759, %v3191
    %v3740 = vsel %vm3214, %v2759, %v3191
    %v3741 = vrot.slane %v3740, 2
    %v3742 = vsel %vm3212, %v2762, %v3192
    %v3743 = vsel %vm3214, %v2762, %v3192
    %v3744 = vrot.slane %v3743, 2
    %v3745 = vsel %vm3212, %v2765, %v3193
    %v3746 = vsel %vm3214, %v2765, %v3193
    %v3747 = vrot.slane %v3746, 2
    %v3748 = vsel %vm3212, %v2768, %v3194
    %v3749 = vsel %vm3214, %v2768, %v3194
    %v3750 = vrot.slane %v3749, 2
    %v3751 = vsel %vm3212, %v2771, %v3195
    %v3752 = vsel %vm3214, %v2771, %v3195
    %v3753 = vrot.slane %v3752, 2
    %v3754 = vsel %vm3212, %v2774, %v3196
    %v3755 = vsel %vm3214, %v2774, %v3196
    %v3756 = vrot.slane %v3755, 2
    %v3757 = vsel %vm3212, %v2777, %v3197
    %v3758 = vsel %vm3214, %v2777, %v3197
    %v3759 = vrot.slane %v3758, 2
    %v3760 = vsel %vm3212, %v2780, %v3198
    %v3761 = vsel %vm3214, %v2780, %v3198
    %v3762 = vrot.slane %v3761, 2
    %v3763 = vsel %vm3212, %v2783, %v3199
    %v3764 = vsel %vm3214, %v2783, %v3199
    %v3765 = vrot.slane %v3764, 2
    %v3766 = vsel %vm3212, %v2786, %v3200
    %v3767 = vsel %vm3214, %v2786, %v3200
    %v3768 = vrot.slane %v3767, 2
    %v3769 = vsel %vm3212, %v2789, %v3201
    %v3770 = vsel %vm3214, %v2789, %v3201
    %v3771 = vrot.slane %v3770, 2
    %v3772 = vsel %vm3212, %v2792, %v3202
    %v3773 = vsel %vm3214, %v2792, %v3202
    %v3774 = vrot.slane %v3773, 2
    %v3775 = vsel %vm3212, %v2795, %v3203
    %v3776 = vsel %vm3214, %v2795, %v3203
    %v3777 = vrot.slane %v3776, 2
    %v3778 = vsel %vm3212, %v2798, %v3204
    %v3779 = vsel %vm3214, %v2798, %v3204
    %v3780 = vrot.slane %v3779, 2
    %v3781 = vsel %vm3212, %v2801, %v3205
    %v3782 = vsel %vm3214, %v2801, %v3205
    %v3783 = vrot.slane %v3782, 2
    %v3784 = vsel %vm3212, %v2804, %v3206
    %v3785 = vsel %vm3214, %v2804, %v3206
    %v3786 = vrot.slane %v3785, 2
    %v3787 = vsel %vm3212, %v2807, %v3207
    %v3788 = vsel %vm3214, %v2807, %v3207
    %v3789 = vrot.slane %v3788, 2
    %v3790 = vsel %vm3212, %v2810, %v3208
    %v3791 = vsel %vm3214, %v2810, %v3208
    %v3792 = vrot.slane %v3791, 2
    %v3793 = vsel %vm3212, %v2813, %v3209
    %v3794 = vsel %vm3214, %v2813, %v3209
    %v3795 = vrot.slane %v3794, 2
    %v3796 = vsel %vm3212, %v2816, %v3210
    %v3797 = vsel %vm3214, %v2816, %v3210
    %v3798 = vrot.slane %v3797, 2
    %v3799 = vsel %vm3212, %v2819, %v3211
    %v3800 = vsel %vm3214, %v2819, %v3211
    %v3801 = vrot.slane %v3800, 2
    %vm4194 = vcmask 41984
    %v4195 = vsel %vm4194, %v3213, -inf
    %v4196 = vrot.slane %v4195, 4
    %v4197 = vmax.f32 %v4195, %v4196
    %v4198 = vrot.slane %v4197, 2
    %v4199 = vmax.f32 %v4197, %v4198
    %v4200 = vrot.slane %v4199, 1
    %v4201 = vmax.f32 %v4199, %v4200
    %v4202 = vsel %vm4194, %v3216, -inf
    %v4203 = vrot.slane %v4202, 4
    %v4204 = vmax.f32 %v4202, %v4203
    %v4205 = vrot.slane %v4204, 2
    %v4206 = vmax.f32 %v4204, %v4205
    %v4207 = vrot.slane %v4206, 1
    %v4208 = vmax.f32 %v4206, %v4207
    %v4209 = vsel %vm4194, %v3217, -inf
    %v4210 = vrot.slane %v4209, 4
    %v4211 = vmax.f32 %v4209, %v4210
    %v4212 = vrot.slane %v4211, 2
    %v4213 = vmax.f32 %v4211, %v4212
    %v4214 = vrot.slane %v4213, 1
    %v4215 = vmax.f32 %v4213, %v4214
    %v4216 = vsel %vm4194, %v3219, -inf
    %v4217 = vrot.slane %v4216, 4
    %v4218 = vmax.f32 %v4216, %v4217
    %v4219 = vrot.slane %v4218, 2
    %v4220 = vmax.f32 %v4218, %v4219
    %v4221 = vrot.slane %v4220, 1
    %v4222 = vmax.f32 %v4220, %v4221
    %v4223 = vsel %vm4194, %v3220, -inf
    %v4224 = vrot.slane %v4223, 4
    %v4225 = vmax.f32 %v4223, %v4224
    %v4226 = vrot.slane %v4225, 2
    %v4227 = vmax.f32 %v4225, %v4226
    %v4228 = vrot.slane %v4227, 1
    %v4229 = vmax.f32 %v4227, %v4228
    %v4230 = vsel %vm4194, %v3222, -inf
    %v4231 = vrot.slane %v4230, 4
    %v4232 = vmax.f32 %v4230, %v4231
    %v4233 = vrot.slane %v4232, 2
    %v4234 = vmax.f32 %v4232, %v4233
    %v4235 = vrot.slane %v4234, 1
    %v4236 = vmax.f32 %v4234, %v4235
    %v4237 = vsel %vm4194, %v3223, -inf
    %v4238 = vrot.slane %v4237, 4
    %v4239 = vmax.f32 %v4237, %v4238
    %v4240 = vrot.slane %v4239, 2
    %v4241 = vmax.f32 %v4239, %v4240
    %v4242 = vrot.slane %v4241, 1
    %v4243 = vmax.f32 %v4241, %v4242
    %v4244 = vsel %vm4194, %v3225, -inf
    %v4245 = vrot.slane %v4244, 4
    %v4246 = vmax.f32 %v4244, %v4245
    %v4247 = vrot.slane %v4246, 2
    %v4248 = vmax.f32 %v4246, %v4247
    %v4249 = vrot.slane %v4248, 1
    %v4250 = vmax.f32 %v4248, %v4249
    %v4251 = vsel %vm4194, %v3226, -inf
    %v4252 = vrot.slane %v4251, 4
    %v4253 = vmax.f32 %v4251, %v4252
    %v4254 = vrot.slane %v4253, 2
    %v4255 = vmax.f32 %v4253, %v4254
    %v4256 = vrot.slane %v4255, 1
    %v4257 = vmax.f32 %v4255, %v4256
    %v4258 = vsel %vm4194, %v3228, -inf
    %v4259 = vrot.slane %v4258, 4
    %v4260 = vmax.f32 %v4258, %v4259
    %v4261 = vrot.slane %v4260, 2
    %v4262 = vmax.f32 %v4260, %v4261
    %v4263 = vrot.slane %v4262, 1
    %v4264 = vmax.f32 %v4262, %v4263
    %v4265 = vsel %vm4194, %v3229, -inf
    %v4266 = vrot.slane %v4265, 4
    %v4267 = vmax.f32 %v4265, %v4266
    %v4268 = vrot.slane %v4267, 2
    %v4269 = vmax.f32 %v4267, %v4268
    %v4270 = vrot.slane %v4269, 1
    %v4271 = vmax.f32 %v4269, %v4270
    %v4272 = vsel %vm4194, %v3231, -inf
    %v4273 = vrot.slane %v4272, 4
    %v4274 = vmax.f32 %v4272, %v4273
    %v4275 = vrot.slane %v4274, 2
    %v4276 = vmax.f32 %v4274, %v4275
    %v4277 = vrot.slane %v4276, 1
    %v4278 = vmax.f32 %v4276, %v4277
    %v4279 = vsel %vm4194, %v3232, -inf
    %v4280 = vrot.slane %v4279, 4
    %v4281 = vmax.f32 %v4279, %v4280
    %v4282 = vrot.slane %v4281, 2
    %v4283 = vmax.f32 %v4281, %v4282
    %v4284 = vrot.slane %v4283, 1
    %v4285 = vmax.f32 %v4283, %v4284
    %v4286 = vsel %vm4194, %v3234, -inf
    %v4287 = vrot.slane %v4286, 4
    %v4288 = vmax.f32 %v4286, %v4287
    %v4289 = vrot.slane %v4288, 2
    %v4290 = vmax.f32 %v4288, %v4289
    %v4291 = vrot.slane %v4290, 1
    %v4292 = vmax.f32 %v4290, %v4291
    %v4293 = vsel %vm4194, %v3235, -inf
    %v4294 = vrot.slane %v4293, 4
    %v4295 = vmax.f32 %v4293, %v4294
    %v4296 = vrot.slane %v4295, 2
    %v4297 = vmax.f32 %v4295, %v4296
    %v4298 = vrot.slane %v4297, 1
    %v4299 = vmax.f32 %v4297, %v4298
    %v4300 = vsel %vm4194, %v3237, -inf
    %v4301 = vrot.slane %v4300, 4
    %v4302 = vmax.f32 %v4300, %v4301
    %v4303 = vrot.slane %v4302, 2
    %v4304 = vmax.f32 %v4302, %v4303
    %v4305 = vrot.slane %v4304, 1
    %v4306 = vmax.f32 %v4304, %v4305
    %v4307 = vsel %vm4194, %v3238, -inf
    %v4308 = vrot.slane %v4307, 4
    %v4309 = vmax.f32 %v4307, %v4308
    %v4310 = vrot.slane %v4309, 2
    %v4311 = vmax.f32 %v4309, %v4310
    %v4312 = vrot.slane %v4311, 1
    %v4313 = vmax.f32 %v4311, %v4312
    %v4314 = vsel %vm4194, %v3240, -inf
    %v4315 = vrot.slane %v4314, 4
    %v4316 = vmax.f32 %v4314, %v4315
    %v4317 = vrot.slane %v4316, 2
    %v4318 = vmax.f32 %v4316, %v4317
    %v4319 = vrot.slane %v4318, 1
    %v4320 = vmax.f32 %v4318, %v4319
    %v4321 = vsel %vm4194, %v3241, -inf
    %v4322 = vrot.slane %v4321, 4
    %v4323 = vmax.f32 %v4321, %v4322
    %v4324 = vrot.slane %v4323, 2
    %v4325 = vmax.f32 %v4323, %v4324
    %v4326 = vrot.slane %v4325, 1
    %v4327 = vmax.f32 %v4325, %v4326
    %v4328 = vsel %vm4194, %v3243, -inf
    %v4329 = vrot.slane %v4328, 4
    %v4330 = vmax.f32 %v4328, %v4329
    %v4331 = vrot.slane %v4330, 2
    %v4332 = vmax.f32 %v4330, %v4331
    %v4333 = vrot.slane %v4332, 1
    %v4334 = vmax.f32 %v4332, %v4333
    %v4335 = vsel %vm4194, %v3244, -inf
    %v4336 = vrot.slane %v4335, 4
    %v4337 = vmax.f32 %v4335, %v4336
    %v4338 = vrot.slane %v4337, 2
    %v4339 = vmax.f32 %v4337, %v4338
    %v4340 = vrot.slane %v4339, 1
    %v4341 = vmax.f32 %v4339, %v4340
    %v4342 = vsel %vm4194, %v3246, -inf
    %v4343 = vrot.slane %v4342, 4
    %v4344 = vmax.f32 %v4342, %v4343
    %v4345 = vrot.slane %v4344, 2
    %v4346 = vmax.f32 %v4344, %v4345
    %v4347 = vrot.slane %v4346, 1
    %v4348 = vmax.f32 %v4346, %v4347
    %v4349 = vsel %vm4194, %v3247, -inf
    %v4350 = vrot.slane %v4349, 4
    %v4351 = vmax.f32 %v4349, %v4350
    %v4352 = vrot.slane %v4351, 2
    %v4353 = vmax.f32 %v4351, %v4352
    %v4354 = vrot.slane %v4353, 1
    %v4355 = vmax.f32 %v4353, %v4354
    %v4356 = vsel %vm4194, %v3249, -inf
    %v4357 = vrot.slane %v4356, 4
    %v4358 = vmax.f32 %v4356, %v4357
    %v4359 = vrot.slane %v4358, 2
    %v4360 = vmax.f32 %v4358, %v4359
    %v4361 = vrot.slane %v4360, 1
    %v4362 = vmax.f32 %v4360, %v4361
    %v4363 = vsel %vm4194, %v3250, -inf
    %v4364 = vrot.slane %v4363, 4
    %v4365 = vmax.f32 %v4363, %v4364
    %v4366 = vrot.slane %v4365, 2
    %v4367 = vmax.f32 %v4365, %v4366
    %v4368 = vrot.slane %v4367, 1
    %v4369 = vmax.f32 %v4367, %v4368
    %v4370 = vsel %vm4194, %v3252, -inf
    %v4371 = vrot.slane %v4370, 4
    %v4372 = vmax.f32 %v4370, %v4371
    %v4373 = vrot.slane %v4372, 2
    %v4374 = vmax.f32 %v4372, %v4373
    %v4375 = vrot.slane %v4374, 1
    %v4376 = vmax.f32 %v4374, %v4375
    %v4377 = vsel %vm4194, %v3253, -inf
    %v4378 = vrot.slane %v4377, 4
    %v4379 = vmax.f32 %v4377, %v4378
    %v4380 = vrot.slane %v4379, 2
    %v4381 = vmax.f32 %v4379, %v4380
    %v4382 = vrot.slane %v4381, 1
    %v4383 = vmax.f32 %v4381, %v4382
    %v4384 = vsel %vm4194, %v3255, -inf
    %v4385 = vrot.slane %v4384, 4
    %v4386 = vmax.f32 %v4384, %v4385
    %v4387 = vrot.slane %v4386, 2
    %v4388 = vmax.f32 %v4386, %v4387
    %v4389 = vrot.slane %v4388, 1
    %v4390 = vmax.f32 %v4388, %v4389
    %v4391 = vsel %vm4194, %v3256, -inf
    %v4392 = vrot.slane %v4391, 4
    %v4393 = vmax.f32 %v4391, %v4392
    %v4394 = vrot.slane %v4393, 2
    %v4395 = vmax.f32 %v4393, %v4394
    %v4396 = vrot.slane %v4395, 1
    %v4397 = vmax.f32 %v4395, %v4396
    %v4398 = vsel %vm4194, %v3258, -inf
    %v4399 = vrot.slane %v4398, 4
    %v4400 = vmax.f32 %v4398, %v4399
    %v4401 = vrot.slane %v4400, 2
    %v4402 = vmax.f32 %v4400, %v4401
    %v4403 = vrot.slane %v4402, 1
    %v4404 = vmax.f32 %v4402, %v4403
    %v4405 = vsel %vm4194, %v3259, -inf
    %v4406 = vrot.slane %v4405, 4
    %v4407 = vmax.f32 %v4405, %v4406
    %v4408 = vrot.slane %v4407, 2
    %v4409 = vmax.f32 %v4407, %v4408
    %v4410 = vrot.slane %v4409, 1
    %v4411 = vmax.f32 %v4409, %v4410
    %v4412 = vsel %vm4194, %v3261, -inf
    %v4413 = vrot.slane %v4412, 4
    %v4414 = vmax.f32 %v4412, %v4413
    %v4415 = vrot.slane %v4414, 2
    %v4416 = vmax.f32 %v4414, %v4415
    %v4417 = vrot.slane %v4416, 1
    %v4418 = vmax.f32 %v4416, %v4417
    %v4419 = vsel %vm4194, %v3262, -inf
    %v4420 = vrot.slane %v4419, 4
    %v4421 = vmax.f32 %v4419, %v4420
    %v4422 = vrot.slane %v4421, 2
    %v4423 = vmax.f32 %v4421, %v4422
    %v4424 = vrot.slane %v4423, 1
    %v4425 = vmax.f32 %v4423, %v4424
    %v4426 = vsel %vm4194, %v3264, -inf
    %v4427 = vrot.slane %v4426, 4
    %v4428 = vmax.f32 %v4426, %v4427
    %v4429 = vrot.slane %v4428, 2
    %v4430 = vmax.f32 %v4428, %v4429
    %v4431 = vrot.slane %v4430, 1
    %v4432 = vmax.f32 %v4430, %v4431
    %v4433 = vsel %vm4194, %v3265, -inf
    %v4434 = vrot.slane %v4433, 4
    %v4435 = vmax.f32 %v4433, %v4434
    %v4436 = vrot.slane %v4435, 2
    %v4437 = vmax.f32 %v4435, %v4436
    %v4438 = vrot.slane %v4437, 1
    %v4439 = vmax.f32 %v4437, %v4438
    %v4440 = vsel %vm4194, %v3267, -inf
    %v4441 = vrot.slane %v4440, 4
    %v4442 = vmax.f32 %v4440, %v4441
    %v4443 = vrot.slane %v4442, 2
    %v4444 = vmax.f32 %v4442, %v4443
    %v4445 = vrot.slane %v4444, 1
    %v4446 = vmax.f32 %v4444, %v4445
    %v4447 = vsel %vm4194, %v3268, -inf
    %v4448 = vrot.slane %v4447, 4
    %v4449 = vmax.f32 %v4447, %v4448
    %v4450 = vrot.slane %v4449, 2
    %v4451 = vmax.f32 %v4449, %v4450
    %v4452 = vrot.slane %v4451, 1
    %v4453 = vmax.f32 %v4451, %v4452
    %v4454 = vsel %vm4194, %v3270, -inf
    %v4455 = vrot.slane %v4454, 4
    %v4456 = vmax.f32 %v4454, %v4455
    %v4457 = vrot.slane %v4456, 2
    %v4458 = vmax.f32 %v4456, %v4457
    %v4459 = vrot.slane %v4458, 1
    %v4460 = vmax.f32 %v4458, %v4459
    %v4461 = vsel %vm4194, %v3271, -inf
    %v4462 = vrot.slane %v4461, 4
    %v4463 = vmax.f32 %v4461, %v4462
    %v4464 = vrot.slane %v4463, 2
    %v4465 = vmax.f32 %v4463, %v4464
    %v4466 = vrot.slane %v4465, 1
    %v4467 = vmax.f32 %v4465, %v4466
    %v4468 = vsel %vm4194, %v3273, -inf
    %v4469 = vrot.slane %v4468, 4
    %v4470 = vmax.f32 %v4468, %v4469
    %v4471 = vrot.slane %v4470, 2
    %v4472 = vmax.f32 %v4470, %v4471
    %v4473 = vrot.slane %v4472, 1
    %v4474 = vmax.f32 %v4472, %v4473
    %v4475 = vsel %vm4194, %v3274, -inf
    %v4476 = vrot.slane %v4475, 4
    %v4477 = vmax.f32 %v4475, %v4476
    %v4478 = vrot.slane %v4477, 2
    %v4479 = vmax.f32 %v4477, %v4478
    %v4480 = vrot.slane %v4479, 1
    %v4481 = vmax.f32 %v4479, %v4480
    %v4482 = vsel %vm4194, %v3276, -inf
    %v4483 = vrot.slane %v4482, 4
    %v4484 = vmax.f32 %v4482, %v4483
    %v4485 = vrot.slane %v4484, 2
    %v4486 = vmax.f32 %v4484, %v4485
    %v4487 = vrot.slane %v4486, 1
    %v4488 = vmax.f32 %v4486, %v4487
    %v4489 = vsel %vm4194, %v3277, -inf
    %v4490 = vrot.slane %v4489, 4
    %v4491 = vmax.f32 %v4489, %v4490
    %v4492 = vrot.slane %v4491, 2
    %v4493 = vmax.f32 %v4491, %v4492
    %v4494 = vrot.slane %v4493, 1
    %v4495 = vmax.f32 %v4493, %v4494
    %v4496 = vsel %vm4194, %v3279, -inf
    %v4497 = vrot.slane %v4496, 4
    %v4498 = vmax.f32 %v4496, %v4497
    %v4499 = vrot.slane %v4498, 2
    %v4500 = vmax.f32 %v4498, %v4499
    %v4501 = vrot.slane %v4500, 1
    %v4502 = vmax.f32 %v4500, %v4501
    %v4503 = vsel %vm4194, %v3280, -inf
    %v4504 = vrot.slane %v4503, 4
    %v4505 = vmax.f32 %v4503, %v4504
    %v4506 = vrot.slane %v4505, 2
    %v4507 = vmax.f32 %v4505, %v4506
    %v4508 = vrot.slane %v4507, 1
    %v4509 = vmax.f32 %v4507, %v4508
    %v4510 = vsel %vm4194, %v3282, -inf
    %v4511 = vrot.slane %v4510, 4
    %v4512 = vmax.f32 %v4510, %v4511
    %v4513 = vrot.slane %v4512, 2
    %v4514 = vmax.f32 %v4512, %v4513
    %v4515 = vrot.slane %v4514, 1
    %v4516 = vmax.f32 %v4514, %v4515
    %v4517 = vsel %vm4194, %v3283, -inf
    %v4518 = vrot.slane %v4517, 4
    %v4519 = vmax.f32 %v4517, %v4518
    %v4520 = vrot.slane %v4519, 2
    %v4521 = vmax.f32 %v4519, %v4520
    %v4522 = vrot.slane %v4521, 1
    %v4523 = vmax.f32 %v4521, %v4522
    %v4524 = vsel %vm4194, %v3285, -inf
    %v4525 = vrot.slane %v4524, 4
    %v4526 = vmax.f32 %v4524, %v4525
    %v4527 = vrot.slane %v4526, 2
    %v4528 = vmax.f32 %v4526, %v4527
    %v4529 = vrot.slane %v4528, 1
    %v4530 = vmax.f32 %v4528, %v4529
    %v4531 = vsel %vm4194, %v3286, -inf
    %v4532 = vrot.slane %v4531, 4
    %v4533 = vmax.f32 %v4531, %v4532
    %v4534 = vrot.slane %v4533, 2
    %v4535 = vmax.f32 %v4533, %v4534
    %v4536 = vrot.slane %v4535, 1
    %v4537 = vmax.f32 %v4535, %v4536
    %v4538 = vsel %vm4194, %v3288, -inf
    %v4539 = vrot.slane %v4538, 4
    %v4540 = vmax.f32 %v4538, %v4539
    %v4541 = vrot.slane %v4540, 2
    %v4542 = vmax.f32 %v4540, %v4541
    %v4543 = vrot.slane %v4542, 1
    %v4544 = vmax.f32 %v4542, %v4543
    %v4545 = vsel %vm4194, %v3289, -inf
    %v4546 = vrot.slane %v4545, 4
    %v4547 = vmax.f32 %v4545, %v4546
    %v4548 = vrot.slane %v4547, 2
    %v4549 = vmax.f32 %v4547, %v4548
    %v4550 = vrot.slane %v4549, 1
    %v4551 = vmax.f32 %v4549, %v4550
    %v4552 = vsel %vm4194, %v3291, -inf
    %v4553 = vrot.slane %v4552, 4
    %v4554 = vmax.f32 %v4552, %v4553
    %v4555 = vrot.slane %v4554, 2
    %v4556 = vmax.f32 %v4554, %v4555
    %v4557 = vrot.slane %v4556, 1
    %v4558 = vmax.f32 %v4556, %v4557
    %v4559 = vsel %vm4194, %v3292, -inf
    %v4560 = vrot.slane %v4559, 4
    %v4561 = vmax.f32 %v4559, %v4560
    %v4562 = vrot.slane %v4561, 2
    %v4563 = vmax.f32 %v4561, %v4562
    %v4564 = vrot.slane %v4563, 1
    %v4565 = vmax.f32 %v4563, %v4564
    %v4566 = vsel %vm4194, %v3294, -inf
    %v4567 = vrot.slane %v4566, 4
    %v4568 = vmax.f32 %v4566, %v4567
    %v4569 = vrot.slane %v4568, 2
    %v4570 = vmax.f32 %v4568, %v4569
    %v4571 = vrot.slane %v4570, 1
    %v4572 = vmax.f32 %v4570, %v4571
    %v4573 = vsel %vm4194, %v3295, -inf
    %v4574 = vrot.slane %v4573, 4
    %v4575 = vmax.f32 %v4573, %v4574
    %v4576 = vrot.slane %v4575, 2
    %v4577 = vmax.f32 %v4575, %v4576
    %v4578 = vrot.slane %v4577, 1
    %v4579 = vmax.f32 %v4577, %v4578
    %v4580 = vsel %vm4194, %v3297, -inf
    %v4581 = vrot.slane %v4580, 4
    %v4582 = vmax.f32 %v4580, %v4581
    %v4583 = vrot.slane %v4582, 2
    %v4584 = vmax.f32 %v4582, %v4583
    %v4585 = vrot.slane %v4584, 1
    %v4586 = vmax.f32 %v4584, %v4585
    %v4587 = vsel %vm4194, %v3298, -inf
    %v4588 = vrot.slane %v4587, 4
    %v4589 = vmax.f32 %v4587, %v4588
    %v4590 = vrot.slane %v4589, 2
    %v4591 = vmax.f32 %v4589, %v4590
    %v4592 = vrot.slane %v4591, 1
    %v4593 = vmax.f32 %v4591, %v4592
    %v4594 = vsel %vm4194, %v3300, -inf
    %v4595 = vrot.slane %v4594, 4
    %v4596 = vmax.f32 %v4594, %v4595
    %v4597 = vrot.slane %v4596, 2
    %v4598 = vmax.f32 %v4596, %v4597
    %v4599 = vrot.slane %v4598, 1
    %v4600 = vmax.f32 %v4598, %v4599
    %v4601 = vsel %vm4194, %v3301, -inf
    %v4602 = vrot.slane %v4601, 4
    %v4603 = vmax.f32 %v4601, %v4602
    %v4604 = vrot.slane %v4603, 2
    %v4605 = vmax.f32 %v4603, %v4604
    %v4606 = vrot.slane %v4605, 1
    %v4607 = vmax.f32 %v4605, %v4606
    %v4608 = vsel %vm4194, %v3303, -inf
    %v4609 = vrot.slane %v4608, 4
    %v4610 = vmax.f32 %v4608, %v4609
    %v4611 = vrot.slane %v4610, 2
    %v4612 = vmax.f32 %v4610, %v4611
    %v4613 = vrot.slane %v4612, 1
    %v4614 = vmax.f32 %v4612, %v4613
    %v4615 = vsel %vm4194, %v3304, -inf
    %v4616 = vrot.slane %v4615, 4
    %v4617 = vmax.f32 %v4615, %v4616
    %v4618 = vrot.slane %v4617, 2
    %v4619 = vmax.f32 %v4617, %v4618
    %v4620 = vrot.slane %v4619, 1
    %v4621 = vmax.f32 %v4619, %v4620
    %v4622 = vsel %vm4194, %v3306, -inf
    %v4623 = vrot.slane %v4622, 4
    %v4624 = vmax.f32 %v4622, %v4623
    %v4625 = vrot.slane %v4624, 2
    %v4626 = vmax.f32 %v4624, %v4625
    %v4627 = vrot.slane %v4626, 1
    %v4628 = vmax.f32 %v4626, %v4627
    %v4629 = vsel %vm4194, %v3307, -inf
    %v4630 = vrot.slane %v4629, 4
    %v4631 = vmax.f32 %v4629, %v4630
    %v4632 = vrot.slane %v4631, 2
    %v4633 = vmax.f32 %v4631, %v4632
    %v4634 = vrot.slane %v4633, 1
    %v4635 = vmax.f32 %v4633, %v4634
    %v4636 = vsel %vm4194, %v3309, -inf
    %v4637 = vrot.slane %v4636, 4
    %v4638 = vmax.f32 %v4636, %v4637
    %v4639 = vrot.slane %v4638, 2
    %v4640 = vmax.f32 %v4638, %v4639
    %v4641 = vrot.slane %v4640, 1
    %v4642 = vmax.f32 %v4640, %v4641
    %v4643 = vsel %vm4194, %v3310, -inf
    %v4644 = vrot.slane %v4643, 4
    %v4645 = vmax.f32 %v4643, %v4644
    %v4646 = vrot.slane %v4645, 2
    %v4647 = vmax.f32 %v4645, %v4646
    %v4648 = vrot.slane %v4647, 1
    %v4649 = vmax.f32 %v4647, %v4648
    %v4650 = vsel %vm4194, %v3312, -inf
    %v4651 = vrot.slane %v4650, 4
    %v4652 = vmax.f32 %v4650, %v4651
    %v4653 = vrot.slane %v4652, 2
    %v4654 = vmax.f32 %v4652, %v4653
    %v4655 = vrot.slane %v4654, 1
    %v4656 = vmax.f32 %v4654, %v4655
    %v4657 = vsel %vm4194, %v3313, -inf
    %v4658 = vrot.slane %v4657, 4
    %v4659 = vmax.f32 %v4657, %v4658
    %v4660 = vrot.slane %v4659, 2
    %v4661 = vmax.f32 %v4659, %v4660
    %v4662 = vrot.slane %v4661, 1
    %v4663 = vmax.f32 %v4661, %v4662
    %v4664 = vsel %vm4194, %v3315, -inf
    %v4665 = vrot.slane %v4664, 4
    %v4666 = vmax.f32 %v4664, %v4665
    %v4667 = vrot.slane %v4666, 2
    %v4668 = vmax.f32 %v4666, %v4667
    %v4669 = vrot.slane %v4668, 1
    %v4670 = vmax.f32 %v4668, %v4669
    %v4671 = vsel %vm4194, %v3316, -inf
    %v4672 = vrot.slane %v4671, 4
    %v4673 = vmax.f32 %v4671, %v4672
    %v4674 = vrot.slane %v4673, 2
    %v4675 = vmax.f32 %v4673, %v4674
    %v4676 = vrot.slane %v4675, 1
    %v4677 = vmax.f32 %v4675, %v4676
    %v4678 = vsel %vm4194, %v3318, -inf
    %v4679 = vrot.slane %v4678, 4
    %v4680 = vmax.f32 %v4678, %v4679
    %v4681 = vrot.slane %v4680, 2
    %v4682 = vmax.f32 %v4680, %v4681
    %v4683 = vrot.slane %v4682, 1
    %v4684 = vmax.f32 %v4682, %v4683
    %v4685 = vsel %vm4194, %v3319, -inf
    %v4686 = vrot.slane %v4685, 4
    %v4687 = vmax.f32 %v4685, %v4686
    %v4688 = vrot.slane %v4687, 2
    %v4689 = vmax.f32 %v4687, %v4688
    %v4690 = vrot.slane %v4689, 1
    %v4691 = vmax.f32 %v4689, %v4690
    %v4692 = vsel %vm4194, %v3321, -inf
    %v4693 = vrot.slane %v4692, 4
    %v4694 = vmax.f32 %v4692, %v4693
    %v4695 = vrot.slane %v4694, 2
    %v4696 = vmax.f32 %v4694, %v4695
    %v4697 = vrot.slane %v4696, 1
    %v4698 = vmax.f32 %v4696, %v4697
    %v4699 = vsel %vm4194, %v3322, -inf
    %v4700 = vrot.slane %v4699, 4
    %v4701 = vmax.f32 %v4699, %v4700
    %v4702 = vrot.slane %v4701, 2
    %v4703 = vmax.f32 %v4701, %v4702
    %v4704 = vrot.slane %v4703, 1
    %v4705 = vmax.f32 %v4703, %v4704
    %v4706 = vsel %vm4194, %v3324, -inf
    %v4707 = vrot.slane %v4706, 4
    %v4708 = vmax.f32 %v4706, %v4707
    %v4709 = vrot.slane %v4708, 2
    %v4710 = vmax.f32 %v4708, %v4709
    %v4711 = vrot.slane %v4710, 1
    %v4712 = vmax.f32 %v4710, %v4711
    %v4713 = vsel %vm4194, %v3325, -inf
    %v4714 = vrot.slane %v4713, 4
    %v4715 = vmax.f32 %v4713, %v4714
    %v4716 = vrot.slane %v4715, 2
    %v4717 = vmax.f32 %v4715, %v4716
    %v4718 = vrot.slane %v4717, 1
    %v4719 = vmax.f32 %v4717, %v4718
    %v4720 = vsel %vm4194, %v3327, -inf
    %v4721 = vrot.slane %v4720, 4
    %v4722 = vmax.f32 %v4720, %v4721
    %v4723 = vrot.slane %v4722, 2
    %v4724 = vmax.f32 %v4722, %v4723
    %v4725 = vrot.slane %v4724, 1
    %v4726 = vmax.f32 %v4724, %v4725
    %v4727 = vsel %vm4194, %v3328, -inf
    %v4728 = vrot.slane %v4727, 4
    %v4729 = vmax.f32 %v4727, %v4728
    %v4730 = vrot.slane %v4729, 2
    %v4731 = vmax.f32 %v4729, %v4730
    %v4732 = vrot.slane %v4731, 1
    %v4733 = vmax.f32 %v4731, %v4732
    %v4734 = vsel %vm4194, %v3330, -inf
    %v4735 = vrot.slane %v4734, 4
    %v4736 = vmax.f32 %v4734, %v4735
    %v4737 = vrot.slane %v4736, 2
    %v4738 = vmax.f32 %v4736, %v4737
    %v4739 = vrot.slane %v4738, 1
    %v4740 = vmax.f32 %v4738, %v4739
    %v4741 = vsel %vm4194, %v3331, -inf
    %v4742 = vrot.slane %v4741, 4
    %v4743 = vmax.f32 %v4741, %v4742
    %v4744 = vrot.slane %v4743, 2
    %v4745 = vmax.f32 %v4743, %v4744
    %v4746 = vrot.slane %v4745, 1
    %v4747 = vmax.f32 %v4745, %v4746
    %v4748 = vsel %vm4194, %v3333, -inf
    %v4749 = vrot.slane %v4748, 4
    %v4750 = vmax.f32 %v4748, %v4749
    %v4751 = vrot.slane %v4750, 2
    %v4752 = vmax.f32 %v4750, %v4751
    %v4753 = vrot.slane %v4752, 1
    %v4754 = vmax.f32 %v4752, %v4753
    %v4755 = vsel %vm4194, %v3334, -inf
    %v4756 = vrot.slane %v4755, 4
    %v4757 = vmax.f32 %v4755, %v4756
    %v4758 = vrot.slane %v4757, 2
    %v4759 = vmax.f32 %v4757, %v4758
    %v4760 = vrot.slane %v4759, 1
    %v4761 = vmax.f32 %v4759, %v4760
    %v4762 = vsel %vm4194, %v3336, -inf
    %v4763 = vrot.slane %v4762, 4
    %v4764 = vmax.f32 %v4762, %v4763
    %v4765 = vrot.slane %v4764, 2
    %v4766 = vmax.f32 %v4764, %v4765
    %v4767 = vrot.slane %v4766, 1
    %v4768 = vmax.f32 %v4766, %v4767
    %v4769 = vsel %vm4194, %v3337, -inf
    %v4770 = vrot.slane %v4769, 4
    %v4771 = vmax.f32 %v4769, %v4770
    %v4772 = vrot.slane %v4771, 2
    %v4773 = vmax.f32 %v4771, %v4772
    %v4774 = vrot.slane %v4773, 1
    %v4775 = vmax.f32 %v4773, %v4774
    %v4776 = vsel %vm4194, %v3339, -inf
    %v4777 = vrot.slane %v4776, 4
    %v4778 = vmax.f32 %v4776, %v4777
    %v4779 = vrot.slane %v4778, 2
    %v4780 = vmax.f32 %v4778, %v4779
    %v4781 = vrot.slane %v4780, 1
    %v4782 = vmax.f32 %v4780, %v4781
    %v4783 = vsel %vm4194, %v3340, -inf
    %v4784 = vrot.slane %v4783, 4
    %v4785 = vmax.f32 %v4783, %v4784
    %v4786 = vrot.slane %v4785, 2
    %v4787 = vmax.f32 %v4785, %v4786
    %v4788 = vrot.slane %v4787, 1
    %v4789 = vmax.f32 %v4787, %v4788
    %v4790 = vsel %vm4194, %v3342, -inf
    %v4791 = vrot.slane %v4790, 4
    %v4792 = vmax.f32 %v4790, %v4791
    %v4793 = vrot.slane %v4792, 2
    %v4794 = vmax.f32 %v4792, %v4793
    %v4795 = vrot.slane %v4794, 1
    %v4796 = vmax.f32 %v4794, %v4795
    %v4797 = vsel %vm4194, %v3343, -inf
    %v4798 = vrot.slane %v4797, 4
    %v4799 = vmax.f32 %v4797, %v4798
    %v4800 = vrot.slane %v4799, 2
    %v4801 = vmax.f32 %v4799, %v4800
    %v4802 = vrot.slane %v4801, 1
    %v4803 = vmax.f32 %v4801, %v4802
    %v4804 = vsel %vm4194, %v3345, -inf
    %v4805 = vrot.slane %v4804, 4
    %v4806 = vmax.f32 %v4804, %v4805
    %v4807 = vrot.slane %v4806, 2
    %v4808 = vmax.f32 %v4806, %v4807
    %v4809 = vrot.slane %v4808, 1
    %v4810 = vmax.f32 %v4808, %v4809
    %v4811 = vsel %vm4194, %v3346, -inf
    %v4812 = vrot.slane %v4811, 4
    %v4813 = vmax.f32 %v4811, %v4812
    %v4814 = vrot.slane %v4813, 2
    %v4815 = vmax.f32 %v4813, %v4814
    %v4816 = vrot.slane %v4815, 1
    %v4817 = vmax.f32 %v4815, %v4816
    %v4818 = vsel %vm4194, %v3348, -inf
    %v4819 = vrot.slane %v4818, 4
    %v4820 = vmax.f32 %v4818, %v4819
    %v4821 = vrot.slane %v4820, 2
    %v4822 = vmax.f32 %v4820, %v4821
    %v4823 = vrot.slane %v4822, 1
    %v4824 = vmax.f32 %v4822, %v4823
    %v4825 = vsel %vm4194, %v3349, -inf
    %v4826 = vrot.slane %v4825, 4
    %v4827 = vmax.f32 %v4825, %v4826
    %v4828 = vrot.slane %v4827, 2
    %v4829 = vmax.f32 %v4827, %v4828
    %v4830 = vrot.slane %v4829, 1
    %v4831 = vmax.f32 %v4829, %v4830
    %v4832 = vsel %vm4194, %v3351, -inf
    %v4833 = vrot.slane %v4832, 4
    %v4834 = vmax.f32 %v4832, %v4833
    %v4835 = vrot.slane %v4834, 2
    %v4836 = vmax.f32 %v4834, %v4835
    %v4837 = vrot.slane %v4836, 1
    %v4838 = vmax.f32 %v4836, %v4837
    %v4839 = vsel %vm4194, %v3352, -inf
    %v4840 = vrot.slane %v4839, 4
    %v4841 = vmax.f32 %v4839, %v4840
    %v4842 = vrot.slane %v4841, 2
    %v4843 = vmax.f32 %v4841, %v4842
    %v4844 = vrot.slane %v4843, 1
    %v4845 = vmax.f32 %v4843, %v4844
    %v4846 = vsel %vm4194, %v3354, -inf
    %v4847 = vrot.slane %v4846, 4
    %v4848 = vmax.f32 %v4846, %v4847
    %v4849 = vrot.slane %v4848, 2
    %v4850 = vmax.f32 %v4848, %v4849
    %v4851 = vrot.slane %v4850, 1
    %v4852 = vmax.f32 %v4850, %v4851
    %v4853 = vsel %vm4194, %v3355, -inf
    %v4854 = vrot.slane %v4853, 4
    %v4855 = vmax.f32 %v4853, %v4854
    %v4856 = vrot.slane %v4855, 2
    %v4857 = vmax.f32 %v4855, %v4856
    %v4858 = vrot.slane %v4857, 1
    %v4859 = vmax.f32 %v4857, %v4858
    %v4860 = vsel %vm4194, %v3357, -inf
    %v4861 = vrot.slane %v4860, 4
    %v4862 = vmax.f32 %v4860, %v4861
    %v4863 = vrot.slane %v4862, 2
    %v4864 = vmax.f32 %v4862, %v4863
    %v4865 = vrot.slane %v4864, 1
    %v4866 = vmax.f32 %v4864, %v4865
    %v4867 = vsel %vm4194, %v3358, -inf
    %v4868 = vrot.slane %v4867, 4
    %v4869 = vmax.f32 %v4867, %v4868
    %v4870 = vrot.slane %v4869, 2
    %v4871 = vmax.f32 %v4869, %v4870
    %v4872 = vrot.slane %v4871, 1
    %v4873 = vmax.f32 %v4871, %v4872
    %v4874 = vsel %vm4194, %v3360, -inf
    %v4875 = vrot.slane %v4874, 4
    %v4876 = vmax.f32 %v4874, %v4875
    %v4877 = vrot.slane %v4876, 2
    %v4878 = vmax.f32 %v4876, %v4877
    %v4879 = vrot.slane %v4878, 1
    %v4880 = vmax.f32 %v4878, %v4879
    %v4881 = vsel %vm4194, %v3361, -inf
    %v4882 = vrot.slane %v4881, 4
    %v4883 = vmax.f32 %v4881, %v4882
    %v4884 = vrot.slane %v4883, 2
    %v4885 = vmax.f32 %v4883, %v4884
    %v4886 = vrot.slane %v4885, 1
    %v4887 = vmax.f32 %v4885, %v4886
    %v4888 = vsel %vm4194, %v3363, -inf
    %v4889 = vrot.slane %v4888, 4
    %v4890 = vmax.f32 %v4888, %v4889
    %v4891 = vrot.slane %v4890, 2
    %v4892 = vmax.f32 %v4890, %v4891
    %v4893 = vrot.slane %v4892, 1
    %v4894 = vmax.f32 %v4892, %v4893
    %v4895 = vsel %vm4194, %v3364, -inf
    %v4896 = vrot.slane %v4895, 4
    %v4897 = vmax.f32 %v4895, %v4896
    %v4898 = vrot.slane %v4897, 2
    %v4899 = vmax.f32 %v4897, %v4898
    %v4900 = vrot.slane %v4899, 1
    %v4901 = vmax.f32 %v4899, %v4900
    %v4902 = vsel %vm4194, %v3366, -inf
    %v4903 = vrot.slane %v4902, 4
    %v4904 = vmax.f32 %v4902, %v4903
    %v4905 = vrot.slane %v4904, 2
    %v4906 = vmax.f32 %v4904, %v4905
    %v4907 = vrot.slane %v4906, 1
    %v4908 = vmax.f32 %v4906, %v4907
    %v4909 = vsel %vm4194, %v3367, -inf
    %v4910 = vrot.slane %v4909, 4
    %v4911 = vmax.f32 %v4909, %v4910
    %v4912 = vrot.slane %v4911, 2
    %v4913 = vmax.f32 %v4911, %v4912
    %v4914 = vrot.slane %v4913, 1
    %v4915 = vmax.f32 %v4913, %v4914
    %v4916 = vsel %vm4194, %v3369, -inf
    %v4917 = vrot.slane %v4916, 4
    %v4918 = vmax.f32 %v4916, %v4917
    %v4919 = vrot.slane %v4918, 2
    %v4920 = vmax.f32 %v4918, %v4919
    %v4921 = vrot.slane %v4920, 1
    %v4922 = vmax.f32 %v4920, %v4921
    %v4923 = vsel %vm4194, %v3370, -inf
    %v4924 = vrot.slane %v4923, 4
    %v4925 = vmax.f32 %v4923, %v4924
    %v4926 = vrot.slane %v4925, 2
    %v4927 = vmax.f32 %v4925, %v4926
    %v4928 = vrot.slane %v4927, 1
    %v4929 = vmax.f32 %v4927, %v4928
    %v4930 = vsel %vm4194, %v3372, -inf
    %v4931 = vrot.slane %v4930, 4
    %v4932 = vmax.f32 %v4930, %v4931
    %v4933 = vrot.slane %v4932, 2
    %v4934 = vmax.f32 %v4932, %v4933
    %v4935 = vrot.slane %v4934, 1
    %v4936 = vmax.f32 %v4934, %v4935
    %v4937 = vsel %vm4194, %v3373, -inf
    %v4938 = vrot.slane %v4937, 4
    %v4939 = vmax.f32 %v4937, %v4938
    %v4940 = vrot.slane %v4939, 2
    %v4941 = vmax.f32 %v4939, %v4940
    %v4942 = vrot.slane %v4941, 1
    %v4943 = vmax.f32 %v4941, %v4942
    %v4944 = vsel %vm4194, %v3375, -inf
    %v4945 = vrot.slane %v4944, 4
    %v4946 = vmax.f32 %v4944, %v4945
    %v4947 = vrot.slane %v4946, 2
    %v4948 = vmax.f32 %v4946, %v4947
    %v4949 = vrot.slane %v4948, 1
    %v4950 = vmax.f32 %v4948, %v4949
    %v4951 = vsel %vm4194, %v3376, -inf
    %v4952 = vrot.slane %v4951, 4
    %v4953 = vmax.f32 %v4951, %v4952
    %v4954 = vrot.slane %v4953, 2
    %v4955 = vmax.f32 %v4953, %v4954
    %v4956 = vrot.slane %v4955, 1
    %v4957 = vmax.f32 %v4955, %v4956
    %v4958 = vsel %vm4194, %v3378, -inf
    %v4959 = vrot.slane %v4958, 4
    %v4960 = vmax.f32 %v4958, %v4959
    %v4961 = vrot.slane %v4960, 2
    %v4962 = vmax.f32 %v4960, %v4961
    %v4963 = vrot.slane %v4962, 1
    %v4964 = vmax.f32 %v4962, %v4963
    %v4965 = vsel %vm4194, %v3379, -inf
    %v4966 = vrot.slane %v4965, 4
    %v4967 = vmax.f32 %v4965, %v4966
    %v4968 = vrot.slane %v4967, 2
    %v4969 = vmax.f32 %v4967, %v4968
    %v4970 = vrot.slane %v4969, 1
    %v4971 = vmax.f32 %v4969, %v4970
    %v4972 = vsel %vm4194, %v3381, -inf
    %v4973 = vrot.slane %v4972, 4
    %v4974 = vmax.f32 %v4972, %v4973
    %v4975 = vrot.slane %v4974, 2
    %v4976 = vmax.f32 %v4974, %v4975
    %v4977 = vrot.slane %v4976, 1
    %v4978 = vmax.f32 %v4976, %v4977
    %v4979 = vsel %vm4194, %v3382, -inf
    %v4980 = vrot.slane %v4979, 4
    %v4981 = vmax.f32 %v4979, %v4980
    %v4982 = vrot.slane %v4981, 2
    %v4983 = vmax.f32 %v4981, %v4982
    %v4984 = vrot.slane %v4983, 1
    %v4985 = vmax.f32 %v4983, %v4984
    %v4986 = vsel %vm4194, %v3384, -inf
    %v4987 = vrot.slane %v4986, 4
    %v4988 = vmax.f32 %v4986, %v4987
    %v4989 = vrot.slane %v4988, 2
    %v4990 = vmax.f32 %v4988, %v4989
    %v4991 = vrot.slane %v4990, 1
    %v4992 = vmax.f32 %v4990, %v4991
    %v4993 = vsel %vm4194, %v3385, -inf
    %v4994 = vrot.slane %v4993, 4
    %v4995 = vmax.f32 %v4993, %v4994
    %v4996 = vrot.slane %v4995, 2
    %v4997 = vmax.f32 %v4995, %v4996
    %v4998 = vrot.slane %v4997, 1
    %v4999 = vmax.f32 %v4997, %v4998
    %v5000 = vsel %vm4194, %v3387, -inf
    %v5001 = vrot.slane %v5000, 4
    %v5002 = vmax.f32 %v5000, %v5001
    %v5003 = vrot.slane %v5002, 2
    %v5004 = vmax.f32 %v5002, %v5003
    %v5005 = vrot.slane %v5004, 1
    %v5006 = vmax.f32 %v5004, %v5005
    %v5007 = vsel %vm4194, %v3388, -inf
    %v5008 = vrot.slane %v5007, 4
    %v5009 = vmax.f32 %v5007, %v5008
    %v5010 = vrot.slane %v5009, 2
    %v5011 = vmax.f32 %v5009, %v5010
    %v5012 = vrot.slane %v5011, 1
    %v5013 = vmax.f32 %v5011, %v5012
    %v5014 = vsel %vm4194, %v3390, -inf
    %v5015 = vrot.slane %v5014, 4
    %v5016 = vmax.f32 %v5014, %v5015
    %v5017 = vrot.slane %v5016, 2
    %v5018 = vmax.f32 %v5016, %v5017
    %v5019 = vrot.slane %v5018, 1
    %v5020 = vmax.f32 %v5018, %v5019
    %v5021 = vsel %vm4194, %v3391, -inf
    %v5022 = vrot.slane %v5021, 4
    %v5023 = vmax.f32 %v5021, %v5022
    %v5024 = vrot.slane %v5023, 2
    %v5025 = vmax.f32 %v5023, %v5024
    %v5026 = vrot.slane %v5025, 1
    %v5027 = vmax.f32 %v5025, %v5026
    %v5028 = vsel %vm4194, %v3393, -inf
    %v5029 = vrot.slane %v5028, 4
    %v5030 = vmax.f32 %v5028, %v5029
    %v5031 = vrot.slane %v5030, 2
    %v5032 = vmax.f32 %v5030, %v5031
    %v5033 = vrot.slane %v5032, 1
    %v5034 = vmax.f32 %v5032, %v5033
    %v5035 = vsel %vm4194, %v3394, -inf
    %v5036 = vrot.slane %v5035, 4
    %v5037 = vmax.f32 %v5035, %v5036
    %v5038 = vrot.slane %v5037, 2
    %v5039 = vmax.f32 %v5037, %v5038
    %v5040 = vrot.slane %v5039, 1
    %v5041 = vmax.f32 %v5039, %v5040
    %v5042 = vsel %vm4194, %v3396, -inf
    %v5043 = vrot.slane %v5042, 4
    %v5044 = vmax.f32 %v5042, %v5043
    %v5045 = vrot.slane %v5044, 2
    %v5046 = vmax.f32 %v5044, %v5045
    %v5047 = vrot.slane %v5046, 1
    %v5048 = vmax.f32 %v5046, %v5047
    %v5049 = vsel %vm4194, %v3397, -inf
    %v5050 = vrot.slane %v5049, 4
    %v5051 = vmax.f32 %v5049, %v5050
    %v5052 = vrot.slane %v5051, 2
    %v5053 = vmax.f32 %v5051, %v5052
    %v5054 = vrot.slane %v5053, 1
    %v5055 = vmax.f32 %v5053, %v5054
    %v5056 = vsel %vm4194, %v3399, -inf
    %v5057 = vrot.slane %v5056, 4
    %v5058 = vmax.f32 %v5056, %v5057
    %v5059 = vrot.slane %v5058, 2
    %v5060 = vmax.f32 %v5058, %v5059
    %v5061 = vrot.slane %v5060, 1
    %v5062 = vmax.f32 %v5060, %v5061
    %v5063 = vsel %vm4194, %v3400, -inf
    %v5064 = vrot.slane %v5063, 4
    %v5065 = vmax.f32 %v5063, %v5064
    %v5066 = vrot.slane %v5065, 2
    %v5067 = vmax.f32 %v5065, %v5066
    %v5068 = vrot.slane %v5067, 1
    %v5069 = vmax.f32 %v5067, %v5068
    %v5070 = vsel %vm4194, %v3402, -inf
    %v5071 = vrot.slane %v5070, 4
    %v5072 = vmax.f32 %v5070, %v5071
    %v5073 = vrot.slane %v5072, 2
    %v5074 = vmax.f32 %v5072, %v5073
    %v5075 = vrot.slane %v5074, 1
    %v5076 = vmax.f32 %v5074, %v5075
    %v5077 = vsel %vm4194, %v3403, -inf
    %v5078 = vrot.slane %v5077, 4
    %v5079 = vmax.f32 %v5077, %v5078
    %v5080 = vrot.slane %v5079, 2
    %v5081 = vmax.f32 %v5079, %v5080
    %v5082 = vrot.slane %v5081, 1
    %v5083 = vmax.f32 %v5081, %v5082
    %v5084 = vsel %vm4194, %v3405, -inf
    %v5085 = vrot.slane %v5084, 4
    %v5086 = vmax.f32 %v5084, %v5085
    %v5087 = vrot.slane %v5086, 2
    %v5088 = vmax.f32 %v5086, %v5087
    %v5089 = vrot.slane %v5088, 1
    %v5090 = vmax.f32 %v5088, %v5089
    %v5091 = vsel %vm4194, %v3406, -inf
    %v5092 = vrot.slane %v5091, 4
    %v5093 = vmax.f32 %v5091, %v5092
    %v5094 = vrot.slane %v5093, 2
    %v5095 = vmax.f32 %v5093, %v5094
    %v5096 = vrot.slane %v5095, 1
    %v5097 = vmax.f32 %v5095, %v5096
    %v5098 = vsel %vm4194, %v3408, -inf
    %v5099 = vrot.slane %v5098, 4
    %v5100 = vmax.f32 %v5098, %v5099
    %v5101 = vrot.slane %v5100, 2
    %v5102 = vmax.f32 %v5100, %v5101
    %v5103 = vrot.slane %v5102, 1
    %v5104 = vmax.f32 %v5102, %v5103
    %v5105 = vsel %vm4194, %v3409, -inf
    %v5106 = vrot.slane %v5105, 4
    %v5107 = vmax.f32 %v5105, %v5106
    %v5108 = vrot.slane %v5107, 2
    %v5109 = vmax.f32 %v5107, %v5108
    %v5110 = vrot.slane %v5109, 1
    %v5111 = vmax.f32 %v5109, %v5110
    %v5112 = vsel %vm4194, %v3411, -inf
    %v5113 = vrot.slane %v5112, 4
    %v5114 = vmax.f32 %v5112, %v5113
    %v5115 = vrot.slane %v5114, 2
    %v5116 = vmax.f32 %v5114, %v5115
    %v5117 = vrot.slane %v5116, 1
    %v5118 = vmax.f32 %v5116, %v5117
    %v5119 = vsel %vm4194, %v3412, -inf
    %v5120 = vrot.slane %v5119, 4
    %v5121 = vmax.f32 %v5119, %v5120
    %v5122 = vrot.slane %v5121, 2
    %v5123 = vmax.f32 %v5121, %v5122
    %v5124 = vrot.slane %v5123, 1
    %v5125 = vmax.f32 %v5123, %v5124
    %v5126 = vsel %vm4194, %v3414, -inf
    %v5127 = vrot.slane %v5126, 4
    %v5128 = vmax.f32 %v5126, %v5127
    %v5129 = vrot.slane %v5128, 2
    %v5130 = vmax.f32 %v5128, %v5129
    %v5131 = vrot.slane %v5130, 1
    %v5132 = vmax.f32 %v5130, %v5131
    %v5133 = vsel %vm4194, %v3415, -inf
    %v5134 = vrot.slane %v5133, 4
    %v5135 = vmax.f32 %v5133, %v5134
    %v5136 = vrot.slane %v5135, 2
    %v5137 = vmax.f32 %v5135, %v5136
    %v5138 = vrot.slane %v5137, 1
    %v5139 = vmax.f32 %v5137, %v5138
    %v5140 = vsel %vm4194, %v3417, -inf
    %v5141 = vrot.slane %v5140, 4
    %v5142 = vmax.f32 %v5140, %v5141
    %v5143 = vrot.slane %v5142, 2
    %v5144 = vmax.f32 %v5142, %v5143
    %v5145 = vrot.slane %v5144, 1
    %v5146 = vmax.f32 %v5144, %v5145
    %v5147 = vsel %vm4194, %v3418, -inf
    %v5148 = vrot.slane %v5147, 4
    %v5149 = vmax.f32 %v5147, %v5148
    %v5150 = vrot.slane %v5149, 2
    %v5151 = vmax.f32 %v5149, %v5150
    %v5152 = vrot.slane %v5151, 1
    %v5153 = vmax.f32 %v5151, %v5152
    %v5154 = vsel %vm4194, %v3420, -inf
    %v5155 = vrot.slane %v5154, 4
    %v5156 = vmax.f32 %v5154, %v5155
    %v5157 = vrot.slane %v5156, 2
    %v5158 = vmax.f32 %v5156, %v5157
    %v5159 = vrot.slane %v5158, 1
    %v5160 = vmax.f32 %v5158, %v5159
    %v5161 = vsel %vm4194, %v3421, -inf
    %v5162 = vrot.slane %v5161, 4
    %v5163 = vmax.f32 %v5161, %v5162
    %v5164 = vrot.slane %v5163, 2
    %v5165 = vmax.f32 %v5163, %v5164
    %v5166 = vrot.slane %v5165, 1
    %v5167 = vmax.f32 %v5165, %v5166
    %v5168 = vsel %vm4194, %v3423, -inf
    %v5169 = vrot.slane %v5168, 4
    %v5170 = vmax.f32 %v5168, %v5169
    %v5171 = vrot.slane %v5170, 2
    %v5172 = vmax.f32 %v5170, %v5171
    %v5173 = vrot.slane %v5172, 1
    %v5174 = vmax.f32 %v5172, %v5173
    %v5175 = vsel %vm4194, %v3424, -inf
    %v5176 = vrot.slane %v5175, 4
    %v5177 = vmax.f32 %v5175, %v5176
    %v5178 = vrot.slane %v5177, 2
    %v5179 = vmax.f32 %v5177, %v5178
    %v5180 = vrot.slane %v5179, 1
    %v5181 = vmax.f32 %v5179, %v5180
    %v5182 = vsel %vm4194, %v3426, -inf
    %v5183 = vrot.slane %v5182, 4
    %v5184 = vmax.f32 %v5182, %v5183
    %v5185 = vrot.slane %v5184, 2
    %v5186 = vmax.f32 %v5184, %v5185
    %v5187 = vrot.slane %v5186, 1
    %v5188 = vmax.f32 %v5186, %v5187
    %v5189 = vsel %vm4194, %v3427, -inf
    %v5190 = vrot.slane %v5189, 4
    %v5191 = vmax.f32 %v5189, %v5190
    %v5192 = vrot.slane %v5191, 2
    %v5193 = vmax.f32 %v5191, %v5192
    %v5194 = vrot.slane %v5193, 1
    %v5195 = vmax.f32 %v5193, %v5194
    %v5196 = vsel %vm4194, %v3429, -inf
    %v5197 = vrot.slane %v5196, 4
    %v5198 = vmax.f32 %v5196, %v5197
    %v5199 = vrot.slane %v5198, 2
    %v5200 = vmax.f32 %v5198, %v5199
    %v5201 = vrot.slane %v5200, 1
    %v5202 = vmax.f32 %v5200, %v5201
    %v5203 = vsel %vm4194, %v3430, -inf
    %v5204 = vrot.slane %v5203, 4
    %v5205 = vmax.f32 %v5203, %v5204
    %v5206 = vrot.slane %v5205, 2
    %v5207 = vmax.f32 %v5205, %v5206
    %v5208 = vrot.slane %v5207, 1
    %v5209 = vmax.f32 %v5207, %v5208
    %v5210 = vsel %vm4194, %v3432, -inf
    %v5211 = vrot.slane %v5210, 4
    %v5212 = vmax.f32 %v5210, %v5211
    %v5213 = vrot.slane %v5212, 2
    %v5214 = vmax.f32 %v5212, %v5213
    %v5215 = vrot.slane %v5214, 1
    %v5216 = vmax.f32 %v5214, %v5215
    %v5217 = vsel %vm4194, %v3433, -inf
    %v5218 = vrot.slane %v5217, 4
    %v5219 = vmax.f32 %v5217, %v5218
    %v5220 = vrot.slane %v5219, 2
    %v5221 = vmax.f32 %v5219, %v5220
    %v5222 = vrot.slane %v5221, 1
    %v5223 = vmax.f32 %v5221, %v5222
    %v5224 = vsel %vm4194, %v3435, -inf
    %v5225 = vrot.slane %v5224, 4
    %v5226 = vmax.f32 %v5224, %v5225
    %v5227 = vrot.slane %v5226, 2
    %v5228 = vmax.f32 %v5226, %v5227
    %v5229 = vrot.slane %v5228, 1
    %v5230 = vmax.f32 %v5228, %v5229
    %v5231 = vsel %vm4194, %v3436, -inf
    %v5232 = vrot.slane %v5231, 4
    %v5233 = vmax.f32 %v5231, %v5232
    %v5234 = vrot.slane %v5233, 2
    %v5235 = vmax.f32 %v5233, %v5234
    %v5236 = vrot.slane %v5235, 1
    %v5237 = vmax.f32 %v5235, %v5236
    %v5238 = vsel %vm4194, %v3438, -inf
    %v5239 = vrot.slane %v5238, 4
    %v5240 = vmax.f32 %v5238, %v5239
    %v5241 = vrot.slane %v5240, 2
    %v5242 = vmax.f32 %v5240, %v5241
    %v5243 = vrot.slane %v5242, 1
    %v5244 = vmax.f32 %v5242, %v5243
    %v5245 = vsel %vm4194, %v3439, -inf
    %v5246 = vrot.slane %v5245, 4
    %v5247 = vmax.f32 %v5245, %v5246
    %v5248 = vrot.slane %v5247, 2
    %v5249 = vmax.f32 %v5247, %v5248
    %v5250 = vrot.slane %v5249, 1
    %v5251 = vmax.f32 %v5249, %v5250
    %v5252 = vsel %vm4194, %v3441, -inf
    %v5253 = vrot.slane %v5252, 4
    %v5254 = vmax.f32 %v5252, %v5253
    %v5255 = vrot.slane %v5254, 2
    %v5256 = vmax.f32 %v5254, %v5255
    %v5257 = vrot.slane %v5256, 1
    %v5258 = vmax.f32 %v5256, %v5257
    %v5259 = vsel %vm4194, %v3442, -inf
    %v5260 = vrot.slane %v5259, 4
    %v5261 = vmax.f32 %v5259, %v5260
    %v5262 = vrot.slane %v5261, 2
    %v5263 = vmax.f32 %v5261, %v5262
    %v5264 = vrot.slane %v5263, 1
    %v5265 = vmax.f32 %v5263, %v5264
    %v5266 = vsel %vm4194, %v3444, -inf
    %v5267 = vrot.slane %v5266, 4
    %v5268 = vmax.f32 %v5266, %v5267
    %v5269 = vrot.slane %v5268, 2
    %v5270 = vmax.f32 %v5268, %v5269
    %v5271 = vrot.slane %v5270, 1
    %v5272 = vmax.f32 %v5270, %v5271
    %v5273 = vsel %vm4194, %v3445, -inf
    %v5274 = vrot.slane %v5273, 4
    %v5275 = vmax.f32 %v5273, %v5274
    %v5276 = vrot.slane %v5275, 2
    %v5277 = vmax.f32 %v5275, %v5276
    %v5278 = vrot.slane %v5277, 1
    %v5279 = vmax.f32 %v5277, %v5278
    %v5280 = vsel %vm4194, %v3447, -inf
    %v5281 = vrot.slane %v5280, 4
    %v5282 = vmax.f32 %v5280, %v5281
    %v5283 = vrot.slane %v5282, 2
    %v5284 = vmax.f32 %v5282, %v5283
    %v5285 = vrot.slane %v5284, 1
    %v5286 = vmax.f32 %v5284, %v5285
    %v5287 = vsel %vm4194, %v3448, -inf
    %v5288 = vrot.slane %v5287, 4
    %v5289 = vmax.f32 %v5287, %v5288
    %v5290 = vrot.slane %v5289, 2
    %v5291 = vmax.f32 %v5289, %v5290
    %v5292 = vrot.slane %v5291, 1
    %v5293 = vmax.f32 %v5291, %v5292
    %v5294 = vsel %vm4194, %v3450, -inf
    %v5295 = vrot.slane %v5294, 4
    %v5296 = vmax.f32 %v5294, %v5295
    %v5297 = vrot.slane %v5296, 2
    %v5298 = vmax.f32 %v5296, %v5297
    %v5299 = vrot.slane %v5298, 1
    %v5300 = vmax.f32 %v5298, %v5299
    %v5301 = vsel %vm4194, %v3451, -inf
    %v5302 = vrot.slane %v5301, 4
    %v5303 = vmax.f32 %v5301, %v5302
    %v5304 = vrot.slane %v5303, 2
    %v5305 = vmax.f32 %v5303, %v5304
    %v5306 = vrot.slane %v5305, 1
    %v5307 = vmax.f32 %v5305, %v5306
    %v5308 = vsel %vm4194, %v3453, -inf
    %v5309 = vrot.slane %v5308, 4
    %v5310 = vmax.f32 %v5308, %v5309
    %v5311 = vrot.slane %v5310, 2
    %v5312 = vmax.f32 %v5310, %v5311
    %v5313 = vrot.slane %v5312, 1
    %v5314 = vmax.f32 %v5312, %v5313
    %v5315 = vsel %vm4194, %v3454, -inf
    %v5316 = vrot.slane %v5315, 4
    %v5317 = vmax.f32 %v5315, %v5316
    %v5318 = vrot.slane %v5317, 2
    %v5319 = vmax.f32 %v5317, %v5318
    %v5320 = vrot.slane %v5319, 1
    %v5321 = vmax.f32 %v5319, %v5320
    %v5322 = vsel %vm4194, %v3456, -inf
    %v5323 = vrot.slane %v5322, 4
    %v5324 = vmax.f32 %v5322, %v5323
    %v5325 = vrot.slane %v5324, 2
    %v5326 = vmax.f32 %v5324, %v5325
    %v5327 = vrot.slane %v5326, 1
    %v5328 = vmax.f32 %v5326, %v5327
    %v5329 = vsel %vm4194, %v3457, -inf
    %v5330 = vrot.slane %v5329, 4
    %v5331 = vmax.f32 %v5329, %v5330
    %v5332 = vrot.slane %v5331, 2
    %v5333 = vmax.f32 %v5331, %v5332
    %v5334 = vrot.slane %v5333, 1
    %v5335 = vmax.f32 %v5333, %v5334
    %v5336 = vsel %vm4194, %v3459, -inf
    %v5337 = vrot.slane %v5336, 4
    %v5338 = vmax.f32 %v5336, %v5337
    %v5339 = vrot.slane %v5338, 2
    %v5340 = vmax.f32 %v5338, %v5339
    %v5341 = vrot.slane %v5340, 1
    %v5342 = vmax.f32 %v5340, %v5341
    %v5343 = vsel %vm4194, %v3460, -inf
    %v5344 = vrot.slane %v5343, 4
    %v5345 = vmax.f32 %v5343, %v5344
    %v5346 = vrot.slane %v5345, 2
    %v5347 = vmax.f32 %v5345, %v5346
    %v5348 = vrot.slane %v5347, 1
    %v5349 = vmax.f32 %v5347, %v5348
    %v5350 = vsel %vm4194, %v3462, -inf
    %v5351 = vrot.slane %v5350, 4
    %v5352 = vmax.f32 %v5350, %v5351
    %v5353 = vrot.slane %v5352, 2
    %v5354 = vmax.f32 %v5352, %v5353
    %v5355 = vrot.slane %v5354, 1
    %v5356 = vmax.f32 %v5354, %v5355
    %v5357 = vsel %vm4194, %v3463, -inf
    %v5358 = vrot.slane %v5357, 4
    %v5359 = vmax.f32 %v5357, %v5358
    %v5360 = vrot.slane %v5359, 2
    %v5361 = vmax.f32 %v5359, %v5360
    %v5362 = vrot.slane %v5361, 1
    %v5363 = vmax.f32 %v5361, %v5362
    %v5364 = vsel %vm4194, %v3465, -inf
    %v5365 = vrot.slane %v5364, 4
    %v5366 = vmax.f32 %v5364, %v5365
    %v5367 = vrot.slane %v5366, 2
    %v5368 = vmax.f32 %v5366, %v5367
    %v5369 = vrot.slane %v5368, 1
    %v5370 = vmax.f32 %v5368, %v5369
    %v5371 = vsel %vm4194, %v3466, -inf
    %v5372 = vrot.slane %v5371, 4
    %v5373 = vmax.f32 %v5371, %v5372
    %v5374 = vrot.slane %v5373, 2
    %v5375 = vmax.f32 %v5373, %v5374
    %v5376 = vrot.slane %v5375, 1
    %v5377 = vmax.f32 %v5375, %v5376
    %v5378 = vsel %vm4194, %v3468, -inf
    %v5379 = vrot.slane %v5378, 4
    %v5380 = vmax.f32 %v5378, %v5379
    %v5381 = vrot.slane %v5380, 2
    %v5382 = vmax.f32 %v5380, %v5381
    %v5383 = vrot.slane %v5382, 1
    %v5384 = vmax.f32 %v5382, %v5383
    %v5385 = vsel %vm4194, %v3469, -inf
    %v5386 = vrot.slane %v5385, 4
    %v5387 = vmax.f32 %v5385, %v5386
    %v5388 = vrot.slane %v5387, 2
    %v5389 = vmax.f32 %v5387, %v5388
    %v5390 = vrot.slane %v5389, 1
    %v5391 = vmax.f32 %v5389, %v5390
    %v5392 = vsel %vm4194, %v3471, -inf
    %v5393 = vrot.slane %v5392, 4
    %v5394 = vmax.f32 %v5392, %v5393
    %v5395 = vrot.slane %v5394, 2
    %v5396 = vmax.f32 %v5394, %v5395
    %v5397 = vrot.slane %v5396, 1
    %v5398 = vmax.f32 %v5396, %v5397
    %v5399 = vsel %vm4194, %v3472, -inf
    %v5400 = vrot.slane %v5399, 4
    %v5401 = vmax.f32 %v5399, %v5400
    %v5402 = vrot.slane %v5401, 2
    %v5403 = vmax.f32 %v5401, %v5402
    %v5404 = vrot.slane %v5403, 1
    %v5405 = vmax.f32 %v5403, %v5404
    %v5406 = vsel %vm4194, %v3474, -inf
    %v5407 = vrot.slane %v5406, 4
    %v5408 = vmax.f32 %v5406, %v5407
    %v5409 = vrot.slane %v5408, 2
    %v5410 = vmax.f32 %v5408, %v5409
    %v5411 = vrot.slane %v5410, 1
    %v5412 = vmax.f32 %v5410, %v5411
    %v5413 = vsel %vm4194, %v3475, -inf
    %v5414 = vrot.slane %v5413, 4
    %v5415 = vmax.f32 %v5413, %v5414
    %v5416 = vrot.slane %v5415, 2
    %v5417 = vmax.f32 %v5415, %v5416
    %v5418 = vrot.slane %v5417, 1
    %v5419 = vmax.f32 %v5417, %v5418
    %v5420 = vsel %vm4194, %v3477, -inf
    %v5421 = vrot.slane %v5420, 4
    %v5422 = vmax.f32 %v5420, %v5421
    %v5423 = vrot.slane %v5422, 2
    %v5424 = vmax.f32 %v5422, %v5423
    %v5425 = vrot.slane %v5424, 1
    %v5426 = vmax.f32 %v5424, %v5425
    %v5427 = vsel %vm4194, %v3478, -inf
    %v5428 = vrot.slane %v5427, 4
    %v5429 = vmax.f32 %v5427, %v5428
    %v5430 = vrot.slane %v5429, 2
    %v5431 = vmax.f32 %v5429, %v5430
    %v5432 = vrot.slane %v5431, 1
    %v5433 = vmax.f32 %v5431, %v5432
    %v5434 = vsel %vm4194, %v3480, -inf
    %v5435 = vrot.slane %v5434, 4
    %v5436 = vmax.f32 %v5434, %v5435
    %v5437 = vrot.slane %v5436, 2
    %v5438 = vmax.f32 %v5436, %v5437
    %v5439 = vrot.slane %v5438, 1
    %v5440 = vmax.f32 %v5438, %v5439
    %v5441 = vsel %vm4194, %v3481, -inf
    %v5442 = vrot.slane %v5441, 4
    %v5443 = vmax.f32 %v5441, %v5442
    %v5444 = vrot.slane %v5443, 2
    %v5445 = vmax.f32 %v5443, %v5444
    %v5446 = vrot.slane %v5445, 1
    %v5447 = vmax.f32 %v5445, %v5446
    %v5448 = vsel %vm4194, %v3483, -inf
    %v5449 = vrot.slane %v5448, 4
    %v5450 = vmax.f32 %v5448, %v5449
    %v5451 = vrot.slane %v5450, 2
    %v5452 = vmax.f32 %v5450, %v5451
    %v5453 = vrot.slane %v5452, 1
    %v5454 = vmax.f32 %v5452, %v5453
    %v5455 = vsel %vm4194, %v3484, -inf
    %v5456 = vrot.slane %v5455, 4
    %v5457 = vmax.f32 %v5455, %v5456
    %v5458 = vrot.slane %v5457, 2
    %v5459 = vmax.f32 %v5457, %v5458
    %v5460 = vrot.slane %v5459, 1
    %v5461 = vmax.f32 %v5459, %v5460
    %v5462 = vsel %vm4194, %v3486, -inf
    %v5463 = vrot.slane %v5462, 4
    %v5464 = vmax.f32 %v5462, %v5463
    %v5465 = vrot.slane %v5464, 2
    %v5466 = vmax.f32 %v5464, %v5465
    %v5467 = vrot.slane %v5466, 1
    %v5468 = vmax.f32 %v5466, %v5467
    %v5469 = vsel %vm4194, %v3487, -inf
    %v5470 = vrot.slane %v5469, 4
    %v5471 = vmax.f32 %v5469, %v5470
    %v5472 = vrot.slane %v5471, 2
    %v5473 = vmax.f32 %v5471, %v5472
    %v5474 = vrot.slane %v5473, 1
    %v5475 = vmax.f32 %v5473, %v5474
    %v5476 = vsel %vm4194, %v3489, -inf
    %v5477 = vrot.slane %v5476, 4
    %v5478 = vmax.f32 %v5476, %v5477
    %v5479 = vrot.slane %v5478, 2
    %v5480 = vmax.f32 %v5478, %v5479
    %v5481 = vrot.slane %v5480, 1
    %v5482 = vmax.f32 %v5480, %v5481
    %v5483 = vsel %vm4194, %v3490, -inf
    %v5484 = vrot.slane %v5483, 4
    %v5485 = vmax.f32 %v5483, %v5484
    %v5486 = vrot.slane %v5485, 2
    %v5487 = vmax.f32 %v5485, %v5486
    %v5488 = vrot.slane %v5487, 1
    %v5489 = vmax.f32 %v5487, %v5488
    %v5490 = vsel %vm4194, %v3492, -inf
    %v5491 = vrot.slane %v5490, 4
    %v5492 = vmax.f32 %v5490, %v5491
    %v5493 = vrot.slane %v5492, 2
    %v5494 = vmax.f32 %v5492, %v5493
    %v5495 = vrot.slane %v5494, 1
    %v5496 = vmax.f32 %v5494, %v5495
    %v5497 = vsel %vm4194, %v3493, -inf
    %v5498 = vrot.slane %v5497, 4
    %v5499 = vmax.f32 %v5497, %v5498
    %v5500 = vrot.slane %v5499, 2
    %v5501 = vmax.f32 %v5499, %v5500
    %v5502 = vrot.slane %v5501, 1
    %v5503 = vmax.f32 %v5501, %v5502
    %v5504 = vsel %vm4194, %v3495, -inf
    %v5505 = vrot.slane %v5504, 4
    %v5506 = vmax.f32 %v5504, %v5505
    %v5507 = vrot.slane %v5506, 2
    %v5508 = vmax.f32 %v5506, %v5507
    %v5509 = vrot.slane %v5508, 1
    %v5510 = vmax.f32 %v5508, %v5509
    %v5511 = vsel %vm4194, %v3496, -inf
    %v5512 = vrot.slane %v5511, 4
    %v5513 = vmax.f32 %v5511, %v5512
    %v5514 = vrot.slane %v5513, 2
    %v5515 = vmax.f32 %v5513, %v5514
    %v5516 = vrot.slane %v5515, 1
    %v5517 = vmax.f32 %v5515, %v5516
    %v5518 = vsel %vm4194, %v3498, -inf
    %v5519 = vrot.slane %v5518, 4
    %v5520 = vmax.f32 %v5518, %v5519
    %v5521 = vrot.slane %v5520, 2
    %v5522 = vmax.f32 %v5520, %v5521
    %v5523 = vrot.slane %v5522, 1
    %v5524 = vmax.f32 %v5522, %v5523
    %v5525 = vsel %vm4194, %v3499, -inf
    %v5526 = vrot.slane %v5525, 4
    %v5527 = vmax.f32 %v5525, %v5526
    %v5528 = vrot.slane %v5527, 2
    %v5529 = vmax.f32 %v5527, %v5528
    %v5530 = vrot.slane %v5529, 1
    %v5531 = vmax.f32 %v5529, %v5530
    %v5532 = vsel %vm4194, %v3501, -inf
    %v5533 = vrot.slane %v5532, 4
    %v5534 = vmax.f32 %v5532, %v5533
    %v5535 = vrot.slane %v5534, 2
    %v5536 = vmax.f32 %v5534, %v5535
    %v5537 = vrot.slane %v5536, 1
    %v5538 = vmax.f32 %v5536, %v5537
    %v5539 = vsel %vm4194, %v3502, -inf
    %v5540 = vrot.slane %v5539, 4
    %v5541 = vmax.f32 %v5539, %v5540
    %v5542 = vrot.slane %v5541, 2
    %v5543 = vmax.f32 %v5541, %v5542
    %v5544 = vrot.slane %v5543, 1
    %v5545 = vmax.f32 %v5543, %v5544
    %v5546 = vsel %vm4194, %v3504, -inf
    %v5547 = vrot.slane %v5546, 4
    %v5548 = vmax.f32 %v5546, %v5547
    %v5549 = vrot.slane %v5548, 2
    %v5550 = vmax.f32 %v5548, %v5549
    %v5551 = vrot.slane %v5550, 1
    %v5552 = vmax.f32 %v5550, %v5551
    %v5553 = vsel %vm4194, %v3505, -inf
    %v5554 = vrot.slane %v5553, 4
    %v5555 = vmax.f32 %v5553, %v5554
    %v5556 = vrot.slane %v5555, 2
    %v5557 = vmax.f32 %v5555, %v5556
    %v5558 = vrot.slane %v5557, 1
    %v5559 = vmax.f32 %v5557, %v5558
    %v5560 = vsel %vm4194, %v3507, -inf
    %v5561 = vrot.slane %v5560, 4
    %v5562 = vmax.f32 %v5560, %v5561
    %v5563 = vrot.slane %v5562, 2
    %v5564 = vmax.f32 %v5562, %v5563
    %v5565 = vrot.slane %v5564, 1
    %v5566 = vmax.f32 %v5564, %v5565
    %v5567 = vsel %vm4194, %v3508, -inf
    %v5568 = vrot.slane %v5567, 4
    %v5569 = vmax.f32 %v5567, %v5568
    %v5570 = vrot.slane %v5569, 2
    %v5571 = vmax.f32 %v5569, %v5570
    %v5572 = vrot.slane %v5571, 1
    %v5573 = vmax.f32 %v5571, %v5572
    %v5574 = vsel %vm4194, %v3510, -inf
    %v5575 = vrot.slane %v5574, 4
    %v5576 = vmax.f32 %v5574, %v5575
    %v5577 = vrot.slane %v5576, 2
    %v5578 = vmax.f32 %v5576, %v5577
    %v5579 = vrot.slane %v5578, 1
    %v5580 = vmax.f32 %v5578, %v5579
    %v5581 = vsel %vm4194, %v3511, -inf
    %v5582 = vrot.slane %v5581, 4
    %v5583 = vmax.f32 %v5581, %v5582
    %v5584 = vrot.slane %v5583, 2
    %v5585 = vmax.f32 %v5583, %v5584
    %v5586 = vrot.slane %v5585, 1
    %v5587 = vmax.f32 %v5585, %v5586
    %v5588 = vsel %vm4194, %v3513, -inf
    %v5589 = vrot.slane %v5588, 4
    %v5590 = vmax.f32 %v5588, %v5589
    %v5591 = vrot.slane %v5590, 2
    %v5592 = vmax.f32 %v5590, %v5591
    %v5593 = vrot.slane %v5592, 1
    %v5594 = vmax.f32 %v5592, %v5593
    %v5595 = vsel %vm4194, %v3514, -inf
    %v5596 = vrot.slane %v5595, 4
    %v5597 = vmax.f32 %v5595, %v5596
    %v5598 = vrot.slane %v5597, 2
    %v5599 = vmax.f32 %v5597, %v5598
    %v5600 = vrot.slane %v5599, 1
    %v5601 = vmax.f32 %v5599, %v5600
    %v5602 = vsel %vm4194, %v3516, -inf
    %v5603 = vrot.slane %v5602, 4
    %v5604 = vmax.f32 %v5602, %v5603
    %v5605 = vrot.slane %v5604, 2
    %v5606 = vmax.f32 %v5604, %v5605
    %v5607 = vrot.slane %v5606, 1
    %v5608 = vmax.f32 %v5606, %v5607
    %v5609 = vsel %vm4194, %v3517, -inf
    %v5610 = vrot.slane %v5609, 4
    %v5611 = vmax.f32 %v5609, %v5610
    %v5612 = vrot.slane %v5611, 2
    %v5613 = vmax.f32 %v5611, %v5612
    %v5614 = vrot.slane %v5613, 1
    %v5615 = vmax.f32 %v5613, %v5614
    %v5616 = vsel %vm4194, %v3519, -inf
    %v5617 = vrot.slane %v5616, 4
    %v5618 = vmax.f32 %v5616, %v5617
    %v5619 = vrot.slane %v5618, 2
    %v5620 = vmax.f32 %v5618, %v5619
    %v5621 = vrot.slane %v5620, 1
    %v5622 = vmax.f32 %v5620, %v5621
    %v5623 = vsel %vm4194, %v3520, -inf
    %v5624 = vrot.slane %v5623, 4
    %v5625 = vmax.f32 %v5623, %v5624
    %v5626 = vrot.slane %v5625, 2
    %v5627 = vmax.f32 %v5625, %v5626
    %v5628 = vrot.slane %v5627, 1
    %v5629 = vmax.f32 %v5627, %v5628
    %v5630 = vsel %vm4194, %v3522, -inf
    %v5631 = vrot.slane %v5630, 4
    %v5632 = vmax.f32 %v5630, %v5631
    %v5633 = vrot.slane %v5632, 2
    %v5634 = vmax.f32 %v5632, %v5633
    %v5635 = vrot.slane %v5634, 1
    %v5636 = vmax.f32 %v5634, %v5635
    %v5637 = vsel %vm4194, %v3523, -inf
    %v5638 = vrot.slane %v5637, 4
    %v5639 = vmax.f32 %v5637, %v5638
    %v5640 = vrot.slane %v5639, 2
    %v5641 = vmax.f32 %v5639, %v5640
    %v5642 = vrot.slane %v5641, 1
    %v5643 = vmax.f32 %v5641, %v5642
    %v5644 = vsel %vm4194, %v3525, -inf
    %v5645 = vrot.slane %v5644, 4
    %v5646 = vmax.f32 %v5644, %v5645
    %v5647 = vrot.slane %v5646, 2
    %v5648 = vmax.f32 %v5646, %v5647
    %v5649 = vrot.slane %v5648, 1
    %v5650 = vmax.f32 %v5648, %v5649
    %v5651 = vsel %vm4194, %v3526, -inf
    %v5652 = vrot.slane %v5651, 4
    %v5653 = vmax.f32 %v5651, %v5652
    %v5654 = vrot.slane %v5653, 2
    %v5655 = vmax.f32 %v5653, %v5654
    %v5656 = vrot.slane %v5655, 1
    %v5657 = vmax.f32 %v5655, %v5656
    %v5658 = vsel %vm4194, %v3528, -inf
    %v5659 = vrot.slane %v5658, 4
    %v5660 = vmax.f32 %v5658, %v5659
    %v5661 = vrot.slane %v5660, 2
    %v5662 = vmax.f32 %v5660, %v5661
    %v5663 = vrot.slane %v5662, 1
    %v5664 = vmax.f32 %v5662, %v5663
    %v5665 = vsel %vm4194, %v3529, -inf
    %v5666 = vrot.slane %v5665, 4
    %v5667 = vmax.f32 %v5665, %v5666
    %v5668 = vrot.slane %v5667, 2
    %v5669 = vmax.f32 %v5667, %v5668
    %v5670 = vrot.slane %v5669, 1
    %v5671 = vmax.f32 %v5669, %v5670
    %v5672 = vsel %vm4194, %v3531, -inf
    %v5673 = vrot.slane %v5672, 4
    %v5674 = vmax.f32 %v5672, %v5673
    %v5675 = vrot.slane %v5674, 2
    %v5676 = vmax.f32 %v5674, %v5675
    %v5677 = vrot.slane %v5676, 1
    %v5678 = vmax.f32 %v5676, %v5677
    %v5679 = vsel %vm4194, %v3532, -inf
    %v5680 = vrot.slane %v5679, 4
    %v5681 = vmax.f32 %v5679, %v5680
    %v5682 = vrot.slane %v5681, 2
    %v5683 = vmax.f32 %v5681, %v5682
    %v5684 = vrot.slane %v5683, 1
    %v5685 = vmax.f32 %v5683, %v5684
    %v5686 = vsel %vm4194, %v3534, -inf
    %v5687 = vrot.slane %v5686, 4
    %v5688 = vmax.f32 %v5686, %v5687
    %v5689 = vrot.slane %v5688, 2
    %v5690 = vmax.f32 %v5688, %v5689
    %v5691 = vrot.slane %v5690, 1
    %v5692 = vmax.f32 %v5690, %v5691
    %v5693 = vsel %vm4194, %v3535, -inf
    %v5694 = vrot.slane %v5693, 4
    %v5695 = vmax.f32 %v5693, %v5694
    %v5696 = vrot.slane %v5695, 2
    %v5697 = vmax.f32 %v5695, %v5696
    %v5698 = vrot.slane %v5697, 1
    %v5699 = vmax.f32 %v5697, %v5698
    %v5700 = vsel %vm4194, %v3537, -inf
    %v5701 = vrot.slane %v5700, 4
    %v5702 = vmax.f32 %v5700, %v5701
    %v5703 = vrot.slane %v5702, 2
    %v5704 = vmax.f32 %v5702, %v5703
    %v5705 = vrot.slane %v5704, 1
    %v5706 = vmax.f32 %v5704, %v5705
    %v5707 = vsel %vm4194, %v3538, -inf
    %v5708 = vrot.slane %v5707, 4
    %v5709 = vmax.f32 %v5707, %v5708
    %v5710 = vrot.slane %v5709, 2
    %v5711 = vmax.f32 %v5709, %v5710
    %v5712 = vrot.slane %v5711, 1
    %v5713 = vmax.f32 %v5711, %v5712
    %v5714 = vsel %vm4194, %v3540, -inf
    %v5715 = vrot.slane %v5714, 4
    %v5716 = vmax.f32 %v5714, %v5715
    %v5717 = vrot.slane %v5716, 2
    %v5718 = vmax.f32 %v5716, %v5717
    %v5719 = vrot.slane %v5718, 1
    %v5720 = vmax.f32 %v5718, %v5719
    %v5721 = vsel %vm4194, %v3541, -inf
    %v5722 = vrot.slane %v5721, 4
    %v5723 = vmax.f32 %v5721, %v5722
    %v5724 = vrot.slane %v5723, 2
    %v5725 = vmax.f32 %v5723, %v5724
    %v5726 = vrot.slane %v5725, 1
    %v5727 = vmax.f32 %v5725, %v5726
    %v5728 = vsel %vm4194, %v3543, -inf
    %v5729 = vrot.slane %v5728, 4
    %v5730 = vmax.f32 %v5728, %v5729
    %v5731 = vrot.slane %v5730, 2
    %v5732 = vmax.f32 %v5730, %v5731
    %v5733 = vrot.slane %v5732, 1
    %v5734 = vmax.f32 %v5732, %v5733
    %v5735 = vsel %vm4194, %v3544, -inf
    %v5736 = vrot.slane %v5735, 4
    %v5737 = vmax.f32 %v5735, %v5736
    %v5738 = vrot.slane %v5737, 2
    %v5739 = vmax.f32 %v5737, %v5738
    %v5740 = vrot.slane %v5739, 1
    %v5741 = vmax.f32 %v5739, %v5740
    %v5742 = vsel %vm4194, %v3546, -inf
    %v5743 = vrot.slane %v5742, 4
    %v5744 = vmax.f32 %v5742, %v5743
    %v5745 = vrot.slane %v5744, 2
    %v5746 = vmax.f32 %v5744, %v5745
    %v5747 = vrot.slane %v5746, 1
    %v5748 = vmax.f32 %v5746, %v5747
    %v5749 = vsel %vm4194, %v3547, -inf
    %v5750 = vrot.slane %v5749, 4
    %v5751 = vmax.f32 %v5749, %v5750
    %v5752 = vrot.slane %v5751, 2
    %v5753 = vmax.f32 %v5751, %v5752
    %v5754 = vrot.slane %v5753, 1
    %v5755 = vmax.f32 %v5753, %v5754
    %v5756 = vsel %vm4194, %v3549, -inf
    %v5757 = vrot.slane %v5756, 4
    %v5758 = vmax.f32 %v5756, %v5757
    %v5759 = vrot.slane %v5758, 2
    %v5760 = vmax.f32 %v5758, %v5759
    %v5761 = vrot.slane %v5760, 1
    %v5762 = vmax.f32 %v5760, %v5761
    %v5763 = vsel %vm4194, %v3550, -inf
    %v5764 = vrot.slane %v5763, 4
    %v5765 = vmax.f32 %v5763, %v5764
    %v5766 = vrot.slane %v5765, 2
    %v5767 = vmax.f32 %v5765, %v5766
    %v5768 = vrot.slane %v5767, 1
    %v5769 = vmax.f32 %v5767, %v5768
    %v5770 = vsel %vm4194, %v3552, -inf
    %v5771 = vrot.slane %v5770, 4
    %v5772 = vmax.f32 %v5770, %v5771
    %v5773 = vrot.slane %v5772, 2
    %v5774 = vmax.f32 %v5772, %v5773
    %v5775 = vrot.slane %v5774, 1
    %v5776 = vmax.f32 %v5774, %v5775
    %v5777 = vsel %vm4194, %v3553, -inf
    %v5778 = vrot.slane %v5777, 4
    %v5779 = vmax.f32 %v5777, %v5778
    %v5780 = vrot.slane %v5779, 2
    %v5781 = vmax.f32 %v5779, %v5780
    %v5782 = vrot.slane %v5781, 1
    %v5783 = vmax.f32 %v5781, %v5782
    %v5784 = vsel %vm4194, %v3555, -inf
    %v5785 = vrot.slane %v5784, 4
    %v5786 = vmax.f32 %v5784, %v5785
    %v5787 = vrot.slane %v5786, 2
    %v5788 = vmax.f32 %v5786, %v5787
    %v5789 = vrot.slane %v5788, 1
    %v5790 = vmax.f32 %v5788, %v5789
    %v5791 = vsel %vm4194, %v3556, -inf
    %v5792 = vrot.slane %v5791, 4
    %v5793 = vmax.f32 %v5791, %v5792
    %v5794 = vrot.slane %v5793, 2
    %v5795 = vmax.f32 %v5793, %v5794
    %v5796 = vrot.slane %v5795, 1
    %v5797 = vmax.f32 %v5795, %v5796
    %v5798 = vsel %vm4194, %v3558, -inf
    %v5799 = vrot.slane %v5798, 4
    %v5800 = vmax.f32 %v5798, %v5799
    %v5801 = vrot.slane %v5800, 2
    %v5802 = vmax.f32 %v5800, %v5801
    %v5803 = vrot.slane %v5802, 1
    %v5804 = vmax.f32 %v5802, %v5803
    %v5805 = vsel %vm4194, %v3559, -inf
    %v5806 = vrot.slane %v5805, 4
    %v5807 = vmax.f32 %v5805, %v5806
    %v5808 = vrot.slane %v5807, 2
    %v5809 = vmax.f32 %v5807, %v5808
    %v5810 = vrot.slane %v5809, 1
    %v5811 = vmax.f32 %v5809, %v5810
    %v5812 = vsel %vm4194, %v3561, -inf
    %v5813 = vrot.slane %v5812, 4
    %v5814 = vmax.f32 %v5812, %v5813
    %v5815 = vrot.slane %v5814, 2
    %v5816 = vmax.f32 %v5814, %v5815
    %v5817 = vrot.slane %v5816, 1
    %v5818 = vmax.f32 %v5816, %v5817
    %v5819 = vsel %vm4194, %v3562, -inf
    %v5820 = vrot.slane %v5819, 4
    %v5821 = vmax.f32 %v5819, %v5820
    %v5822 = vrot.slane %v5821, 2
    %v5823 = vmax.f32 %v5821, %v5822
    %v5824 = vrot.slane %v5823, 1
    %v5825 = vmax.f32 %v5823, %v5824
    %v5826 = vsel %vm4194, %v3564, -inf
    %v5827 = vrot.slane %v5826, 4
    %v5828 = vmax.f32 %v5826, %v5827
    %v5829 = vrot.slane %v5828, 2
    %v5830 = vmax.f32 %v5828, %v5829
    %v5831 = vrot.slane %v5830, 1
    %v5832 = vmax.f32 %v5830, %v5831
    %v5833 = vsel %vm4194, %v3565, -inf
    %v5834 = vrot.slane %v5833, 4
    %v5835 = vmax.f32 %v5833, %v5834
    %v5836 = vrot.slane %v5835, 2
    %v5837 = vmax.f32 %v5835, %v5836
    %v5838 = vrot.slane %v5837, 1
    %v5839 = vmax.f32 %v5837, %v5838
    %v5840 = vsel %vm4194, %v3567, -inf
    %v5841 = vrot.slane %v5840, 4
    %v5842 = vmax.f32 %v5840, %v5841
    %v5843 = vrot.slane %v5842, 2
    %v5844 = vmax.f32 %v5842, %v5843
    %v5845 = vrot.slane %v5844, 1
    %v5846 = vmax.f32 %v5844, %v5845
    %v5847 = vsel %vm4194, %v3568, -inf
    %v5848 = vrot.slane %v5847, 4
    %v5849 = vmax.f32 %v5847, %v5848
    %v5850 = vrot.slane %v5849, 2
    %v5851 = vmax.f32 %v5849, %v5850
    %v5852 = vrot.slane %v5851, 1
    %v5853 = vmax.f32 %v5851, %v5852
    %v5854 = vsel %vm4194, %v3570, -inf
    %v5855 = vrot.slane %v5854, 4
    %v5856 = vmax.f32 %v5854, %v5855
    %v5857 = vrot.slane %v5856, 2
    %v5858 = vmax.f32 %v5856, %v5857
    %v5859 = vrot.slane %v5858, 1
    %v5860 = vmax.f32 %v5858, %v5859
    %v5861 = vsel %vm4194, %v3571, -inf
    %v5862 = vrot.slane %v5861, 4
    %v5863 = vmax.f32 %v5861, %v5862
    %v5864 = vrot.slane %v5863, 2
    %v5865 = vmax.f32 %v5863, %v5864
    %v5866 = vrot.slane %v5865, 1
    %v5867 = vmax.f32 %v5865, %v5866
    %v5868 = vsel %vm4194, %v3573, -inf
    %v5869 = vrot.slane %v5868, 4
    %v5870 = vmax.f32 %v5868, %v5869
    %v5871 = vrot.slane %v5870, 2
    %v5872 = vmax.f32 %v5870, %v5871
    %v5873 = vrot.slane %v5872, 1
    %v5874 = vmax.f32 %v5872, %v5873
    %v5875 = vsel %vm4194, %v3574, -inf
    %v5876 = vrot.slane %v5875, 4
    %v5877 = vmax.f32 %v5875, %v5876
    %v5878 = vrot.slane %v5877, 2
    %v5879 = vmax.f32 %v5877, %v5878
    %v5880 = vrot.slane %v5879, 1
    %v5881 = vmax.f32 %v5879, %v5880
    %v5882 = vsel %vm4194, %v3576, -inf
    %v5883 = vrot.slane %v5882, 4
    %v5884 = vmax.f32 %v5882, %v5883
    %v5885 = vrot.slane %v5884, 2
    %v5886 = vmax.f32 %v5884, %v5885
    %v5887 = vrot.slane %v5886, 1
    %v5888 = vmax.f32 %v5886, %v5887
    %v5889 = vsel %vm4194, %v3577, -inf
    %v5890 = vrot.slane %v5889, 4
    %v5891 = vmax.f32 %v5889, %v5890
    %v5892 = vrot.slane %v5891, 2
    %v5893 = vmax.f32 %v5891, %v5892
    %v5894 = vrot.slane %v5893, 1
    %v5895 = vmax.f32 %v5893, %v5894
    %v5896 = vsel %vm4194, %v3579, -inf
    %v5897 = vrot.slane %v5896, 4
    %v5898 = vmax.f32 %v5896, %v5897
    %v5899 = vrot.slane %v5898, 2
    %v5900 = vmax.f32 %v5898, %v5899
    %v5901 = vrot.slane %v5900, 1
    %v5902 = vmax.f32 %v5900, %v5901
    %v5903 = vsel %vm4194, %v3580, -inf
    %v5904 = vrot.slane %v5903, 4
    %v5905 = vmax.f32 %v5903, %v5904
    %v5906 = vrot.slane %v5905, 2
    %v5907 = vmax.f32 %v5905, %v5906
    %v5908 = vrot.slane %v5907, 1
    %v5909 = vmax.f32 %v5907, %v5908
    %v5910 = vsel %vm4194, %v3582, -inf
    %v5911 = vrot.slane %v5910, 4
    %v5912 = vmax.f32 %v5910, %v5911
    %v5913 = vrot.slane %v5912, 2
    %v5914 = vmax.f32 %v5912, %v5913
    %v5915 = vrot.slane %v5914, 1
    %v5916 = vmax.f32 %v5914, %v5915
    %v5917 = vsel %vm4194, %v3583, -inf
    %v5918 = vrot.slane %v5917, 4
    %v5919 = vmax.f32 %v5917, %v5918
    %v5920 = vrot.slane %v5919, 2
    %v5921 = vmax.f32 %v5919, %v5920
    %v5922 = vrot.slane %v5921, 1
    %v5923 = vmax.f32 %v5921, %v5922
    %v5924 = vsel %vm4194, %v3585, -inf
    %v5925 = vrot.slane %v5924, 4
    %v5926 = vmax.f32 %v5924, %v5925
    %v5927 = vrot.slane %v5926, 2
    %v5928 = vmax.f32 %v5926, %v5927
    %v5929 = vrot.slane %v5928, 1
    %v5930 = vmax.f32 %v5928, %v5929
    %v5931 = vsel %vm4194, %v3586, -inf
    %v5932 = vrot.slane %v5931, 4
    %v5933 = vmax.f32 %v5931, %v5932
    %v5934 = vrot.slane %v5933, 2
    %v5935 = vmax.f32 %v5933, %v5934
    %v5936 = vrot.slane %v5935, 1
    %v5937 = vmax.f32 %v5935, %v5936
    %v5938 = vsel %vm4194, %v3588, -inf
    %v5939 = vrot.slane %v5938, 4
    %v5940 = vmax.f32 %v5938, %v5939
    %v5941 = vrot.slane %v5940, 2
    %v5942 = vmax.f32 %v5940, %v5941
    %v5943 = vrot.slane %v5942, 1
    %v5944 = vmax.f32 %v5942, %v5943
    %v5945 = vsel %vm4194, %v3589, -inf
    %v5946 = vrot.slane %v5945, 4
    %v5947 = vmax.f32 %v5945, %v5946
    %v5948 = vrot.slane %v5947, 2
    %v5949 = vmax.f32 %v5947, %v5948
    %v5950 = vrot.slane %v5949, 1
    %v5951 = vmax.f32 %v5949, %v5950
    %v5952 = vsel %vm4194, %v3591, -inf
    %v5953 = vrot.slane %v5952, 4
    %v5954 = vmax.f32 %v5952, %v5953
    %v5955 = vrot.slane %v5954, 2
    %v5956 = vmax.f32 %v5954, %v5955
    %v5957 = vrot.slane %v5956, 1
    %v5958 = vmax.f32 %v5956, %v5957
    %v5959 = vsel %vm4194, %v3592, -inf
    %v5960 = vrot.slane %v5959, 4
    %v5961 = vmax.f32 %v5959, %v5960
    %v5962 = vrot.slane %v5961, 2
    %v5963 = vmax.f32 %v5961, %v5962
    %v5964 = vrot.slane %v5963, 1
    %v5965 = vmax.f32 %v5963, %v5964
    %v5966 = vsel %vm4194, %v3594, -inf
    %v5967 = vrot.slane %v5966, 4
    %v5968 = vmax.f32 %v5966, %v5967
    %v5969 = vrot.slane %v5968, 2
    %v5970 = vmax.f32 %v5968, %v5969
    %v5971 = vrot.slane %v5970, 1
    %v5972 = vmax.f32 %v5970, %v5971
    %v5973 = vsel %vm4194, %v3595, -inf
    %v5974 = vrot.slane %v5973, 4
    %v5975 = vmax.f32 %v5973, %v5974
    %v5976 = vrot.slane %v5975, 2
    %v5977 = vmax.f32 %v5975, %v5976
    %v5978 = vrot.slane %v5977, 1
    %v5979 = vmax.f32 %v5977, %v5978
    %v5980 = vsel %vm4194, %v3597, -inf
    %v5981 = vrot.slane %v5980, 4
    %v5982 = vmax.f32 %v5980, %v5981
    %v5983 = vrot.slane %v5982, 2
    %v5984 = vmax.f32 %v5982, %v5983
    %v5985 = vrot.slane %v5984, 1
    %v5986 = vmax.f32 %v5984, %v5985
    %v5987 = vsel %vm4194, %v3598, -inf
    %v5988 = vrot.slane %v5987, 4
    %v5989 = vmax.f32 %v5987, %v5988
    %v5990 = vrot.slane %v5989, 2
    %v5991 = vmax.f32 %v5989, %v5990
    %v5992 = vrot.slane %v5991, 1
    %v5993 = vmax.f32 %v5991, %v5992
    %v5994 = vsel %vm4194, %v3600, -inf
    %v5995 = vrot.slane %v5994, 4
    %v5996 = vmax.f32 %v5994, %v5995
    %v5997 = vrot.slane %v5996, 2
    %v5998 = vmax.f32 %v5996, %v5997
    %v5999 = vrot.slane %v5998, 1
    %v6000 = vmax.f32 %v5998, %v5999
    %v6001 = vsel %vm4194, %v3601, -inf
    %v6002 = vrot.slane %v6001, 4
    %v6003 = vmax.f32 %v6001, %v6002
    %v6004 = vrot.slane %v6003, 2
    %v6005 = vmax.f32 %v6003, %v6004
    %v6006 = vrot.slane %v6005, 1
    %v6007 = vmax.f32 %v6005, %v6006
    %v6008 = vsel %vm4194, %v3603, -inf
    %v6009 = vrot.slane %v6008, 4
    %v6010 = vmax.f32 %v6008, %v6009
    %v6011 = vrot.slane %v6010, 2
    %v6012 = vmax.f32 %v6010, %v6011
    %v6013 = vrot.slane %v6012, 1
    %v6014 = vmax.f32 %v6012, %v6013
    %v6015 = vsel %vm4194, %v3604, -inf
    %v6016 = vrot.slane %v6015, 4
    %v6017 = vmax.f32 %v6015, %v6016
    %v6018 = vrot.slane %v6017, 2
    %v6019 = vmax.f32 %v6017, %v6018
    %v6020 = vrot.slane %v6019, 1
    %v6021 = vmax.f32 %v6019, %v6020
    %v6022 = vsel %vm4194, %v3606, -inf
    %v6023 = vrot.slane %v6022, 4
    %v6024 = vmax.f32 %v6022, %v6023
    %v6025 = vrot.slane %v6024, 2
    %v6026 = vmax.f32 %v6024, %v6025
    %v6027 = vrot.slane %v6026, 1
    %v6028 = vmax.f32 %v6026, %v6027
    %v6029 = vsel %vm4194, %v3607, -inf
    %v6030 = vrot.slane %v6029, 4
    %v6031 = vmax.f32 %v6029, %v6030
    %v6032 = vrot.slane %v6031, 2
    %v6033 = vmax.f32 %v6031, %v6032
    %v6034 = vrot.slane %v6033, 1
    %v6035 = vmax.f32 %v6033, %v6034
    %v6036 = vsel %vm4194, %v3609, -inf
    %v6037 = vrot.slane %v6036, 4
    %v6038 = vmax.f32 %v6036, %v6037
    %v6039 = vrot.slane %v6038, 2
    %v6040 = vmax.f32 %v6038, %v6039
    %v6041 = vrot.slane %v6040, 1
    %v6042 = vmax.f32 %v6040, %v6041
    %v6043 = vsel %vm4194, %v3610, -inf
    %v6044 = vrot.slane %v6043, 4
    %v6045 = vmax.f32 %v6043, %v6044
    %v6046 = vrot.slane %v6045, 2
    %v6047 = vmax.f32 %v6045, %v6046
    %v6048 = vrot.slane %v6047, 1
    %v6049 = vmax.f32 %v6047, %v6048
    %v6050 = vsel %vm4194, %v3612, -inf
    %v6051 = vrot.slane %v6050, 4
    %v6052 = vmax.f32 %v6050, %v6051
    %v6053 = vrot.slane %v6052, 2
    %v6054 = vmax.f32 %v6052, %v6053
    %v6055 = vrot.slane %v6054, 1
    %v6056 = vmax.f32 %v6054, %v6055
    %v6057 = vsel %vm4194, %v3613, -inf
    %v6058 = vrot.slane %v6057, 4
    %v6059 = vmax.f32 %v6057, %v6058
    %v6060 = vrot.slane %v6059, 2
    %v6061 = vmax.f32 %v6059, %v6060
    %v6062 = vrot.slane %v6061, 1
    %v6063 = vmax.f32 %v6061, %v6062
    %v6064 = vsel %vm4194, %v3615, -inf
    %v6065 = vrot.slane %v6064, 4
    %v6066 = vmax.f32 %v6064, %v6065
    %v6067 = vrot.slane %v6066, 2
    %v6068 = vmax.f32 %v6066, %v6067
    %v6069 = vrot.slane %v6068, 1
    %v6070 = vmax.f32 %v6068, %v6069
    %v6071 = vsel %vm4194, %v3616, -inf
    %v6072 = vrot.slane %v6071, 4
    %v6073 = vmax.f32 %v6071, %v6072
    %v6074 = vrot.slane %v6073, 2
    %v6075 = vmax.f32 %v6073, %v6074
    %v6076 = vrot.slane %v6075, 1
    %v6077 = vmax.f32 %v6075, %v6076
    %v6078 = vsel %vm4194, %v3618, -inf
    %v6079 = vrot.slane %v6078, 4
    %v6080 = vmax.f32 %v6078, %v6079
    %v6081 = vrot.slane %v6080, 2
    %v6082 = vmax.f32 %v6080, %v6081
    %v6083 = vrot.slane %v6082, 1
    %v6084 = vmax.f32 %v6082, %v6083
    %v6085 = vsel %vm4194, %v3619, -inf
    %v6086 = vrot.slane %v6085, 4
    %v6087 = vmax.f32 %v6085, %v6086
    %v6088 = vrot.slane %v6087, 2
    %v6089 = vmax.f32 %v6087, %v6088
    %v6090 = vrot.slane %v6089, 1
    %v6091 = vmax.f32 %v6089, %v6090
    %v6092 = vsel %vm4194, %v3621, -inf
    %v6093 = vrot.slane %v6092, 4
    %v6094 = vmax.f32 %v6092, %v6093
    %v6095 = vrot.slane %v6094, 2
    %v6096 = vmax.f32 %v6094, %v6095
    %v6097 = vrot.slane %v6096, 1
    %v6098 = vmax.f32 %v6096, %v6097
    %v6099 = vsel %vm4194, %v3622, -inf
    %v6100 = vrot.slane %v6099, 4
    %v6101 = vmax.f32 %v6099, %v6100
    %v6102 = vrot.slane %v6101, 2
    %v6103 = vmax.f32 %v6101, %v6102
    %v6104 = vrot.slane %v6103, 1
    %v6105 = vmax.f32 %v6103, %v6104
    %v6106 = vsel %vm4194, %v3624, -inf
    %v6107 = vrot.slane %v6106, 4
    %v6108 = vmax.f32 %v6106, %v6107
    %v6109 = vrot.slane %v6108, 2
    %v6110 = vmax.f32 %v6108, %v6109
    %v6111 = vrot.slane %v6110, 1
    %v6112 = vmax.f32 %v6110, %v6111
    %v6113 = vsel %vm4194, %v3625, -inf
    %v6114 = vrot.slane %v6113, 4
    %v6115 = vmax.f32 %v6113, %v6114
    %v6116 = vrot.slane %v6115, 2
    %v6117 = vmax.f32 %v6115, %v6116
    %v6118 = vrot.slane %v6117, 1
    %v6119 = vmax.f32 %v6117, %v6118
    %v6120 = vsel %vm4194, %v3627, -inf
    %v6121 = vrot.slane %v6120, 4
    %v6122 = vmax.f32 %v6120, %v6121
    %v6123 = vrot.slane %v6122, 2
    %v6124 = vmax.f32 %v6122, %v6123
    %v6125 = vrot.slane %v6124, 1
    %v6126 = vmax.f32 %v6124, %v6125
    %v6127 = vsel %vm4194, %v3628, -inf
    %v6128 = vrot.slane %v6127, 4
    %v6129 = vmax.f32 %v6127, %v6128
    %v6130 = vrot.slane %v6129, 2
    %v6131 = vmax.f32 %v6129, %v6130
    %v6132 = vrot.slane %v6131, 1
    %v6133 = vmax.f32 %v6131, %v6132
    %v6134 = vsel %vm4194, %v3630, -inf
    %v6135 = vrot.slane %v6134, 4
    %v6136 = vmax.f32 %v6134, %v6135
    %v6137 = vrot.slane %v6136, 2
    %v6138 = vmax.f32 %v6136, %v6137
    %v6139 = vrot.slane %v6138, 1
    %v6140 = vmax.f32 %v6138, %v6139
    %v6141 = vsel %vm4194, %v3631, -inf
    %v6142 = vrot.slane %v6141, 4
    %v6143 = vmax.f32 %v6141, %v6142
    %v6144 = vrot.slane %v6143, 2
    %v6145 = vmax.f32 %v6143, %v6144
    %v6146 = vrot.slane %v6145, 1
    %v6147 = vmax.f32 %v6145, %v6146
    %v6148 = vsel %vm4194, %v3633, -inf
    %v6149 = vrot.slane %v6148, 4
    %v6150 = vmax.f32 %v6148, %v6149
    %v6151 = vrot.slane %v6150, 2
    %v6152 = vmax.f32 %v6150, %v6151
    %v6153 = vrot.slane %v6152, 1
    %v6154 = vmax.f32 %v6152, %v6153
    %v6155 = vsel %vm4194, %v3634, -inf
    %v6156 = vrot.slane %v6155, 4
    %v6157 = vmax.f32 %v6155, %v6156
    %v6158 = vrot.slane %v6157, 2
    %v6159 = vmax.f32 %v6157, %v6158
    %v6160 = vrot.slane %v6159, 1
    %v6161 = vmax.f32 %v6159, %v6160
    %v6162 = vsel %vm4194, %v3636, -inf
    %v6163 = vrot.slane %v6162, 4
    %v6164 = vmax.f32 %v6162, %v6163
    %v6165 = vrot.slane %v6164, 2
    %v6166 = vmax.f32 %v6164, %v6165
    %v6167 = vrot.slane %v6166, 1
    %v6168 = vmax.f32 %v6166, %v6167
    %v6169 = vsel %vm4194, %v3637, -inf
    %v6170 = vrot.slane %v6169, 4
    %v6171 = vmax.f32 %v6169, %v6170
    %v6172 = vrot.slane %v6171, 2
    %v6173 = vmax.f32 %v6171, %v6172
    %v6174 = vrot.slane %v6173, 1
    %v6175 = vmax.f32 %v6173, %v6174
    %v6176 = vsel %vm4194, %v3639, -inf
    %v6177 = vrot.slane %v6176, 4
    %v6178 = vmax.f32 %v6176, %v6177
    %v6179 = vrot.slane %v6178, 2
    %v6180 = vmax.f32 %v6178, %v6179
    %v6181 = vrot.slane %v6180, 1
    %v6182 = vmax.f32 %v6180, %v6181
    %v6183 = vsel %vm4194, %v3640, -inf
    %v6184 = vrot.slane %v6183, 4
    %v6185 = vmax.f32 %v6183, %v6184
    %v6186 = vrot.slane %v6185, 2
    %v6187 = vmax.f32 %v6185, %v6186
    %v6188 = vrot.slane %v6187, 1
    %v6189 = vmax.f32 %v6187, %v6188
    %v6190 = vsel %vm4194, %v3642, -inf
    %v6191 = vrot.slane %v6190, 4
    %v6192 = vmax.f32 %v6190, %v6191
    %v6193 = vrot.slane %v6192, 2
    %v6194 = vmax.f32 %v6192, %v6193
    %v6195 = vrot.slane %v6194, 1
    %v6196 = vmax.f32 %v6194, %v6195
    %v6197 = vsel %vm4194, %v3643, -inf
    %v6198 = vrot.slane %v6197, 4
    %v6199 = vmax.f32 %v6197, %v6198
    %v6200 = vrot.slane %v6199, 2
    %v6201 = vmax.f32 %v6199, %v6200
    %v6202 = vrot.slane %v6201, 1
    %v6203 = vmax.f32 %v6201, %v6202
    %v6204 = vsel %vm4194, %v3645, -inf
    %v6205 = vrot.slane %v6204, 4
    %v6206 = vmax.f32 %v6204, %v6205
    %v6207 = vrot.slane %v6206, 2
    %v6208 = vmax.f32 %v6206, %v6207
    %v6209 = vrot.slane %v6208, 1
    %v6210 = vmax.f32 %v6208, %v6209
    %v6211 = vsel %vm4194, %v3646, -inf
    %v6212 = vrot.slane %v6211, 4
    %v6213 = vmax.f32 %v6211, %v6212
    %v6214 = vrot.slane %v6213, 2
    %v6215 = vmax.f32 %v6213, %v6214
    %v6216 = vrot.slane %v6215, 1
    %v6217 = vmax.f32 %v6215, %v6216
    %v6218 = vsel %vm4194, %v3648, -inf
    %v6219 = vrot.slane %v6218, 4
    %v6220 = vmax.f32 %v6218, %v6219
    %v6221 = vrot.slane %v6220, 2
    %v6222 = vmax.f32 %v6220, %v6221
    %v6223 = vrot.slane %v6222, 1
    %v6224 = vmax.f32 %v6222, %v6223
    %v6225 = vsel %vm4194, %v3649, -inf
    %v6226 = vrot.slane %v6225, 4
    %v6227 = vmax.f32 %v6225, %v6226
    %v6228 = vrot.slane %v6227, 2
    %v6229 = vmax.f32 %v6227, %v6228
    %v6230 = vrot.slane %v6229, 1
    %v6231 = vmax.f32 %v6229, %v6230
    %v6232 = vsel %vm4194, %v3651, -inf
    %v6233 = vrot.slane %v6232, 4
    %v6234 = vmax.f32 %v6232, %v6233
    %v6235 = vrot.slane %v6234, 2
    %v6236 = vmax.f32 %v6234, %v6235
    %v6237 = vrot.slane %v6236, 1
    %v6238 = vmax.f32 %v6236, %v6237
    %v6239 = vsel %vm4194, %v3652, -inf
    %v6240 = vrot.slane %v6239, 4
    %v6241 = vmax.f32 %v6239, %v6240
    %v6242 = vrot.slane %v6241, 2
    %v6243 = vmax.f32 %v6241, %v6242
    %v6244 = vrot.slane %v6243, 1
    %v6245 = vmax.f32 %v6243, %v6244
    %v6246 = vsel %vm4194, %v3654, -inf
    %v6247 = vrot.slane %v6246, 4
    %v6248 = vmax.f32 %v6246, %v6247
    %v6249 = vrot.slane %v6248, 2
    %v6250 = vmax.f32 %v6248, %v6249
    %v6251 = vrot.slane %v6250, 1
    %v6252 = vmax.f32 %v6250, %v6251
    %v6253 = vsel %vm4194, %v3655, -inf
    %v6254 = vrot.slane %v6253, 4
    %v6255 = vmax.f32 %v6253, %v6254
    %v6256 = vrot.slane %v6255, 2
    %v6257 = vmax.f32 %v6255, %v6256
    %v6258 = vrot.slane %v6257, 1
    %v6259 = vmax.f32 %v6257, %v6258
    %v6260 = vsel %vm4194, %v3657, -inf
    %v6261 = vrot.slane %v6260, 4
    %v6262 = vmax.f32 %v6260, %v6261
    %v6263 = vrot.slane %v6262, 2
    %v6264 = vmax.f32 %v6262, %v6263
    %v6265 = vrot.slane %v6264, 1
    %v6266 = vmax.f32 %v6264, %v6265
    %v6267 = vsel %vm4194, %v3658, -inf
    %v6268 = vrot.slane %v6267, 4
    %v6269 = vmax.f32 %v6267, %v6268
    %v6270 = vrot.slane %v6269, 2
    %v6271 = vmax.f32 %v6269, %v6270
    %v6272 = vrot.slane %v6271, 1
    %v6273 = vmax.f32 %v6271, %v6272
    %v6274 = vsel %vm4194, %v3660, -inf
    %v6275 = vrot.slane %v6274, 4
    %v6276 = vmax.f32 %v6274, %v6275
    %v6277 = vrot.slane %v6276, 2
    %v6278 = vmax.f32 %v6276, %v6277
    %v6279 = vrot.slane %v6278, 1
    %v6280 = vmax.f32 %v6278, %v6279
    %v6281 = vsel %vm4194, %v3661, -inf
    %v6282 = vrot.slane %v6281, 4
    %v6283 = vmax.f32 %v6281, %v6282
    %v6284 = vrot.slane %v6283, 2
    %v6285 = vmax.f32 %v6283, %v6284
    %v6286 = vrot.slane %v6285, 1
    %v6287 = vmax.f32 %v6285, %v6286
    %v6288 = vsel %vm4194, %v3663, -inf
    %v6289 = vrot.slane %v6288, 4
    %v6290 = vmax.f32 %v6288, %v6289
    %v6291 = vrot.slane %v6290, 2
    %v6292 = vmax.f32 %v6290, %v6291
    %v6293 = vrot.slane %v6292, 1
    %v6294 = vmax.f32 %v6292, %v6293
    %v6295 = vsel %vm4194, %v3664, -inf
    %v6296 = vrot.slane %v6295, 4
    %v6297 = vmax.f32 %v6295, %v6296
    %v6298 = vrot.slane %v6297, 2
    %v6299 = vmax.f32 %v6297, %v6298
    %v6300 = vrot.slane %v6299, 1
    %v6301 = vmax.f32 %v6299, %v6300
    %v6302 = vsel %vm4194, %v3666, -inf
    %v6303 = vrot.slane %v6302, 4
    %v6304 = vmax.f32 %v6302, %v6303
    %v6305 = vrot.slane %v6304, 2
    %v6306 = vmax.f32 %v6304, %v6305
    %v6307 = vrot.slane %v6306, 1
    %v6308 = vmax.f32 %v6306, %v6307
    %v6309 = vsel %vm4194, %v3667, -inf
    %v6310 = vrot.slane %v6309, 4
    %v6311 = vmax.f32 %v6309, %v6310
    %v6312 = vrot.slane %v6311, 2
    %v6313 = vmax.f32 %v6311, %v6312
    %v6314 = vrot.slane %v6313, 1
    %v6315 = vmax.f32 %v6313, %v6314
    %v6316 = vsel %vm4194, %v3669, -inf
    %v6317 = vrot.slane %v6316, 4
    %v6318 = vmax.f32 %v6316, %v6317
    %v6319 = vrot.slane %v6318, 2
    %v6320 = vmax.f32 %v6318, %v6319
    %v6321 = vrot.slane %v6320, 1
    %v6322 = vmax.f32 %v6320, %v6321
    %v6323 = vsel %vm4194, %v3670, -inf
    %v6324 = vrot.slane %v6323, 4
    %v6325 = vmax.f32 %v6323, %v6324
    %v6326 = vrot.slane %v6325, 2
    %v6327 = vmax.f32 %v6325, %v6326
    %v6328 = vrot.slane %v6327, 1
    %v6329 = vmax.f32 %v6327, %v6328
    %v6330 = vsel %vm4194, %v3672, -inf
    %v6331 = vrot.slane %v6330, 4
    %v6332 = vmax.f32 %v6330, %v6331
    %v6333 = vrot.slane %v6332, 2
    %v6334 = vmax.f32 %v6332, %v6333
    %v6335 = vrot.slane %v6334, 1
    %v6336 = vmax.f32 %v6334, %v6335
    %v6337 = vsel %vm4194, %v3673, -inf
    %v6338 = vrot.slane %v6337, 4
    %v6339 = vmax.f32 %v6337, %v6338
    %v6340 = vrot.slane %v6339, 2
    %v6341 = vmax.f32 %v6339, %v6340
    %v6342 = vrot.slane %v6341, 1
    %v6343 = vmax.f32 %v6341, %v6342
    %v6344 = vsel %vm4194, %v3675, -inf
    %v6345 = vrot.slane %v6344, 4
    %v6346 = vmax.f32 %v6344, %v6345
    %v6347 = vrot.slane %v6346, 2
    %v6348 = vmax.f32 %v6346, %v6347
    %v6349 = vrot.slane %v6348, 1
    %v6350 = vmax.f32 %v6348, %v6349
    %v6351 = vsel %vm4194, %v3676, -inf
    %v6352 = vrot.slane %v6351, 4
    %v6353 = vmax.f32 %v6351, %v6352
    %v6354 = vrot.slane %v6353, 2
    %v6355 = vmax.f32 %v6353, %v6354
    %v6356 = vrot.slane %v6355, 1
    %v6357 = vmax.f32 %v6355, %v6356
    %v6358 = vsel %vm4194, %v3678, -inf
    %v6359 = vrot.slane %v6358, 4
    %v6360 = vmax.f32 %v6358, %v6359
    %v6361 = vrot.slane %v6360, 2
    %v6362 = vmax.f32 %v6360, %v6361
    %v6363 = vrot.slane %v6362, 1
    %v6364 = vmax.f32 %v6362, %v6363
    %v6365 = vsel %vm4194, %v3679, -inf
    %v6366 = vrot.slane %v6365, 4
    %v6367 = vmax.f32 %v6365, %v6366
    %v6368 = vrot.slane %v6367, 2
    %v6369 = vmax.f32 %v6367, %v6368
    %v6370 = vrot.slane %v6369, 1
    %v6371 = vmax.f32 %v6369, %v6370
    %v6372 = vsel %vm4194, %v3681, -inf
    %v6373 = vrot.slane %v6372, 4
    %v6374 = vmax.f32 %v6372, %v6373
    %v6375 = vrot.slane %v6374, 2
    %v6376 = vmax.f32 %v6374, %v6375
    %v6377 = vrot.slane %v6376, 1
    %v6378 = vmax.f32 %v6376, %v6377
    %v6379 = vsel %vm4194, %v3682, -inf
    %v6380 = vrot.slane %v6379, 4
    %v6381 = vmax.f32 %v6379, %v6380
    %v6382 = vrot.slane %v6381, 2
    %v6383 = vmax.f32 %v6381, %v6382
    %v6384 = vrot.slane %v6383, 1
    %v6385 = vmax.f32 %v6383, %v6384
    %v6386 = vsel %vm4194, %v3684, -inf
    %v6387 = vrot.slane %v6386, 4
    %v6388 = vmax.f32 %v6386, %v6387
    %v6389 = vrot.slane %v6388, 2
    %v6390 = vmax.f32 %v6388, %v6389
    %v6391 = vrot.slane %v6390, 1
    %v6392 = vmax.f32 %v6390, %v6391
    %v6393 = vsel %vm4194, %v3685, -inf
    %v6394 = vrot.slane %v6393, 4
    %v6395 = vmax.f32 %v6393, %v6394
    %v6396 = vrot.slane %v6395, 2
    %v6397 = vmax.f32 %v6395, %v6396
    %v6398 = vrot.slane %v6397, 1
    %v6399 = vmax.f32 %v6397, %v6398
    %v6400 = vsel %vm4194, %v3687, -inf
    %v6401 = vrot.slane %v6400, 4
    %v6402 = vmax.f32 %v6400, %v6401
    %v6403 = vrot.slane %v6402, 2
    %v6404 = vmax.f32 %v6402, %v6403
    %v6405 = vrot.slane %v6404, 1
    %v6406 = vmax.f32 %v6404, %v6405
    %v6407 = vsel %vm4194, %v3688, -inf
    %v6408 = vrot.slane %v6407, 4
    %v6409 = vmax.f32 %v6407, %v6408
    %v6410 = vrot.slane %v6409, 2
    %v6411 = vmax.f32 %v6409, %v6410
    %v6412 = vrot.slane %v6411, 1
    %v6413 = vmax.f32 %v6411, %v6412
    %v6414 = vsel %vm4194, %v3690, -inf
    %v6415 = vrot.slane %v6414, 4
    %v6416 = vmax.f32 %v6414, %v6415
    %v6417 = vrot.slane %v6416, 2
    %v6418 = vmax.f32 %v6416, %v6417
    %v6419 = vrot.slane %v6418, 1
    %v6420 = vmax.f32 %v6418, %v6419
    %v6421 = vsel %vm4194, %v3691, -inf
    %v6422 = vrot.slane %v6421, 4
    %v6423 = vmax.f32 %v6421, %v6422
    %v6424 = vrot.slane %v6423, 2
    %v6425 = vmax.f32 %v6423, %v6424
    %v6426 = vrot.slane %v6425, 1
    %v6427 = vmax.f32 %v6425, %v6426
    %v6428 = vsel %vm4194, %v3693, -inf
    %v6429 = vrot.slane %v6428, 4
    %v6430 = vmax.f32 %v6428, %v6429
    %v6431 = vrot.slane %v6430, 2
    %v6432 = vmax.f32 %v6430, %v6431
    %v6433 = vrot.slane %v6432, 1
    %v6434 = vmax.f32 %v6432, %v6433
    %v6435 = vsel %vm4194, %v3694, -inf
    %v6436 = vrot.slane %v6435, 4
    %v6437 = vmax.f32 %v6435, %v6436
    %v6438 = vrot.slane %v6437, 2
    %v6439 = vmax.f32 %v6437, %v6438
    %v6440 = vrot.slane %v6439, 1
    %v6441 = vmax.f32 %v6439, %v6440
    %v6442 = vsel %vm4194, %v3696, -inf
    %v6443 = vrot.slane %v6442, 4
    %v6444 = vmax.f32 %v6442, %v6443
    %v6445 = vrot.slane %v6444, 2
    %v6446 = vmax.f32 %v6444, %v6445
    %v6447 = vrot.slane %v6446, 1
    %v6448 = vmax.f32 %v6446, %v6447
    %v6449 = vsel %vm4194, %v3697, -inf
    %v6450 = vrot.slane %v6449, 4
    %v6451 = vmax.f32 %v6449, %v6450
    %v6452 = vrot.slane %v6451, 2
    %v6453 = vmax.f32 %v6451, %v6452
    %v6454 = vrot.slane %v6453, 1
    %v6455 = vmax.f32 %v6453, %v6454
    %v6456 = vsel %vm4194, %v3699, -inf
    %v6457 = vrot.slane %v6456, 4
    %v6458 = vmax.f32 %v6456, %v6457
    %v6459 = vrot.slane %v6458, 2
    %v6460 = vmax.f32 %v6458, %v6459
    %v6461 = vrot.slane %v6460, 1
    %v6462 = vmax.f32 %v6460, %v6461
    %v6463 = vsel %vm4194, %v3700, -inf
    %v6464 = vrot.slane %v6463, 4
    %v6465 = vmax.f32 %v6463, %v6464
    %v6466 = vrot.slane %v6465, 2
    %v6467 = vmax.f32 %v6465, %v6466
    %v6468 = vrot.slane %v6467, 1
    %v6469 = vmax.f32 %v6467, %v6468
    %v6470 = vsel %vm4194, %v3702, -inf
    %v6471 = vrot.slane %v6470, 4
    %v6472 = vmax.f32 %v6470, %v6471
    %v6473 = vrot.slane %v6472, 2
    %v6474 = vmax.f32 %v6472, %v6473
    %v6475 = vrot.slane %v6474, 1
    %v6476 = vmax.f32 %v6474, %v6475
    %v6477 = vsel %vm4194, %v3703, -inf
    %v6478 = vrot.slane %v6477, 4
    %v6479 = vmax.f32 %v6477, %v6478
    %v6480 = vrot.slane %v6479, 2
    %v6481 = vmax.f32 %v6479, %v6480
    %v6482 = vrot.slane %v6481, 1
    %v6483 = vmax.f32 %v6481, %v6482
    %v6484 = vsel %vm4194, %v3705, -inf
    %v6485 = vrot.slane %v6484, 4
    %v6486 = vmax.f32 %v6484, %v6485
    %v6487 = vrot.slane %v6486, 2
    %v6488 = vmax.f32 %v6486, %v6487
    %v6489 = vrot.slane %v6488, 1
    %v6490 = vmax.f32 %v6488, %v6489
    %v6491 = vsel %vm4194, %v3706, -inf
    %v6492 = vrot.slane %v6491, 4
    %v6493 = vmax.f32 %v6491, %v6492
    %v6494 = vrot.slane %v6493, 2
    %v6495 = vmax.f32 %v6493, %v6494
    %v6496 = vrot.slane %v6495, 1
    %v6497 = vmax.f32 %v6495, %v6496
    %v6498 = vsel %vm4194, %v3708, -inf
    %v6499 = vrot.slane %v6498, 4
    %v6500 = vmax.f32 %v6498, %v6499
    %v6501 = vrot.slane %v6500, 2
    %v6502 = vmax.f32 %v6500, %v6501
    %v6503 = vrot.slane %v6502, 1
    %v6504 = vmax.f32 %v6502, %v6503
    %v6505 = vsel %vm4194, %v3709, -inf
    %v6506 = vrot.slane %v6505, 4
    %v6507 = vmax.f32 %v6505, %v6506
    %v6508 = vrot.slane %v6507, 2
    %v6509 = vmax.f32 %v6507, %v6508
    %v6510 = vrot.slane %v6509, 1
    %v6511 = vmax.f32 %v6509, %v6510
    %v6512 = vsel %vm4194, %v3711, -inf
    %v6513 = vrot.slane %v6512, 4
    %v6514 = vmax.f32 %v6512, %v6513
    %v6515 = vrot.slane %v6514, 2
    %v6516 = vmax.f32 %v6514, %v6515
    %v6517 = vrot.slane %v6516, 1
    %v6518 = vmax.f32 %v6516, %v6517
    %v6519 = vsel %vm4194, %v3712, -inf
    %v6520 = vrot.slane %v6519, 4
    %v6521 = vmax.f32 %v6519, %v6520
    %v6522 = vrot.slane %v6521, 2
    %v6523 = vmax.f32 %v6521, %v6522
    %v6524 = vrot.slane %v6523, 1
    %v6525 = vmax.f32 %v6523, %v6524
    %v6526 = vsel %vm4194, %v3714, -inf
    %v6527 = vrot.slane %v6526, 4
    %v6528 = vmax.f32 %v6526, %v6527
    %v6529 = vrot.slane %v6528, 2
    %v6530 = vmax.f32 %v6528, %v6529
    %v6531 = vrot.slane %v6530, 1
    %v6532 = vmax.f32 %v6530, %v6531
    %v6533 = vsel %vm4194, %v3715, -inf
    %v6534 = vrot.slane %v6533, 4
    %v6535 = vmax.f32 %v6533, %v6534
    %v6536 = vrot.slane %v6535, 2
    %v6537 = vmax.f32 %v6535, %v6536
    %v6538 = vrot.slane %v6537, 1
    %v6539 = vmax.f32 %v6537, %v6538
    %v6540 = vsel %vm4194, %v3717, -inf
    %v6541 = vrot.slane %v6540, 4
    %v6542 = vmax.f32 %v6540, %v6541
    %v6543 = vrot.slane %v6542, 2
    %v6544 = vmax.f32 %v6542, %v6543
    %v6545 = vrot.slane %v6544, 1
    %v6546 = vmax.f32 %v6544, %v6545
    %v6547 = vsel %vm4194, %v3718, -inf
    %v6548 = vrot.slane %v6547, 4
    %v6549 = vmax.f32 %v6547, %v6548
    %v6550 = vrot.slane %v6549, 2
    %v6551 = vmax.f32 %v6549, %v6550
    %v6552 = vrot.slane %v6551, 1
    %v6553 = vmax.f32 %v6551, %v6552
    %v6554 = vsel %vm4194, %v3720, -inf
    %v6555 = vrot.slane %v6554, 4
    %v6556 = vmax.f32 %v6554, %v6555
    %v6557 = vrot.slane %v6556, 2
    %v6558 = vmax.f32 %v6556, %v6557
    %v6559 = vrot.slane %v6558, 1
    %v6560 = vmax.f32 %v6558, %v6559
    %v6561 = vsel %vm4194, %v3721, -inf
    %v6562 = vrot.slane %v6561, 4
    %v6563 = vmax.f32 %v6561, %v6562
    %v6564 = vrot.slane %v6563, 2
    %v6565 = vmax.f32 %v6563, %v6564
    %v6566 = vrot.slane %v6565, 1
    %v6567 = vmax.f32 %v6565, %v6566
    %v6568 = vsel %vm4194, %v3723, -inf
    %v6569 = vrot.slane %v6568, 4
    %v6570 = vmax.f32 %v6568, %v6569
    %v6571 = vrot.slane %v6570, 2
    %v6572 = vmax.f32 %v6570, %v6571
    %v6573 = vrot.slane %v6572, 1
    %v6574 = vmax.f32 %v6572, %v6573
    %v6575 = vsel %vm4194, %v3724, -inf
    %v6576 = vrot.slane %v6575, 4
    %v6577 = vmax.f32 %v6575, %v6576
    %v6578 = vrot.slane %v6577, 2
    %v6579 = vmax.f32 %v6577, %v6578
    %v6580 = vrot.slane %v6579, 1
    %v6581 = vmax.f32 %v6579, %v6580
    %v6582 = vsel %vm4194, %v3726, -inf
    %v6583 = vrot.slane %v6582, 4
    %v6584 = vmax.f32 %v6582, %v6583
    %v6585 = vrot.slane %v6584, 2
    %v6586 = vmax.f32 %v6584, %v6585
    %v6587 = vrot.slane %v6586, 1
    %v6588 = vmax.f32 %v6586, %v6587
    %v6589 = vsel %vm4194, %v3727, -inf
    %v6590 = vrot.slane %v6589, 4
    %v6591 = vmax.f32 %v6589, %v6590
    %v6592 = vrot.slane %v6591, 2
    %v6593 = vmax.f32 %v6591, %v6592
    %v6594 = vrot.slane %v6593, 1
    %v6595 = vmax.f32 %v6593, %v6594
    %v6596 = vsel %vm4194, %v3729, -inf
    %v6597 = vrot.slane %v6596, 4
    %v6598 = vmax.f32 %v6596, %v6597
    %v6599 = vrot.slane %v6598, 2
    %v6600 = vmax.f32 %v6598, %v6599
    %v6601 = vrot.slane %v6600, 1
    %v6602 = vmax.f32 %v6600, %v6601
    %v6603 = vsel %vm4194, %v3730, -inf
    %v6604 = vrot.slane %v6603, 4
    %v6605 = vmax.f32 %v6603, %v6604
    %v6606 = vrot.slane %v6605, 2
    %v6607 = vmax.f32 %v6605, %v6606
    %v6608 = vrot.slane %v6607, 1
    %v6609 = vmax.f32 %v6607, %v6608
    %v6610 = vsel %vm4194, %v3732, -inf
    %v6611 = vrot.slane %v6610, 4
    %v6612 = vmax.f32 %v6610, %v6611
    %v6613 = vrot.slane %v6612, 2
    %v6614 = vmax.f32 %v6612, %v6613
    %v6615 = vrot.slane %v6614, 1
    %v6616 = vmax.f32 %v6614, %v6615
    %v6617 = vsel %vm4194, %v3733, -inf
    %v6618 = vrot.slane %v6617, 4
    %v6619 = vmax.f32 %v6617, %v6618
    %v6620 = vrot.slane %v6619, 2
    %v6621 = vmax.f32 %v6619, %v6620
    %v6622 = vrot.slane %v6621, 1
    %v6623 = vmax.f32 %v6621, %v6622
    %v6624 = vsel %vm4194, %v3735, -inf
    %v6625 = vrot.slane %v6624, 4
    %v6626 = vmax.f32 %v6624, %v6625
    %v6627 = vrot.slane %v6626, 2
    %v6628 = vmax.f32 %v6626, %v6627
    %v6629 = vrot.slane %v6628, 1
    %v6630 = vmax.f32 %v6628, %v6629
    %v6631 = vsel %vm4194, %v3736, -inf
    %v6632 = vrot.slane %v6631, 4
    %v6633 = vmax.f32 %v6631, %v6632
    %v6634 = vrot.slane %v6633, 2
    %v6635 = vmax.f32 %v6633, %v6634
    %v6636 = vrot.slane %v6635, 1
    %v6637 = vmax.f32 %v6635, %v6636
    %v6638 = vsel %vm4194, %v3738, -inf
    %v6639 = vrot.slane %v6638, 4
    %v6640 = vmax.f32 %v6638, %v6639
    %v6641 = vrot.slane %v6640, 2
    %v6642 = vmax.f32 %v6640, %v6641
    %v6643 = vrot.slane %v6642, 1
    %v6644 = vmax.f32 %v6642, %v6643
    %v6645 = vsel %vm4194, %v3739, -inf
    %v6646 = vrot.slane %v6645, 4
    %v6647 = vmax.f32 %v6645, %v6646
    %v6648 = vrot.slane %v6647, 2
    %v6649 = vmax.f32 %v6647, %v6648
    %v6650 = vrot.slane %v6649, 1
    %v6651 = vmax.f32 %v6649, %v6650
    %v6652 = vsel %vm4194, %v3741, -inf
    %v6653 = vrot.slane %v6652, 4
    %v6654 = vmax.f32 %v6652, %v6653
    %v6655 = vrot.slane %v6654, 2
    %v6656 = vmax.f32 %v6654, %v6655
    %v6657 = vrot.slane %v6656, 1
    %v6658 = vmax.f32 %v6656, %v6657
    %v6659 = vsel %vm4194, %v3742, -inf
    %v6660 = vrot.slane %v6659, 4
    %v6661 = vmax.f32 %v6659, %v6660
    %v6662 = vrot.slane %v6661, 2
    %v6663 = vmax.f32 %v6661, %v6662
    %v6664 = vrot.slane %v6663, 1
    %v6665 = vmax.f32 %v6663, %v6664
    %v6666 = vsel %vm4194, %v3744, -inf
    %v6667 = vrot.slane %v6666, 4
    %v6668 = vmax.f32 %v6666, %v6667
    %v6669 = vrot.slane %v6668, 2
    %v6670 = vmax.f32 %v6668, %v6669
    %v6671 = vrot.slane %v6670, 1
    %v6672 = vmax.f32 %v6670, %v6671
    %v6673 = vsel %vm4194, %v3745, -inf
    %v6674 = vrot.slane %v6673, 4
    %v6675 = vmax.f32 %v6673, %v6674
    %v6676 = vrot.slane %v6675, 2
    %v6677 = vmax.f32 %v6675, %v6676
    %v6678 = vrot.slane %v6677, 1
    %v6679 = vmax.f32 %v6677, %v6678
    %v6680 = vsel %vm4194, %v3747, -inf
    %v6681 = vrot.slane %v6680, 4
    %v6682 = vmax.f32 %v6680, %v6681
    %v6683 = vrot.slane %v6682, 2
    %v6684 = vmax.f32 %v6682, %v6683
    %v6685 = vrot.slane %v6684, 1
    %v6686 = vmax.f32 %v6684, %v6685
    %v6687 = vsel %vm4194, %v3748, -inf
    %v6688 = vrot.slane %v6687, 4
    %v6689 = vmax.f32 %v6687, %v6688
    %v6690 = vrot.slane %v6689, 2
    %v6691 = vmax.f32 %v6689, %v6690
    %v6692 = vrot.slane %v6691, 1
    %v6693 = vmax.f32 %v6691, %v6692
    %v6694 = vsel %vm4194, %v3750, -inf
    %v6695 = vrot.slane %v6694, 4
    %v6696 = vmax.f32 %v6694, %v6695
    %v6697 = vrot.slane %v6696, 2
    %v6698 = vmax.f32 %v6696, %v6697
    %v6699 = vrot.slane %v6698, 1
    %v6700 = vmax.f32 %v6698, %v6699
    %v6701 = vsel %vm4194, %v3751, -inf
    %v6702 = vrot.slane %v6701, 4
    %v6703 = vmax.f32 %v6701, %v6702
    %v6704 = vrot.slane %v6703, 2
    %v6705 = vmax.f32 %v6703, %v6704
    %v6706 = vrot.slane %v6705, 1
    %v6707 = vmax.f32 %v6705, %v6706
    %v6708 = vsel %vm4194, %v3753, -inf
    %v6709 = vrot.slane %v6708, 4
    %v6710 = vmax.f32 %v6708, %v6709
    %v6711 = vrot.slane %v6710, 2
    %v6712 = vmax.f32 %v6710, %v6711
    %v6713 = vrot.slane %v6712, 1
    %v6714 = vmax.f32 %v6712, %v6713
    %v6715 = vsel %vm4194, %v3754, -inf
    %v6716 = vrot.slane %v6715, 4
    %v6717 = vmax.f32 %v6715, %v6716
    %v6718 = vrot.slane %v6717, 2
    %v6719 = vmax.f32 %v6717, %v6718
    %v6720 = vrot.slane %v6719, 1
    %v6721 = vmax.f32 %v6719, %v6720
    %v6722 = vsel %vm4194, %v3756, -inf
    %v6723 = vrot.slane %v6722, 4
    %v6724 = vmax.f32 %v6722, %v6723
    %v6725 = vrot.slane %v6724, 2
    %v6726 = vmax.f32 %v6724, %v6725
    %v6727 = vrot.slane %v6726, 1
    %v6728 = vmax.f32 %v6726, %v6727
    %v6729 = vsel %vm4194, %v3757, -inf
    %v6730 = vrot.slane %v6729, 4
    %v6731 = vmax.f32 %v6729, %v6730
    %v6732 = vrot.slane %v6731, 2
    %v6733 = vmax.f32 %v6731, %v6732
    %v6734 = vrot.slane %v6733, 1
    %v6735 = vmax.f32 %v6733, %v6734
    %v6736 = vsel %vm4194, %v3759, -inf
    %v6737 = vrot.slane %v6736, 4
    %v6738 = vmax.f32 %v6736, %v6737
    %v6739 = vrot.slane %v6738, 2
    %v6740 = vmax.f32 %v6738, %v6739
    %v6741 = vrot.slane %v6740, 1
    %v6742 = vmax.f32 %v6740, %v6741
    %v6743 = vsel %vm4194, %v3760, -inf
    %v6744 = vrot.slane %v6743, 4
    %v6745 = vmax.f32 %v6743, %v6744
    %v6746 = vrot.slane %v6745, 2
    %v6747 = vmax.f32 %v6745, %v6746
    %v6748 = vrot.slane %v6747, 1
    %v6749 = vmax.f32 %v6747, %v6748
    %v6750 = vsel %vm4194, %v3762, -inf
    %v6751 = vrot.slane %v6750, 4
    %v6752 = vmax.f32 %v6750, %v6751
    %v6753 = vrot.slane %v6752, 2
    %v6754 = vmax.f32 %v6752, %v6753
    %v6755 = vrot.slane %v6754, 1
    %v6756 = vmax.f32 %v6754, %v6755
    %v6757 = vsel %vm4194, %v3763, -inf
    %v6758 = vrot.slane %v6757, 4
    %v6759 = vmax.f32 %v6757, %v6758
    %v6760 = vrot.slane %v6759, 2
    %v6761 = vmax.f32 %v6759, %v6760
    %v6762 = vrot.slane %v6761, 1
    %v6763 = vmax.f32 %v6761, %v6762
    %v6764 = vsel %vm4194, %v3765, -inf
    %v6765 = vrot.slane %v6764, 4
    %v6766 = vmax.f32 %v6764, %v6765
    %v6767 = vrot.slane %v6766, 2
    %v6768 = vmax.f32 %v6766, %v6767
    %v6769 = vrot.slane %v6768, 1
    %v6770 = vmax.f32 %v6768, %v6769
    %v6771 = vsel %vm4194, %v3766, -inf
    %v6772 = vrot.slane %v6771, 4
    %v6773 = vmax.f32 %v6771, %v6772
    %v6774 = vrot.slane %v6773, 2
    %v6775 = vmax.f32 %v6773, %v6774
    %v6776 = vrot.slane %v6775, 1
    %v6777 = vmax.f32 %v6775, %v6776
    %v6778 = vsel %vm4194, %v3768, -inf
    %v6779 = vrot.slane %v6778, 4
    %v6780 = vmax.f32 %v6778, %v6779
    %v6781 = vrot.slane %v6780, 2
    %v6782 = vmax.f32 %v6780, %v6781
    %v6783 = vrot.slane %v6782, 1
    %v6784 = vmax.f32 %v6782, %v6783
    %v6785 = vsel %vm4194, %v3769, -inf
    %v6786 = vrot.slane %v6785, 4
    %v6787 = vmax.f32 %v6785, %v6786
    %v6788 = vrot.slane %v6787, 2
    %v6789 = vmax.f32 %v6787, %v6788
    %v6790 = vrot.slane %v6789, 1
    %v6791 = vmax.f32 %v6789, %v6790
    %v6792 = vsel %vm4194, %v3771, -inf
    %v6793 = vrot.slane %v6792, 4
    %v6794 = vmax.f32 %v6792, %v6793
    %v6795 = vrot.slane %v6794, 2
    %v6796 = vmax.f32 %v6794, %v6795
    %v6797 = vrot.slane %v6796, 1
    %v6798 = vmax.f32 %v6796, %v6797
    %v6799 = vsel %vm4194, %v3772, -inf
    %v6800 = vrot.slane %v6799, 4
    %v6801 = vmax.f32 %v6799, %v6800
    %v6802 = vrot.slane %v6801, 2
    %v6803 = vmax.f32 %v6801, %v6802
    %v6804 = vrot.slane %v6803, 1
    %v6805 = vmax.f32 %v6803, %v6804
    %v6806 = vsel %vm4194, %v3774, -inf
    %v6807 = vrot.slane %v6806, 4
    %v6808 = vmax.f32 %v6806, %v6807
    %v6809 = vrot.slane %v6808, 2
    %v6810 = vmax.f32 %v6808, %v6809
    %v6811 = vrot.slane %v6810, 1
    %v6812 = vmax.f32 %v6810, %v6811
    %v6813 = vsel %vm4194, %v3775, -inf
    %v6814 = vrot.slane %v6813, 4
    %v6815 = vmax.f32 %v6813, %v6814
    %v6816 = vrot.slane %v6815, 2
    %v6817 = vmax.f32 %v6815, %v6816
    %v6818 = vrot.slane %v6817, 1
    %v6819 = vmax.f32 %v6817, %v6818
    %v6820 = vsel %vm4194, %v3777, -inf
    %v6821 = vrot.slane %v6820, 4
    %v6822 = vmax.f32 %v6820, %v6821
    %v6823 = vrot.slane %v6822, 2
    %v6824 = vmax.f32 %v6822, %v6823
    %v6825 = vrot.slane %v6824, 1
    %v6826 = vmax.f32 %v6824, %v6825
    %v6827 = vsel %vm4194, %v3778, -inf
    %v6828 = vrot.slane %v6827, 4
    %v6829 = vmax.f32 %v6827, %v6828
    %v6830 = vrot.slane %v6829, 2
    %v6831 = vmax.f32 %v6829, %v6830
    %v6832 = vrot.slane %v6831, 1
    %v6833 = vmax.f32 %v6831, %v6832
    %v6834 = vsel %vm4194, %v3780, -inf
    %v6835 = vrot.slane %v6834, 4
    %v6836 = vmax.f32 %v6834, %v6835
    %v6837 = vrot.slane %v6836, 2
    %v6838 = vmax.f32 %v6836, %v6837
    %v6839 = vrot.slane %v6838, 1
    %v6840 = vmax.f32 %v6838, %v6839
    %v6841 = vsel %vm4194, %v3781, -inf
    %v6842 = vrot.slane %v6841, 4
    %v6843 = vmax.f32 %v6841, %v6842
    %v6844 = vrot.slane %v6843, 2
    %v6845 = vmax.f32 %v6843, %v6844
    %v6846 = vrot.slane %v6845, 1
    %v6847 = vmax.f32 %v6845, %v6846
    %v6848 = vsel %vm4194, %v3783, -inf
    %v6849 = vrot.slane %v6848, 4
    %v6850 = vmax.f32 %v6848, %v6849
    %v6851 = vrot.slane %v6850, 2
    %v6852 = vmax.f32 %v6850, %v6851
    %v6853 = vrot.slane %v6852, 1
    %v6854 = vmax.f32 %v6852, %v6853
    %v6855 = vsel %vm4194, %v3784, -inf
    %v6856 = vrot.slane %v6855, 4
    %v6857 = vmax.f32 %v6855, %v6856
    %v6858 = vrot.slane %v6857, 2
    %v6859 = vmax.f32 %v6857, %v6858
    %v6860 = vrot.slane %v6859, 1
    %v6861 = vmax.f32 %v6859, %v6860
    %v6862 = vsel %vm4194, %v3786, -inf
    %v6863 = vrot.slane %v6862, 4
    %v6864 = vmax.f32 %v6862, %v6863
    %v6865 = vrot.slane %v6864, 2
    %v6866 = vmax.f32 %v6864, %v6865
    %v6867 = vrot.slane %v6866, 1
    %v6868 = vmax.f32 %v6866, %v6867
    %v6869 = vsel %vm4194, %v3787, -inf
    %v6870 = vrot.slane %v6869, 4
    %v6871 = vmax.f32 %v6869, %v6870
    %v6872 = vrot.slane %v6871, 2
    %v6873 = vmax.f32 %v6871, %v6872
    %v6874 = vrot.slane %v6873, 1
    %v6875 = vmax.f32 %v6873, %v6874
    %v6876 = vsel %vm4194, %v3789, -inf
    %v6877 = vrot.slane %v6876, 4
    %v6878 = vmax.f32 %v6876, %v6877
    %v6879 = vrot.slane %v6878, 2
    %v6880 = vmax.f32 %v6878, %v6879
    %v6881 = vrot.slane %v6880, 1
    %v6882 = vmax.f32 %v6880, %v6881
    %v6883 = vsel %vm4194, %v3790, -inf
    %v6884 = vrot.slane %v6883, 4
    %v6885 = vmax.f32 %v6883, %v6884
    %v6886 = vrot.slane %v6885, 2
    %v6887 = vmax.f32 %v6885, %v6886
    %v6888 = vrot.slane %v6887, 1
    %v6889 = vmax.f32 %v6887, %v6888
    %v6890 = vsel %vm4194, %v3792, -inf
    %v6891 = vrot.slane %v6890, 4
    %v6892 = vmax.f32 %v6890, %v6891
    %v6893 = vrot.slane %v6892, 2
    %v6894 = vmax.f32 %v6892, %v6893
    %v6895 = vrot.slane %v6894, 1
    %v6896 = vmax.f32 %v6894, %v6895
    %v6897 = vsel %vm4194, %v3793, -inf
    %v6898 = vrot.slane %v6897, 4
    %v6899 = vmax.f32 %v6897, %v6898
    %v6900 = vrot.slane %v6899, 2
    %v6901 = vmax.f32 %v6899, %v6900
    %v6902 = vrot.slane %v6901, 1
    %v6903 = vmax.f32 %v6901, %v6902
    %v6904 = vsel %vm4194, %v3795, -inf
    %v6905 = vrot.slane %v6904, 4
    %v6906 = vmax.f32 %v6904, %v6905
    %v6907 = vrot.slane %v6906, 2
    %v6908 = vmax.f32 %v6906, %v6907
    %v6909 = vrot.slane %v6908, 1
    %v6910 = vmax.f32 %v6908, %v6909
    %v6911 = vsel %vm4194, %v3796, -inf
    %v6912 = vrot.slane %v6911, 4
    %v6913 = vmax.f32 %v6911, %v6912
    %v6914 = vrot.slane %v6913, 2
    %v6915 = vmax.f32 %v6913, %v6914
    %v6916 = vrot.slane %v6915, 1
    %v6917 = vmax.f32 %v6915, %v6916
    %v6918 = vsel %vm4194, %v3798, -inf
    %v6919 = vrot.slane %v6918, 4
    %v6920 = vmax.f32 %v6918, %v6919
    %v6921 = vrot.slane %v6920, 2
    %v6922 = vmax.f32 %v6920, %v6921
    %v6923 = vrot.slane %v6922, 1
    %v6924 = vmax.f32 %v6922, %v6923
    %v6925 = vsel %vm4194, %v3799, -inf
    %v6926 = vrot.slane %v6925, 4
    %v6927 = vmax.f32 %v6925, %v6926
    %v6928 = vrot.slane %v6927, 2
    %v6929 = vmax.f32 %v6927, %v6928
    %v6930 = vrot.slane %v6929, 1
    %v6931 = vmax.f32 %v6929, %v6930
    %v6932 = vsel %vm4194, %v3801, -inf
    %v6933 = vrot.slane %v6932, 4
    %v6934 = vmax.f32 %v6932, %v6933
    %v6935 = vrot.slane %v6934, 2
    %v6936 = vmax.f32 %v6934, %v6935
    %v6937 = vrot.slane %v6936, 1
    %v6938 = vmax.f32 %v6936, %v6937
    %vm7139 = vcmask 1041409
    %v7140 = vsel %vm7139, %v4208, %v4201
    %vm7141 = vcmask 1042434
    %v7142 = vsel %vm7141, %v4215, %v7140
    %vm7143 = vcmask 1043459
    %v7144 = vsel %vm7143, %v4222, %v7142
    %vm7145 = vcmask 1044484
    %v7146 = vsel %vm7145, %v4229, %v7144
    %vm7147 = vcmask 1045509
    %v7148 = vsel %vm7147, %v4236, %v7146
    %vm7149 = vcmask 1046534
    %v7150 = vsel %vm7149, %v4243, %v7148
    %vm7151 = vcmask 1047559
    %v7152 = vsel %vm7151, %v4250, %v7150
    %v7153 = vsel %vm7139, %v4264, %v4257
    %v7154 = vsel %vm7139, %v4306, %v4299
    %v7155 = vsel %vm7141, %v4313, %v7154
    %v7156 = vsel %vm7143, %v4320, %v7155
    %v7157 = vsel %vm7145, %v4327, %v7156
    %v7158 = vsel %vm7147, %v4334, %v7157
    %v7159 = vsel %vm7149, %v4341, %v7158
    %v7160 = vsel %vm7151, %v4348, %v7159
    %v7161 = vsel %vm7139, %v4362, %v4355
    %v7162 = vsel %vm7139, %v4404, %v4397
    %v7163 = vsel %vm7141, %v4411, %v7162
    %v7164 = vsel %vm7143, %v4418, %v7163
    %v7165 = vsel %vm7145, %v4425, %v7164
    %v7166 = vsel %vm7147, %v4432, %v7165
    %v7167 = vsel %vm7149, %v4439, %v7166
    %v7168 = vsel %vm7151, %v4446, %v7167
    %v7169 = vsel %vm7139, %v4460, %v4453
    %v7170 = vsel %vm7139, %v4502, %v4495
    %v7171 = vsel %vm7141, %v4509, %v7170
    %v7172 = vsel %vm7143, %v4516, %v7171
    %v7173 = vsel %vm7145, %v4523, %v7172
    %v7174 = vsel %vm7147, %v4530, %v7173
    %v7175 = vsel %vm7149, %v4537, %v7174
    %v7176 = vsel %vm7151, %v4544, %v7175
    %v7177 = vsel %vm7139, %v4558, %v4551
    %v7178 = vsel %vm7139, %v4600, %v4593
    %v7179 = vsel %vm7141, %v4607, %v7178
    %v7180 = vsel %vm7143, %v4614, %v7179
    %v7181 = vsel %vm7145, %v4621, %v7180
    %v7182 = vsel %vm7147, %v4628, %v7181
    %v7183 = vsel %vm7149, %v4635, %v7182
    %v7184 = vsel %vm7151, %v4642, %v7183
    %v7185 = vsel %vm7139, %v4656, %v4649
    %v7186 = vsel %vm7139, %v4698, %v4691
    %v7187 = vsel %vm7141, %v4705, %v7186
    %v7188 = vsel %vm7143, %v4712, %v7187
    %v7189 = vsel %vm7145, %v4719, %v7188
    %v7190 = vsel %vm7147, %v4726, %v7189
    %v7191 = vsel %vm7149, %v4733, %v7190
    %v7192 = vsel %vm7151, %v4740, %v7191
    %v7193 = vsel %vm7139, %v4754, %v4747
    %v7194 = vsel %vm7139, %v4796, %v4789
    %v7195 = vsel %vm7141, %v4803, %v7194
    %v7196 = vsel %vm7143, %v4810, %v7195
    %v7197 = vsel %vm7145, %v4817, %v7196
    %v7198 = vsel %vm7147, %v4824, %v7197
    %v7199 = vsel %vm7149, %v4831, %v7198
    %v7200 = vsel %vm7151, %v4838, %v7199
    %v7201 = vsel %vm7139, %v4852, %v4845
    %v7202 = vsel %vm7139, %v4894, %v4887
    %v7203 = vsel %vm7141, %v4901, %v7202
    %v7204 = vsel %vm7143, %v4908, %v7203
    %v7205 = vsel %vm7145, %v4915, %v7204
    %v7206 = vsel %vm7147, %v4922, %v7205
    %v7207 = vsel %vm7149, %v4929, %v7206
    %v7208 = vsel %vm7151, %v4936, %v7207
    %v7209 = vsel %vm7139, %v4950, %v4943
    %v7210 = vsel %vm7139, %v4992, %v4985
    %v7211 = vsel %vm7141, %v4999, %v7210
    %v7212 = vsel %vm7143, %v5006, %v7211
    %v7213 = vsel %vm7145, %v5013, %v7212
    %v7214 = vsel %vm7147, %v5020, %v7213
    %v7215 = vsel %vm7149, %v5027, %v7214
    %v7216 = vsel %vm7151, %v5034, %v7215
    %v7217 = vsel %vm7139, %v5048, %v5041
    %v7218 = vsel %vm7139, %v5090, %v5083
    %v7219 = vsel %vm7141, %v5097, %v7218
    %v7220 = vsel %vm7143, %v5104, %v7219
    %v7221 = vsel %vm7145, %v5111, %v7220
    %v7222 = vsel %vm7147, %v5118, %v7221
    %v7223 = vsel %vm7149, %v5125, %v7222
    %v7224 = vsel %vm7151, %v5132, %v7223
    %v7225 = vsel %vm7139, %v5146, %v5139
    %v7226 = vsel %vm7139, %v5580, %v5573
    %v7227 = vsel %vm7141, %v5587, %v7226
    %v7228 = vsel %vm7143, %v5594, %v7227
    %v7229 = vsel %vm7145, %v5601, %v7228
    %v7230 = vsel %vm7147, %v5608, %v7229
    %v7231 = vsel %vm7149, %v5615, %v7230
    %v7232 = vsel %vm7151, %v5622, %v7231
    %v7233 = vsel %vm7139, %v5636, %v5629
    %v7234 = vsel %vm7139, %v5678, %v5671
    %v7235 = vsel %vm7141, %v5685, %v7234
    %v7236 = vsel %vm7143, %v5692, %v7235
    %v7237 = vsel %vm7145, %v5699, %v7236
    %v7238 = vsel %vm7147, %v5706, %v7237
    %v7239 = vsel %vm7149, %v5713, %v7238
    %v7240 = vsel %vm7151, %v5720, %v7239
    %v7241 = vsel %vm7139, %v5734, %v5727
    %v7242 = vsel %vm7139, %v5776, %v5769
    %v7243 = vsel %vm7141, %v5783, %v7242
    %v7244 = vsel %vm7143, %v5790, %v7243
    %v7245 = vsel %vm7145, %v5797, %v7244
    %v7246 = vsel %vm7147, %v5804, %v7245
    %v7247 = vsel %vm7149, %v5811, %v7246
    %v7248 = vsel %vm7151, %v5818, %v7247
    %v7249 = vsel %vm7139, %v5832, %v5825
    %v7250 = vsel %vm7139, %v5874, %v5867
    %v7251 = vsel %vm7141, %v5881, %v7250
    %v7252 = vsel %vm7143, %v5888, %v7251
    %v7253 = vsel %vm7145, %v5895, %v7252
    %v7254 = vsel %vm7147, %v5902, %v7253
    %v7255 = vsel %vm7149, %v5909, %v7254
    %v7256 = vsel %vm7151, %v5916, %v7255
    %v7257 = vsel %vm7139, %v5930, %v5923
    %v7258 = vsel %vm7139, %v5972, %v5965
    %v7259 = vsel %vm7141, %v5979, %v7258
    %v7260 = vsel %vm7143, %v5986, %v7259
    %v7261 = vsel %vm7145, %v5993, %v7260
    %v7262 = vsel %vm7147, %v6000, %v7261
    %v7263 = vsel %vm7149, %v6007, %v7262
    %v7264 = vsel %vm7151, %v6014, %v7263
    %v7265 = vsel %vm7139, %v6028, %v6021
    %v7266 = vsel %vm7139, %v6070, %v6063
    %v7267 = vsel %vm7141, %v6077, %v7266
    %v7268 = vsel %vm7143, %v6084, %v7267
    %v7269 = vsel %vm7145, %v6091, %v7268
    %v7270 = vsel %vm7147, %v6098, %v7269
    %v7271 = vsel %vm7149, %v6105, %v7270
    %v7272 = vsel %vm7151, %v6112, %v7271
    %v7273 = vsel %vm7139, %v6126, %v6119
    %v7274 = vsel %vm7139, %v6168, %v6161
    %v7275 = vsel %vm7141, %v6175, %v7274
    %v7276 = vsel %vm7143, %v6182, %v7275
    %v7277 = vsel %vm7145, %v6189, %v7276
    %v7278 = vsel %vm7147, %v6196, %v7277
    %v7279 = vsel %vm7149, %v6203, %v7278
    %v7280 = vsel %vm7151, %v6210, %v7279
    %v7281 = vsel %vm7139, %v6224, %v6217
    %v7282 = vsel %vm7139, %v6266, %v6259
    %v7283 = vsel %vm7141, %v6273, %v7282
    %v7284 = vsel %vm7143, %v6280, %v7283
    %v7285 = vsel %vm7145, %v6287, %v7284
    %v7286 = vsel %vm7147, %v6294, %v7285
    %v7287 = vsel %vm7149, %v6301, %v7286
    %v7288 = vsel %vm7151, %v6308, %v7287
    %v7289 = vsel %vm7139, %v6322, %v6315
    %v7290 = vsel %vm7139, %v6364, %v6357
    %v7291 = vsel %vm7141, %v6371, %v7290
    %v7292 = vsel %vm7143, %v6378, %v7291
    %v7293 = vsel %vm7145, %v6385, %v7292
    %v7294 = vsel %vm7147, %v6392, %v7293
    %v7295 = vsel %vm7149, %v6399, %v7294
    %v7296 = vsel %vm7151, %v6406, %v7295
    %v7297 = vsel %vm7139, %v6420, %v6413
    %v7298 = vsel %vm7139, %v6462, %v6455
    %v7299 = vsel %vm7141, %v6469, %v7298
    %v7300 = vsel %vm7143, %v6476, %v7299
    %v7301 = vsel %vm7145, %v6483, %v7300
    %v7302 = vsel %vm7147, %v6490, %v7301
    %v7303 = vsel %vm7149, %v6497, %v7302
    %v7304 = vsel %vm7151, %v6504, %v7303
    %v7305 = vsel %vm7139, %v6518, %v6511
    %v7366 = vsel %vm7139, %v4215, %v4208
    %v7367 = vsel %vm7141, %v4222, %v7366
    %v7368 = vsel %vm7143, %v4229, %v7367
    %v7369 = vsel %vm7145, %v4236, %v7368
    %v7370 = vsel %vm7147, %v4243, %v7369
    %v7371 = vsel %vm7149, %v4250, %v7370
    %v7372 = vsel %vm7151, %v4257, %v7371
    %v7373 = vsel %vm7139, %v4271, %v4264
    %v7374 = vsel %vm7139, %v4313, %v4306
    %v7375 = vsel %vm7141, %v4320, %v7374
    %v7376 = vsel %vm7143, %v4327, %v7375
    %v7377 = vsel %vm7145, %v4334, %v7376
    %v7378 = vsel %vm7147, %v4341, %v7377
    %v7379 = vsel %vm7149, %v4348, %v7378
    %v7380 = vsel %vm7151, %v4355, %v7379
    %v7381 = vsel %vm7139, %v4369, %v4362
    %v7382 = vsel %vm7139, %v4411, %v4404
    %v7383 = vsel %vm7141, %v4418, %v7382
    %v7384 = vsel %vm7143, %v4425, %v7383
    %v7385 = vsel %vm7145, %v4432, %v7384
    %v7386 = vsel %vm7147, %v4439, %v7385
    %v7387 = vsel %vm7149, %v4446, %v7386
    %v7388 = vsel %vm7151, %v4453, %v7387
    %v7389 = vsel %vm7139, %v4467, %v4460
    %v7390 = vsel %vm7139, %v4509, %v4502
    %v7391 = vsel %vm7141, %v4516, %v7390
    %v7392 = vsel %vm7143, %v4523, %v7391
    %v7393 = vsel %vm7145, %v4530, %v7392
    %v7394 = vsel %vm7147, %v4537, %v7393
    %v7395 = vsel %vm7149, %v4544, %v7394
    %v7396 = vsel %vm7151, %v4551, %v7395
    %v7397 = vsel %vm7139, %v4565, %v4558
    %v7398 = vsel %vm7139, %v4607, %v4600
    %v7399 = vsel %vm7141, %v4614, %v7398
    %v7400 = vsel %vm7143, %v4621, %v7399
    %v7401 = vsel %vm7145, %v4628, %v7400
    %v7402 = vsel %vm7147, %v4635, %v7401
    %v7403 = vsel %vm7149, %v4642, %v7402
    %v7404 = vsel %vm7151, %v4649, %v7403
    %v7405 = vsel %vm7139, %v4663, %v4656
    %v7406 = vsel %vm7139, %v4705, %v4698
    %v7407 = vsel %vm7141, %v4712, %v7406
    %v7408 = vsel %vm7143, %v4719, %v7407
    %v7409 = vsel %vm7145, %v4726, %v7408
    %v7410 = vsel %vm7147, %v4733, %v7409
    %v7411 = vsel %vm7149, %v4740, %v7410
    %v7412 = vsel %vm7151, %v4747, %v7411
    %v7413 = vsel %vm7139, %v4761, %v4754
    %v7414 = vsel %vm7139, %v4803, %v4796
    %v7415 = vsel %vm7141, %v4810, %v7414
    %v7416 = vsel %vm7143, %v4817, %v7415
    %v7417 = vsel %vm7145, %v4824, %v7416
    %v7418 = vsel %vm7147, %v4831, %v7417
    %v7419 = vsel %vm7149, %v4838, %v7418
    %v7420 = vsel %vm7151, %v4845, %v7419
    %v7421 = vsel %vm7139, %v4859, %v4852
    %v7422 = vsel %vm7139, %v4901, %v4894
    %v7423 = vsel %vm7141, %v4908, %v7422
    %v7424 = vsel %vm7143, %v4915, %v7423
    %v7425 = vsel %vm7145, %v4922, %v7424
    %v7426 = vsel %vm7147, %v4929, %v7425
    %v7427 = vsel %vm7149, %v4936, %v7426
    %v7428 = vsel %vm7151, %v4943, %v7427
    %v7429 = vsel %vm7139, %v4957, %v4950
    %v7430 = vsel %vm7139, %v4999, %v4992
    %v7431 = vsel %vm7141, %v5006, %v7430
    %v7432 = vsel %vm7143, %v5013, %v7431
    %v7433 = vsel %vm7145, %v5020, %v7432
    %v7434 = vsel %vm7147, %v5027, %v7433
    %v7435 = vsel %vm7149, %v5034, %v7434
    %v7436 = vsel %vm7151, %v5041, %v7435
    %v7437 = vsel %vm7139, %v5055, %v5048
    %v7438 = vsel %vm7139, %v5097, %v5090
    %v7439 = vsel %vm7141, %v5104, %v7438
    %v7440 = vsel %vm7143, %v5111, %v7439
    %v7441 = vsel %vm7145, %v5118, %v7440
    %v7442 = vsel %vm7147, %v5125, %v7441
    %v7443 = vsel %vm7149, %v5132, %v7442
    %v7444 = vsel %vm7151, %v5139, %v7443
    %v7445 = vsel %vm7139, %v5153, %v5146
    %v7446 = vsel %vm7139, %v5587, %v5580
    %v7447 = vsel %vm7141, %v5594, %v7446
    %v7448 = vsel %vm7143, %v5601, %v7447
    %v7449 = vsel %vm7145, %v5608, %v7448
    %v7450 = vsel %vm7147, %v5615, %v7449
    %v7451 = vsel %vm7149, %v5622, %v7450
    %v7452 = vsel %vm7151, %v5629, %v7451
    %v7453 = vsel %vm7139, %v5643, %v5636
    %v7454 = vsel %vm7139, %v5685, %v5678
    %v7455 = vsel %vm7141, %v5692, %v7454
    %v7456 = vsel %vm7143, %v5699, %v7455
    %v7457 = vsel %vm7145, %v5706, %v7456
    %v7458 = vsel %vm7147, %v5713, %v7457
    %v7459 = vsel %vm7149, %v5720, %v7458
    %v7460 = vsel %vm7151, %v5727, %v7459
    %v7461 = vsel %vm7139, %v5741, %v5734
    %v7462 = vsel %vm7139, %v5783, %v5776
    %v7463 = vsel %vm7141, %v5790, %v7462
    %v7464 = vsel %vm7143, %v5797, %v7463
    %v7465 = vsel %vm7145, %v5804, %v7464
    %v7466 = vsel %vm7147, %v5811, %v7465
    %v7467 = vsel %vm7149, %v5818, %v7466
    %v7468 = vsel %vm7151, %v5825, %v7467
    %v7469 = vsel %vm7139, %v5839, %v5832
    %v7470 = vsel %vm7139, %v5881, %v5874
    %v7471 = vsel %vm7141, %v5888, %v7470
    %v7472 = vsel %vm7143, %v5895, %v7471
    %v7473 = vsel %vm7145, %v5902, %v7472
    %v7474 = vsel %vm7147, %v5909, %v7473
    %v7475 = vsel %vm7149, %v5916, %v7474
    %v7476 = vsel %vm7151, %v5923, %v7475
    %v7477 = vsel %vm7139, %v5937, %v5930
    %v7478 = vsel %vm7139, %v5979, %v5972
    %v7479 = vsel %vm7141, %v5986, %v7478
    %v7480 = vsel %vm7143, %v5993, %v7479
    %v7481 = vsel %vm7145, %v6000, %v7480
    %v7482 = vsel %vm7147, %v6007, %v7481
    %v7483 = vsel %vm7149, %v6014, %v7482
    %v7484 = vsel %vm7151, %v6021, %v7483
    %v7485 = vsel %vm7139, %v6035, %v6028
    %v7486 = vsel %vm7139, %v6077, %v6070
    %v7487 = vsel %vm7141, %v6084, %v7486
    %v7488 = vsel %vm7143, %v6091, %v7487
    %v7489 = vsel %vm7145, %v6098, %v7488
    %v7490 = vsel %vm7147, %v6105, %v7489
    %v7491 = vsel %vm7149, %v6112, %v7490
    %v7492 = vsel %vm7151, %v6119, %v7491
    %v7493 = vsel %vm7139, %v6133, %v6126
    %v7494 = vsel %vm7139, %v6175, %v6168
    %v7495 = vsel %vm7141, %v6182, %v7494
    %v7496 = vsel %vm7143, %v6189, %v7495
    %v7497 = vsel %vm7145, %v6196, %v7496
    %v7498 = vsel %vm7147, %v6203, %v7497
    %v7499 = vsel %vm7149, %v6210, %v7498
    %v7500 = vsel %vm7151, %v6217, %v7499
    %v7501 = vsel %vm7139, %v6231, %v6224
    %v7502 = vsel %vm7139, %v6273, %v6266
    %v7503 = vsel %vm7141, %v6280, %v7502
    %v7504 = vsel %vm7143, %v6287, %v7503
    %v7505 = vsel %vm7145, %v6294, %v7504
    %v7506 = vsel %vm7147, %v6301, %v7505
    %v7507 = vsel %vm7149, %v6308, %v7506
    %v7508 = vsel %vm7151, %v6315, %v7507
    %v7509 = vsel %vm7139, %v6329, %v6322
    %v7510 = vsel %vm7139, %v6371, %v6364
    %v7511 = vsel %vm7141, %v6378, %v7510
    %v7512 = vsel %vm7143, %v6385, %v7511
    %v7513 = vsel %vm7145, %v6392, %v7512
    %v7514 = vsel %vm7147, %v6399, %v7513
    %v7515 = vsel %vm7149, %v6406, %v7514
    %v7516 = vsel %vm7151, %v6413, %v7515
    %v7517 = vsel %vm7139, %v6427, %v6420
    %v7518 = vsel %vm7139, %v6469, %v6462
    %v7519 = vsel %vm7141, %v6476, %v7518
    %v7520 = vsel %vm7143, %v6483, %v7519
    %v7521 = vsel %vm7145, %v6490, %v7520
    %v7522 = vsel %vm7147, %v6497, %v7521
    %v7523 = vsel %vm7149, %v6504, %v7522
    %v7524 = vsel %vm7151, %v6511, %v7523
    %v7525 = vsel %vm7139, %v6525, %v6518
    %7526 = vrot.lane.b32.xlu0 %v7372, 6
    %v7527 = vpop.permute.xlu0 %7526
    %7528 = vrot.lane.b32.xlu0 %v7373, 6
    %v7529 = vpop.permute.xlu0 %7528
    %7530 = vrot.lane.b32.xlu0 %v7380, 6
    %v7531 = vpop.permute.xlu0 %7530
    %7532 = vrot.lane.b32.xlu0 %v7381, 6
    %v7533 = vpop.permute.xlu0 %7532
    %7534 = vrot.lane.b32.xlu0 %v7388, 6
    %v7535 = vpop.permute.xlu0 %7534
    %7536 = vrot.lane.b32.xlu0 %v7389, 6
    %v7537 = vpop.permute.xlu0 %7536
    %7538 = vrot.lane.b32.xlu0 %v7396, 6
    %v7539 = vpop.permute.xlu0 %7538
    %7540 = vrot.lane.b32.xlu0 %v7397, 6
    %v7541 = vpop.permute.xlu0 %7540
    %7542 = vrot.lane.b32.xlu0 %v7404, 6
    %v7543 = vpop.permute.xlu0 %7542
    %7544 = vrot.lane.b32.xlu0 %v7405, 6
    %v7545 = vpop.permute.xlu0 %7544
    %7546 = vrot.lane.b32.xlu0 %v7412, 6
    %v7547 = vpop.permute.xlu0 %7546
    %7548 = vrot.lane.b32.xlu0 %v7413, 6
    %v7549 = vpop.permute.xlu0 %7548
    %7550 = vrot.lane.b32.xlu0 %v7420, 6
    %v7551 = vpop.permute.xlu0 %7550
    %7552 = vrot.lane.b32.xlu0 %v7421, 6
    %v7553 = vpop.permute.xlu0 %7552
    %7554 = vrot.lane.b32.xlu0 %v7428, 6
    %v7555 = vpop.permute.xlu0 %7554
    %7556 = vrot.lane.b32.xlu0 %v7429, 6
    %v7557 = vpop.permute.xlu0 %7556
    %7558 = vrot.lane.b32.xlu0 %v7436, 6
    %v7559 = vpop.permute.xlu0 %7558
    %7560 = vrot.lane.b32.xlu0 %v7437, 6
    %v7561 = vpop.permute.xlu0 %7560
    %7562 = vrot.lane.b32.xlu0 %v7444, 6
    %v7563 = vpop.permute.xlu0 %7562
    %7564 = vrot.lane.b32.xlu0 %v7445, 6
    %v7565 = vpop.permute.xlu0 %7564
    %7566 = vrot.lane.b32.xlu0 %v7452, 6
    %v7567 = vpop.permute.xlu0 %7566
    %7568 = vrot.lane.b32.xlu0 %v7453, 6
    %v7569 = vpop.permute.xlu0 %7568
    %7570 = vrot.lane.b32.xlu0 %v7460, 6
    %v7571 = vpop.permute.xlu0 %7570
    %7572 = vrot.lane.b32.xlu0 %v7461, 6
    %v7573 = vpop.permute.xlu0 %7572
    %7574 = vrot.lane.b32.xlu0 %v7468, 6
    %v7575 = vpop.permute.xlu0 %7574
    %7576 = vrot.lane.b32.xlu0 %v7469, 6
    %v7577 = vpop.permute.xlu0 %7576
    %7578 = vrot.lane.b32.xlu0 %v7476, 6
    %v7579 = vpop.permute.xlu0 %7578
    %7580 = vrot.lane.b32.xlu0 %v7477, 6
    %v7581 = vpop.permute.xlu0 %7580
    %7582 = vrot.lane.b32.xlu0 %v7484, 6
    %v7583 = vpop.permute.xlu0 %7582
    %7584 = vrot.lane.b32.xlu0 %v7485, 6
    %v7585 = vpop.permute.xlu0 %7584
    %7586 = vrot.lane.b32.xlu0 %v7492, 6
    %v7587 = vpop.permute.xlu0 %7586
    %7588 = vrot.lane.b32.xlu0 %v7493, 6
    %v7589 = vpop.permute.xlu0 %7588
    %7590 = vrot.lane.b32.xlu0 %v7500, 6
    %v7591 = vpop.permute.xlu0 %7590
    %7592 = vrot.lane.b32.xlu0 %v7501, 6
    %v7593 = vpop.permute.xlu0 %7592
    %7594 = vrot.lane.b32.xlu0 %v7508, 6
    %v7595 = vpop.permute.xlu0 %7594
    %7596 = vrot.lane.b32.xlu0 %v7509, 6
    %v7597 = vpop.permute.xlu0 %7596
    %7598 = vrot.lane.b32.xlu0 %v7516, 6
    %v7599 = vpop.permute.xlu0 %7598
    %7600 = vrot.lane.b32.xlu0 %v7517, 6
    %v7601 = vpop.permute.xlu0 %7600
    %7602 = vrot.lane.b32.xlu0 %v7524, 6
    %v7603 = vpop.permute.xlu0 %7602
    %7604 = vrot.lane.b32.xlu0 %v7525, 6
    %v7605 = vpop.permute.xlu0 %7604
    %v7666 = vsel %vm7139, %v4222, %v4215
    %v7667 = vsel %vm7141, %v4229, %v7666
    %v7668 = vsel %vm7143, %v4236, %v7667
    %v7669 = vsel %vm7145, %v4243, %v7668
    %v7670 = vsel %vm7147, %v4250, %v7669
    %v7671 = vsel %vm7149, %v4257, %v7670
    %v7672 = vsel %vm7151, %v4264, %v7671
    %v7673 = vsel %vm7139, %v4278, %v4271
    %v7674 = vsel %vm7139, %v4320, %v4313
    %v7675 = vsel %vm7141, %v4327, %v7674
    %v7676 = vsel %vm7143, %v4334, %v7675
    %v7677 = vsel %vm7145, %v4341, %v7676
    %v7678 = vsel %vm7147, %v4348, %v7677
    %v7679 = vsel %vm7149, %v4355, %v7678
    %v7680 = vsel %vm7151, %v4362, %v7679
    %v7681 = vsel %vm7139, %v4376, %v4369
    %v7682 = vsel %vm7139, %v4418, %v4411
    %v7683 = vsel %vm7141, %v4425, %v7682
    %v7684 = vsel %vm7143, %v4432, %v7683
    %v7685 = vsel %vm7145, %v4439, %v7684
    %v7686 = vsel %vm7147, %v4446, %v7685
    %v7687 = vsel %vm7149, %v4453, %v7686
    %v7688 = vsel %vm7151, %v4460, %v7687
    %v7689 = vsel %vm7139, %v4474, %v4467
    %v7690 = vsel %vm7139, %v4516, %v4509
    %v7691 = vsel %vm7141, %v4523, %v7690
    %v7692 = vsel %vm7143, %v4530, %v7691
    %v7693 = vsel %vm7145, %v4537, %v7692
    %v7694 = vsel %vm7147, %v4544, %v7693
    %v7695 = vsel %vm7149, %v4551, %v7694
    %v7696 = vsel %vm7151, %v4558, %v7695
    %v7697 = vsel %vm7139, %v4572, %v4565
    %v7698 = vsel %vm7139, %v4614, %v4607
    %v7699 = vsel %vm7141, %v4621, %v7698
    %v7700 = vsel %vm7143, %v4628, %v7699
    %v7701 = vsel %vm7145, %v4635, %v7700
    %v7702 = vsel %vm7147, %v4642, %v7701
    %v7703 = vsel %vm7149, %v4649, %v7702
    %v7704 = vsel %vm7151, %v4656, %v7703
    %v7705 = vsel %vm7139, %v4670, %v4663
    %v7706 = vsel %vm7139, %v4712, %v4705
    %v7707 = vsel %vm7141, %v4719, %v7706
    %v7708 = vsel %vm7143, %v4726, %v7707
    %v7709 = vsel %vm7145, %v4733, %v7708
    %v7710 = vsel %vm7147, %v4740, %v7709
    %v7711 = vsel %vm7149, %v4747, %v7710
    %v7712 = vsel %vm7151, %v4754, %v7711
    %v7713 = vsel %vm7139, %v4768, %v4761
    %v7714 = vsel %vm7139, %v4810, %v4803
    %v7715 = vsel %vm7141, %v4817, %v7714
    %v7716 = vsel %vm7143, %v4824, %v7715
    %v7717 = vsel %vm7145, %v4831, %v7716
    %v7718 = vsel %vm7147, %v4838, %v7717
    %v7719 = vsel %vm7149, %v4845, %v7718
    %v7720 = vsel %vm7151, %v4852, %v7719
    %v7721 = vsel %vm7139, %v4866, %v4859
    %v7722 = vsel %vm7139, %v4908, %v4901
    %v7723 = vsel %vm7141, %v4915, %v7722
    %v7724 = vsel %vm7143, %v4922, %v7723
    %v7725 = vsel %vm7145, %v4929, %v7724
    %v7726 = vsel %vm7147, %v4936, %v7725
    %v7727 = vsel %vm7149, %v4943, %v7726
    %v7728 = vsel %vm7151, %v4950, %v7727
    %v7729 = vsel %vm7139, %v4964, %v4957
    %v7730 = vsel %vm7139, %v5006, %v4999
    %v7731 = vsel %vm7141, %v5013, %v7730
    %v7732 = vsel %vm7143, %v5020, %v7731
    %v7733 = vsel %vm7145, %v5027, %v7732
    %v7734 = vsel %vm7147, %v5034, %v7733
    %v7735 = vsel %vm7149, %v5041, %v7734
    %v7736 = vsel %vm7151, %v5048, %v7735
    %v7737 = vsel %vm7139, %v5062, %v5055
    %v7738 = vsel %vm7139, %v5104, %v5097
    %v7739 = vsel %vm7141, %v5111, %v7738
    %v7740 = vsel %vm7143, %v5118, %v7739
    %v7741 = vsel %vm7145, %v5125, %v7740
    %v7742 = vsel %vm7147, %v5132, %v7741
    %v7743 = vsel %vm7149, %v5139, %v7742
    %v7744 = vsel %vm7151, %v5146, %v7743
    %v7745 = vsel %vm7139, %v5160, %v5153
    %v7746 = vsel %vm7139, %v5594, %v5587
    %v7747 = vsel %vm7141, %v5601, %v7746
    %v7748 = vsel %vm7143, %v5608, %v7747
    %v7749 = vsel %vm7145, %v5615, %v7748
    %v7750 = vsel %vm7147, %v5622, %v7749
    %v7751 = vsel %vm7149, %v5629, %v7750
    %v7752 = vsel %vm7151, %v5636, %v7751
    %v7753 = vsel %vm7139, %v5650, %v5643
    %v7754 = vsel %vm7139, %v5692, %v5685
    %v7755 = vsel %vm7141, %v5699, %v7754
    %v7756 = vsel %vm7143, %v5706, %v7755
    %v7757 = vsel %vm7145, %v5713, %v7756
    %v7758 = vsel %vm7147, %v5720, %v7757
    %v7759 = vsel %vm7149, %v5727, %v7758
    %v7760 = vsel %vm7151, %v5734, %v7759
    %v7761 = vsel %vm7139, %v5748, %v5741
    %v7762 = vsel %vm7139, %v5790, %v5783
    %v7763 = vsel %vm7141, %v5797, %v7762
    %v7764 = vsel %vm7143, %v5804, %v7763
    %v7765 = vsel %vm7145, %v5811, %v7764
    %v7766 = vsel %vm7147, %v5818, %v7765
    %v7767 = vsel %vm7149, %v5825, %v7766
    %v7768 = vsel %vm7151, %v5832, %v7767
    %v7769 = vsel %vm7139, %v5846, %v5839
    %v7770 = vsel %vm7139, %v5888, %v5881
    %v7771 = vsel %vm7141, %v5895, %v7770
    %v7772 = vsel %vm7143, %v5902, %v7771
    %v7773 = vsel %vm7145, %v5909, %v7772
    %v7774 = vsel %vm7147, %v5916, %v7773
    %v7775 = vsel %vm7149, %v5923, %v7774
    %v7776 = vsel %vm7151, %v5930, %v7775
    %v7777 = vsel %vm7139, %v5944, %v5937
    %v7778 = vsel %vm7139, %v5986, %v5979
    %v7779 = vsel %vm7141, %v5993, %v7778
    %v7780 = vsel %vm7143, %v6000, %v7779
    %v7781 = vsel %vm7145, %v6007, %v7780
    %v7782 = vsel %vm7147, %v6014, %v7781
    %v7783 = vsel %vm7149, %v6021, %v7782
    %v7784 = vsel %vm7151, %v6028, %v7783
    %v7785 = vsel %vm7139, %v6042, %v6035
    %v7786 = vsel %vm7139, %v6084, %v6077
    %v7787 = vsel %vm7141, %v6091, %v7786
    %v7788 = vsel %vm7143, %v6098, %v7787
    %v7789 = vsel %vm7145, %v6105, %v7788
    %v7790 = vsel %vm7147, %v6112, %v7789
    %v7791 = vsel %vm7149, %v6119, %v7790
    %v7792 = vsel %vm7151, %v6126, %v7791
    %v7793 = vsel %vm7139, %v6140, %v6133
    %v7794 = vsel %vm7139, %v6182, %v6175
    %v7795 = vsel %vm7141, %v6189, %v7794
    %v7796 = vsel %vm7143, %v6196, %v7795
    %v7797 = vsel %vm7145, %v6203, %v7796
    %v7798 = vsel %vm7147, %v6210, %v7797
    %v7799 = vsel %vm7149, %v6217, %v7798
    %v7800 = vsel %vm7151, %v6224, %v7799
    %v7801 = vsel %vm7139, %v6238, %v6231
    %v7802 = vsel %vm7139, %v6280, %v6273
    %v7803 = vsel %vm7141, %v6287, %v7802
    %v7804 = vsel %vm7143, %v6294, %v7803
    %v7805 = vsel %vm7145, %v6301, %v7804
    %v7806 = vsel %vm7147, %v6308, %v7805
    %v7807 = vsel %vm7149, %v6315, %v7806
    %v7808 = vsel %vm7151, %v6322, %v7807
    %v7809 = vsel %vm7139, %v6336, %v6329
    %v7810 = vsel %vm7139, %v6378, %v6371
    %v7811 = vsel %vm7141, %v6385, %v7810
    %v7812 = vsel %vm7143, %v6392, %v7811
    %v7813 = vsel %vm7145, %v6399, %v7812
    %v7814 = vsel %vm7147, %v6406, %v7813
    %v7815 = vsel %vm7149, %v6413, %v7814
    %v7816 = vsel %vm7151, %v6420, %v7815
    %v7817 = vsel %vm7139, %v6434, %v6427
    %v7818 = vsel %vm7139, %v6476, %v6469
    %v7819 = vsel %vm7141, %v6483, %v7818
    %v7820 = vsel %vm7143, %v6490, %v7819
    %v7821 = vsel %vm7145, %v6497, %v7820
    %v7822 = vsel %vm7147, %v6504, %v7821
    %v7823 = vsel %vm7149, %v6511, %v7822
    %v7824 = vsel %vm7151, %v6518, %v7823
    %v7825 = vsel %vm7139, %v6532, %v6525
    %7826 = vrot.lane.b32.xlu0 %v7672, 12
    %v7827 = vpop.permute.xlu0 %7826
    %7828 = vrot.lane.b32.xlu0 %v7673, 12
    %v7829 = vpop.permute.xlu0 %7828
    %7830 = vrot.lane.b32.xlu0 %v7680, 12
    %v7831 = vpop.permute.xlu0 %7830
    %7832 = vrot.lane.b32.xlu0 %v7681, 12
    %v7833 = vpop.permute.xlu0 %7832
    %7834 = vrot.lane.b32.xlu0 %v7688, 12
    %v7835 = vpop.permute.xlu0 %7834
    %7836 = vrot.lane.b32.xlu0 %v7689, 12
    %v7837 = vpop.permute.xlu0 %7836
    %7838 = vrot.lane.b32.xlu0 %v7696, 12
    %v7839 = vpop.permute.xlu0 %7838
    %7840 = vrot.lane.b32.xlu0 %v7697, 12
    %v7841 = vpop.permute.xlu0 %7840
    %7842 = vrot.lane.b32.xlu0 %v7704, 12
    %v7843 = vpop.permute.xlu0 %7842
    %7844 = vrot.lane.b32.xlu0 %v7705, 12
    %v7845 = vpop.permute.xlu0 %7844
    %7846 = vrot.lane.b32.xlu0 %v7712, 12
    %v7847 = vpop.permute.xlu0 %7846
    %7848 = vrot.lane.b32.xlu0 %v7713, 12
    %v7849 = vpop.permute.xlu0 %7848
    %7850 = vrot.lane.b32.xlu0 %v7720, 12
    %v7851 = vpop.permute.xlu0 %7850
    %7852 = vrot.lane.b32.xlu0 %v7721, 12
    %v7853 = vpop.permute.xlu0 %7852
    %7854 = vrot.lane.b32.xlu0 %v7728, 12
    %v7855 = vpop.permute.xlu0 %7854
    %7856 = vrot.lane.b32.xlu0 %v7729, 12
    %v7857 = vpop.permute.xlu0 %7856
    %7858 = vrot.lane.b32.xlu0 %v7736, 12
    %v7859 = vpop.permute.xlu0 %7858
    %7860 = vrot.lane.b32.xlu0 %v7737, 12
    %v7861 = vpop.permute.xlu0 %7860
    %7862 = vrot.lane.b32.xlu0 %v7744, 12
    %v7863 = vpop.permute.xlu0 %7862
    %7864 = vrot.lane.b32.xlu0 %v7745, 12
    %v7865 = vpop.permute.xlu0 %7864
    %7866 = vrot.lane.b32.xlu0 %v7752, 12
    %v7867 = vpop.permute.xlu0 %7866
    %7868 = vrot.lane.b32.xlu0 %v7753, 12
    %v7869 = vpop.permute.xlu0 %7868
    %7870 = vrot.lane.b32.xlu0 %v7760, 12
    %v7871 = vpop.permute.xlu0 %7870
    %7872 = vrot.lane.b32.xlu0 %v7761, 12
    %v7873 = vpop.permute.xlu0 %7872
    %7874 = vrot.lane.b32.xlu0 %v7768, 12
    %v7875 = vpop.permute.xlu0 %7874
    %7876 = vrot.lane.b32.xlu0 %v7769, 12
    %v7877 = vpop.permute.xlu0 %7876
    %7878 = vrot.lane.b32.xlu0 %v7776, 12
    %v7879 = vpop.permute.xlu0 %7878
    %7880 = vrot.lane.b32.xlu0 %v7777, 12
    %v7881 = vpop.permute.xlu0 %7880
    %7882 = vrot.lane.b32.xlu0 %v7784, 12
    %v7883 = vpop.permute.xlu0 %7882
    %7884 = vrot.lane.b32.xlu0 %v7785, 12
    %v7885 = vpop.permute.xlu0 %7884
    %7886 = vrot.lane.b32.xlu0 %v7792, 12
    %v7887 = vpop.permute.xlu0 %7886
    %7888 = vrot.lane.b32.xlu0 %v7793, 12
    %v7889 = vpop.permute.xlu0 %7888
    %7890 = vrot.lane.b32.xlu0 %v7800, 12
    %v7891 = vpop.permute.xlu0 %7890
    %7892 = vrot.lane.b32.xlu0 %v7801, 12
    %v7893 = vpop.permute.xlu0 %7892
    %7894 = vrot.lane.b32.xlu0 %v7808, 12
    %v7895 = vpop.permute.xlu0 %7894
    %7896 = vrot.lane.b32.xlu0 %v7809, 12
    %v7897 = vpop.permute.xlu0 %7896
    %7898 = vrot.lane.b32.xlu0 %v7816, 12
    %v7899 = vpop.permute.xlu0 %7898
    %7900 = vrot.lane.b32.xlu0 %v7817, 12
    %v7901 = vpop.permute.xlu0 %7900
    %7902 = vrot.lane.b32.xlu0 %v7824, 12
    %v7903 = vpop.permute.xlu0 %7902
    %7904 = vrot.lane.b32.xlu0 %v7825, 12
    %v7905 = vpop.permute.xlu0 %7904
    %v7966 = vsel %vm7139, %v4229, %v4222
    %v7967 = vsel %vm7141, %v4236, %v7966
    %v7968 = vsel %vm7143, %v4243, %v7967
    %v7969 = vsel %vm7145, %v4250, %v7968
    %v7970 = vsel %vm7147, %v4257, %v7969
    %v7971 = vsel %vm7149, %v4264, %v7970
    %v7972 = vsel %vm7151, %v4271, %v7971
    %v7973 = vsel %vm7139, %v4285, %v4278
    %v7974 = vsel %vm7139, %v4327, %v4320
    %v7975 = vsel %vm7141, %v4334, %v7974
    %v7976 = vsel %vm7143, %v4341, %v7975
    %v7977 = vsel %vm7145, %v4348, %v7976
    %v7978 = vsel %vm7147, %v4355, %v7977
    %v7979 = vsel %vm7149, %v4362, %v7978
    %v7980 = vsel %vm7151, %v4369, %v7979
    %v7981 = vsel %vm7139, %v4383, %v4376
    %v7982 = vsel %vm7139, %v4425, %v4418
    %v7983 = vsel %vm7141, %v4432, %v7982
    %v7984 = vsel %vm7143, %v4439, %v7983
    %v7985 = vsel %vm7145, %v4446, %v7984
    %v7986 = vsel %vm7147, %v4453, %v7985
    %v7987 = vsel %vm7149, %v4460, %v7986
    %v7988 = vsel %vm7151, %v4467, %v7987
    %v7989 = vsel %vm7139, %v4481, %v4474
    %v7990 = vsel %vm7139, %v4523, %v4516
    %v7991 = vsel %vm7141, %v4530, %v7990
    %v7992 = vsel %vm7143, %v4537, %v7991
    %v7993 = vsel %vm7145, %v4544, %v7992
    %v7994 = vsel %vm7147, %v4551, %v7993
    %v7995 = vsel %vm7149, %v4558, %v7994
    %v7996 = vsel %vm7151, %v4565, %v7995
    %v7997 = vsel %vm7139, %v4579, %v4572
    %v7998 = vsel %vm7139, %v4621, %v4614
    %v7999 = vsel %vm7141, %v4628, %v7998
    %v8000 = vsel %vm7143, %v4635, %v7999
    %v8001 = vsel %vm7145, %v4642, %v8000
    %v8002 = vsel %vm7147, %v4649, %v8001
    %v8003 = vsel %vm7149, %v4656, %v8002
    %v8004 = vsel %vm7151, %v4663, %v8003
    %v8005 = vsel %vm7139, %v4677, %v4670
    %v8006 = vsel %vm7139, %v4719, %v4712
    %v8007 = vsel %vm7141, %v4726, %v8006
    %v8008 = vsel %vm7143, %v4733, %v8007
    %v8009 = vsel %vm7145, %v4740, %v8008
    %v8010 = vsel %vm7147, %v4747, %v8009
    %v8011 = vsel %vm7149, %v4754, %v8010
    %v8012 = vsel %vm7151, %v4761, %v8011
    %v8013 = vsel %vm7139, %v4775, %v4768
    %v8014 = vsel %vm7139, %v4817, %v4810
    %v8015 = vsel %vm7141, %v4824, %v8014
    %v8016 = vsel %vm7143, %v4831, %v8015
    %v8017 = vsel %vm7145, %v4838, %v8016
    %v8018 = vsel %vm7147, %v4845, %v8017
    %v8019 = vsel %vm7149, %v4852, %v8018
    %v8020 = vsel %vm7151, %v4859, %v8019
    %v8021 = vsel %vm7139, %v4873, %v4866
    %v8022 = vsel %vm7139, %v4915, %v4908
    %v8023 = vsel %vm7141, %v4922, %v8022
    %v8024 = vsel %vm7143, %v4929, %v8023
    %v8025 = vsel %vm7145, %v4936, %v8024
    %v8026 = vsel %vm7147, %v4943, %v8025
    %v8027 = vsel %vm7149, %v4950, %v8026
    %v8028 = vsel %vm7151, %v4957, %v8027
    %v8029 = vsel %vm7139, %v4971, %v4964
    %v8030 = vsel %vm7139, %v5013, %v5006
    %v8031 = vsel %vm7141, %v5020, %v8030
    %v8032 = vsel %vm7143, %v5027, %v8031
    %v8033 = vsel %vm7145, %v5034, %v8032
    %v8034 = vsel %vm7147, %v5041, %v8033
    %v8035 = vsel %vm7149, %v5048, %v8034
    %v8036 = vsel %vm7151, %v5055, %v8035
    %v8037 = vsel %vm7139, %v5069, %v5062
    %v8038 = vsel %vm7139, %v5111, %v5104
    %v8039 = vsel %vm7141, %v5118, %v8038
    %v8040 = vsel %vm7143, %v5125, %v8039
    %v8041 = vsel %vm7145, %v5132, %v8040
    %v8042 = vsel %vm7147, %v5139, %v8041
    %v8043 = vsel %vm7149, %v5146, %v8042
    %v8044 = vsel %vm7151, %v5153, %v8043
    %v8045 = vsel %vm7139, %v5167, %v5160
    %v8046 = vsel %vm7139, %v5601, %v5594
    %v8047 = vsel %vm7141, %v5608, %v8046
    %v8048 = vsel %vm7143, %v5615, %v8047
    %v8049 = vsel %vm7145, %v5622, %v8048
    %v8050 = vsel %vm7147, %v5629, %v8049
    %v8051 = vsel %vm7149, %v5636, %v8050
    %v8052 = vsel %vm7151, %v5643, %v8051
    %v8053 = vsel %vm7139, %v5657, %v5650
    %v8054 = vsel %vm7139, %v5699, %v5692
    %v8055 = vsel %vm7141, %v5706, %v8054
    %v8056 = vsel %vm7143, %v5713, %v8055
    %v8057 = vsel %vm7145, %v5720, %v8056
    %v8058 = vsel %vm7147, %v5727, %v8057
    %v8059 = vsel %vm7149, %v5734, %v8058
    %v8060 = vsel %vm7151, %v5741, %v8059
    %v8061 = vsel %vm7139, %v5755, %v5748
    %v8062 = vsel %vm7139, %v5797, %v5790
    %v8063 = vsel %vm7141, %v5804, %v8062
    %v8064 = vsel %vm7143, %v5811, %v8063
    %v8065 = vsel %vm7145, %v5818, %v8064
    %v8066 = vsel %vm7147, %v5825, %v8065
    %v8067 = vsel %vm7149, %v5832, %v8066
    %v8068 = vsel %vm7151, %v5839, %v8067
    %v8069 = vsel %vm7139, %v5853, %v5846
    %v8070 = vsel %vm7139, %v5895, %v5888
    %v8071 = vsel %vm7141, %v5902, %v8070
    %v8072 = vsel %vm7143, %v5909, %v8071
    %v8073 = vsel %vm7145, %v5916, %v8072
    %v8074 = vsel %vm7147, %v5923, %v8073
    %v8075 = vsel %vm7149, %v5930, %v8074
    %v8076 = vsel %vm7151, %v5937, %v8075
    %v8077 = vsel %vm7139, %v5951, %v5944
    %v8078 = vsel %vm7139, %v5993, %v5986
    %v8079 = vsel %vm7141, %v6000, %v8078
    %v8080 = vsel %vm7143, %v6007, %v8079
    %v8081 = vsel %vm7145, %v6014, %v8080
    %v8082 = vsel %vm7147, %v6021, %v8081
    %v8083 = vsel %vm7149, %v6028, %v8082
    %v8084 = vsel %vm7151, %v6035, %v8083
    %v8085 = vsel %vm7139, %v6049, %v6042
    %v8086 = vsel %vm7139, %v6091, %v6084
    %v8087 = vsel %vm7141, %v6098, %v8086
    %v8088 = vsel %vm7143, %v6105, %v8087
    %v8089 = vsel %vm7145, %v6112, %v8088
    %v8090 = vsel %vm7147, %v6119, %v8089
    %v8091 = vsel %vm7149, %v6126, %v8090
    %v8092 = vsel %vm7151, %v6133, %v8091
    %v8093 = vsel %vm7139, %v6147, %v6140
    %v8094 = vsel %vm7139, %v6189, %v6182
    %v8095 = vsel %vm7141, %v6196, %v8094
    %v8096 = vsel %vm7143, %v6203, %v8095
    %v8097 = vsel %vm7145, %v6210, %v8096
    %v8098 = vsel %vm7147, %v6217, %v8097
    %v8099 = vsel %vm7149, %v6224, %v8098
    %v8100 = vsel %vm7151, %v6231, %v8099
    %v8101 = vsel %vm7139, %v6245, %v6238
    %v8102 = vsel %vm7139, %v6287, %v6280
    %v8103 = vsel %vm7141, %v6294, %v8102
    %v8104 = vsel %vm7143, %v6301, %v8103
    %v8105 = vsel %vm7145, %v6308, %v8104
    %v8106 = vsel %vm7147, %v6315, %v8105
    %v8107 = vsel %vm7149, %v6322, %v8106
    %v8108 = vsel %vm7151, %v6329, %v8107
    %v8109 = vsel %vm7139, %v6343, %v6336
    %v8110 = vsel %vm7139, %v6385, %v6378
    %v8111 = vsel %vm7141, %v6392, %v8110
    %v8112 = vsel %vm7143, %v6399, %v8111
    %v8113 = vsel %vm7145, %v6406, %v8112
    %v8114 = vsel %vm7147, %v6413, %v8113
    %v8115 = vsel %vm7149, %v6420, %v8114
    %v8116 = vsel %vm7151, %v6427, %v8115
    %v8117 = vsel %vm7139, %v6441, %v6434
    %v8118 = vsel %vm7139, %v6483, %v6476
    %v8119 = vsel %vm7141, %v6490, %v8118
    %v8120 = vsel %vm7143, %v6497, %v8119
    %v8121 = vsel %vm7145, %v6504, %v8120
    %v8122 = vsel %vm7147, %v6511, %v8121
    %v8123 = vsel %vm7149, %v6518, %v8122
    %v8124 = vsel %vm7151, %v6525, %v8123
    %v8125 = vsel %vm7139, %v6539, %v6532
    %8126 = vrot.lane.b32.xlu0 %v7972, 18
    %v8127 = vpop.permute.xlu0 %8126
    %8128 = vrot.lane.b32.xlu0 %v7973, 18
    %v8129 = vpop.permute.xlu0 %8128
    %8130 = vrot.lane.b32.xlu0 %v7980, 18
    %v8131 = vpop.permute.xlu0 %8130
    %8132 = vrot.lane.b32.xlu0 %v7981, 18
    %v8133 = vpop.permute.xlu0 %8132
    %8134 = vrot.lane.b32.xlu0 %v7988, 18
    %v8135 = vpop.permute.xlu0 %8134
    %8136 = vrot.lane.b32.xlu0 %v7989, 18
    %v8137 = vpop.permute.xlu0 %8136
    %8138 = vrot.lane.b32.xlu0 %v7996, 18
    %v8139 = vpop.permute.xlu0 %8138
    %8140 = vrot.lane.b32.xlu0 %v7997, 18
    %v8141 = vpop.permute.xlu0 %8140
    %8142 = vrot.lane.b32.xlu0 %v8004, 18
    %v8143 = vpop.permute.xlu0 %8142
    %8144 = vrot.lane.b32.xlu0 %v8005, 18
    %v8145 = vpop.permute.xlu0 %8144
    %8146 = vrot.lane.b32.xlu0 %v8012, 18
    %v8147 = vpop.permute.xlu0 %8146
    %8148 = vrot.lane.b32.xlu0 %v8013, 18
    %v8149 = vpop.permute.xlu0 %8148
    %8150 = vrot.lane.b32.xlu0 %v8020, 18
    %v8151 = vpop.permute.xlu0 %8150
    %8152 = vrot.lane.b32.xlu0 %v8021, 18
    %v8153 = vpop.permute.xlu0 %8152
    %8154 = vrot.lane.b32.xlu0 %v8028, 18
    %v8155 = vpop.permute.xlu0 %8154
    %8156 = vrot.lane.b32.xlu0 %v8029, 18
    %v8157 = vpop.permute.xlu0 %8156
    %8158 = vrot.lane.b32.xlu0 %v8036, 18
    %v8159 = vpop.permute.xlu0 %8158
    %8160 = vrot.lane.b32.xlu0 %v8037, 18
    %v8161 = vpop.permute.xlu0 %8160
    %8162 = vrot.lane.b32.xlu0 %v8044, 18
    %v8163 = vpop.permute.xlu0 %8162
    %8164 = vrot.lane.b32.xlu0 %v8045, 18
    %v8165 = vpop.permute.xlu0 %8164
    %8166 = vrot.lane.b32.xlu0 %v8052, 18
    %v8167 = vpop.permute.xlu0 %8166
    %8168 = vrot.lane.b32.xlu0 %v8053, 18
    %v8169 = vpop.permute.xlu0 %8168
    %8170 = vrot.lane.b32.xlu0 %v8060, 18
    %v8171 = vpop.permute.xlu0 %8170
    %8172 = vrot.lane.b32.xlu0 %v8061, 18
    %v8173 = vpop.permute.xlu0 %8172
    %8174 = vrot.lane.b32.xlu0 %v8068, 18
    %v8175 = vpop.permute.xlu0 %8174
    %8176 = vrot.lane.b32.xlu0 %v8069, 18
    %v8177 = vpop.permute.xlu0 %8176
    %8178 = vrot.lane.b32.xlu0 %v8076, 18
    %v8179 = vpop.permute.xlu0 %8178
    %8180 = vrot.lane.b32.xlu0 %v8077, 18
    %v8181 = vpop.permute.xlu0 %8180
    %8182 = vrot.lane.b32.xlu0 %v8084, 18
    %v8183 = vpop.permute.xlu0 %8182
    %8184 = vrot.lane.b32.xlu0 %v8085, 18
    %v8185 = vpop.permute.xlu0 %8184
    %8186 = vrot.lane.b32.xlu0 %v8092, 18
    %v8187 = vpop.permute.xlu0 %8186
    %8188 = vrot.lane.b32.xlu0 %v8093, 18
    %v8189 = vpop.permute.xlu0 %8188
    %8190 = vrot.lane.b32.xlu0 %v8100, 18
    %v8191 = vpop.permute.xlu0 %8190
    %8192 = vrot.lane.b32.xlu0 %v8101, 18
    %v8193 = vpop.permute.xlu0 %8192
    %8194 = vrot.lane.b32.xlu0 %v8108, 18
    %v8195 = vpop.permute.xlu0 %8194
    %8196 = vrot.lane.b32.xlu0 %v8109, 18
    %v8197 = vpop.permute.xlu0 %8196
    %8198 = vrot.lane.b32.xlu0 %v8116, 18
    %v8199 = vpop.permute.xlu0 %8198
    %8200 = vrot.lane.b32.xlu0 %v8117, 18
    %v8201 = vpop.permute.xlu0 %8200
    %8202 = vrot.lane.b32.xlu0 %v8124, 18
    %v8203 = vpop.permute.xlu0 %8202
    %8204 = vrot.lane.b32.xlu0 %v8125, 18
    %v8205 = vpop.permute.xlu0 %8204
    %v8266 = vsel %vm7139, %v4236, %v4229
    %v8267 = vsel %vm7141, %v4243, %v8266
    %v8268 = vsel %vm7143, %v4250, %v8267
    %v8269 = vsel %vm7145, %v4257, %v8268
    %v8270 = vsel %vm7147, %v4264, %v8269
    %v8271 = vsel %vm7149, %v4271, %v8270
    %v8272 = vsel %vm7151, %v4278, %v8271
    %v8273 = vsel %vm7139, %v4292, %v4285
    %v8274 = vsel %vm7139, %v4334, %v4327
    %v8275 = vsel %vm7141, %v4341, %v8274
    %v8276 = vsel %vm7143, %v4348, %v8275
    %v8277 = vsel %vm7145, %v4355, %v8276
    %v8278 = vsel %vm7147, %v4362, %v8277
    %v8279 = vsel %vm7149, %v4369, %v8278
    %v8280 = vsel %vm7151, %v4376, %v8279
    %v8281 = vsel %vm7139, %v4390, %v4383
    %v8282 = vsel %vm7139, %v4432, %v4425
    %v8283 = vsel %vm7141, %v4439, %v8282
    %v8284 = vsel %vm7143, %v4446, %v8283
    %v8285 = vsel %vm7145, %v4453, %v8284
    %v8286 = vsel %vm7147, %v4460, %v8285
    %v8287 = vsel %vm7149, %v4467, %v8286
    %v8288 = vsel %vm7151, %v4474, %v8287
    %v8289 = vsel %vm7139, %v4488, %v4481
    %v8290 = vsel %vm7139, %v4530, %v4523
    %v8291 = vsel %vm7141, %v4537, %v8290
    %v8292 = vsel %vm7143, %v4544, %v8291
    %v8293 = vsel %vm7145, %v4551, %v8292
    %v8294 = vsel %vm7147, %v4558, %v8293
    %v8295 = vsel %vm7149, %v4565, %v8294
    %v8296 = vsel %vm7151, %v4572, %v8295
    %v8297 = vsel %vm7139, %v4586, %v4579
    %v8298 = vsel %vm7139, %v4628, %v4621
    %v8299 = vsel %vm7141, %v4635, %v8298
    %v8300 = vsel %vm7143, %v4642, %v8299
    %v8301 = vsel %vm7145, %v4649, %v8300
    %v8302 = vsel %vm7147, %v4656, %v8301
    %v8303 = vsel %vm7149, %v4663, %v8302
    %v8304 = vsel %vm7151, %v4670, %v8303
    %v8305 = vsel %vm7139, %v4684, %v4677
    %v8306 = vsel %vm7139, %v4726, %v4719
    %v8307 = vsel %vm7141, %v4733, %v8306
    %v8308 = vsel %vm7143, %v4740, %v8307
    %v8309 = vsel %vm7145, %v4747, %v8308
    %v8310 = vsel %vm7147, %v4754, %v8309
    %v8311 = vsel %vm7149, %v4761, %v8310
    %v8312 = vsel %vm7151, %v4768, %v8311
    %v8313 = vsel %vm7139, %v4782, %v4775
    %v8314 = vsel %vm7139, %v4824, %v4817
    %v8315 = vsel %vm7141, %v4831, %v8314
    %v8316 = vsel %vm7143, %v4838, %v8315
    %v8317 = vsel %vm7145, %v4845, %v8316
    %v8318 = vsel %vm7147, %v4852, %v8317
    %v8319 = vsel %vm7149, %v4859, %v8318
    %v8320 = vsel %vm7151, %v4866, %v8319
    %v8321 = vsel %vm7139, %v4880, %v4873
    %v8322 = vsel %vm7139, %v4922, %v4915
    %v8323 = vsel %vm7141, %v4929, %v8322
    %v8324 = vsel %vm7143, %v4936, %v8323
    %v8325 = vsel %vm7145, %v4943, %v8324
    %v8326 = vsel %vm7147, %v4950, %v8325
    %v8327 = vsel %vm7149, %v4957, %v8326
    %v8328 = vsel %vm7151, %v4964, %v8327
    %v8329 = vsel %vm7139, %v4978, %v4971
    %v8330 = vsel %vm7139, %v5020, %v5013
    %v8331 = vsel %vm7141, %v5027, %v8330
    %v8332 = vsel %vm7143, %v5034, %v8331
    %v8333 = vsel %vm7145, %v5041, %v8332
    %v8334 = vsel %vm7147, %v5048, %v8333
    %v8335 = vsel %vm7149, %v5055, %v8334
    %v8336 = vsel %vm7151, %v5062, %v8335
    %v8337 = vsel %vm7139, %v5076, %v5069
    %v8338 = vsel %vm7139, %v5118, %v5111
    %v8339 = vsel %vm7141, %v5125, %v8338
    %v8340 = vsel %vm7143, %v5132, %v8339
    %v8341 = vsel %vm7145, %v5139, %v8340
    %v8342 = vsel %vm7147, %v5146, %v8341
    %v8343 = vsel %vm7149, %v5153, %v8342
    %v8344 = vsel %vm7151, %v5160, %v8343
    %v8345 = vsel %vm7139, %v5174, %v5167
    %v8346 = vsel %vm7139, %v5608, %v5601
    %v8347 = vsel %vm7141, %v5615, %v8346
    %v8348 = vsel %vm7143, %v5622, %v8347
    %v8349 = vsel %vm7145, %v5629, %v8348
    %v8350 = vsel %vm7147, %v5636, %v8349
    %v8351 = vsel %vm7149, %v5643, %v8350
    %v8352 = vsel %vm7151, %v5650, %v8351
    %v8353 = vsel %vm7139, %v5664, %v5657
    %v8354 = vsel %vm7139, %v5706, %v5699
    %v8355 = vsel %vm7141, %v5713, %v8354
    %v8356 = vsel %vm7143, %v5720, %v8355
    %v8357 = vsel %vm7145, %v5727, %v8356
    %v8358 = vsel %vm7147, %v5734, %v8357
    %v8359 = vsel %vm7149, %v5741, %v8358
    %v8360 = vsel %vm7151, %v5748, %v8359
    %v8361 = vsel %vm7139, %v5762, %v5755
    %v8362 = vsel %vm7139, %v5804, %v5797
    %v8363 = vsel %vm7141, %v5811, %v8362
    %v8364 = vsel %vm7143, %v5818, %v8363
    %v8365 = vsel %vm7145, %v5825, %v8364
    %v8366 = vsel %vm7147, %v5832, %v8365
    %v8367 = vsel %vm7149, %v5839, %v8366
    %v8368 = vsel %vm7151, %v5846, %v8367
    %v8369 = vsel %vm7139, %v5860, %v5853
    %v8370 = vsel %vm7139, %v5902, %v5895
    %v8371 = vsel %vm7141, %v5909, %v8370
    %v8372 = vsel %vm7143, %v5916, %v8371
    %v8373 = vsel %vm7145, %v5923, %v8372
    %v8374 = vsel %vm7147, %v5930, %v8373
    %v8375 = vsel %vm7149, %v5937, %v8374
    %v8376 = vsel %vm7151, %v5944, %v8375
    %v8377 = vsel %vm7139, %v5958, %v5951
    %v8378 = vsel %vm7139, %v6000, %v5993
    %v8379 = vsel %vm7141, %v6007, %v8378
    %v8380 = vsel %vm7143, %v6014, %v8379
    %v8381 = vsel %vm7145, %v6021, %v8380
    %v8382 = vsel %vm7147, %v6028, %v8381
    %v8383 = vsel %vm7149, %v6035, %v8382
    %v8384 = vsel %vm7151, %v6042, %v8383
    %v8385 = vsel %vm7139, %v6056, %v6049
    %v8386 = vsel %vm7139, %v6098, %v6091
    %v8387 = vsel %vm7141, %v6105, %v8386
    %v8388 = vsel %vm7143, %v6112, %v8387
    %v8389 = vsel %vm7145, %v6119, %v8388
    %v8390 = vsel %vm7147, %v6126, %v8389
    %v8391 = vsel %vm7149, %v6133, %v8390
    %v8392 = vsel %vm7151, %v6140, %v8391
    %v8393 = vsel %vm7139, %v6154, %v6147
    %v8394 = vsel %vm7139, %v6196, %v6189
    %v8395 = vsel %vm7141, %v6203, %v8394
    %v8396 = vsel %vm7143, %v6210, %v8395
    %v8397 = vsel %vm7145, %v6217, %v8396
    %v8398 = vsel %vm7147, %v6224, %v8397
    %v8399 = vsel %vm7149, %v6231, %v8398
    %v8400 = vsel %vm7151, %v6238, %v8399
    %v8401 = vsel %vm7139, %v6252, %v6245
    %v8402 = vsel %vm7139, %v6294, %v6287
    %v8403 = vsel %vm7141, %v6301, %v8402
    %v8404 = vsel %vm7143, %v6308, %v8403
    %v8405 = vsel %vm7145, %v6315, %v8404
    %v8406 = vsel %vm7147, %v6322, %v8405
    %v8407 = vsel %vm7149, %v6329, %v8406
    %v8408 = vsel %vm7151, %v6336, %v8407
    %v8409 = vsel %vm7139, %v6350, %v6343
    %v8410 = vsel %vm7139, %v6392, %v6385
    %v8411 = vsel %vm7141, %v6399, %v8410
    %v8412 = vsel %vm7143, %v6406, %v8411
    %v8413 = vsel %vm7145, %v6413, %v8412
    %v8414 = vsel %vm7147, %v6420, %v8413
    %v8415 = vsel %vm7149, %v6427, %v8414
    %v8416 = vsel %vm7151, %v6434, %v8415
    %v8417 = vsel %vm7139, %v6448, %v6441
    %v8418 = vsel %vm7139, %v6490, %v6483
    %v8419 = vsel %vm7141, %v6497, %v8418
    %v8420 = vsel %vm7143, %v6504, %v8419
    %v8421 = vsel %vm7145, %v6511, %v8420
    %v8422 = vsel %vm7147, %v6518, %v8421
    %v8423 = vsel %vm7149, %v6525, %v8422
    %v8424 = vsel %vm7151, %v6532, %v8423
    %v8425 = vsel %vm7139, %v6546, %v6539
    %8426 = vrot.lane.b32.xlu0 %v8272, 24
    %v8427 = vpop.permute.xlu0 %8426
    %8428 = vrot.lane.b32.xlu0 %v8273, 24
    %v8429 = vpop.permute.xlu0 %8428
    %8430 = vrot.lane.b32.xlu0 %v8280, 24
    %v8431 = vpop.permute.xlu0 %8430
    %8432 = vrot.lane.b32.xlu0 %v8281, 24
    %v8433 = vpop.permute.xlu0 %8432
    %8434 = vrot.lane.b32.xlu0 %v8288, 24
    %v8435 = vpop.permute.xlu0 %8434
    %8436 = vrot.lane.b32.xlu0 %v8289, 24
    %v8437 = vpop.permute.xlu0 %8436
    %8438 = vrot.lane.b32.xlu0 %v8296, 24
    %v8439 = vpop.permute.xlu0 %8438
    %8440 = vrot.lane.b32.xlu0 %v8297, 24
    %v8441 = vpop.permute.xlu0 %8440
    %8442 = vrot.lane.b32.xlu0 %v8304, 24
    %v8443 = vpop.permute.xlu0 %8442
    %8444 = vrot.lane.b32.xlu0 %v8305, 24
    %v8445 = vpop.permute.xlu0 %8444
    %8446 = vrot.lane.b32.xlu0 %v8312, 24
    %v8447 = vpop.permute.xlu0 %8446
    %8448 = vrot.lane.b32.xlu0 %v8313, 24
    %v8449 = vpop.permute.xlu0 %8448
    %8450 = vrot.lane.b32.xlu0 %v8320, 24
    %v8451 = vpop.permute.xlu0 %8450
    %8452 = vrot.lane.b32.xlu0 %v8321, 24
    %v8453 = vpop.permute.xlu0 %8452
    %8454 = vrot.lane.b32.xlu0 %v8328, 24
    %v8455 = vpop.permute.xlu0 %8454
    %8456 = vrot.lane.b32.xlu0 %v8329, 24
    %v8457 = vpop.permute.xlu0 %8456
    %8458 = vrot.lane.b32.xlu0 %v8336, 24
    %v8459 = vpop.permute.xlu0 %8458
    %8460 = vrot.lane.b32.xlu0 %v8337, 24
    %v8461 = vpop.permute.xlu0 %8460
    %8462 = vrot.lane.b32.xlu0 %v8344, 24
    %v8463 = vpop.permute.xlu0 %8462
    %8464 = vrot.lane.b32.xlu0 %v8345, 24
    %v8465 = vpop.permute.xlu0 %8464
    %8466 = vrot.lane.b32.xlu0 %v8352, 24
    %v8467 = vpop.permute.xlu0 %8466
    %8468 = vrot.lane.b32.xlu0 %v8353, 24
    %v8469 = vpop.permute.xlu0 %8468
    %8470 = vrot.lane.b32.xlu0 %v8360, 24
    %v8471 = vpop.permute.xlu0 %8470
    %8472 = vrot.lane.b32.xlu0 %v8361, 24
    %v8473 = vpop.permute.xlu0 %8472
    %8474 = vrot.lane.b32.xlu0 %v8368, 24
    %v8475 = vpop.permute.xlu0 %8474
    %8476 = vrot.lane.b32.xlu0 %v8369, 24
    %v8477 = vpop.permute.xlu0 %8476
    %8478 = vrot.lane.b32.xlu0 %v8376, 24
    %v8479 = vpop.permute.xlu0 %8478
    %8480 = vrot.lane.b32.xlu0 %v8377, 24
    %v8481 = vpop.permute.xlu0 %8480
    %8482 = vrot.lane.b32.xlu0 %v8384, 24
    %v8483 = vpop.permute.xlu0 %8482
    %8484 = vrot.lane.b32.xlu0 %v8385, 24
    %v8485 = vpop.permute.xlu0 %8484
    %8486 = vrot.lane.b32.xlu0 %v8392, 24
    %v8487 = vpop.permute.xlu0 %8486
    %8488 = vrot.lane.b32.xlu0 %v8393, 24
    %v8489 = vpop.permute.xlu0 %8488
    %8490 = vrot.lane.b32.xlu0 %v8400, 24
    %v8491 = vpop.permute.xlu0 %8490
    %8492 = vrot.lane.b32.xlu0 %v8401, 24
    %v8493 = vpop.permute.xlu0 %8492
    %8494 = vrot.lane.b32.xlu0 %v8408, 24
    %v8495 = vpop.permute.xlu0 %8494
    %8496 = vrot.lane.b32.xlu0 %v8409, 24
    %v8497 = vpop.permute.xlu0 %8496
    %8498 = vrot.lane.b32.xlu0 %v8416, 24
    %v8499 = vpop.permute.xlu0 %8498
    %8500 = vrot.lane.b32.xlu0 %v8417, 24
    %v8501 = vpop.permute.xlu0 %8500
    %8502 = vrot.lane.b32.xlu0 %v8424, 24
    %v8503 = vpop.permute.xlu0 %8502
    %8504 = vrot.lane.b32.xlu0 %v8425, 24
    %v8505 = vpop.permute.xlu0 %8504
    %v8566 = vsel %vm7139, %v5188, %v5181
    %v8567 = vsel %vm7141, %v5195, %v8566
    %v8568 = vsel %vm7143, %v5202, %v8567
    %v8569 = vsel %vm7145, %v5209, %v8568
    %v8570 = vsel %vm7147, %v5216, %v8569
    %v8571 = vsel %vm7149, %v5223, %v8570
    %v8572 = vsel %vm7151, %v5230, %v8571
    %v8573 = vsel %vm7139, %v5244, %v5237
    %v8574 = vsel %vm7139, %v6560, %v6553
    %v8575 = vsel %vm7141, %v6567, %v8574
    %v8576 = vsel %vm7143, %v6574, %v8575
    %v8577 = vsel %vm7145, %v6581, %v8576
    %v8578 = vsel %vm7147, %v6588, %v8577
    %v8579 = vsel %vm7149, %v6595, %v8578
    %v8580 = vsel %vm7151, %v6602, %v8579
    %v8581 = vsel %vm7139, %v6616, %v6609
    %8582 = vrot.lane.b32.xlu0 %v7160, 30
    %v8583 = vpop.permute.xlu0 %8582
    %8584 = vrot.lane.b32.xlu0 %v7161, 30
    %v8585 = vpop.permute.xlu0 %8584
    %8586 = vrot.lane.b32.xlu0 %v7168, 30
    %v8587 = vpop.permute.xlu0 %8586
    %8588 = vrot.lane.b32.xlu0 %v7169, 30
    %v8589 = vpop.permute.xlu0 %8588
    %8590 = vrot.lane.b32.xlu0 %v7176, 30
    %v8591 = vpop.permute.xlu0 %8590
    %8592 = vrot.lane.b32.xlu0 %v7177, 30
    %v8593 = vpop.permute.xlu0 %8592
    %8594 = vrot.lane.b32.xlu0 %v7184, 30
    %v8595 = vpop.permute.xlu0 %8594
    %8596 = vrot.lane.b32.xlu0 %v7185, 30
    %v8597 = vpop.permute.xlu0 %8596
    %8598 = vrot.lane.b32.xlu0 %v7192, 30
    %v8599 = vpop.permute.xlu0 %8598
    %8600 = vrot.lane.b32.xlu0 %v7193, 30
    %v8601 = vpop.permute.xlu0 %8600
    %8602 = vrot.lane.b32.xlu0 %v7200, 30
    %v8603 = vpop.permute.xlu0 %8602
    %8604 = vrot.lane.b32.xlu0 %v7201, 30
    %v8605 = vpop.permute.xlu0 %8604
    %8606 = vrot.lane.b32.xlu0 %v7208, 30
    %v8607 = vpop.permute.xlu0 %8606
    %8608 = vrot.lane.b32.xlu0 %v7209, 30
    %v8609 = vpop.permute.xlu0 %8608
    %8610 = vrot.lane.b32.xlu0 %v7216, 30
    %v8611 = vpop.permute.xlu0 %8610
    %8612 = vrot.lane.b32.xlu0 %v7217, 30
    %v8613 = vpop.permute.xlu0 %8612
    %8614 = vrot.lane.b32.xlu0 %v7224, 30
    %v8615 = vpop.permute.xlu0 %8614
    %8616 = vrot.lane.b32.xlu0 %v7225, 30
    %v8617 = vpop.permute.xlu0 %8616
    %8618 = vrot.lane.b32.xlu0 %v8572, 30
    %v8619 = vpop.permute.xlu0 %8618
    %8620 = vrot.lane.b32.xlu0 %v8573, 30
    %v8621 = vpop.permute.xlu0 %8620
    %8622 = vrot.lane.b32.xlu0 %v7240, 30
    %v8623 = vpop.permute.xlu0 %8622
    %8624 = vrot.lane.b32.xlu0 %v7241, 30
    %v8625 = vpop.permute.xlu0 %8624
    %8626 = vrot.lane.b32.xlu0 %v7248, 30
    %v8627 = vpop.permute.xlu0 %8626
    %8628 = vrot.lane.b32.xlu0 %v7249, 30
    %v8629 = vpop.permute.xlu0 %8628
    %8630 = vrot.lane.b32.xlu0 %v7256, 30
    %v8631 = vpop.permute.xlu0 %8630
    %8632 = vrot.lane.b32.xlu0 %v7257, 30
    %v8633 = vpop.permute.xlu0 %8632
    %8634 = vrot.lane.b32.xlu0 %v7264, 30
    %v8635 = vpop.permute.xlu0 %8634
    %8636 = vrot.lane.b32.xlu0 %v7265, 30
    %v8637 = vpop.permute.xlu0 %8636
    %8638 = vrot.lane.b32.xlu0 %v7272, 30
    %v8639 = vpop.permute.xlu0 %8638
    %8640 = vrot.lane.b32.xlu0 %v7273, 30
    %v8641 = vpop.permute.xlu0 %8640
    %8642 = vrot.lane.b32.xlu0 %v7280, 30
    %v8643 = vpop.permute.xlu0 %8642
    %8644 = vrot.lane.b32.xlu0 %v7281, 30
    %v8645 = vpop.permute.xlu0 %8644
    %8646 = vrot.lane.b32.xlu0 %v7288, 30
    %v8647 = vpop.permute.xlu0 %8646
    %8648 = vrot.lane.b32.xlu0 %v7289, 30
    %v8649 = vpop.permute.xlu0 %8648
    %8650 = vrot.lane.b32.xlu0 %v7296, 30
    %v8651 = vpop.permute.xlu0 %8650
    %8652 = vrot.lane.b32.xlu0 %v7297, 30
    %v8653 = vpop.permute.xlu0 %8652
    %8654 = vrot.lane.b32.xlu0 %v7304, 30
    %v8655 = vpop.permute.xlu0 %8654
    %8656 = vrot.lane.b32.xlu0 %v7305, 30
    %v8657 = vpop.permute.xlu0 %8656
    %8658 = vrot.lane.b32.xlu0 %v8580, 30
    %v8659 = vpop.permute.xlu0 %8658
    %8660 = vrot.lane.b32.xlu0 %v8581, 30
    %v8661 = vpop.permute.xlu0 %8660
    %v8704 = vsel %vm7139, %v5195, %v5188
    %v8705 = vsel %vm7141, %v5202, %v8704
    %v8706 = vsel %vm7143, %v5209, %v8705
    %v8707 = vsel %vm7145, %v5216, %v8706
    %v8708 = vsel %vm7147, %v5223, %v8707
    %v8709 = vsel %vm7149, %v5230, %v8708
    %v8710 = vsel %vm7151, %v5237, %v8709
    %v8711 = vsel %vm7139, %v5251, %v5244
    %v8712 = vsel %vm7139, %v6567, %v6560
    %v8713 = vsel %vm7141, %v6574, %v8712
    %v8714 = vsel %vm7143, %v6581, %v8713
    %v8715 = vsel %vm7145, %v6588, %v8714
    %v8716 = vsel %vm7147, %v6595, %v8715
    %v8717 = vsel %vm7149, %v6602, %v8716
    %v8718 = vsel %vm7151, %v6609, %v8717
    %v8719 = vsel %vm7139, %v6623, %v6616
    %8720 = vrot.lane.b32.xlu0 %v7380, 36
    %v8721 = vpop.permute.xlu0 %8720
    %8722 = vrot.lane.b32.xlu0 %v7381, 36
    %v8723 = vpop.permute.xlu0 %8722
    %8724 = vrot.lane.b32.xlu0 %v7388, 36
    %v8725 = vpop.permute.xlu0 %8724
    %8726 = vrot.lane.b32.xlu0 %v7389, 36
    %v8727 = vpop.permute.xlu0 %8726
    %8728 = vrot.lane.b32.xlu0 %v7396, 36
    %v8729 = vpop.permute.xlu0 %8728
    %8730 = vrot.lane.b32.xlu0 %v7397, 36
    %v8731 = vpop.permute.xlu0 %8730
    %8732 = vrot.lane.b32.xlu0 %v7404, 36
    %v8733 = vpop.permute.xlu0 %8732
    %8734 = vrot.lane.b32.xlu0 %v7405, 36
    %v8735 = vpop.permute.xlu0 %8734
    %8736 = vrot.lane.b32.xlu0 %v7412, 36
    %v8737 = vpop.permute.xlu0 %8736
    %8738 = vrot.lane.b32.xlu0 %v7413, 36
    %v8739 = vpop.permute.xlu0 %8738
    %8740 = vrot.lane.b32.xlu0 %v7420, 36
    %v8741 = vpop.permute.xlu0 %8740
    %8742 = vrot.lane.b32.xlu0 %v7421, 36
    %v8743 = vpop.permute.xlu0 %8742
    %8744 = vrot.lane.b32.xlu0 %v7428, 36
    %v8745 = vpop.permute.xlu0 %8744
    %8746 = vrot.lane.b32.xlu0 %v7429, 36
    %v8747 = vpop.permute.xlu0 %8746
    %8748 = vrot.lane.b32.xlu0 %v7436, 36
    %v8749 = vpop.permute.xlu0 %8748
    %8750 = vrot.lane.b32.xlu0 %v7437, 36
    %v8751 = vpop.permute.xlu0 %8750
    %8752 = vrot.lane.b32.xlu0 %v7444, 36
    %v8753 = vpop.permute.xlu0 %8752
    %8754 = vrot.lane.b32.xlu0 %v7445, 36
    %v8755 = vpop.permute.xlu0 %8754
    %8756 = vrot.lane.b32.xlu0 %v8710, 36
    %v8757 = vpop.permute.xlu0 %8756
    %8758 = vrot.lane.b32.xlu0 %v8711, 36
    %v8759 = vpop.permute.xlu0 %8758
    %8760 = vrot.lane.b32.xlu0 %v7460, 36
    %v8761 = vpop.permute.xlu0 %8760
    %8762 = vrot.lane.b32.xlu0 %v7461, 36
    %v8763 = vpop.permute.xlu0 %8762
    %8764 = vrot.lane.b32.xlu0 %v7468, 36
    %v8765 = vpop.permute.xlu0 %8764
    %8766 = vrot.lane.b32.xlu0 %v7469, 36
    %v8767 = vpop.permute.xlu0 %8766
    %8768 = vrot.lane.b32.xlu0 %v7476, 36
    %v8769 = vpop.permute.xlu0 %8768
    %8770 = vrot.lane.b32.xlu0 %v7477, 36
    %v8771 = vpop.permute.xlu0 %8770
    %8772 = vrot.lane.b32.xlu0 %v7484, 36
    %v8773 = vpop.permute.xlu0 %8772
    %8774 = vrot.lane.b32.xlu0 %v7485, 36
    %v8775 = vpop.permute.xlu0 %8774
    %8776 = vrot.lane.b32.xlu0 %v7492, 36
    %v8777 = vpop.permute.xlu0 %8776
    %8778 = vrot.lane.b32.xlu0 %v7493, 36
    %v8779 = vpop.permute.xlu0 %8778
    %8780 = vrot.lane.b32.xlu0 %v7500, 36
    %v8781 = vpop.permute.xlu0 %8780
    %8782 = vrot.lane.b32.xlu0 %v7501, 36
    %v8783 = vpop.permute.xlu0 %8782
    %8784 = vrot.lane.b32.xlu0 %v7508, 36
    %v8785 = vpop.permute.xlu0 %8784
    %8786 = vrot.lane.b32.xlu0 %v7509, 36
    %v8787 = vpop.permute.xlu0 %8786
    %8788 = vrot.lane.b32.xlu0 %v7516, 36
    %v8789 = vpop.permute.xlu0 %8788
    %8790 = vrot.lane.b32.xlu0 %v7517, 36
    %v8791 = vpop.permute.xlu0 %8790
    %8792 = vrot.lane.b32.xlu0 %v7524, 36
    %v8793 = vpop.permute.xlu0 %8792
    %8794 = vrot.lane.b32.xlu0 %v7525, 36
    %v8795 = vpop.permute.xlu0 %8794
    %8796 = vrot.lane.b32.xlu0 %v8718, 36
    %v8797 = vpop.permute.xlu0 %8796
    %8798 = vrot.lane.b32.xlu0 %v8719, 36
    %v8799 = vpop.permute.xlu0 %8798
    %v8842 = vsel %vm7139, %v5202, %v5195
    %v8843 = vsel %vm7141, %v5209, %v8842
    %v8844 = vsel %vm7143, %v5216, %v8843
    %v8845 = vsel %vm7145, %v5223, %v8844
    %v8846 = vsel %vm7147, %v5230, %v8845
    %v8847 = vsel %vm7149, %v5237, %v8846
    %v8848 = vsel %vm7151, %v5244, %v8847
    %v8849 = vsel %vm7139, %v5258, %v5251
    %v8850 = vsel %vm7139, %v6574, %v6567
    %v8851 = vsel %vm7141, %v6581, %v8850
    %v8852 = vsel %vm7143, %v6588, %v8851
    %v8853 = vsel %vm7145, %v6595, %v8852
    %v8854 = vsel %vm7147, %v6602, %v8853
    %v8855 = vsel %vm7149, %v6609, %v8854
    %v8856 = vsel %vm7151, %v6616, %v8855
    %v8857 = vsel %vm7139, %v6630, %v6623
    %8858 = vrot.lane.b32.xlu0 %v7680, 42
    %v8859 = vpop.permute.xlu0 %8858
    %8860 = vrot.lane.b32.xlu0 %v7681, 42
    %v8861 = vpop.permute.xlu0 %8860
    %8862 = vrot.lane.b32.xlu0 %v7688, 42
    %v8863 = vpop.permute.xlu0 %8862
    %8864 = vrot.lane.b32.xlu0 %v7689, 42
    %v8865 = vpop.permute.xlu0 %8864
    %8866 = vrot.lane.b32.xlu0 %v7696, 42
    %v8867 = vpop.permute.xlu0 %8866
    %8868 = vrot.lane.b32.xlu0 %v7697, 42
    %v8869 = vpop.permute.xlu0 %8868
    %8870 = vrot.lane.b32.xlu0 %v7704, 42
    %v8871 = vpop.permute.xlu0 %8870
    %8872 = vrot.lane.b32.xlu0 %v7705, 42
    %v8873 = vpop.permute.xlu0 %8872
    %8874 = vrot.lane.b32.xlu0 %v7712, 42
    %v8875 = vpop.permute.xlu0 %8874
    %8876 = vrot.lane.b32.xlu0 %v7713, 42
    %v8877 = vpop.permute.xlu0 %8876
    %8878 = vrot.lane.b32.xlu0 %v7720, 42
    %v8879 = vpop.permute.xlu0 %8878
    %8880 = vrot.lane.b32.xlu0 %v7721, 42
    %v8881 = vpop.permute.xlu0 %8880
    %8882 = vrot.lane.b32.xlu0 %v7728, 42
    %v8883 = vpop.permute.xlu0 %8882
    %8884 = vrot.lane.b32.xlu0 %v7729, 42
    %v8885 = vpop.permute.xlu0 %8884
    %8886 = vrot.lane.b32.xlu0 %v7736, 42
    %v8887 = vpop.permute.xlu0 %8886
    %8888 = vrot.lane.b32.xlu0 %v7737, 42
    %v8889 = vpop.permute.xlu0 %8888
    %8890 = vrot.lane.b32.xlu0 %v7744, 42
    %v8891 = vpop.permute.xlu0 %8890
    %8892 = vrot.lane.b32.xlu0 %v7745, 42
    %v8893 = vpop.permute.xlu0 %8892
    %8894 = vrot.lane.b32.xlu0 %v8848, 42
    %v8895 = vpop.permute.xlu0 %8894
    %8896 = vrot.lane.b32.xlu0 %v8849, 42
    %v8897 = vpop.permute.xlu0 %8896
    %8898 = vrot.lane.b32.xlu0 %v7760, 42
    %v8899 = vpop.permute.xlu0 %8898
    %8900 = vrot.lane.b32.xlu0 %v7761, 42
    %v8901 = vpop.permute.xlu0 %8900
    %8902 = vrot.lane.b32.xlu0 %v7768, 42
    %v8903 = vpop.permute.xlu0 %8902
    %8904 = vrot.lane.b32.xlu0 %v7769, 42
    %v8905 = vpop.permute.xlu0 %8904
    %8906 = vrot.lane.b32.xlu0 %v7776, 42
    %v8907 = vpop.permute.xlu0 %8906
    %8908 = vrot.lane.b32.xlu0 %v7777, 42
    %v8909 = vpop.permute.xlu0 %8908
    %8910 = vrot.lane.b32.xlu0 %v7784, 42
    %v8911 = vpop.permute.xlu0 %8910
    %8912 = vrot.lane.b32.xlu0 %v7785, 42
    %v8913 = vpop.permute.xlu0 %8912
    %8914 = vrot.lane.b32.xlu0 %v7792, 42
    %v8915 = vpop.permute.xlu0 %8914
    %8916 = vrot.lane.b32.xlu0 %v7793, 42
    %v8917 = vpop.permute.xlu0 %8916
    %8918 = vrot.lane.b32.xlu0 %v7800, 42
    %v8919 = vpop.permute.xlu0 %8918
    %8920 = vrot.lane.b32.xlu0 %v7801, 42
    %v8921 = vpop.permute.xlu0 %8920
    %8922 = vrot.lane.b32.xlu0 %v7808, 42
    %v8923 = vpop.permute.xlu0 %8922
    %8924 = vrot.lane.b32.xlu0 %v7809, 42
    %v8925 = vpop.permute.xlu0 %8924
    %8926 = vrot.lane.b32.xlu0 %v7816, 42
    %v8927 = vpop.permute.xlu0 %8926
    %8928 = vrot.lane.b32.xlu0 %v7817, 42
    %v8929 = vpop.permute.xlu0 %8928
    %8930 = vrot.lane.b32.xlu0 %v7824, 42
    %v8931 = vpop.permute.xlu0 %8930
    %8932 = vrot.lane.b32.xlu0 %v7825, 42
    %v8933 = vpop.permute.xlu0 %8932
    %8934 = vrot.lane.b32.xlu0 %v8856, 42
    %v8935 = vpop.permute.xlu0 %8934
    %8936 = vrot.lane.b32.xlu0 %v8857, 42
    %v8937 = vpop.permute.xlu0 %8936
    %v8980 = vsel %vm7139, %v5209, %v5202
    %v8981 = vsel %vm7141, %v5216, %v8980
    %v8982 = vsel %vm7143, %v5223, %v8981
    %v8983 = vsel %vm7145, %v5230, %v8982
    %v8984 = vsel %vm7147, %v5237, %v8983
    %v8985 = vsel %vm7149, %v5244, %v8984
    %v8986 = vsel %vm7151, %v5251, %v8985
    %v8987 = vsel %vm7139, %v5265, %v5258
    %v8988 = vsel %vm7139, %v6581, %v6574
    %v8989 = vsel %vm7141, %v6588, %v8988
    %v8990 = vsel %vm7143, %v6595, %v8989
    %v8991 = vsel %vm7145, %v6602, %v8990
    %v8992 = vsel %vm7147, %v6609, %v8991
    %v8993 = vsel %vm7149, %v6616, %v8992
    %v8994 = vsel %vm7151, %v6623, %v8993
    %v8995 = vsel %vm7139, %v6637, %v6630
    %8996 = vrot.lane.b32.xlu0 %v7980, 48
    %v8997 = vpop.permute.xlu0 %8996
    %8998 = vrot.lane.b32.xlu0 %v7981, 48
    %v8999 = vpop.permute.xlu0 %8998
    %9000 = vrot.lane.b32.xlu0 %v7988, 48
    %v9001 = vpop.permute.xlu0 %9000
    %9002 = vrot.lane.b32.xlu0 %v7989, 48
    %v9003 = vpop.permute.xlu0 %9002
    %9004 = vrot.lane.b32.xlu0 %v7996, 48
    %v9005 = vpop.permute.xlu0 %9004
    %9006 = vrot.lane.b32.xlu0 %v7997, 48
    %v9007 = vpop.permute.xlu0 %9006
    %9008 = vrot.lane.b32.xlu0 %v8004, 48
    %v9009 = vpop.permute.xlu0 %9008
    %9010 = vrot.lane.b32.xlu0 %v8005, 48
    %v9011 = vpop.permute.xlu0 %9010
    %9012 = vrot.lane.b32.xlu0 %v8012, 48
    %v9013 = vpop.permute.xlu0 %9012
    %9014 = vrot.lane.b32.xlu0 %v8013, 48
    %v9015 = vpop.permute.xlu0 %9014
    %9016 = vrot.lane.b32.xlu0 %v8020, 48
    %v9017 = vpop.permute.xlu0 %9016
    %9018 = vrot.lane.b32.xlu0 %v8021, 48
    %v9019 = vpop.permute.xlu0 %9018
    %9020 = vrot.lane.b32.xlu0 %v8028, 48
    %v9021 = vpop.permute.xlu0 %9020
    %9022 = vrot.lane.b32.xlu0 %v8029, 48
    %v9023 = vpop.permute.xlu0 %9022
    %9024 = vrot.lane.b32.xlu0 %v8036, 48
    %v9025 = vpop.permute.xlu0 %9024
    %9026 = vrot.lane.b32.xlu0 %v8037, 48
    %v9027 = vpop.permute.xlu0 %9026
    %9028 = vrot.lane.b32.xlu0 %v8044, 48
    %v9029 = vpop.permute.xlu0 %9028
    %9030 = vrot.lane.b32.xlu0 %v8045, 48
    %v9031 = vpop.permute.xlu0 %9030
    %9032 = vrot.lane.b32.xlu0 %v8986, 48
    %v9033 = vpop.permute.xlu0 %9032
    %9034 = vrot.lane.b32.xlu0 %v8987, 48
    %v9035 = vpop.permute.xlu0 %9034
    %9036 = vrot.lane.b32.xlu0 %v8060, 48
    %v9037 = vpop.permute.xlu0 %9036
    %9038 = vrot.lane.b32.xlu0 %v8061, 48
    %v9039 = vpop.permute.xlu0 %9038
    %9040 = vrot.lane.b32.xlu0 %v8068, 48
    %v9041 = vpop.permute.xlu0 %9040
    %9042 = vrot.lane.b32.xlu0 %v8069, 48
    %v9043 = vpop.permute.xlu0 %9042
    %9044 = vrot.lane.b32.xlu0 %v8076, 48
    %v9045 = vpop.permute.xlu0 %9044
    %9046 = vrot.lane.b32.xlu0 %v8077, 48
    %v9047 = vpop.permute.xlu0 %9046
    %9048 = vrot.lane.b32.xlu0 %v8084, 48
    %v9049 = vpop.permute.xlu0 %9048
    %9050 = vrot.lane.b32.xlu0 %v8085, 48
    %v9051 = vpop.permute.xlu0 %9050
    %9052 = vrot.lane.b32.xlu0 %v8092, 48
    %v9053 = vpop.permute.xlu0 %9052
    %9054 = vrot.lane.b32.xlu0 %v8093, 48
    %v9055 = vpop.permute.xlu0 %9054
    %9056 = vrot.lane.b32.xlu0 %v8100, 48
    %v9057 = vpop.permute.xlu0 %9056
    %9058 = vrot.lane.b32.xlu0 %v8101, 48
    %v9059 = vpop.permute.xlu0 %9058
    %9060 = vrot.lane.b32.xlu0 %v8108, 48
    %v9061 = vpop.permute.xlu0 %9060
    %9062 = vrot.lane.b32.xlu0 %v8109, 48
    %v9063 = vpop.permute.xlu0 %9062
    %9064 = vrot.lane.b32.xlu0 %v8116, 48
    %v9065 = vpop.permute.xlu0 %9064
    %9066 = vrot.lane.b32.xlu0 %v8117, 48
    %v9067 = vpop.permute.xlu0 %9066
    %9068 = vrot.lane.b32.xlu0 %v8124, 48
    %v9069 = vpop.permute.xlu0 %9068
    %9070 = vrot.lane.b32.xlu0 %v8125, 48
    %v9071 = vpop.permute.xlu0 %9070
    %9072 = vrot.lane.b32.xlu0 %v8994, 48
    %v9073 = vpop.permute.xlu0 %9072
    %9074 = vrot.lane.b32.xlu0 %v8995, 48
    %v9075 = vpop.permute.xlu0 %9074
    %v9118 = vsel %vm7139, %v5216, %v5209
    %v9119 = vsel %vm7141, %v5223, %v9118
    %v9120 = vsel %vm7143, %v5230, %v9119
    %v9121 = vsel %vm7145, %v5237, %v9120
    %v9122 = vsel %vm7147, %v5244, %v9121
    %v9123 = vsel %vm7149, %v5251, %v9122
    %v9124 = vsel %vm7151, %v5258, %v9123
    %v9125 = vsel %vm7139, %v5272, %v5265
    %v9126 = vsel %vm7139, %v6588, %v6581
    %v9127 = vsel %vm7141, %v6595, %v9126
    %v9128 = vsel %vm7143, %v6602, %v9127
    %v9129 = vsel %vm7145, %v6609, %v9128
    %v9130 = vsel %vm7147, %v6616, %v9129
    %v9131 = vsel %vm7149, %v6623, %v9130
    %v9132 = vsel %vm7151, %v6630, %v9131
    %v9133 = vsel %vm7139, %v6644, %v6637
    %9134 = vrot.lane.b32.xlu0 %v8280, 54
    %v9135 = vpop.permute.xlu0 %9134
    %9136 = vrot.lane.b32.xlu0 %v8281, 54
    %v9137 = vpop.permute.xlu0 %9136
    %9138 = vrot.lane.b32.xlu0 %v8288, 54
    %v9139 = vpop.permute.xlu0 %9138
    %9140 = vrot.lane.b32.xlu0 %v8289, 54
    %v9141 = vpop.permute.xlu0 %9140
    %9142 = vrot.lane.b32.xlu0 %v8296, 54
    %v9143 = vpop.permute.xlu0 %9142
    %9144 = vrot.lane.b32.xlu0 %v8297, 54
    %v9145 = vpop.permute.xlu0 %9144
    %9146 = vrot.lane.b32.xlu0 %v8304, 54
    %v9147 = vpop.permute.xlu0 %9146
    %9148 = vrot.lane.b32.xlu0 %v8305, 54
    %v9149 = vpop.permute.xlu0 %9148
    %9150 = vrot.lane.b32.xlu0 %v8312, 54
    %v9151 = vpop.permute.xlu0 %9150
    %9152 = vrot.lane.b32.xlu0 %v8313, 54
    %v9153 = vpop.permute.xlu0 %9152
    %9154 = vrot.lane.b32.xlu0 %v8320, 54
    %v9155 = vpop.permute.xlu0 %9154
    %9156 = vrot.lane.b32.xlu0 %v8321, 54
    %v9157 = vpop.permute.xlu0 %9156
    %9158 = vrot.lane.b32.xlu0 %v8328, 54
    %v9159 = vpop.permute.xlu0 %9158
    %9160 = vrot.lane.b32.xlu0 %v8329, 54
    %v9161 = vpop.permute.xlu0 %9160
    %9162 = vrot.lane.b32.xlu0 %v8336, 54
    %v9163 = vpop.permute.xlu0 %9162
    %9164 = vrot.lane.b32.xlu0 %v8337, 54
    %v9165 = vpop.permute.xlu0 %9164
    %9166 = vrot.lane.b32.xlu0 %v8344, 54
    %v9167 = vpop.permute.xlu0 %9166
    %9168 = vrot.lane.b32.xlu0 %v8345, 54
    %v9169 = vpop.permute.xlu0 %9168
    %9170 = vrot.lane.b32.xlu0 %v9124, 54
    %v9171 = vpop.permute.xlu0 %9170
    %9172 = vrot.lane.b32.xlu0 %v9125, 54
    %v9173 = vpop.permute.xlu0 %9172
    %9174 = vrot.lane.b32.xlu0 %v8360, 54
    %v9175 = vpop.permute.xlu0 %9174
    %9176 = vrot.lane.b32.xlu0 %v8361, 54
    %v9177 = vpop.permute.xlu0 %9176
    %9178 = vrot.lane.b32.xlu0 %v8368, 54
    %v9179 = vpop.permute.xlu0 %9178
    %9180 = vrot.lane.b32.xlu0 %v8369, 54
    %v9181 = vpop.permute.xlu0 %9180
    %9182 = vrot.lane.b32.xlu0 %v8376, 54
    %v9183 = vpop.permute.xlu0 %9182
    %9184 = vrot.lane.b32.xlu0 %v8377, 54
    %v9185 = vpop.permute.xlu0 %9184
    %9186 = vrot.lane.b32.xlu0 %v8384, 54
    %v9187 = vpop.permute.xlu0 %9186
    %9188 = vrot.lane.b32.xlu0 %v8385, 54
    %v9189 = vpop.permute.xlu0 %9188
    %9190 = vrot.lane.b32.xlu0 %v8392, 54
    %v9191 = vpop.permute.xlu0 %9190
    %9192 = vrot.lane.b32.xlu0 %v8393, 54
    %v9193 = vpop.permute.xlu0 %9192
    %9194 = vrot.lane.b32.xlu0 %v8400, 54
    %v9195 = vpop.permute.xlu0 %9194
    %9196 = vrot.lane.b32.xlu0 %v8401, 54
    %v9197 = vpop.permute.xlu0 %9196
    %9198 = vrot.lane.b32.xlu0 %v8408, 54
    %v9199 = vpop.permute.xlu0 %9198
    %9200 = vrot.lane.b32.xlu0 %v8409, 54
    %v9201 = vpop.permute.xlu0 %9200
    %9202 = vrot.lane.b32.xlu0 %v8416, 54
    %v9203 = vpop.permute.xlu0 %9202
    %9204 = vrot.lane.b32.xlu0 %v8417, 54
    %v9205 = vpop.permute.xlu0 %9204
    %9206 = vrot.lane.b32.xlu0 %v8424, 54
    %v9207 = vpop.permute.xlu0 %9206
    %9208 = vrot.lane.b32.xlu0 %v8425, 54
    %v9209 = vpop.permute.xlu0 %9208
    %9210 = vrot.lane.b32.xlu0 %v9132, 54
    %v9211 = vpop.permute.xlu0 %9210
    %9212 = vrot.lane.b32.xlu0 %v9133, 54
    %v9213 = vpop.permute.xlu0 %9212
    %v9274 = vsel %vm7139, %v5286, %v5279
    %v9275 = vsel %vm7141, %v5293, %v9274
    %v9276 = vsel %vm7143, %v5300, %v9275
    %v9277 = vsel %vm7145, %v5307, %v9276
    %v9278 = vsel %vm7147, %v5314, %v9277
    %v9279 = vsel %vm7149, %v5321, %v9278
    %v9280 = vsel %vm7151, %v5328, %v9279
    %v9281 = vsel %vm7139, %v5342, %v5335
    %v9282 = vsel %vm7139, %v6658, %v6651
    %v9283 = vsel %vm7141, %v6665, %v9282
    %v9284 = vsel %vm7143, %v6672, %v9283
    %v9285 = vsel %vm7145, %v6679, %v9284
    %v9286 = vsel %vm7147, %v6686, %v9285
    %v9287 = vsel %vm7149, %v6693, %v9286
    %v9288 = vsel %vm7151, %v6700, %v9287
    %v9289 = vsel %vm7139, %v6714, %v6707
    %9290 = vrot.lane.b32.xlu0 %v7168, 60
    %v9291 = vpop.permute.xlu0 %9290
    %9292 = vrot.lane.b32.xlu0 %v7169, 60
    %v9293 = vpop.permute.xlu0 %9292
    %9294 = vrot.lane.b32.xlu0 %v7176, 60
    %v9295 = vpop.permute.xlu0 %9294
    %9296 = vrot.lane.b32.xlu0 %v7177, 60
    %v9297 = vpop.permute.xlu0 %9296
    %9298 = vrot.lane.b32.xlu0 %v7184, 60
    %v9299 = vpop.permute.xlu0 %9298
    %9300 = vrot.lane.b32.xlu0 %v7185, 60
    %v9301 = vpop.permute.xlu0 %9300
    %9302 = vrot.lane.b32.xlu0 %v7192, 60
    %v9303 = vpop.permute.xlu0 %9302
    %9304 = vrot.lane.b32.xlu0 %v7193, 60
    %v9305 = vpop.permute.xlu0 %9304
    %9306 = vrot.lane.b32.xlu0 %v7200, 60
    %v9307 = vpop.permute.xlu0 %9306
    %9308 = vrot.lane.b32.xlu0 %v7201, 60
    %v9309 = vpop.permute.xlu0 %9308
    %9310 = vrot.lane.b32.xlu0 %v7208, 60
    %v9311 = vpop.permute.xlu0 %9310
    %9312 = vrot.lane.b32.xlu0 %v7209, 60
    %v9313 = vpop.permute.xlu0 %9312
    %9314 = vrot.lane.b32.xlu0 %v7216, 60
    %v9315 = vpop.permute.xlu0 %9314
    %9316 = vrot.lane.b32.xlu0 %v7217, 60
    %v9317 = vpop.permute.xlu0 %9316
    %9318 = vrot.lane.b32.xlu0 %v7224, 60
    %v9319 = vpop.permute.xlu0 %9318
    %9320 = vrot.lane.b32.xlu0 %v7225, 60
    %v9321 = vpop.permute.xlu0 %9320
    %9322 = vrot.lane.b32.xlu0 %v8572, 60
    %v9323 = vpop.permute.xlu0 %9322
    %9324 = vrot.lane.b32.xlu0 %v8573, 60
    %v9325 = vpop.permute.xlu0 %9324
    %9326 = vrot.lane.b32.xlu0 %v9280, 60
    %v9327 = vpop.permute.xlu0 %9326
    %9328 = vrot.lane.b32.xlu0 %v9281, 60
    %v9329 = vpop.permute.xlu0 %9328
    %9330 = vrot.lane.b32.xlu0 %v7248, 60
    %v9331 = vpop.permute.xlu0 %9330
    %9332 = vrot.lane.b32.xlu0 %v7249, 60
    %v9333 = vpop.permute.xlu0 %9332
    %9334 = vrot.lane.b32.xlu0 %v7256, 60
    %v9335 = vpop.permute.xlu0 %9334
    %9336 = vrot.lane.b32.xlu0 %v7257, 60
    %v9337 = vpop.permute.xlu0 %9336
    %9338 = vrot.lane.b32.xlu0 %v7264, 60
    %v9339 = vpop.permute.xlu0 %9338
    %9340 = vrot.lane.b32.xlu0 %v7265, 60
    %v9341 = vpop.permute.xlu0 %9340
    %9342 = vrot.lane.b32.xlu0 %v7272, 60
    %v9343 = vpop.permute.xlu0 %9342
    %9344 = vrot.lane.b32.xlu0 %v7273, 60
    %v9345 = vpop.permute.xlu0 %9344
    %9346 = vrot.lane.b32.xlu0 %v7280, 60
    %v9347 = vpop.permute.xlu0 %9346
    %9348 = vrot.lane.b32.xlu0 %v7281, 60
    %v9349 = vpop.permute.xlu0 %9348
    %9350 = vrot.lane.b32.xlu0 %v7288, 60
    %v9351 = vpop.permute.xlu0 %9350
    %9352 = vrot.lane.b32.xlu0 %v7289, 60
    %v9353 = vpop.permute.xlu0 %9352
    %9354 = vrot.lane.b32.xlu0 %v7296, 60
    %v9355 = vpop.permute.xlu0 %9354
    %9356 = vrot.lane.b32.xlu0 %v7297, 60
    %v9357 = vpop.permute.xlu0 %9356
    %9358 = vrot.lane.b32.xlu0 %v7304, 60
    %v9359 = vpop.permute.xlu0 %9358
    %9360 = vrot.lane.b32.xlu0 %v7305, 60
    %v9361 = vpop.permute.xlu0 %9360
    %9362 = vrot.lane.b32.xlu0 %v8580, 60
    %v9363 = vpop.permute.xlu0 %9362
    %9364 = vrot.lane.b32.xlu0 %v8581, 60
    %v9365 = vpop.permute.xlu0 %9364
    %9366 = vrot.lane.b32.xlu0 %v9288, 60
    %v9367 = vpop.permute.xlu0 %9366
    %9368 = vrot.lane.b32.xlu0 %v9289, 60
    %v9369 = vpop.permute.xlu0 %9368
    %v9412 = vsel %vm7139, %v5293, %v5286
    %v9413 = vsel %vm7141, %v5300, %v9412
    %v9414 = vsel %vm7143, %v5307, %v9413
    %v9415 = vsel %vm7145, %v5314, %v9414
    %v9416 = vsel %vm7147, %v5321, %v9415
    %v9417 = vsel %vm7149, %v5328, %v9416
    %v9418 = vsel %vm7151, %v5335, %v9417
    %v9419 = vsel %vm7139, %v5349, %v5342
    %v9420 = vsel %vm7139, %v6665, %v6658
    %v9421 = vsel %vm7141, %v6672, %v9420
    %v9422 = vsel %vm7143, %v6679, %v9421
    %v9423 = vsel %vm7145, %v6686, %v9422
    %v9424 = vsel %vm7147, %v6693, %v9423
    %v9425 = vsel %vm7149, %v6700, %v9424
    %v9426 = vsel %vm7151, %v6707, %v9425
    %v9427 = vsel %vm7139, %v6721, %v6714
    %9428 = vrot.lane.b32.xlu0 %v7388, 66
    %v9429 = vpop.permute.xlu0 %9428
    %9430 = vrot.lane.b32.xlu0 %v7389, 66
    %v9431 = vpop.permute.xlu0 %9430
    %9432 = vrot.lane.b32.xlu0 %v7396, 66
    %v9433 = vpop.permute.xlu0 %9432
    %9434 = vrot.lane.b32.xlu0 %v7397, 66
    %v9435 = vpop.permute.xlu0 %9434
    %9436 = vrot.lane.b32.xlu0 %v7404, 66
    %v9437 = vpop.permute.xlu0 %9436
    %9438 = vrot.lane.b32.xlu0 %v7405, 66
    %v9439 = vpop.permute.xlu0 %9438
    %9440 = vrot.lane.b32.xlu0 %v7412, 66
    %v9441 = vpop.permute.xlu0 %9440
    %9442 = vrot.lane.b32.xlu0 %v7413, 66
    %v9443 = vpop.permute.xlu0 %9442
    %9444 = vrot.lane.b32.xlu0 %v7420, 66
    %v9445 = vpop.permute.xlu0 %9444
    %9446 = vrot.lane.b32.xlu0 %v7421, 66
    %v9447 = vpop.permute.xlu0 %9446
    %9448 = vrot.lane.b32.xlu0 %v7428, 66
    %v9449 = vpop.permute.xlu0 %9448
    %9450 = vrot.lane.b32.xlu0 %v7429, 66
    %v9451 = vpop.permute.xlu0 %9450
    %9452 = vrot.lane.b32.xlu0 %v7436, 66
    %v9453 = vpop.permute.xlu0 %9452
    %9454 = vrot.lane.b32.xlu0 %v7437, 66
    %v9455 = vpop.permute.xlu0 %9454
    %9456 = vrot.lane.b32.xlu0 %v7444, 66
    %v9457 = vpop.permute.xlu0 %9456
    %9458 = vrot.lane.b32.xlu0 %v7445, 66
    %v9459 = vpop.permute.xlu0 %9458
    %9460 = vrot.lane.b32.xlu0 %v8710, 66
    %v9461 = vpop.permute.xlu0 %9460
    %9462 = vrot.lane.b32.xlu0 %v8711, 66
    %v9463 = vpop.permute.xlu0 %9462
    %9464 = vrot.lane.b32.xlu0 %v9418, 66
    %v9465 = vpop.permute.xlu0 %9464
    %9466 = vrot.lane.b32.xlu0 %v9419, 66
    %v9467 = vpop.permute.xlu0 %9466
    %9468 = vrot.lane.b32.xlu0 %v7468, 66
    %v9469 = vpop.permute.xlu0 %9468
    %9470 = vrot.lane.b32.xlu0 %v7469, 66
    %v9471 = vpop.permute.xlu0 %9470
    %9472 = vrot.lane.b32.xlu0 %v7476, 66
    %v9473 = vpop.permute.xlu0 %9472
    %9474 = vrot.lane.b32.xlu0 %v7477, 66
    %v9475 = vpop.permute.xlu0 %9474
    %9476 = vrot.lane.b32.xlu0 %v7484, 66
    %v9477 = vpop.permute.xlu0 %9476
    %9478 = vrot.lane.b32.xlu0 %v7485, 66
    %v9479 = vpop.permute.xlu0 %9478
    %9480 = vrot.lane.b32.xlu0 %v7492, 66
    %v9481 = vpop.permute.xlu0 %9480
    %9482 = vrot.lane.b32.xlu0 %v7493, 66
    %v9483 = vpop.permute.xlu0 %9482
    %9484 = vrot.lane.b32.xlu0 %v7500, 66
    %v9485 = vpop.permute.xlu0 %9484
    %9486 = vrot.lane.b32.xlu0 %v7501, 66
    %v9487 = vpop.permute.xlu0 %9486
    %9488 = vrot.lane.b32.xlu0 %v7508, 66
    %v9489 = vpop.permute.xlu0 %9488
    %9490 = vrot.lane.b32.xlu0 %v7509, 66
    %v9491 = vpop.permute.xlu0 %9490
    %9492 = vrot.lane.b32.xlu0 %v7516, 66
    %v9493 = vpop.permute.xlu0 %9492
    %9494 = vrot.lane.b32.xlu0 %v7517, 66
    %v9495 = vpop.permute.xlu0 %9494
    %9496 = vrot.lane.b32.xlu0 %v7524, 66
    %v9497 = vpop.permute.xlu0 %9496
    %9498 = vrot.lane.b32.xlu0 %v7525, 66
    %v9499 = vpop.permute.xlu0 %9498
    %9500 = vrot.lane.b32.xlu0 %v8718, 66
    %v9501 = vpop.permute.xlu0 %9500
    %9502 = vrot.lane.b32.xlu0 %v8719, 66
    %v9503 = vpop.permute.xlu0 %9502
    %9504 = vrot.lane.b32.xlu0 %v9426, 66
    %v9505 = vpop.permute.xlu0 %9504
    %9506 = vrot.lane.b32.xlu0 %v9427, 66
    %v9507 = vpop.permute.xlu0 %9506
    %v9550 = vsel %vm7139, %v5300, %v5293
    %v9551 = vsel %vm7141, %v5307, %v9550
    %v9552 = vsel %vm7143, %v5314, %v9551
    %v9553 = vsel %vm7145, %v5321, %v9552
    %v9554 = vsel %vm7147, %v5328, %v9553
    %v9555 = vsel %vm7149, %v5335, %v9554
    %v9556 = vsel %vm7151, %v5342, %v9555
    %v9557 = vsel %vm7139, %v5356, %v5349
    %v9558 = vsel %vm7139, %v6672, %v6665
    %v9559 = vsel %vm7141, %v6679, %v9558
    %v9560 = vsel %vm7143, %v6686, %v9559
    %v9561 = vsel %vm7145, %v6693, %v9560
    %v9562 = vsel %vm7147, %v6700, %v9561
    %v9563 = vsel %vm7149, %v6707, %v9562
    %v9564 = vsel %vm7151, %v6714, %v9563
    %v9565 = vsel %vm7139, %v6728, %v6721
    %9566 = vrot.lane.b32.xlu0 %v7688, 72
    %v9567 = vpop.permute.xlu0 %9566
    %9568 = vrot.lane.b32.xlu0 %v7689, 72
    %v9569 = vpop.permute.xlu0 %9568
    %9570 = vrot.lane.b32.xlu0 %v7696, 72
    %v9571 = vpop.permute.xlu0 %9570
    %9572 = vrot.lane.b32.xlu0 %v7697, 72
    %v9573 = vpop.permute.xlu0 %9572
    %9574 = vrot.lane.b32.xlu0 %v7704, 72
    %v9575 = vpop.permute.xlu0 %9574
    %9576 = vrot.lane.b32.xlu0 %v7705, 72
    %v9577 = vpop.permute.xlu0 %9576
    %9578 = vrot.lane.b32.xlu0 %v7712, 72
    %v9579 = vpop.permute.xlu0 %9578
    %9580 = vrot.lane.b32.xlu0 %v7713, 72
    %v9581 = vpop.permute.xlu0 %9580
    %9582 = vrot.lane.b32.xlu0 %v7720, 72
    %v9583 = vpop.permute.xlu0 %9582
    %9584 = vrot.lane.b32.xlu0 %v7721, 72
    %v9585 = vpop.permute.xlu0 %9584
    %9586 = vrot.lane.b32.xlu0 %v7728, 72
    %v9587 = vpop.permute.xlu0 %9586
    %9588 = vrot.lane.b32.xlu0 %v7729, 72
    %v9589 = vpop.permute.xlu0 %9588
    %9590 = vrot.lane.b32.xlu0 %v7736, 72
    %v9591 = vpop.permute.xlu0 %9590
    %9592 = vrot.lane.b32.xlu0 %v7737, 72
    %v9593 = vpop.permute.xlu0 %9592
    %9594 = vrot.lane.b32.xlu0 %v7744, 72
    %v9595 = vpop.permute.xlu0 %9594
    %9596 = vrot.lane.b32.xlu0 %v7745, 72
    %v9597 = vpop.permute.xlu0 %9596
    %9598 = vrot.lane.b32.xlu0 %v8848, 72
    %v9599 = vpop.permute.xlu0 %9598
    %9600 = vrot.lane.b32.xlu0 %v8849, 72
    %v9601 = vpop.permute.xlu0 %9600
    %9602 = vrot.lane.b32.xlu0 %v9556, 72
    %v9603 = vpop.permute.xlu0 %9602
    %9604 = vrot.lane.b32.xlu0 %v9557, 72
    %v9605 = vpop.permute.xlu0 %9604
    %9606 = vrot.lane.b32.xlu0 %v7768, 72
    %v9607 = vpop.permute.xlu0 %9606
    %9608 = vrot.lane.b32.xlu0 %v7769, 72
    %v9609 = vpop.permute.xlu0 %9608
    %9610 = vrot.lane.b32.xlu0 %v7776, 72
    %v9611 = vpop.permute.xlu0 %9610
    %9612 = vrot.lane.b32.xlu0 %v7777, 72
    %v9613 = vpop.permute.xlu0 %9612
    %9614 = vrot.lane.b32.xlu0 %v7784, 72
    %v9615 = vpop.permute.xlu0 %9614
    %9616 = vrot.lane.b32.xlu0 %v7785, 72
    %v9617 = vpop.permute.xlu0 %9616
    %9618 = vrot.lane.b32.xlu0 %v7792, 72
    %v9619 = vpop.permute.xlu0 %9618
    %9620 = vrot.lane.b32.xlu0 %v7793, 72
    %v9621 = vpop.permute.xlu0 %9620
    %9622 = vrot.lane.b32.xlu0 %v7800, 72
    %v9623 = vpop.permute.xlu0 %9622
    %9624 = vrot.lane.b32.xlu0 %v7801, 72
    %v9625 = vpop.permute.xlu0 %9624
    %9626 = vrot.lane.b32.xlu0 %v7808, 72
    %v9627 = vpop.permute.xlu0 %9626
    %9628 = vrot.lane.b32.xlu0 %v7809, 72
    %v9629 = vpop.permute.xlu0 %9628
    %9630 = vrot.lane.b32.xlu0 %v7816, 72
    %v9631 = vpop.permute.xlu0 %9630
    %9632 = vrot.lane.b32.xlu0 %v7817, 72
    %v9633 = vpop.permute.xlu0 %9632
    %9634 = vrot.lane.b32.xlu0 %v7824, 72
    %v9635 = vpop.permute.xlu0 %9634
    %9636 = vrot.lane.b32.xlu0 %v7825, 72
    %v9637 = vpop.permute.xlu0 %9636
    %9638 = vrot.lane.b32.xlu0 %v8856, 72
    %v9639 = vpop.permute.xlu0 %9638
    %9640 = vrot.lane.b32.xlu0 %v8857, 72
    %v9641 = vpop.permute.xlu0 %9640
    %9642 = vrot.lane.b32.xlu0 %v9564, 72
    %v9643 = vpop.permute.xlu0 %9642
    %9644 = vrot.lane.b32.xlu0 %v9565, 72
    %v9645 = vpop.permute.xlu0 %9644
    %v9688 = vsel %vm7139, %v5307, %v5300
    %v9689 = vsel %vm7141, %v5314, %v9688
    %v9690 = vsel %vm7143, %v5321, %v9689
    %v9691 = vsel %vm7145, %v5328, %v9690
    %v9692 = vsel %vm7147, %v5335, %v9691
    %v9693 = vsel %vm7149, %v5342, %v9692
    %v9694 = vsel %vm7151, %v5349, %v9693
    %v9695 = vsel %vm7139, %v5363, %v5356
    %v9696 = vsel %vm7139, %v6679, %v6672
    %v9697 = vsel %vm7141, %v6686, %v9696
    %v9698 = vsel %vm7143, %v6693, %v9697
    %v9699 = vsel %vm7145, %v6700, %v9698
    %v9700 = vsel %vm7147, %v6707, %v9699
    %v9701 = vsel %vm7149, %v6714, %v9700
    %v9702 = vsel %vm7151, %v6721, %v9701
    %v9703 = vsel %vm7139, %v6735, %v6728
    %9704 = vrot.lane.b32.xlu0 %v7988, 78
    %v9705 = vpop.permute.xlu0 %9704
    %9706 = vrot.lane.b32.xlu0 %v7989, 78
    %v9707 = vpop.permute.xlu0 %9706
    %9708 = vrot.lane.b32.xlu0 %v7996, 78
    %v9709 = vpop.permute.xlu0 %9708
    %9710 = vrot.lane.b32.xlu0 %v7997, 78
    %v9711 = vpop.permute.xlu0 %9710
    %9712 = vrot.lane.b32.xlu0 %v8004, 78
    %v9713 = vpop.permute.xlu0 %9712
    %9714 = vrot.lane.b32.xlu0 %v8005, 78
    %v9715 = vpop.permute.xlu0 %9714
    %9716 = vrot.lane.b32.xlu0 %v8012, 78
    %v9717 = vpop.permute.xlu0 %9716
    %9718 = vrot.lane.b32.xlu0 %v8013, 78
    %v9719 = vpop.permute.xlu0 %9718
    %9720 = vrot.lane.b32.xlu0 %v8020, 78
    %v9721 = vpop.permute.xlu0 %9720
    %9722 = vrot.lane.b32.xlu0 %v8021, 78
    %v9723 = vpop.permute.xlu0 %9722
    %9724 = vrot.lane.b32.xlu0 %v8028, 78
    %v9725 = vpop.permute.xlu0 %9724
    %9726 = vrot.lane.b32.xlu0 %v8029, 78
    %v9727 = vpop.permute.xlu0 %9726
    %9728 = vrot.lane.b32.xlu0 %v8036, 78
    %v9729 = vpop.permute.xlu0 %9728
    %9730 = vrot.lane.b32.xlu0 %v8037, 78
    %v9731 = vpop.permute.xlu0 %9730
    %9732 = vrot.lane.b32.xlu0 %v8044, 78
    %v9733 = vpop.permute.xlu0 %9732
    %9734 = vrot.lane.b32.xlu0 %v8045, 78
    %v9735 = vpop.permute.xlu0 %9734
    %9736 = vrot.lane.b32.xlu0 %v8986, 78
    %v9737 = vpop.permute.xlu0 %9736
    %9738 = vrot.lane.b32.xlu0 %v8987, 78
    %v9739 = vpop.permute.xlu0 %9738
    %9740 = vrot.lane.b32.xlu0 %v9694, 78
    %v9741 = vpop.permute.xlu0 %9740
    %9742 = vrot.lane.b32.xlu0 %v9695, 78
    %v9743 = vpop.permute.xlu0 %9742
    %9744 = vrot.lane.b32.xlu0 %v8068, 78
    %v9745 = vpop.permute.xlu0 %9744
    %9746 = vrot.lane.b32.xlu0 %v8069, 78
    %v9747 = vpop.permute.xlu0 %9746
    %9748 = vrot.lane.b32.xlu0 %v8076, 78
    %v9749 = vpop.permute.xlu0 %9748
    %9750 = vrot.lane.b32.xlu0 %v8077, 78
    %v9751 = vpop.permute.xlu0 %9750
    %9752 = vrot.lane.b32.xlu0 %v8084, 78
    %v9753 = vpop.permute.xlu0 %9752
    %9754 = vrot.lane.b32.xlu0 %v8085, 78
    %v9755 = vpop.permute.xlu0 %9754
    %9756 = vrot.lane.b32.xlu0 %v8092, 78
    %v9757 = vpop.permute.xlu0 %9756
    %9758 = vrot.lane.b32.xlu0 %v8093, 78
    %v9759 = vpop.permute.xlu0 %9758
    %9760 = vrot.lane.b32.xlu0 %v8100, 78
    %v9761 = vpop.permute.xlu0 %9760
    %9762 = vrot.lane.b32.xlu0 %v8101, 78
    %v9763 = vpop.permute.xlu0 %9762
    %9764 = vrot.lane.b32.xlu0 %v8108, 78
    %v9765 = vpop.permute.xlu0 %9764
    %9766 = vrot.lane.b32.xlu0 %v8109, 78
    %v9767 = vpop.permute.xlu0 %9766
    %9768 = vrot.lane.b32.xlu0 %v8116, 78
    %v9769 = vpop.permute.xlu0 %9768
    %9770 = vrot.lane.b32.xlu0 %v8117, 78
    %v9771 = vpop.permute.xlu0 %9770
    %9772 = vrot.lane.b32.xlu0 %v8124, 78
    %v9773 = vpop.permute.xlu0 %9772
    %9774 = vrot.lane.b32.xlu0 %v8125, 78
    %v9775 = vpop.permute.xlu0 %9774
    %9776 = vrot.lane.b32.xlu0 %v8994, 78
    %v9777 = vpop.permute.xlu0 %9776
    %9778 = vrot.lane.b32.xlu0 %v8995, 78
    %v9779 = vpop.permute.xlu0 %9778
    %9780 = vrot.lane.b32.xlu0 %v9702, 78
    %v9781 = vpop.permute.xlu0 %9780
    %9782 = vrot.lane.b32.xlu0 %v9703, 78
    %v9783 = vpop.permute.xlu0 %9782
    %v9826 = vsel %vm7139, %v5314, %v5307
    %v9827 = vsel %vm7141, %v5321, %v9826
    %v9828 = vsel %vm7143, %v5328, %v9827
    %v9829 = vsel %vm7145, %v5335, %v9828
    %v9830 = vsel %vm7147, %v5342, %v9829
    %v9831 = vsel %vm7149, %v5349, %v9830
    %v9832 = vsel %vm7151, %v5356, %v9831
    %v9833 = vsel %vm7139, %v5370, %v5363
    %v9834 = vsel %vm7139, %v6686, %v6679
    %v9835 = vsel %vm7141, %v6693, %v9834
    %v9836 = vsel %vm7143, %v6700, %v9835
    %v9837 = vsel %vm7145, %v6707, %v9836
    %v9838 = vsel %vm7147, %v6714, %v9837
    %v9839 = vsel %vm7149, %v6721, %v9838
    %v9840 = vsel %vm7151, %v6728, %v9839
    %v9841 = vsel %vm7139, %v6742, %v6735
    %9842 = vrot.lane.b32.xlu0 %v8288, 84
    %v9843 = vpop.permute.xlu0 %9842
    %9844 = vrot.lane.b32.xlu0 %v8289, 84
    %v9845 = vpop.permute.xlu0 %9844
    %9846 = vrot.lane.b32.xlu0 %v8296, 84
    %v9847 = vpop.permute.xlu0 %9846
    %9848 = vrot.lane.b32.xlu0 %v8297, 84
    %v9849 = vpop.permute.xlu0 %9848
    %9850 = vrot.lane.b32.xlu0 %v8304, 84
    %v9851 = vpop.permute.xlu0 %9850
    %9852 = vrot.lane.b32.xlu0 %v8305, 84
    %v9853 = vpop.permute.xlu0 %9852
    %9854 = vrot.lane.b32.xlu0 %v8312, 84
    %v9855 = vpop.permute.xlu0 %9854
    %9856 = vrot.lane.b32.xlu0 %v8313, 84
    %v9857 = vpop.permute.xlu0 %9856
    %9858 = vrot.lane.b32.xlu0 %v8320, 84
    %v9859 = vpop.permute.xlu0 %9858
    %9860 = vrot.lane.b32.xlu0 %v8321, 84
    %v9861 = vpop.permute.xlu0 %9860
    %9862 = vrot.lane.b32.xlu0 %v8328, 84
    %v9863 = vpop.permute.xlu0 %9862
    %9864 = vrot.lane.b32.xlu0 %v8329, 84
    %v9865 = vpop.permute.xlu0 %9864
    %9866 = vrot.lane.b32.xlu0 %v8336, 84
    %v9867 = vpop.permute.xlu0 %9866
    %9868 = vrot.lane.b32.xlu0 %v8337, 84
    %v9869 = vpop.permute.xlu0 %9868
    %9870 = vrot.lane.b32.xlu0 %v8344, 84
    %v9871 = vpop.permute.xlu0 %9870
    %9872 = vrot.lane.b32.xlu0 %v8345, 84
    %v9873 = vpop.permute.xlu0 %9872
    %9874 = vrot.lane.b32.xlu0 %v9124, 84
    %v9875 = vpop.permute.xlu0 %9874
    %9876 = vrot.lane.b32.xlu0 %v9125, 84
    %v9877 = vpop.permute.xlu0 %9876
    %9878 = vrot.lane.b32.xlu0 %v9832, 84
    %v9879 = vpop.permute.xlu0 %9878
    %9880 = vrot.lane.b32.xlu0 %v9833, 84
    %v9881 = vpop.permute.xlu0 %9880
    %9882 = vrot.lane.b32.xlu0 %v8368, 84
    %v9883 = vpop.permute.xlu0 %9882
    %9884 = vrot.lane.b32.xlu0 %v8369, 84
    %v9885 = vpop.permute.xlu0 %9884
    %9886 = vrot.lane.b32.xlu0 %v8376, 84
    %v9887 = vpop.permute.xlu0 %9886
    %9888 = vrot.lane.b32.xlu0 %v8377, 84
    %v9889 = vpop.permute.xlu0 %9888
    %9890 = vrot.lane.b32.xlu0 %v8384, 84
    %v9891 = vpop.permute.xlu0 %9890
    %9892 = vrot.lane.b32.xlu0 %v8385, 84
    %v9893 = vpop.permute.xlu0 %9892
    %9894 = vrot.lane.b32.xlu0 %v8392, 84
    %v9895 = vpop.permute.xlu0 %9894
    %9896 = vrot.lane.b32.xlu0 %v8393, 84
    %v9897 = vpop.permute.xlu0 %9896
    %9898 = vrot.lane.b32.xlu0 %v8400, 84
    %v9899 = vpop.permute.xlu0 %9898
    %9900 = vrot.lane.b32.xlu0 %v8401, 84
    %v9901 = vpop.permute.xlu0 %9900
    %9902 = vrot.lane.b32.xlu0 %v8408, 84
    %v9903 = vpop.permute.xlu0 %9902
    %9904 = vrot.lane.b32.xlu0 %v8409, 84
    %v9905 = vpop.permute.xlu0 %9904
    %9906 = vrot.lane.b32.xlu0 %v8416, 84
    %v9907 = vpop.permute.xlu0 %9906
    %9908 = vrot.lane.b32.xlu0 %v8417, 84
    %v9909 = vpop.permute.xlu0 %9908
    %9910 = vrot.lane.b32.xlu0 %v8424, 84
    %v9911 = vpop.permute.xlu0 %9910
    %9912 = vrot.lane.b32.xlu0 %v8425, 84
    %v9913 = vpop.permute.xlu0 %9912
    %9914 = vrot.lane.b32.xlu0 %v9132, 84
    %v9915 = vpop.permute.xlu0 %9914
    %9916 = vrot.lane.b32.xlu0 %v9133, 84
    %v9917 = vpop.permute.xlu0 %9916
    %9918 = vrot.lane.b32.xlu0 %v9840, 84
    %v9919 = vpop.permute.xlu0 %9918
    %9920 = vrot.lane.b32.xlu0 %v9841, 84
    %v9921 = vpop.permute.xlu0 %9920
    %v9982 = vsel %vm7139, %v5384, %v5377
    %v9983 = vsel %vm7141, %v5391, %v9982
    %v9984 = vsel %vm7143, %v5398, %v9983
    %v9985 = vsel %vm7145, %v5405, %v9984
    %v9986 = vsel %vm7147, %v5412, %v9985
    %v9987 = vsel %vm7149, %v5419, %v9986
    %v9988 = vsel %vm7151, %v5426, %v9987
    %v9989 = vsel %vm7139, %v5440, %v5433
    %v9990 = vsel %vm7139, %v6756, %v6749
    %v9991 = vsel %vm7141, %v6763, %v9990
    %v9992 = vsel %vm7143, %v6770, %v9991
    %v9993 = vsel %vm7145, %v6777, %v9992
    %v9994 = vsel %vm7147, %v6784, %v9993
    %v9995 = vsel %vm7149, %v6791, %v9994
    %v9996 = vsel %vm7151, %v6798, %v9995
    %v9997 = vsel %vm7139, %v6812, %v6805
    %9998 = vrot.lane.b32.xlu0 %v7176, 90
    %v9999 = vpop.permute.xlu0 %9998
    %10000 = vrot.lane.b32.xlu0 %v7177, 90
    %v10001 = vpop.permute.xlu0 %10000
    %10002 = vrot.lane.b32.xlu0 %v7184, 90
    %v10003 = vpop.permute.xlu0 %10002
    %10004 = vrot.lane.b32.xlu0 %v7185, 90
    %v10005 = vpop.permute.xlu0 %10004
    %10006 = vrot.lane.b32.xlu0 %v7192, 90
    %v10007 = vpop.permute.xlu0 %10006
    %10008 = vrot.lane.b32.xlu0 %v7193, 90
    %v10009 = vpop.permute.xlu0 %10008
    %10010 = vrot.lane.b32.xlu0 %v7200, 90
    %v10011 = vpop.permute.xlu0 %10010
    %10012 = vrot.lane.b32.xlu0 %v7201, 90
    %v10013 = vpop.permute.xlu0 %10012
    %10014 = vrot.lane.b32.xlu0 %v7208, 90
    %v10015 = vpop.permute.xlu0 %10014
    %10016 = vrot.lane.b32.xlu0 %v7209, 90
    %v10017 = vpop.permute.xlu0 %10016
    %10018 = vrot.lane.b32.xlu0 %v7216, 90
    %v10019 = vpop.permute.xlu0 %10018
    %10020 = vrot.lane.b32.xlu0 %v7217, 90
    %v10021 = vpop.permute.xlu0 %10020
    %10022 = vrot.lane.b32.xlu0 %v7224, 90
    %v10023 = vpop.permute.xlu0 %10022
    %10024 = vrot.lane.b32.xlu0 %v7225, 90
    %v10025 = vpop.permute.xlu0 %10024
    %10026 = vrot.lane.b32.xlu0 %v8572, 90
    %v10027 = vpop.permute.xlu0 %10026
    %10028 = vrot.lane.b32.xlu0 %v8573, 90
    %v10029 = vpop.permute.xlu0 %10028
    %10030 = vrot.lane.b32.xlu0 %v9280, 90
    %v10031 = vpop.permute.xlu0 %10030
    %10032 = vrot.lane.b32.xlu0 %v9281, 90
    %v10033 = vpop.permute.xlu0 %10032
    %10034 = vrot.lane.b32.xlu0 %v9988, 90
    %v10035 = vpop.permute.xlu0 %10034
    %10036 = vrot.lane.b32.xlu0 %v9989, 90
    %v10037 = vpop.permute.xlu0 %10036
    %10038 = vrot.lane.b32.xlu0 %v7256, 90
    %v10039 = vpop.permute.xlu0 %10038
    %10040 = vrot.lane.b32.xlu0 %v7257, 90
    %v10041 = vpop.permute.xlu0 %10040
    %10042 = vrot.lane.b32.xlu0 %v7264, 90
    %v10043 = vpop.permute.xlu0 %10042
    %10044 = vrot.lane.b32.xlu0 %v7265, 90
    %v10045 = vpop.permute.xlu0 %10044
    %10046 = vrot.lane.b32.xlu0 %v7272, 90
    %v10047 = vpop.permute.xlu0 %10046
    %10048 = vrot.lane.b32.xlu0 %v7273, 90
    %v10049 = vpop.permute.xlu0 %10048
    %10050 = vrot.lane.b32.xlu0 %v7280, 90
    %v10051 = vpop.permute.xlu0 %10050
    %10052 = vrot.lane.b32.xlu0 %v7281, 90
    %v10053 = vpop.permute.xlu0 %10052
    %10054 = vrot.lane.b32.xlu0 %v7288, 90
    %v10055 = vpop.permute.xlu0 %10054
    %10056 = vrot.lane.b32.xlu0 %v7289, 90
    %v10057 = vpop.permute.xlu0 %10056
    %10058 = vrot.lane.b32.xlu0 %v7296, 90
    %v10059 = vpop.permute.xlu0 %10058
    %10060 = vrot.lane.b32.xlu0 %v7297, 90
    %v10061 = vpop.permute.xlu0 %10060
    %10062 = vrot.lane.b32.xlu0 %v7304, 90
    %v10063 = vpop.permute.xlu0 %10062
    %10064 = vrot.lane.b32.xlu0 %v7305, 90
    %v10065 = vpop.permute.xlu0 %10064
    %10066 = vrot.lane.b32.xlu0 %v8580, 90
    %v10067 = vpop.permute.xlu0 %10066
    %10068 = vrot.lane.b32.xlu0 %v8581, 90
    %v10069 = vpop.permute.xlu0 %10068
    %10070 = vrot.lane.b32.xlu0 %v9288, 90
    %v10071 = vpop.permute.xlu0 %10070
    %10072 = vrot.lane.b32.xlu0 %v9289, 90
    %v10073 = vpop.permute.xlu0 %10072
    %10074 = vrot.lane.b32.xlu0 %v9996, 90
    %v10075 = vpop.permute.xlu0 %10074
    %10076 = vrot.lane.b32.xlu0 %v9997, 90
    %v10077 = vpop.permute.xlu0 %10076
    %vm10118 = vcmask 48128
    %v10119 = vsel %vm10118, %v7152, %v7527
    %v10120 = vsel %vm10118, %v7153, %v7529
    %v10121 = vsel %vm10118, %v7160, %v7531
    %v10122 = vsel %vm10118, %v7161, %v7533
    %v10123 = vsel %vm10118, %v7168, %v7535
    %v10124 = vsel %vm10118, %v7169, %v7537
    %v10125 = vsel %vm10118, %v7176, %v7539
    %v10126 = vsel %vm10118, %v7177, %v7541
    %v10127 = vsel %vm10118, %v7184, %v7543
    %v10128 = vsel %vm10118, %v7185, %v7545
    %v10129 = vsel %vm10118, %v7192, %v7547
    %v10130 = vsel %vm10118, %v7193, %v7549
    %v10131 = vsel %vm10118, %v7200, %v7551
    %v10132 = vsel %vm10118, %v7201, %v7553
    %v10133 = vsel %vm10118, %v7208, %v7555
    %v10134 = vsel %vm10118, %v7209, %v7557
    %v10135 = vsel %vm10118, %v7216, %v7559
    %v10136 = vsel %vm10118, %v7217, %v7561
    %v10137 = vsel %vm10118, %v7224, %v7563
    %v10138 = vsel %vm10118, %v7225, %v7565
    %v10139 = vsel %vm10118, %v7232, %v7567
    %v10140 = vsel %vm10118, %v7233, %v7569
    %v10141 = vsel %vm10118, %v7240, %v7571
    %v10142 = vsel %vm10118, %v7241, %v7573
    %v10143 = vsel %vm10118, %v7248, %v7575
    %v10144 = vsel %vm10118, %v7249, %v7577
    %v10145 = vsel %vm10118, %v7256, %v7579
    %v10146 = vsel %vm10118, %v7257, %v7581
    %v10147 = vsel %vm10118, %v7264, %v7583
    %v10148 = vsel %vm10118, %v7265, %v7585
    %v10149 = vsel %vm10118, %v7272, %v7587
    %v10150 = vsel %vm10118, %v7273, %v7589
    %v10151 = vsel %vm10118, %v7280, %v7591
    %v10152 = vsel %vm10118, %v7281, %v7593
    %v10153 = vsel %vm10118, %v7288, %v7595
    %v10154 = vsel %vm10118, %v7289, %v7597
    %v10155 = vsel %vm10118, %v7296, %v7599
    %v10156 = vsel %vm10118, %v7297, %v7601
    %v10157 = vsel %vm10118, %v7304, %v7603
    %v10158 = vsel %vm10118, %v7305, %v7605
    %vm10159 = vcmask 97280
    %v10160 = vsel %vm10159, %v10119, %v7827
    %v10161 = vsel %vm10159, %v10120, %v7829
    %v10162 = vsel %vm10159, %v10121, %v7831
    %v10163 = vsel %vm10159, %v10122, %v7833
    %v10164 = vsel %vm10159, %v10123, %v7835
    %v10165 = vsel %vm10159, %v10124, %v7837
    %v10166 = vsel %vm10159, %v10125, %v7839
    %v10167 = vsel %vm10159, %v10126, %v7841
    %v10168 = vsel %vm10159, %v10127, %v7843
    %v10169 = vsel %vm10159, %v10128, %v7845
    %v10170 = vsel %vm10159, %v10129, %v7847
    %v10171 = vsel %vm10159, %v10130, %v7849
    %v10172 = vsel %vm10159, %v10131, %v7851
    %v10173 = vsel %vm10159, %v10132, %v7853
    %v10174 = vsel %vm10159, %v10133, %v7855
    %v10175 = vsel %vm10159, %v10134, %v7857
    %v10176 = vsel %vm10159, %v10135, %v7859
    %v10177 = vsel %vm10159, %v10136, %v7861
    %v10178 = vsel %vm10159, %v10137, %v7863
    %v10179 = vsel %vm10159, %v10138, %v7865
    %v10180 = vsel %vm10159, %v10139, %v7867
    %v10181 = vsel %vm10159, %v10140, %v7869
    %v10182 = vsel %vm10159, %v10141, %v7871
    %v10183 = vsel %vm10159, %v10142, %v7873
    %v10184 = vsel %vm10159, %v10143, %v7875
    %v10185 = vsel %vm10159, %v10144, %v7877
    %v10186 = vsel %vm10159, %v10145, %v7879
    %v10187 = vsel %vm10159, %v10146, %v7881
    %v10188 = vsel %vm10159, %v10147, %v7883
    %v10189 = vsel %vm10159, %v10148, %v7885
    %v10190 = vsel %vm10159, %v10149, %v7887
    %v10191 = vsel %vm10159, %v10150, %v7889
    %v10192 = vsel %vm10159, %v10151, %v7891
    %v10193 = vsel %vm10159, %v10152, %v7893
    %v10194 = vsel %vm10159, %v10153, %v7895
    %v10195 = vsel %vm10159, %v10154, %v7897
    %v10196 = vsel %vm10159, %v10155, %v7899
    %v10197 = vsel %vm10159, %v10156, %v7901
    %v10198 = vsel %vm10159, %v10157, %v7903
    %v10199 = vsel %vm10159, %v10158, %v7905
    %vm10200 = vcmask 146432
    %v10201 = vsel %vm10200, %v10160, %v8127
    %v10202 = vsel %vm10200, %v10161, %v8129
    %v10203 = vsel %vm10200, %v10162, %v8131
    %v10204 = vsel %vm10200, %v10163, %v8133
    %v10205 = vsel %vm10200, %v10164, %v8135
    %v10206 = vsel %vm10200, %v10165, %v8137
    %v10207 = vsel %vm10200, %v10166, %v8139
    %v10208 = vsel %vm10200, %v10167, %v8141
    %v10209 = vsel %vm10200, %v10168, %v8143
    %v10210 = vsel %vm10200, %v10169, %v8145
    %v10211 = vsel %vm10200, %v10170, %v8147
    %v10212 = vsel %vm10200, %v10171, %v8149
    %v10213 = vsel %vm10200, %v10172, %v8151
    %v10214 = vsel %vm10200, %v10173, %v8153
    %v10215 = vsel %vm10200, %v10174, %v8155
    %v10216 = vsel %vm10200, %v10175, %v8157
    %v10217 = vsel %vm10200, %v10176, %v8159
    %v10218 = vsel %vm10200, %v10177, %v8161
    %v10219 = vsel %vm10200, %v10178, %v8163
    %v10220 = vsel %vm10200, %v10179, %v8165
    %v10221 = vsel %vm10200, %v10180, %v8167
    %v10222 = vsel %vm10200, %v10181, %v8169
    %v10223 = vsel %vm10200, %v10182, %v8171
    %v10224 = vsel %vm10200, %v10183, %v8173
    %v10225 = vsel %vm10200, %v10184, %v8175
    %v10226 = vsel %vm10200, %v10185, %v8177
    %v10227 = vsel %vm10200, %v10186, %v8179
    %v10228 = vsel %vm10200, %v10187, %v8181
    %v10229 = vsel %vm10200, %v10188, %v8183
    %v10230 = vsel %vm10200, %v10189, %v8185
    %v10231 = vsel %vm10200, %v10190, %v8187
    %v10232 = vsel %vm10200, %v10191, %v8189
    %v10233 = vsel %vm10200, %v10192, %v8191
    %v10234 = vsel %vm10200, %v10193, %v8193
    %v10235 = vsel %vm10200, %v10194, %v8195
    %v10236 = vsel %vm10200, %v10195, %v8197
    %v10237 = vsel %vm10200, %v10196, %v8199
    %v10238 = vsel %vm10200, %v10197, %v8201
    %v10239 = vsel %vm10200, %v10198, %v8203
    %v10240 = vsel %vm10200, %v10199, %v8205
    %vm10241 = vcmask 195584
    %v10242 = vsel %vm10241, %v10201, %v8427
    %v10243 = vsel %vm10241, %v10202, %v8429
    %v10244 = vsel %vm10241, %v10203, %v8431
    %v10245 = vsel %vm10241, %v10204, %v8433
    %v10246 = vsel %vm10241, %v10205, %v8435
    %v10247 = vsel %vm10241, %v10206, %v8437
    %v10248 = vsel %vm10241, %v10207, %v8439
    %v10249 = vsel %vm10241, %v10208, %v8441
    %v10250 = vsel %vm10241, %v10209, %v8443
    %v10251 = vsel %vm10241, %v10210, %v8445
    %v10252 = vsel %vm10241, %v10211, %v8447
    %v10253 = vsel %vm10241, %v10212, %v8449
    %v10254 = vsel %vm10241, %v10213, %v8451
    %v10255 = vsel %vm10241, %v10214, %v8453
    %v10256 = vsel %vm10241, %v10215, %v8455
    %v10257 = vsel %vm10241, %v10216, %v8457
    %v10258 = vsel %vm10241, %v10217, %v8459
    %v10259 = vsel %vm10241, %v10218, %v8461
    %v10260 = vsel %vm10241, %v10219, %v8463
    %v10261 = vsel %vm10241, %v10220, %v8465
    %v10262 = vsel %vm10241, %v10221, %v8467
    %v10263 = vsel %vm10241, %v10222, %v8469
    %v10264 = vsel %vm10241, %v10223, %v8471
    %v10265 = vsel %vm10241, %v10224, %v8473
    %v10266 = vsel %vm10241, %v10225, %v8475
    %v10267 = vsel %vm10241, %v10226, %v8477
    %v10268 = vsel %vm10241, %v10227, %v8479
    %v10269 = vsel %vm10241, %v10228, %v8481
    %v10270 = vsel %vm10241, %v10229, %v8483
    %v10271 = vsel %vm10241, %v10230, %v8485
    %v10272 = vsel %vm10241, %v10231, %v8487
    %v10273 = vsel %vm10241, %v10232, %v8489
    %v10274 = vsel %vm10241, %v10233, %v8491
    %v10275 = vsel %vm10241, %v10234, %v8493
    %v10276 = vsel %vm10241, %v10235, %v8495
    %v10277 = vsel %vm10241, %v10236, %v8497
    %v10278 = vsel %vm10241, %v10237, %v8499
    %v10279 = vsel %vm10241, %v10238, %v8501
    %v10280 = vsel %vm10241, %v10239, %v8503
    %v10281 = vsel %vm10241, %v10240, %v8505
    %vm10282 = vcmask 244736
    %v10283 = vsel %vm10282, %v10242, %v8583
    %v10284 = vsel %vm10282, %v10243, %v8585
    %v10285 = vsel %vm10282, %v10244, %v8587
    %v10286 = vsel %vm10282, %v10245, %v8589
    %v10287 = vsel %vm10282, %v10246, %v8591
    %v10288 = vsel %vm10282, %v10247, %v8593
    %v10289 = vsel %vm10282, %v10248, %v8595
    %v10290 = vsel %vm10282, %v10249, %v8597
    %v10291 = vsel %vm10282, %v10250, %v8599
    %v10292 = vsel %vm10282, %v10251, %v8601
    %v10293 = vsel %vm10282, %v10252, %v8603
    %v10294 = vsel %vm10282, %v10253, %v8605
    %v10295 = vsel %vm10282, %v10254, %v8607
    %v10296 = vsel %vm10282, %v10255, %v8609
    %v10297 = vsel %vm10282, %v10256, %v8611
    %v10298 = vsel %vm10282, %v10257, %v8613
    %v10299 = vsel %vm10282, %v10258, %v8615
    %v10300 = vsel %vm10282, %v10259, %v8617
    %v10301 = vsel %vm10282, %v10260, %v8619
    %v10302 = vsel %vm10282, %v10261, %v8621
    %v10303 = vsel %vm10282, %v10262, %v8623
    %v10304 = vsel %vm10282, %v10263, %v8625
    %v10305 = vsel %vm10282, %v10264, %v8627
    %v10306 = vsel %vm10282, %v10265, %v8629
    %v10307 = vsel %vm10282, %v10266, %v8631
    %v10308 = vsel %vm10282, %v10267, %v8633
    %v10309 = vsel %vm10282, %v10268, %v8635
    %v10310 = vsel %vm10282, %v10269, %v8637
    %v10311 = vsel %vm10282, %v10270, %v8639
    %v10312 = vsel %vm10282, %v10271, %v8641
    %v10313 = vsel %vm10282, %v10272, %v8643
    %v10314 = vsel %vm10282, %v10273, %v8645
    %v10315 = vsel %vm10282, %v10274, %v8647
    %v10316 = vsel %vm10282, %v10275, %v8649
    %v10317 = vsel %vm10282, %v10276, %v8651
    %v10318 = vsel %vm10282, %v10277, %v8653
    %v10319 = vsel %vm10282, %v10278, %v8655
    %v10320 = vsel %vm10282, %v10279, %v8657
    %v10321 = vsel %vm10282, %v10280, %v8659
    %v10322 = vsel %vm10282, %v10281, %v8661
    %vm10323 = vcmask 293888
    %v10324 = vsel %vm10323, %v10283, %v8721
    %v10325 = vsel %vm10323, %v10284, %v8723
    %v10326 = vsel %vm10323, %v10285, %v8725
    %v10327 = vsel %vm10323, %v10286, %v8727
    %v10328 = vsel %vm10323, %v10287, %v8729
    %v10329 = vsel %vm10323, %v10288, %v8731
    %v10330 = vsel %vm10323, %v10289, %v8733
    %v10331 = vsel %vm10323, %v10290, %v8735
    %v10332 = vsel %vm10323, %v10291, %v8737
    %v10333 = vsel %vm10323, %v10292, %v8739
    %v10334 = vsel %vm10323, %v10293, %v8741
    %v10335 = vsel %vm10323, %v10294, %v8743
    %v10336 = vsel %vm10323, %v10295, %v8745
    %v10337 = vsel %vm10323, %v10296, %v8747
    %v10338 = vsel %vm10323, %v10297, %v8749
    %v10339 = vsel %vm10323, %v10298, %v8751
    %v10340 = vsel %vm10323, %v10299, %v8753
    %v10341 = vsel %vm10323, %v10300, %v8755
    %v10342 = vsel %vm10323, %v10301, %v8757
    %v10343 = vsel %vm10323, %v10302, %v8759
    %v10344 = vsel %vm10323, %v10303, %v8761
    %v10345 = vsel %vm10323, %v10304, %v8763
    %v10346 = vsel %vm10323, %v10305, %v8765
    %v10347 = vsel %vm10323, %v10306, %v8767
    %v10348 = vsel %vm10323, %v10307, %v8769
    %v10349 = vsel %vm10323, %v10308, %v8771
    %v10350 = vsel %vm10323, %v10309, %v8773
    %v10351 = vsel %vm10323, %v10310, %v8775
    %v10352 = vsel %vm10323, %v10311, %v8777
    %v10353 = vsel %vm10323, %v10312, %v8779
    %v10354 = vsel %vm10323, %v10313, %v8781
    %v10355 = vsel %vm10323, %v10314, %v8783
    %v10356 = vsel %vm10323, %v10315, %v8785
    %v10357 = vsel %vm10323, %v10316, %v8787
    %v10358 = vsel %vm10323, %v10317, %v8789
    %v10359 = vsel %vm10323, %v10318, %v8791
    %v10360 = vsel %vm10323, %v10319, %v8793
    %v10361 = vsel %vm10323, %v10320, %v8795
    %v10362 = vsel %vm10323, %v10321, %v8797
    %v10363 = vsel %vm10323, %v10322, %v8799
    %vm10364 = vcmask 343040
    %v10365 = vsel %vm10364, %v10324, %v8859
    %v10366 = vsel %vm10364, %v10325, %v8861
    %v10367 = vsel %vm10364, %v10326, %v8863
    %v10368 = vsel %vm10364, %v10327, %v8865
    %v10369 = vsel %vm10364, %v10328, %v8867
    %v10370 = vsel %vm10364, %v10329, %v8869
    %v10371 = vsel %vm10364, %v10330, %v8871
    %v10372 = vsel %vm10364, %v10331, %v8873
    %v10373 = vsel %vm10364, %v10332, %v8875
    %v10374 = vsel %vm10364, %v10333, %v8877
    %v10375 = vsel %vm10364, %v10334, %v8879
    %v10376 = vsel %vm10364, %v10335, %v8881
    %v10377 = vsel %vm10364, %v10336, %v8883
    %v10378 = vsel %vm10364, %v10337, %v8885
    %v10379 = vsel %vm10364, %v10338, %v8887
    %v10380 = vsel %vm10364, %v10339, %v8889
    %v10381 = vsel %vm10364, %v10340, %v8891
    %v10382 = vsel %vm10364, %v10341, %v8893
    %v10383 = vsel %vm10364, %v10342, %v8895
    %v10384 = vsel %vm10364, %v10343, %v8897
    %v10385 = vsel %vm10364, %v10344, %v8899
    %v10386 = vsel %vm10364, %v10345, %v8901
    %v10387 = vsel %vm10364, %v10346, %v8903
    %v10388 = vsel %vm10364, %v10347, %v8905
    %v10389 = vsel %vm10364, %v10348, %v8907
    %v10390 = vsel %vm10364, %v10349, %v8909
    %v10391 = vsel %vm10364, %v10350, %v8911
    %v10392 = vsel %vm10364, %v10351, %v8913
    %v10393 = vsel %vm10364, %v10352, %v8915
    %v10394 = vsel %vm10364, %v10353, %v8917
    %v10395 = vsel %vm10364, %v10354, %v8919
    %v10396 = vsel %vm10364, %v10355, %v8921
    %v10397 = vsel %vm10364, %v10356, %v8923
    %v10398 = vsel %vm10364, %v10357, %v8925
    %v10399 = vsel %vm10364, %v10358, %v8927
    %v10400 = vsel %vm10364, %v10359, %v8929
    %v10401 = vsel %vm10364, %v10360, %v8931
    %v10402 = vsel %vm10364, %v10361, %v8933
    %v10403 = vsel %vm10364, %v10362, %v8935
    %v10404 = vsel %vm10364, %v10363, %v8937
    %vm10405 = vcmask 392192
    %v10406 = vsel %vm10405, %v10365, %v8997
    %v10407 = vsel %vm10405, %v10366, %v8999
    %v10408 = vsel %vm10405, %v10367, %v9001
    %v10409 = vsel %vm10405, %v10368, %v9003
    %v10410 = vsel %vm10405, %v10369, %v9005
    %v10411 = vsel %vm10405, %v10370, %v9007
    %v10412 = vsel %vm10405, %v10371, %v9009
    %v10413 = vsel %vm10405, %v10372, %v9011
    %v10414 = vsel %vm10405, %v10373, %v9013
    %v10415 = vsel %vm10405, %v10374, %v9015
    %v10416 = vsel %vm10405, %v10375, %v9017
    %v10417 = vsel %vm10405, %v10376, %v9019
    %v10418 = vsel %vm10405, %v10377, %v9021
    %v10419 = vsel %vm10405, %v10378, %v9023
    %v10420 = vsel %vm10405, %v10379, %v9025
    %v10421 = vsel %vm10405, %v10380, %v9027
    %v10422 = vsel %vm10405, %v10381, %v9029
    %v10423 = vsel %vm10405, %v10382, %v9031
    %v10424 = vsel %vm10405, %v10383, %v9033
    %v10425 = vsel %vm10405, %v10384, %v9035
    %v10426 = vsel %vm10405, %v10385, %v9037
    %v10427 = vsel %vm10405, %v10386, %v9039
    %v10428 = vsel %vm10405, %v10387, %v9041
    %v10429 = vsel %vm10405, %v10388, %v9043
    %v10430 = vsel %vm10405, %v10389, %v9045
    %v10431 = vsel %vm10405, %v10390, %v9047
    %v10432 = vsel %vm10405, %v10391, %v9049
    %v10433 = vsel %vm10405, %v10392, %v9051
    %v10434 = vsel %vm10405, %v10393, %v9053
    %v10435 = vsel %vm10405, %v10394, %v9055
    %v10436 = vsel %vm10405, %v10395, %v9057
    %v10437 = vsel %vm10405, %v10396, %v9059
    %v10438 = vsel %vm10405, %v10397, %v9061
    %v10439 = vsel %vm10405, %v10398, %v9063
    %v10440 = vsel %vm10405, %v10399, %v9065
    %v10441 = vsel %vm10405, %v10400, %v9067
    %v10442 = vsel %vm10405, %v10401, %v9069
    %v10443 = vsel %vm10405, %v10402, %v9071
    %v10444 = vsel %vm10405, %v10403, %v9073
    %v10445 = vsel %vm10405, %v10404, %v9075
    %vm10446 = vcmask 441344
    %v10447 = vsel %vm10446, %v10406, %v9135
    %v10448 = vsel %vm10446, %v10407, %v9137
    %v10449 = vsel %vm10446, %v10408, %v9139
    %v10450 = vsel %vm10446, %v10409, %v9141
    %v10451 = vsel %vm10446, %v10410, %v9143
    %v10452 = vsel %vm10446, %v10411, %v9145
    %v10453 = vsel %vm10446, %v10412, %v9147
    %v10454 = vsel %vm10446, %v10413, %v9149
    %v10455 = vsel %vm10446, %v10414, %v9151
    %v10456 = vsel %vm10446, %v10415, %v9153
    %v10457 = vsel %vm10446, %v10416, %v9155
    %v10458 = vsel %vm10446, %v10417, %v9157
    %v10459 = vsel %vm10446, %v10418, %v9159
    %v10460 = vsel %vm10446, %v10419, %v9161
    %v10461 = vsel %vm10446, %v10420, %v9163
    %v10462 = vsel %vm10446, %v10421, %v9165
    %v10463 = vsel %vm10446, %v10422, %v9167
    %v10464 = vsel %vm10446, %v10423, %v9169
    %v10465 = vsel %vm10446, %v10424, %v9171
    %v10466 = vsel %vm10446, %v10425, %v9173
    %v10467 = vsel %vm10446, %v10426, %v9175
    %v10468 = vsel %vm10446, %v10427, %v9177
    %v10469 = vsel %vm10446, %v10428, %v9179
    %v10470 = vsel %vm10446, %v10429, %v9181
    %v10471 = vsel %vm10446, %v10430, %v9183
    %v10472 = vsel %vm10446, %v10431, %v9185
    %v10473 = vsel %vm10446, %v10432, %v9187
    %v10474 = vsel %vm10446, %v10433, %v9189
    %v10475 = vsel %vm10446, %v10434, %v9191
    %v10476 = vsel %vm10446, %v10435, %v9193
    %v10477 = vsel %vm10446, %v10436, %v9195
    %v10478 = vsel %vm10446, %v10437, %v9197
    %v10479 = vsel %vm10446, %v10438, %v9199
    %v10480 = vsel %vm10446, %v10439, %v9201
    %v10481 = vsel %vm10446, %v10440, %v9203
    %v10482 = vsel %vm10446, %v10441, %v9205
    %v10483 = vsel %vm10446, %v10442, %v9207
    %v10484 = vsel %vm10446, %v10443, %v9209
    %v10485 = vsel %vm10446, %v10444, %v9211
    %v10486 = vsel %vm10446, %v10445, %v9213
    %vm10487 = vcmask 490496
    %v10488 = vsel %vm10487, %v10447, %v9291
    %v10489 = vsel %vm10487, %v10448, %v9293
    %v10490 = vsel %vm10487, %v10449, %v9295
    %v10491 = vsel %vm10487, %v10450, %v9297
    %v10492 = vsel %vm10487, %v10451, %v9299
    %v10493 = vsel %vm10487, %v10452, %v9301
    %v10494 = vsel %vm10487, %v10453, %v9303
    %v10495 = vsel %vm10487, %v10454, %v9305
    %v10496 = vsel %vm10487, %v10455, %v9307
    %v10497 = vsel %vm10487, %v10456, %v9309
    %v10498 = vsel %vm10487, %v10457, %v9311
    %v10499 = vsel %vm10487, %v10458, %v9313
    %v10500 = vsel %vm10487, %v10459, %v9315
    %v10501 = vsel %vm10487, %v10460, %v9317
    %v10502 = vsel %vm10487, %v10461, %v9319
    %v10503 = vsel %vm10487, %v10462, %v9321
    %v10504 = vsel %vm10487, %v10463, %v9323
    %v10505 = vsel %vm10487, %v10464, %v9325
    %v10506 = vsel %vm10487, %v10465, %v9327
    %v10507 = vsel %vm10487, %v10466, %v9329
    %v10508 = vsel %vm10487, %v10467, %v9331
    %v10509 = vsel %vm10487, %v10468, %v9333
    %v10510 = vsel %vm10487, %v10469, %v9335
    %v10511 = vsel %vm10487, %v10470, %v9337
    %v10512 = vsel %vm10487, %v10471, %v9339
    %v10513 = vsel %vm10487, %v10472, %v9341
    %v10514 = vsel %vm10487, %v10473, %v9343
    %v10515 = vsel %vm10487, %v10474, %v9345
    %v10516 = vsel %vm10487, %v10475, %v9347
    %v10517 = vsel %vm10487, %v10476, %v9349
    %v10518 = vsel %vm10487, %v10477, %v9351
    %v10519 = vsel %vm10487, %v10478, %v9353
    %v10520 = vsel %vm10487, %v10479, %v9355
    %v10521 = vsel %vm10487, %v10480, %v9357
    %v10522 = vsel %vm10487, %v10481, %v9359
    %v10523 = vsel %vm10487, %v10482, %v9361
    %v10524 = vsel %vm10487, %v10483, %v9363
    %v10525 = vsel %vm10487, %v10484, %v9365
    %v10526 = vsel %vm10487, %v10485, %v9367
    %v10527 = vsel %vm10487, %v10486, %v9369
    %vm10528 = vcmask 539648
    %v10529 = vsel %vm10528, %v10488, %v9429
    %v10530 = vsel %vm10528, %v10489, %v9431
    %v10531 = vsel %vm10528, %v10490, %v9433
    %v10532 = vsel %vm10528, %v10491, %v9435
    %v10533 = vsel %vm10528, %v10492, %v9437
    %v10534 = vsel %vm10528, %v10493, %v9439
    %v10535 = vsel %vm10528, %v10494, %v9441
    %v10536 = vsel %vm10528, %v10495, %v9443
    %v10537 = vsel %vm10528, %v10496, %v9445
    %v10538 = vsel %vm10528, %v10497, %v9447
    %v10539 = vsel %vm10528, %v10498, %v9449
    %v10540 = vsel %vm10528, %v10499, %v9451
    %v10541 = vsel %vm10528, %v10500, %v9453
    %v10542 = vsel %vm10528, %v10501, %v9455
    %v10543 = vsel %vm10528, %v10502, %v9457
    %v10544 = vsel %vm10528, %v10503, %v9459
    %v10545 = vsel %vm10528, %v10504, %v9461
    %v10546 = vsel %vm10528, %v10505, %v9463
    %v10547 = vsel %vm10528, %v10506, %v9465
    %v10548 = vsel %vm10528, %v10507, %v9467
    %v10549 = vsel %vm10528, %v10508, %v9469
    %v10550 = vsel %vm10528, %v10509, %v9471
    %v10551 = vsel %vm10528, %v10510, %v9473
    %v10552 = vsel %vm10528, %v10511, %v9475
    %v10553 = vsel %vm10528, %v10512, %v9477
    %v10554 = vsel %vm10528, %v10513, %v9479
    %v10555 = vsel %vm10528, %v10514, %v9481
    %v10556 = vsel %vm10528, %v10515, %v9483
    %v10557 = vsel %vm10528, %v10516, %v9485
    %v10558 = vsel %vm10528, %v10517, %v9487
    %v10559 = vsel %vm10528, %v10518, %v9489
    %v10560 = vsel %vm10528, %v10519, %v9491
    %v10561 = vsel %vm10528, %v10520, %v9493
    %v10562 = vsel %vm10528, %v10521, %v9495
    %v10563 = vsel %vm10528, %v10522, %v9497
    %v10564 = vsel %vm10528, %v10523, %v9499
    %v10565 = vsel %vm10528, %v10524, %v9501
    %v10566 = vsel %vm10528, %v10525, %v9503
    %v10567 = vsel %vm10528, %v10526, %v9505
    %v10568 = vsel %vm10528, %v10527, %v9507
    %vm10569 = vcmask 588800
    %v10570 = vsel %vm10569, %v10529, %v9567
    %v10571 = vsel %vm10569, %v10530, %v9569
    %v10572 = vsel %vm10569, %v10531, %v9571
    %v10573 = vsel %vm10569, %v10532, %v9573
    %v10574 = vsel %vm10569, %v10533, %v9575
    %v10575 = vsel %vm10569, %v10534, %v9577
    %v10576 = vsel %vm10569, %v10535, %v9579
    %v10577 = vsel %vm10569, %v10536, %v9581
    %v10578 = vsel %vm10569, %v10537, %v9583
    %v10579 = vsel %vm10569, %v10538, %v9585
    %v10580 = vsel %vm10569, %v10539, %v9587
    %v10581 = vsel %vm10569, %v10540, %v9589
    %v10582 = vsel %vm10569, %v10541, %v9591
    %v10583 = vsel %vm10569, %v10542, %v9593
    %v10584 = vsel %vm10569, %v10543, %v9595
    %v10585 = vsel %vm10569, %v10544, %v9597
    %v10586 = vsel %vm10569, %v10545, %v9599
    %v10587 = vsel %vm10569, %v10546, %v9601
    %v10588 = vsel %vm10569, %v10547, %v9603
    %v10589 = vsel %vm10569, %v10548, %v9605
    %v10590 = vsel %vm10569, %v10549, %v9607
    %v10591 = vsel %vm10569, %v10550, %v9609
    %v10592 = vsel %vm10569, %v10551, %v9611
    %v10593 = vsel %vm10569, %v10552, %v9613
    %v10594 = vsel %vm10569, %v10553, %v9615
    %v10595 = vsel %vm10569, %v10554, %v9617
    %v10596 = vsel %vm10569, %v10555, %v9619
    %v10597 = vsel %vm10569, %v10556, %v9621
    %v10598 = vsel %vm10569, %v10557, %v9623
    %v10599 = vsel %vm10569, %v10558, %v9625
    %v10600 = vsel %vm10569, %v10559, %v9627
    %v10601 = vsel %vm10569, %v10560, %v9629
    %v10602 = vsel %vm10569, %v10561, %v9631
    %v10603 = vsel %vm10569, %v10562, %v9633
    %v10604 = vsel %vm10569, %v10563, %v9635
    %v10605 = vsel %vm10569, %v10564, %v9637
    %v10606 = vsel %vm10569, %v10565, %v9639
    %v10607 = vsel %vm10569, %v10566, %v9641
    %v10608 = vsel %vm10569, %v10567, %v9643
    %v10609 = vsel %vm10569, %v10568, %v9645
    %vm10610 = vcmask 637952
    %v10611 = vsel %vm10610, %v10570, %v9705
    %v10612 = vsel %vm10610, %v10571, %v9707
    %v10613 = vsel %vm10610, %v10572, %v9709
    %v10614 = vsel %vm10610, %v10573, %v9711
    %v10615 = vsel %vm10610, %v10574, %v9713
    %v10616 = vsel %vm10610, %v10575, %v9715
    %v10617 = vsel %vm10610, %v10576, %v9717
    %v10618 = vsel %vm10610, %v10577, %v9719
    %v10619 = vsel %vm10610, %v10578, %v9721
    %v10620 = vsel %vm10610, %v10579, %v9723
    %v10621 = vsel %vm10610, %v10580, %v9725
    %v10622 = vsel %vm10610, %v10581, %v9727
    %v10623 = vsel %vm10610, %v10582, %v9729
    %v10624 = vsel %vm10610, %v10583, %v9731
    %v10625 = vsel %vm10610, %v10584, %v9733
    %v10626 = vsel %vm10610, %v10585, %v9735
    %v10627 = vsel %vm10610, %v10586, %v9737
    %v10628 = vsel %vm10610, %v10587, %v9739
    %v10629 = vsel %vm10610, %v10588, %v9741
    %v10630 = vsel %vm10610, %v10589, %v9743
    %v10631 = vsel %vm10610, %v10590, %v9745
    %v10632 = vsel %vm10610, %v10591, %v9747
    %v10633 = vsel %vm10610, %v10592, %v9749
    %v10634 = vsel %vm10610, %v10593, %v9751
    %v10635 = vsel %vm10610, %v10594, %v9753
    %v10636 = vsel %vm10610, %v10595, %v9755
    %v10637 = vsel %vm10610, %v10596, %v9757
    %v10638 = vsel %vm10610, %v10597, %v9759
    %v10639 = vsel %vm10610, %v10598, %v9761
    %v10640 = vsel %vm10610, %v10599, %v9763
    %v10641 = vsel %vm10610, %v10600, %v9765
    %v10642 = vsel %vm10610, %v10601, %v9767
    %v10643 = vsel %vm10610, %v10602, %v9769
    %v10644 = vsel %vm10610, %v10603, %v9771
    %v10645 = vsel %vm10610, %v10604, %v9773
    %v10646 = vsel %vm10610, %v10605, %v9775
    %v10647 = vsel %vm10610, %v10606, %v9777
    %v10648 = vsel %vm10610, %v10607, %v9779
    %v10649 = vsel %vm10610, %v10608, %v9781
    %v10650 = vsel %vm10610, %v10609, %v9783
    %vm10651 = vcmask 687104
    %v10652 = vsel %vm10651, %v10611, %v9843
    %v10653 = vsel %vm10651, %v10612, %v9845
    %v10654 = vsel %vm10651, %v10613, %v9847
    %v10655 = vsel %vm10651, %v10614, %v9849
    %v10656 = vsel %vm10651, %v10615, %v9851
    %v10657 = vsel %vm10651, %v10616, %v9853
    %v10658 = vsel %vm10651, %v10617, %v9855
    %v10659 = vsel %vm10651, %v10618, %v9857
    %v10660 = vsel %vm10651, %v10619, %v9859
    %v10661 = vsel %vm10651, %v10620, %v9861
    %v10662 = vsel %vm10651, %v10621, %v9863
    %v10663 = vsel %vm10651, %v10622, %v9865
    %v10664 = vsel %vm10651, %v10623, %v9867
    %v10665 = vsel %vm10651, %v10624, %v9869
    %v10666 = vsel %vm10651, %v10625, %v9871
    %v10667 = vsel %vm10651, %v10626, %v9873
    %v10668 = vsel %vm10651, %v10627, %v9875
    %v10669 = vsel %vm10651, %v10628, %v9877
    %v10670 = vsel %vm10651, %v10629, %v9879
    %v10671 = vsel %vm10651, %v10630, %v9881
    %v10672 = vsel %vm10651, %v10631, %v9883
    %v10673 = vsel %vm10651, %v10632, %v9885
    %v10674 = vsel %vm10651, %v10633, %v9887
    %v10675 = vsel %vm10651, %v10634, %v9889
    %v10676 = vsel %vm10651, %v10635, %v9891
    %v10677 = vsel %vm10651, %v10636, %v9893
    %v10678 = vsel %vm10651, %v10637, %v9895
    %v10679 = vsel %vm10651, %v10638, %v9897
    %v10680 = vsel %vm10651, %v10639, %v9899
    %v10681 = vsel %vm10651, %v10640, %v9901
    %v10682 = vsel %vm10651, %v10641, %v9903
    %v10683 = vsel %vm10651, %v10642, %v9905
    %v10684 = vsel %vm10651, %v10643, %v9907
    %v10685 = vsel %vm10651, %v10644, %v9909
    %v10686 = vsel %vm10651, %v10645, %v9911
    %v10687 = vsel %vm10651, %v10646, %v9913
    %v10688 = vsel %vm10651, %v10647, %v9915
    %v10689 = vsel %vm10651, %v10648, %v9917
    %v10690 = vsel %vm10651, %v10649, %v9919
    %v10691 = vsel %vm10651, %v10650, %v9921
    %vm10692 = vcmask 736256
    %v10693 = vsel %vm10692, %v10652, %v9999
    %v10694 = vsel %vm10692, %v10653, %v10001
    %v10695 = vsel %vm10692, %v10654, %v10003
    %v10696 = vsel %vm10692, %v10655, %v10005
    %v10697 = vsel %vm10692, %v10656, %v10007
    %v10698 = vsel %vm10692, %v10657, %v10009
    %v10699 = vsel %vm10692, %v10658, %v10011
    %v10700 = vsel %vm10692, %v10659, %v10013
    %v10701 = vsel %vm10692, %v10660, %v10015
    %v10702 = vsel %vm10692, %v10661, %v10017
    %v10703 = vsel %vm10692, %v10662, %v10019
    %v10704 = vsel %vm10692, %v10663, %v10021
    %v10705 = vsel %vm10692, %v10664, %v10023
    %v10706 = vsel %vm10692, %v10665, %v10025
    %v10707 = vsel %vm10692, %v10666, %v10027
    %v10708 = vsel %vm10692, %v10667, %v10029
    %v10709 = vsel %vm10692, %v10668, %v10031
    %v10710 = vsel %vm10692, %v10669, %v10033
    %v10711 = vsel %vm10692, %v10670, %v10035
    %v10712 = vsel %vm10692, %v10671, %v10037
    %v10713 = vsel %vm10692, %v10672, %v10039
    %v10714 = vsel %vm10692, %v10673, %v10041
    %v10715 = vsel %vm10692, %v10674, %v10043
    %v10716 = vsel %vm10692, %v10675, %v10045
    %v10717 = vsel %vm10692, %v10676, %v10047
    %v10718 = vsel %vm10692, %v10677, %v10049
    %v10719 = vsel %vm10692, %v10678, %v10051
    %v10720 = vsel %vm10692, %v10679, %v10053
    %v10721 = vsel %vm10692, %v10680, %v10055
    %v10722 = vsel %vm10692, %v10681, %v10057
    %v10723 = vsel %vm10692, %v10682, %v10059
    %v10724 = vsel %vm10692, %v10683, %v10061
    %v10725 = vsel %vm10692, %v10684, %v10063
    %v10726 = vsel %vm10692, %v10685, %v10065
    %v10727 = vsel %vm10692, %v10686, %v10067
    %v10728 = vsel %vm10692, %v10687, %v10069
    %v10729 = vsel %vm10692, %v10688, %v10071
    %v10730 = vsel %vm10692, %v10689, %v10073
    %v10731 = vsel %vm10692, %v10690, %v10075
    %v10732 = vsel %vm10692, %v10691, %v10077
    %v10735 = vsel %vm7139, %v5391, %v5384
    %v10736 = vsel %vm7141, %v5398, %v10735
    %v10737 = vsel %vm7143, %v5405, %v10736
    %v10738 = vsel %vm7145, %v5412, %v10737
    %v10739 = vsel %vm7147, %v5419, %v10738
    %v10740 = vsel %vm7149, %v5426, %v10739
    %v10741 = vsel %vm7151, %v5433, %v10740
    %v10742 = vsel %vm7139, %v5447, %v5440
    %v10743 = vsel %vm7139, %v6763, %v6756
    %v10744 = vsel %vm7141, %v6770, %v10743
    %v10745 = vsel %vm7143, %v6777, %v10744
    %v10746 = vsel %vm7145, %v6784, %v10745
    %v10747 = vsel %vm7147, %v6791, %v10746
    %v10748 = vsel %vm7149, %v6798, %v10747
    %v10749 = vsel %vm7151, %v6805, %v10748
    %v10750 = vsel %vm7139, %v6819, %v6812
    %v10793 = vsel %vm7139, %v5398, %v5391
    %v10794 = vsel %vm7141, %v5405, %v10793
    %v10795 = vsel %vm7143, %v5412, %v10794
    %v10796 = vsel %vm7145, %v5419, %v10795
    %v10797 = vsel %vm7147, %v5426, %v10796
    %v10798 = vsel %vm7149, %v5433, %v10797
    %v10799 = vsel %vm7151, %v5440, %v10798
    %v10800 = vsel %vm7139, %v5454, %v5447
    %v10801 = vsel %vm7139, %v6770, %v6763
    %v10802 = vsel %vm7141, %v6777, %v10801
    %v10803 = vsel %vm7143, %v6784, %v10802
    %v10804 = vsel %vm7145, %v6791, %v10803
    %v10805 = vsel %vm7147, %v6798, %v10804
    %v10806 = vsel %vm7149, %v6805, %v10805
    %v10807 = vsel %vm7151, %v6812, %v10806
    %v10808 = vsel %vm7139, %v6826, %v6819
    %10809 = vrot.lane.b32.xlu0 %v7696, 6
    %v10810 = vpop.permute.xlu0 %10809
    %10811 = vrot.lane.b32.xlu0 %v7697, 6
    %v10812 = vpop.permute.xlu0 %10811
    %10813 = vrot.lane.b32.xlu0 %v7704, 6
    %v10814 = vpop.permute.xlu0 %10813
    %10815 = vrot.lane.b32.xlu0 %v7705, 6
    %v10816 = vpop.permute.xlu0 %10815
    %10817 = vrot.lane.b32.xlu0 %v7712, 6
    %v10818 = vpop.permute.xlu0 %10817
    %10819 = vrot.lane.b32.xlu0 %v7713, 6
    %v10820 = vpop.permute.xlu0 %10819
    %10821 = vrot.lane.b32.xlu0 %v7720, 6
    %v10822 = vpop.permute.xlu0 %10821
    %10823 = vrot.lane.b32.xlu0 %v7721, 6
    %v10824 = vpop.permute.xlu0 %10823
    %10825 = vrot.lane.b32.xlu0 %v7728, 6
    %v10826 = vpop.permute.xlu0 %10825
    %10827 = vrot.lane.b32.xlu0 %v7729, 6
    %v10828 = vpop.permute.xlu0 %10827
    %10829 = vrot.lane.b32.xlu0 %v7736, 6
    %v10830 = vpop.permute.xlu0 %10829
    %10831 = vrot.lane.b32.xlu0 %v7737, 6
    %v10832 = vpop.permute.xlu0 %10831
    %10833 = vrot.lane.b32.xlu0 %v7744, 6
    %v10834 = vpop.permute.xlu0 %10833
    %10835 = vrot.lane.b32.xlu0 %v7745, 6
    %v10836 = vpop.permute.xlu0 %10835
    %10837 = vrot.lane.b32.xlu0 %v8848, 6
    %v10838 = vpop.permute.xlu0 %10837
    %10839 = vrot.lane.b32.xlu0 %v8849, 6
    %v10840 = vpop.permute.xlu0 %10839
    %10841 = vrot.lane.b32.xlu0 %v9556, 6
    %v10842 = vpop.permute.xlu0 %10841
    %10843 = vrot.lane.b32.xlu0 %v9557, 6
    %v10844 = vpop.permute.xlu0 %10843
    %10845 = vrot.lane.b32.xlu0 %v10799, 6
    %v10846 = vpop.permute.xlu0 %10845
    %10847 = vrot.lane.b32.xlu0 %v10800, 6
    %v10848 = vpop.permute.xlu0 %10847
    %10849 = vrot.lane.b32.xlu0 %v7776, 6
    %v10850 = vpop.permute.xlu0 %10849
    %10851 = vrot.lane.b32.xlu0 %v7777, 6
    %v10852 = vpop.permute.xlu0 %10851
    %10853 = vrot.lane.b32.xlu0 %v7784, 6
    %v10854 = vpop.permute.xlu0 %10853
    %10855 = vrot.lane.b32.xlu0 %v7785, 6
    %v10856 = vpop.permute.xlu0 %10855
    %10857 = vrot.lane.b32.xlu0 %v7792, 6
    %v10858 = vpop.permute.xlu0 %10857
    %10859 = vrot.lane.b32.xlu0 %v7793, 6
    %v10860 = vpop.permute.xlu0 %10859
    %10861 = vrot.lane.b32.xlu0 %v7800, 6
    %v10862 = vpop.permute.xlu0 %10861
    %10863 = vrot.lane.b32.xlu0 %v7801, 6
    %v10864 = vpop.permute.xlu0 %10863
    %10865 = vrot.lane.b32.xlu0 %v7808, 6
    %v10866 = vpop.permute.xlu0 %10865
    %10867 = vrot.lane.b32.xlu0 %v7809, 6
    %v10868 = vpop.permute.xlu0 %10867
    %10869 = vrot.lane.b32.xlu0 %v7816, 6
    %v10870 = vpop.permute.xlu0 %10869
    %10871 = vrot.lane.b32.xlu0 %v7817, 6
    %v10872 = vpop.permute.xlu0 %10871
    %10873 = vrot.lane.b32.xlu0 %v7824, 6
    %v10874 = vpop.permute.xlu0 %10873
    %10875 = vrot.lane.b32.xlu0 %v7825, 6
    %v10876 = vpop.permute.xlu0 %10875
    %10877 = vrot.lane.b32.xlu0 %v8856, 6
    %v10878 = vpop.permute.xlu0 %10877
    %10879 = vrot.lane.b32.xlu0 %v8857, 6
    %v10880 = vpop.permute.xlu0 %10879
    %10881 = vrot.lane.b32.xlu0 %v9564, 6
    %v10882 = vpop.permute.xlu0 %10881
    %10883 = vrot.lane.b32.xlu0 %v9565, 6
    %v10884 = vpop.permute.xlu0 %10883
    %10885 = vrot.lane.b32.xlu0 %v10807, 6
    %v10886 = vpop.permute.xlu0 %10885
    %10887 = vrot.lane.b32.xlu0 %v10808, 6
    %v10888 = vpop.permute.xlu0 %10887
    %v10931 = vsel %vm7139, %v5405, %v5398
    %v10932 = vsel %vm7141, %v5412, %v10931
    %v10933 = vsel %vm7143, %v5419, %v10932
    %v10934 = vsel %vm7145, %v5426, %v10933
    %v10935 = vsel %vm7147, %v5433, %v10934
    %v10936 = vsel %vm7149, %v5440, %v10935
    %v10937 = vsel %vm7151, %v5447, %v10936
    %v10938 = vsel %vm7139, %v5461, %v5454
    %v10939 = vsel %vm7139, %v6777, %v6770
    %v10940 = vsel %vm7141, %v6784, %v10939
    %v10941 = vsel %vm7143, %v6791, %v10940
    %v10942 = vsel %vm7145, %v6798, %v10941
    %v10943 = vsel %vm7147, %v6805, %v10942
    %v10944 = vsel %vm7149, %v6812, %v10943
    %v10945 = vsel %vm7151, %v6819, %v10944
    %v10946 = vsel %vm7139, %v6833, %v6826
    %10947 = vrot.lane.b32.xlu0 %v7996, 12
    %v10948 = vpop.permute.xlu0 %10947
    %10949 = vrot.lane.b32.xlu0 %v7997, 12
    %v10950 = vpop.permute.xlu0 %10949
    %10951 = vrot.lane.b32.xlu0 %v8004, 12
    %v10952 = vpop.permute.xlu0 %10951
    %10953 = vrot.lane.b32.xlu0 %v8005, 12
    %v10954 = vpop.permute.xlu0 %10953
    %10955 = vrot.lane.b32.xlu0 %v8012, 12
    %v10956 = vpop.permute.xlu0 %10955
    %10957 = vrot.lane.b32.xlu0 %v8013, 12
    %v10958 = vpop.permute.xlu0 %10957
    %10959 = vrot.lane.b32.xlu0 %v8020, 12
    %v10960 = vpop.permute.xlu0 %10959
    %10961 = vrot.lane.b32.xlu0 %v8021, 12
    %v10962 = vpop.permute.xlu0 %10961
    %10963 = vrot.lane.b32.xlu0 %v8028, 12
    %v10964 = vpop.permute.xlu0 %10963
    %10965 = vrot.lane.b32.xlu0 %v8029, 12
    %v10966 = vpop.permute.xlu0 %10965
    %10967 = vrot.lane.b32.xlu0 %v8036, 12
    %v10968 = vpop.permute.xlu0 %10967
    %10969 = vrot.lane.b32.xlu0 %v8037, 12
    %v10970 = vpop.permute.xlu0 %10969
    %10971 = vrot.lane.b32.xlu0 %v8044, 12
    %v10972 = vpop.permute.xlu0 %10971
    %10973 = vrot.lane.b32.xlu0 %v8045, 12
    %v10974 = vpop.permute.xlu0 %10973
    %10975 = vrot.lane.b32.xlu0 %v8986, 12
    %v10976 = vpop.permute.xlu0 %10975
    %10977 = vrot.lane.b32.xlu0 %v8987, 12
    %v10978 = vpop.permute.xlu0 %10977
    %10979 = vrot.lane.b32.xlu0 %v9694, 12
    %v10980 = vpop.permute.xlu0 %10979
    %10981 = vrot.lane.b32.xlu0 %v9695, 12
    %v10982 = vpop.permute.xlu0 %10981
    %10983 = vrot.lane.b32.xlu0 %v10937, 12
    %v10984 = vpop.permute.xlu0 %10983
    %10985 = vrot.lane.b32.xlu0 %v10938, 12
    %v10986 = vpop.permute.xlu0 %10985
    %10987 = vrot.lane.b32.xlu0 %v8076, 12
    %v10988 = vpop.permute.xlu0 %10987
    %10989 = vrot.lane.b32.xlu0 %v8077, 12
    %v10990 = vpop.permute.xlu0 %10989
    %10991 = vrot.lane.b32.xlu0 %v8084, 12
    %v10992 = vpop.permute.xlu0 %10991
    %10993 = vrot.lane.b32.xlu0 %v8085, 12
    %v10994 = vpop.permute.xlu0 %10993
    %10995 = vrot.lane.b32.xlu0 %v8092, 12
    %v10996 = vpop.permute.xlu0 %10995
    %10997 = vrot.lane.b32.xlu0 %v8093, 12
    %v10998 = vpop.permute.xlu0 %10997
    %10999 = vrot.lane.b32.xlu0 %v8100, 12
    %v11000 = vpop.permute.xlu0 %10999
    %11001 = vrot.lane.b32.xlu0 %v8101, 12
    %v11002 = vpop.permute.xlu0 %11001
    %11003 = vrot.lane.b32.xlu0 %v8108, 12
    %v11004 = vpop.permute.xlu0 %11003
    %11005 = vrot.lane.b32.xlu0 %v8109, 12
    %v11006 = vpop.permute.xlu0 %11005
    %11007 = vrot.lane.b32.xlu0 %v8116, 12
    %v11008 = vpop.permute.xlu0 %11007
    %11009 = vrot.lane.b32.xlu0 %v8117, 12
    %v11010 = vpop.permute.xlu0 %11009
    %11011 = vrot.lane.b32.xlu0 %v8124, 12
    %v11012 = vpop.permute.xlu0 %11011
    %11013 = vrot.lane.b32.xlu0 %v8125, 12
    %v11014 = vpop.permute.xlu0 %11013
    %11015 = vrot.lane.b32.xlu0 %v8994, 12
    %v11016 = vpop.permute.xlu0 %11015
    %11017 = vrot.lane.b32.xlu0 %v8995, 12
    %v11018 = vpop.permute.xlu0 %11017
    %11019 = vrot.lane.b32.xlu0 %v9702, 12
    %v11020 = vpop.permute.xlu0 %11019
    %11021 = vrot.lane.b32.xlu0 %v9703, 12
    %v11022 = vpop.permute.xlu0 %11021
    %11023 = vrot.lane.b32.xlu0 %v10945, 12
    %v11024 = vpop.permute.xlu0 %11023
    %11025 = vrot.lane.b32.xlu0 %v10946, 12
    %v11026 = vpop.permute.xlu0 %11025
    %v11069 = vsel %vm7139, %v5412, %v5405
    %v11070 = vsel %vm7141, %v5419, %v11069
    %v11071 = vsel %vm7143, %v5426, %v11070
    %v11072 = vsel %vm7145, %v5433, %v11071
    %v11073 = vsel %vm7147, %v5440, %v11072
    %v11074 = vsel %vm7149, %v5447, %v11073
    %v11075 = vsel %vm7151, %v5454, %v11074
    %v11076 = vsel %vm7139, %v5468, %v5461
    %v11077 = vsel %vm7139, %v6784, %v6777
    %v11078 = vsel %vm7141, %v6791, %v11077
    %v11079 = vsel %vm7143, %v6798, %v11078
    %v11080 = vsel %vm7145, %v6805, %v11079
    %v11081 = vsel %vm7147, %v6812, %v11080
    %v11082 = vsel %vm7149, %v6819, %v11081
    %v11083 = vsel %vm7151, %v6826, %v11082
    %v11084 = vsel %vm7139, %v6840, %v6833
    %11085 = vrot.lane.b32.xlu0 %v8296, 18
    %v11086 = vpop.permute.xlu0 %11085
    %11087 = vrot.lane.b32.xlu0 %v8297, 18
    %v11088 = vpop.permute.xlu0 %11087
    %11089 = vrot.lane.b32.xlu0 %v8304, 18
    %v11090 = vpop.permute.xlu0 %11089
    %11091 = vrot.lane.b32.xlu0 %v8305, 18
    %v11092 = vpop.permute.xlu0 %11091
    %11093 = vrot.lane.b32.xlu0 %v8312, 18
    %v11094 = vpop.permute.xlu0 %11093
    %11095 = vrot.lane.b32.xlu0 %v8313, 18
    %v11096 = vpop.permute.xlu0 %11095
    %11097 = vrot.lane.b32.xlu0 %v8320, 18
    %v11098 = vpop.permute.xlu0 %11097
    %11099 = vrot.lane.b32.xlu0 %v8321, 18
    %v11100 = vpop.permute.xlu0 %11099
    %11101 = vrot.lane.b32.xlu0 %v8328, 18
    %v11102 = vpop.permute.xlu0 %11101
    %11103 = vrot.lane.b32.xlu0 %v8329, 18
    %v11104 = vpop.permute.xlu0 %11103
    %11105 = vrot.lane.b32.xlu0 %v8336, 18
    %v11106 = vpop.permute.xlu0 %11105
    %11107 = vrot.lane.b32.xlu0 %v8337, 18
    %v11108 = vpop.permute.xlu0 %11107
    %11109 = vrot.lane.b32.xlu0 %v8344, 18
    %v11110 = vpop.permute.xlu0 %11109
    %11111 = vrot.lane.b32.xlu0 %v8345, 18
    %v11112 = vpop.permute.xlu0 %11111
    %11113 = vrot.lane.b32.xlu0 %v9124, 18
    %v11114 = vpop.permute.xlu0 %11113
    %11115 = vrot.lane.b32.xlu0 %v9125, 18
    %v11116 = vpop.permute.xlu0 %11115
    %11117 = vrot.lane.b32.xlu0 %v9832, 18
    %v11118 = vpop.permute.xlu0 %11117
    %11119 = vrot.lane.b32.xlu0 %v9833, 18
    %v11120 = vpop.permute.xlu0 %11119
    %11121 = vrot.lane.b32.xlu0 %v11075, 18
    %v11122 = vpop.permute.xlu0 %11121
    %11123 = vrot.lane.b32.xlu0 %v11076, 18
    %v11124 = vpop.permute.xlu0 %11123
    %11125 = vrot.lane.b32.xlu0 %v8376, 18
    %v11126 = vpop.permute.xlu0 %11125
    %11127 = vrot.lane.b32.xlu0 %v8377, 18
    %v11128 = vpop.permute.xlu0 %11127
    %11129 = vrot.lane.b32.xlu0 %v8384, 18
    %v11130 = vpop.permute.xlu0 %11129
    %11131 = vrot.lane.b32.xlu0 %v8385, 18
    %v11132 = vpop.permute.xlu0 %11131
    %11133 = vrot.lane.b32.xlu0 %v8392, 18
    %v11134 = vpop.permute.xlu0 %11133
    %11135 = vrot.lane.b32.xlu0 %v8393, 18
    %v11136 = vpop.permute.xlu0 %11135
    %11137 = vrot.lane.b32.xlu0 %v8400, 18
    %v11138 = vpop.permute.xlu0 %11137
    %11139 = vrot.lane.b32.xlu0 %v8401, 18
    %v11140 = vpop.permute.xlu0 %11139
    %11141 = vrot.lane.b32.xlu0 %v8408, 18
    %v11142 = vpop.permute.xlu0 %11141
    %11143 = vrot.lane.b32.xlu0 %v8409, 18
    %v11144 = vpop.permute.xlu0 %11143
    %11145 = vrot.lane.b32.xlu0 %v8416, 18
    %v11146 = vpop.permute.xlu0 %11145
    %11147 = vrot.lane.b32.xlu0 %v8417, 18
    %v11148 = vpop.permute.xlu0 %11147
    %11149 = vrot.lane.b32.xlu0 %v8424, 18
    %v11150 = vpop.permute.xlu0 %11149
    %11151 = vrot.lane.b32.xlu0 %v8425, 18
    %v11152 = vpop.permute.xlu0 %11151
    %11153 = vrot.lane.b32.xlu0 %v9132, 18
    %v11154 = vpop.permute.xlu0 %11153
    %11155 = vrot.lane.b32.xlu0 %v9133, 18
    %v11156 = vpop.permute.xlu0 %11155
    %11157 = vrot.lane.b32.xlu0 %v9840, 18
    %v11158 = vpop.permute.xlu0 %11157
    %11159 = vrot.lane.b32.xlu0 %v9841, 18
    %v11160 = vpop.permute.xlu0 %11159
    %11161 = vrot.lane.b32.xlu0 %v11083, 18
    %v11162 = vpop.permute.xlu0 %11161
    %11163 = vrot.lane.b32.xlu0 %v11084, 18
    %v11164 = vpop.permute.xlu0 %11163
    %v11225 = vsel %vm7139, %v5482, %v5475
    %v11226 = vsel %vm7141, %v5489, %v11225
    %v11227 = vsel %vm7143, %v5496, %v11226
    %v11228 = vsel %vm7145, %v5503, %v11227
    %v11229 = vsel %vm7147, %v5510, %v11228
    %v11230 = vsel %vm7149, %v5517, %v11229
    %v11231 = vsel %vm7151, %v5524, %v11230
    %v11232 = vsel %vm7139, %v5538, %v5531
    %v11233 = vsel %vm7139, %v6854, %v6847
    %v11234 = vsel %vm7141, %v6861, %v11233
    %v11235 = vsel %vm7143, %v6868, %v11234
    %v11236 = vsel %vm7145, %v6875, %v11235
    %v11237 = vsel %vm7147, %v6882, %v11236
    %v11238 = vsel %vm7149, %v6889, %v11237
    %v11239 = vsel %vm7151, %v6896, %v11238
    %v11240 = vsel %vm7139, %v6910, %v6903
    %11241 = vrot.lane.b32.xlu0 %v7184, 24
    %v11242 = vpop.permute.xlu0 %11241
    %11243 = vrot.lane.b32.xlu0 %v7185, 24
    %v11244 = vpop.permute.xlu0 %11243
    %11245 = vrot.lane.b32.xlu0 %v7192, 24
    %v11246 = vpop.permute.xlu0 %11245
    %11247 = vrot.lane.b32.xlu0 %v7193, 24
    %v11248 = vpop.permute.xlu0 %11247
    %11249 = vrot.lane.b32.xlu0 %v7200, 24
    %v11250 = vpop.permute.xlu0 %11249
    %11251 = vrot.lane.b32.xlu0 %v7201, 24
    %v11252 = vpop.permute.xlu0 %11251
    %11253 = vrot.lane.b32.xlu0 %v7208, 24
    %v11254 = vpop.permute.xlu0 %11253
    %11255 = vrot.lane.b32.xlu0 %v7209, 24
    %v11256 = vpop.permute.xlu0 %11255
    %11257 = vrot.lane.b32.xlu0 %v7216, 24
    %v11258 = vpop.permute.xlu0 %11257
    %11259 = vrot.lane.b32.xlu0 %v7217, 24
    %v11260 = vpop.permute.xlu0 %11259
    %11261 = vrot.lane.b32.xlu0 %v7224, 24
    %v11262 = vpop.permute.xlu0 %11261
    %11263 = vrot.lane.b32.xlu0 %v7225, 24
    %v11264 = vpop.permute.xlu0 %11263
    %11265 = vrot.lane.b32.xlu0 %v8572, 24
    %v11266 = vpop.permute.xlu0 %11265
    %11267 = vrot.lane.b32.xlu0 %v8573, 24
    %v11268 = vpop.permute.xlu0 %11267
    %11269 = vrot.lane.b32.xlu0 %v9280, 24
    %v11270 = vpop.permute.xlu0 %11269
    %11271 = vrot.lane.b32.xlu0 %v9281, 24
    %v11272 = vpop.permute.xlu0 %11271
    %11273 = vrot.lane.b32.xlu0 %v9988, 24
    %v11274 = vpop.permute.xlu0 %11273
    %11275 = vrot.lane.b32.xlu0 %v9989, 24
    %v11276 = vpop.permute.xlu0 %11275
    %11277 = vrot.lane.b32.xlu0 %v11231, 24
    %v11278 = vpop.permute.xlu0 %11277
    %11279 = vrot.lane.b32.xlu0 %v11232, 24
    %v11280 = vpop.permute.xlu0 %11279
    %11281 = vrot.lane.b32.xlu0 %v7264, 24
    %v11282 = vpop.permute.xlu0 %11281
    %11283 = vrot.lane.b32.xlu0 %v7265, 24
    %v11284 = vpop.permute.xlu0 %11283
    %11285 = vrot.lane.b32.xlu0 %v7272, 24
    %v11286 = vpop.permute.xlu0 %11285
    %11287 = vrot.lane.b32.xlu0 %v7273, 24
    %v11288 = vpop.permute.xlu0 %11287
    %11289 = vrot.lane.b32.xlu0 %v7280, 24
    %v11290 = vpop.permute.xlu0 %11289
    %11291 = vrot.lane.b32.xlu0 %v7281, 24
    %v11292 = vpop.permute.xlu0 %11291
    %11293 = vrot.lane.b32.xlu0 %v7288, 24
    %v11294 = vpop.permute.xlu0 %11293
    %11295 = vrot.lane.b32.xlu0 %v7289, 24
    %v11296 = vpop.permute.xlu0 %11295
    %11297 = vrot.lane.b32.xlu0 %v7296, 24
    %v11298 = vpop.permute.xlu0 %11297
    %11299 = vrot.lane.b32.xlu0 %v7297, 24
    %v11300 = vpop.permute.xlu0 %11299
    %11301 = vrot.lane.b32.xlu0 %v7304, 24
    %v11302 = vpop.permute.xlu0 %11301
    %11303 = vrot.lane.b32.xlu0 %v7305, 24
    %v11304 = vpop.permute.xlu0 %11303
    %11305 = vrot.lane.b32.xlu0 %v8580, 24
    %v11306 = vpop.permute.xlu0 %11305
    %11307 = vrot.lane.b32.xlu0 %v8581, 24
    %v11308 = vpop.permute.xlu0 %11307
    %11309 = vrot.lane.b32.xlu0 %v9288, 24
    %v11310 = vpop.permute.xlu0 %11309
    %11311 = vrot.lane.b32.xlu0 %v9289, 24
    %v11312 = vpop.permute.xlu0 %11311
    %11313 = vrot.lane.b32.xlu0 %v9996, 24
    %v11314 = vpop.permute.xlu0 %11313
    %11315 = vrot.lane.b32.xlu0 %v9997, 24
    %v11316 = vpop.permute.xlu0 %11315
    %11317 = vrot.lane.b32.xlu0 %v11239, 24
    %v11318 = vpop.permute.xlu0 %11317
    %11319 = vrot.lane.b32.xlu0 %v11240, 24
    %v11320 = vpop.permute.xlu0 %11319
    %v11363 = vsel %vm7139, %v5489, %v5482
    %v11364 = vsel %vm7141, %v5496, %v11363
    %v11365 = vsel %vm7143, %v5503, %v11364
    %v11366 = vsel %vm7145, %v5510, %v11365
    %v11367 = vsel %vm7147, %v5517, %v11366
    %v11368 = vsel %vm7149, %v5524, %v11367
    %v11369 = vsel %vm7151, %v5531, %v11368
    %v11370 = vsel %vm7139, %v5545, %v5538
    %v11371 = vsel %vm7139, %v6861, %v6854
    %v11372 = vsel %vm7141, %v6868, %v11371
    %v11373 = vsel %vm7143, %v6875, %v11372
    %v11374 = vsel %vm7145, %v6882, %v11373
    %v11375 = vsel %vm7147, %v6889, %v11374
    %v11376 = vsel %vm7149, %v6896, %v11375
    %v11377 = vsel %vm7151, %v6903, %v11376
    %v11378 = vsel %vm7139, %v6917, %v6910
    %11379 = vrot.lane.b32.xlu0 %v7404, 30
    %v11380 = vpop.permute.xlu0 %11379
    %11381 = vrot.lane.b32.xlu0 %v7405, 30
    %v11382 = vpop.permute.xlu0 %11381
    %11383 = vrot.lane.b32.xlu0 %v7412, 30
    %v11384 = vpop.permute.xlu0 %11383
    %11385 = vrot.lane.b32.xlu0 %v7413, 30
    %v11386 = vpop.permute.xlu0 %11385
    %11387 = vrot.lane.b32.xlu0 %v7420, 30
    %v11388 = vpop.permute.xlu0 %11387
    %11389 = vrot.lane.b32.xlu0 %v7421, 30
    %v11390 = vpop.permute.xlu0 %11389
    %11391 = vrot.lane.b32.xlu0 %v7428, 30
    %v11392 = vpop.permute.xlu0 %11391
    %11393 = vrot.lane.b32.xlu0 %v7429, 30
    %v11394 = vpop.permute.xlu0 %11393
    %11395 = vrot.lane.b32.xlu0 %v7436, 30
    %v11396 = vpop.permute.xlu0 %11395
    %11397 = vrot.lane.b32.xlu0 %v7437, 30
    %v11398 = vpop.permute.xlu0 %11397
    %11399 = vrot.lane.b32.xlu0 %v7444, 30
    %v11400 = vpop.permute.xlu0 %11399
    %11401 = vrot.lane.b32.xlu0 %v7445, 30
    %v11402 = vpop.permute.xlu0 %11401
    %11403 = vrot.lane.b32.xlu0 %v8710, 30
    %v11404 = vpop.permute.xlu0 %11403
    %11405 = vrot.lane.b32.xlu0 %v8711, 30
    %v11406 = vpop.permute.xlu0 %11405
    %11407 = vrot.lane.b32.xlu0 %v9418, 30
    %v11408 = vpop.permute.xlu0 %11407
    %11409 = vrot.lane.b32.xlu0 %v9419, 30
    %v11410 = vpop.permute.xlu0 %11409
    %11411 = vrot.lane.b32.xlu0 %v10741, 30
    %v11412 = vpop.permute.xlu0 %11411
    %11413 = vrot.lane.b32.xlu0 %v10742, 30
    %v11414 = vpop.permute.xlu0 %11413
    %11415 = vrot.lane.b32.xlu0 %v11369, 30
    %v11416 = vpop.permute.xlu0 %11415
    %11417 = vrot.lane.b32.xlu0 %v11370, 30
    %v11418 = vpop.permute.xlu0 %11417
    %11419 = vrot.lane.b32.xlu0 %v7484, 30
    %v11420 = vpop.permute.xlu0 %11419
    %11421 = vrot.lane.b32.xlu0 %v7485, 30
    %v11422 = vpop.permute.xlu0 %11421
    %11423 = vrot.lane.b32.xlu0 %v7492, 30
    %v11424 = vpop.permute.xlu0 %11423
    %11425 = vrot.lane.b32.xlu0 %v7493, 30
    %v11426 = vpop.permute.xlu0 %11425
    %11427 = vrot.lane.b32.xlu0 %v7500, 30
    %v11428 = vpop.permute.xlu0 %11427
    %11429 = vrot.lane.b32.xlu0 %v7501, 30
    %v11430 = vpop.permute.xlu0 %11429
    %11431 = vrot.lane.b32.xlu0 %v7508, 30
    %v11432 = vpop.permute.xlu0 %11431
    %11433 = vrot.lane.b32.xlu0 %v7509, 30
    %v11434 = vpop.permute.xlu0 %11433
    %11435 = vrot.lane.b32.xlu0 %v7516, 30
    %v11436 = vpop.permute.xlu0 %11435
    %11437 = vrot.lane.b32.xlu0 %v7517, 30
    %v11438 = vpop.permute.xlu0 %11437
    %11439 = vrot.lane.b32.xlu0 %v7524, 30
    %v11440 = vpop.permute.xlu0 %11439
    %11441 = vrot.lane.b32.xlu0 %v7525, 30
    %v11442 = vpop.permute.xlu0 %11441
    %11443 = vrot.lane.b32.xlu0 %v8718, 30
    %v11444 = vpop.permute.xlu0 %11443
    %11445 = vrot.lane.b32.xlu0 %v8719, 30
    %v11446 = vpop.permute.xlu0 %11445
    %11447 = vrot.lane.b32.xlu0 %v9426, 30
    %v11448 = vpop.permute.xlu0 %11447
    %11449 = vrot.lane.b32.xlu0 %v9427, 30
    %v11450 = vpop.permute.xlu0 %11449
    %11451 = vrot.lane.b32.xlu0 %v10749, 30
    %v11452 = vpop.permute.xlu0 %11451
    %11453 = vrot.lane.b32.xlu0 %v10750, 30
    %v11454 = vpop.permute.xlu0 %11453
    %11455 = vrot.lane.b32.xlu0 %v11377, 30
    %v11456 = vpop.permute.xlu0 %11455
    %11457 = vrot.lane.b32.xlu0 %v11378, 30
    %v11458 = vpop.permute.xlu0 %11457
    %v11501 = vsel %vm7139, %v5496, %v5489
    %v11502 = vsel %vm7141, %v5503, %v11501
    %v11503 = vsel %vm7143, %v5510, %v11502
    %v11504 = vsel %vm7145, %v5517, %v11503
    %v11505 = vsel %vm7147, %v5524, %v11504
    %v11506 = vsel %vm7149, %v5531, %v11505
    %v11507 = vsel %vm7151, %v5538, %v11506
    %v11508 = vsel %vm7139, %v5552, %v5545
    %v11509 = vsel %vm7139, %v6868, %v6861
    %v11510 = vsel %vm7141, %v6875, %v11509
    %v11511 = vsel %vm7143, %v6882, %v11510
    %v11512 = vsel %vm7145, %v6889, %v11511
    %v11513 = vsel %vm7147, %v6896, %v11512
    %v11514 = vsel %vm7149, %v6903, %v11513
    %v11515 = vsel %vm7151, %v6910, %v11514
    %v11516 = vsel %vm7139, %v6924, %v6917
    %11517 = vrot.lane.b32.xlu0 %v7704, 36
    %v11518 = vpop.permute.xlu0 %11517
    %11519 = vrot.lane.b32.xlu0 %v7705, 36
    %v11520 = vpop.permute.xlu0 %11519
    %11521 = vrot.lane.b32.xlu0 %v7712, 36
    %v11522 = vpop.permute.xlu0 %11521
    %11523 = vrot.lane.b32.xlu0 %v7713, 36
    %v11524 = vpop.permute.xlu0 %11523
    %11525 = vrot.lane.b32.xlu0 %v7720, 36
    %v11526 = vpop.permute.xlu0 %11525
    %11527 = vrot.lane.b32.xlu0 %v7721, 36
    %v11528 = vpop.permute.xlu0 %11527
    %11529 = vrot.lane.b32.xlu0 %v7728, 36
    %v11530 = vpop.permute.xlu0 %11529
    %11531 = vrot.lane.b32.xlu0 %v7729, 36
    %v11532 = vpop.permute.xlu0 %11531
    %11533 = vrot.lane.b32.xlu0 %v7736, 36
    %v11534 = vpop.permute.xlu0 %11533
    %11535 = vrot.lane.b32.xlu0 %v7737, 36
    %v11536 = vpop.permute.xlu0 %11535
    %11537 = vrot.lane.b32.xlu0 %v7744, 36
    %v11538 = vpop.permute.xlu0 %11537
    %11539 = vrot.lane.b32.xlu0 %v7745, 36
    %v11540 = vpop.permute.xlu0 %11539
    %11541 = vrot.lane.b32.xlu0 %v8848, 36
    %v11542 = vpop.permute.xlu0 %11541
    %11543 = vrot.lane.b32.xlu0 %v8849, 36
    %v11544 = vpop.permute.xlu0 %11543
    %11545 = vrot.lane.b32.xlu0 %v9556, 36
    %v11546 = vpop.permute.xlu0 %11545
    %11547 = vrot.lane.b32.xlu0 %v9557, 36
    %v11548 = vpop.permute.xlu0 %11547
    %11549 = vrot.lane.b32.xlu0 %v10799, 36
    %v11550 = vpop.permute.xlu0 %11549
    %11551 = vrot.lane.b32.xlu0 %v10800, 36
    %v11552 = vpop.permute.xlu0 %11551
    %11553 = vrot.lane.b32.xlu0 %v11507, 36
    %v11554 = vpop.permute.xlu0 %11553
    %11555 = vrot.lane.b32.xlu0 %v11508, 36
    %v11556 = vpop.permute.xlu0 %11555
    %11557 = vrot.lane.b32.xlu0 %v7784, 36
    %v11558 = vpop.permute.xlu0 %11557
    %11559 = vrot.lane.b32.xlu0 %v7785, 36
    %v11560 = vpop.permute.xlu0 %11559
    %11561 = vrot.lane.b32.xlu0 %v7792, 36
    %v11562 = vpop.permute.xlu0 %11561
    %11563 = vrot.lane.b32.xlu0 %v7793, 36
    %v11564 = vpop.permute.xlu0 %11563
    %11565 = vrot.lane.b32.xlu0 %v7800, 36
    %v11566 = vpop.permute.xlu0 %11565
    %11567 = vrot.lane.b32.xlu0 %v7801, 36
    %v11568 = vpop.permute.xlu0 %11567
    %11569 = vrot.lane.b32.xlu0 %v7808, 36
    %v11570 = vpop.permute.xlu0 %11569
    %11571 = vrot.lane.b32.xlu0 %v7809, 36
    %v11572 = vpop.permute.xlu0 %11571
    %11573 = vrot.lane.b32.xlu0 %v7816, 36
    %v11574 = vpop.permute.xlu0 %11573
    %11575 = vrot.lane.b32.xlu0 %v7817, 36
    %v11576 = vpop.permute.xlu0 %11575
    %11577 = vrot.lane.b32.xlu0 %v7824, 36
    %v11578 = vpop.permute.xlu0 %11577
    %11579 = vrot.lane.b32.xlu0 %v7825, 36
    %v11580 = vpop.permute.xlu0 %11579
    %11581 = vrot.lane.b32.xlu0 %v8856, 36
    %v11582 = vpop.permute.xlu0 %11581
    %11583 = vrot.lane.b32.xlu0 %v8857, 36
    %v11584 = vpop.permute.xlu0 %11583
    %11585 = vrot.lane.b32.xlu0 %v9564, 36
    %v11586 = vpop.permute.xlu0 %11585
    %11587 = vrot.lane.b32.xlu0 %v9565, 36
    %v11588 = vpop.permute.xlu0 %11587
    %11589 = vrot.lane.b32.xlu0 %v10807, 36
    %v11590 = vpop.permute.xlu0 %11589
    %11591 = vrot.lane.b32.xlu0 %v10808, 36
    %v11592 = vpop.permute.xlu0 %11591
    %11593 = vrot.lane.b32.xlu0 %v11515, 36
    %v11594 = vpop.permute.xlu0 %11593
    %11595 = vrot.lane.b32.xlu0 %v11516, 36
    %v11596 = vpop.permute.xlu0 %11595
    %v11639 = vsel %vm7139, %v5503, %v5496
    %v11640 = vsel %vm7141, %v5510, %v11639
    %v11641 = vsel %vm7143, %v5517, %v11640
    %v11642 = vsel %vm7145, %v5524, %v11641
    %v11643 = vsel %vm7147, %v5531, %v11642
    %v11644 = vsel %vm7149, %v5538, %v11643
    %v11645 = vsel %vm7151, %v5545, %v11644
    %v11646 = vsel %vm7139, %v5559, %v5552
    %v11647 = vsel %vm7139, %v6875, %v6868
    %v11648 = vsel %vm7141, %v6882, %v11647
    %v11649 = vsel %vm7143, %v6889, %v11648
    %v11650 = vsel %vm7145, %v6896, %v11649
    %v11651 = vsel %vm7147, %v6903, %v11650
    %v11652 = vsel %vm7149, %v6910, %v11651
    %v11653 = vsel %vm7151, %v6917, %v11652
    %v11654 = vsel %vm7139, %v6931, %v6924
    %11655 = vrot.lane.b32.xlu0 %v8004, 42
    %v11656 = vpop.permute.xlu0 %11655
    %11657 = vrot.lane.b32.xlu0 %v8005, 42
    %v11658 = vpop.permute.xlu0 %11657
    %11659 = vrot.lane.b32.xlu0 %v8012, 42
    %v11660 = vpop.permute.xlu0 %11659
    %11661 = vrot.lane.b32.xlu0 %v8013, 42
    %v11662 = vpop.permute.xlu0 %11661
    %11663 = vrot.lane.b32.xlu0 %v8020, 42
    %v11664 = vpop.permute.xlu0 %11663
    %11665 = vrot.lane.b32.xlu0 %v8021, 42
    %v11666 = vpop.permute.xlu0 %11665
    %11667 = vrot.lane.b32.xlu0 %v8028, 42
    %v11668 = vpop.permute.xlu0 %11667
    %11669 = vrot.lane.b32.xlu0 %v8029, 42
    %v11670 = vpop.permute.xlu0 %11669
    %11671 = vrot.lane.b32.xlu0 %v8036, 42
    %v11672 = vpop.permute.xlu0 %11671
    %11673 = vrot.lane.b32.xlu0 %v8037, 42
    %v11674 = vpop.permute.xlu0 %11673
    %11675 = vrot.lane.b32.xlu0 %v8044, 42
    %v11676 = vpop.permute.xlu0 %11675
    %11677 = vrot.lane.b32.xlu0 %v8045, 42
    %v11678 = vpop.permute.xlu0 %11677
    %11679 = vrot.lane.b32.xlu0 %v8986, 42
    %v11680 = vpop.permute.xlu0 %11679
    %11681 = vrot.lane.b32.xlu0 %v8987, 42
    %v11682 = vpop.permute.xlu0 %11681
    %11683 = vrot.lane.b32.xlu0 %v9694, 42
    %v11684 = vpop.permute.xlu0 %11683
    %11685 = vrot.lane.b32.xlu0 %v9695, 42
    %v11686 = vpop.permute.xlu0 %11685
    %11687 = vrot.lane.b32.xlu0 %v10937, 42
    %v11688 = vpop.permute.xlu0 %11687
    %11689 = vrot.lane.b32.xlu0 %v10938, 42
    %v11690 = vpop.permute.xlu0 %11689
    %11691 = vrot.lane.b32.xlu0 %v11645, 42
    %v11692 = vpop.permute.xlu0 %11691
    %11693 = vrot.lane.b32.xlu0 %v11646, 42
    %v11694 = vpop.permute.xlu0 %11693
    %11695 = vrot.lane.b32.xlu0 %v8084, 42
    %v11696 = vpop.permute.xlu0 %11695
    %11697 = vrot.lane.b32.xlu0 %v8085, 42
    %v11698 = vpop.permute.xlu0 %11697
    %11699 = vrot.lane.b32.xlu0 %v8092, 42
    %v11700 = vpop.permute.xlu0 %11699
    %11701 = vrot.lane.b32.xlu0 %v8093, 42
    %v11702 = vpop.permute.xlu0 %11701
    %11703 = vrot.lane.b32.xlu0 %v8100, 42
    %v11704 = vpop.permute.xlu0 %11703
    %11705 = vrot.lane.b32.xlu0 %v8101, 42
    %v11706 = vpop.permute.xlu0 %11705
    %11707 = vrot.lane.b32.xlu0 %v8108, 42
    %v11708 = vpop.permute.xlu0 %11707
    %11709 = vrot.lane.b32.xlu0 %v8109, 42
    %v11710 = vpop.permute.xlu0 %11709
    %11711 = vrot.lane.b32.xlu0 %v8116, 42
    %v11712 = vpop.permute.xlu0 %11711
    %11713 = vrot.lane.b32.xlu0 %v8117, 42
    %v11714 = vpop.permute.xlu0 %11713
    %11715 = vrot.lane.b32.xlu0 %v8124, 42
    %v11716 = vpop.permute.xlu0 %11715
    %11717 = vrot.lane.b32.xlu0 %v8125, 42
    %v11718 = vpop.permute.xlu0 %11717
    %11719 = vrot.lane.b32.xlu0 %v8994, 42
    %v11720 = vpop.permute.xlu0 %11719
    %11721 = vrot.lane.b32.xlu0 %v8995, 42
    %v11722 = vpop.permute.xlu0 %11721
    %11723 = vrot.lane.b32.xlu0 %v9702, 42
    %v11724 = vpop.permute.xlu0 %11723
    %11725 = vrot.lane.b32.xlu0 %v9703, 42
    %v11726 = vpop.permute.xlu0 %11725
    %11727 = vrot.lane.b32.xlu0 %v10945, 42
    %v11728 = vpop.permute.xlu0 %11727
    %11729 = vrot.lane.b32.xlu0 %v10946, 42
    %v11730 = vpop.permute.xlu0 %11729
    %11731 = vrot.lane.b32.xlu0 %v11653, 42
    %v11732 = vpop.permute.xlu0 %11731
    %11733 = vrot.lane.b32.xlu0 %v11654, 42
    %v11734 = vpop.permute.xlu0 %11733
    %v11777 = vsel %vm7139, %v5510, %v5503
    %v11778 = vsel %vm7141, %v5517, %v11777
    %v11779 = vsel %vm7143, %v5524, %v11778
    %v11780 = vsel %vm7145, %v5531, %v11779
    %v11781 = vsel %vm7147, %v5538, %v11780
    %v11782 = vsel %vm7149, %v5545, %v11781
    %v11783 = vsel %vm7151, %v5552, %v11782
    %v11784 = vsel %vm7139, %v5566, %v5559
    %v11785 = vsel %vm7139, %v6882, %v6875
    %v11786 = vsel %vm7141, %v6889, %v11785
    %v11787 = vsel %vm7143, %v6896, %v11786
    %v11788 = vsel %vm7145, %v6903, %v11787
    %v11789 = vsel %vm7147, %v6910, %v11788
    %v11790 = vsel %vm7149, %v6917, %v11789
    %v11791 = vsel %vm7151, %v6924, %v11790
    %v11792 = vsel %vm7139, %v6938, %v6931
    %11793 = vrot.lane.b32.xlu0 %v8304, 48
    %v11794 = vpop.permute.xlu0 %11793
    %11795 = vrot.lane.b32.xlu0 %v8305, 48
    %v11796 = vpop.permute.xlu0 %11795
    %11797 = vrot.lane.b32.xlu0 %v8312, 48
    %v11798 = vpop.permute.xlu0 %11797
    %11799 = vrot.lane.b32.xlu0 %v8313, 48
    %v11800 = vpop.permute.xlu0 %11799
    %11801 = vrot.lane.b32.xlu0 %v8320, 48
    %v11802 = vpop.permute.xlu0 %11801
    %11803 = vrot.lane.b32.xlu0 %v8321, 48
    %v11804 = vpop.permute.xlu0 %11803
    %11805 = vrot.lane.b32.xlu0 %v8328, 48
    %v11806 = vpop.permute.xlu0 %11805
    %11807 = vrot.lane.b32.xlu0 %v8329, 48
    %v11808 = vpop.permute.xlu0 %11807
    %11809 = vrot.lane.b32.xlu0 %v8336, 48
    %v11810 = vpop.permute.xlu0 %11809
    %11811 = vrot.lane.b32.xlu0 %v8337, 48
    %v11812 = vpop.permute.xlu0 %11811
    %11813 = vrot.lane.b32.xlu0 %v8344, 48
    %v11814 = vpop.permute.xlu0 %11813
    %11815 = vrot.lane.b32.xlu0 %v8345, 48
    %v11816 = vpop.permute.xlu0 %11815
    %11817 = vrot.lane.b32.xlu0 %v9124, 48
    %v11818 = vpop.permute.xlu0 %11817
    %11819 = vrot.lane.b32.xlu0 %v9125, 48
    %v11820 = vpop.permute.xlu0 %11819
    %11821 = vrot.lane.b32.xlu0 %v9832, 48
    %v11822 = vpop.permute.xlu0 %11821
    %11823 = vrot.lane.b32.xlu0 %v9833, 48
    %v11824 = vpop.permute.xlu0 %11823
    %11825 = vrot.lane.b32.xlu0 %v11075, 48
    %v11826 = vpop.permute.xlu0 %11825
    %11827 = vrot.lane.b32.xlu0 %v11076, 48
    %v11828 = vpop.permute.xlu0 %11827
    %11829 = vrot.lane.b32.xlu0 %v11783, 48
    %v11830 = vpop.permute.xlu0 %11829
    %11831 = vrot.lane.b32.xlu0 %v11784, 48
    %v11832 = vpop.permute.xlu0 %11831
    %11833 = vrot.lane.b32.xlu0 %v8384, 48
    %v11834 = vpop.permute.xlu0 %11833
    %11835 = vrot.lane.b32.xlu0 %v8385, 48
    %v11836 = vpop.permute.xlu0 %11835
    %11837 = vrot.lane.b32.xlu0 %v8392, 48
    %v11838 = vpop.permute.xlu0 %11837
    %11839 = vrot.lane.b32.xlu0 %v8393, 48
    %v11840 = vpop.permute.xlu0 %11839
    %11841 = vrot.lane.b32.xlu0 %v8400, 48
    %v11842 = vpop.permute.xlu0 %11841
    %11843 = vrot.lane.b32.xlu0 %v8401, 48
    %v11844 = vpop.permute.xlu0 %11843
    %11845 = vrot.lane.b32.xlu0 %v8408, 48
    %v11846 = vpop.permute.xlu0 %11845
    %11847 = vrot.lane.b32.xlu0 %v8409, 48
    %v11848 = vpop.permute.xlu0 %11847
    %11849 = vrot.lane.b32.xlu0 %v8416, 48
    %v11850 = vpop.permute.xlu0 %11849
    %11851 = vrot.lane.b32.xlu0 %v8417, 48
    %v11852 = vpop.permute.xlu0 %11851
    %11853 = vrot.lane.b32.xlu0 %v8424, 48
    %v11854 = vpop.permute.xlu0 %11853
    %11855 = vrot.lane.b32.xlu0 %v8425, 48
    %v11856 = vpop.permute.xlu0 %11855
    %11857 = vrot.lane.b32.xlu0 %v9132, 48
    %v11858 = vpop.permute.xlu0 %11857
    %11859 = vrot.lane.b32.xlu0 %v9133, 48
    %v11860 = vpop.permute.xlu0 %11859
    %11861 = vrot.lane.b32.xlu0 %v9840, 48
    %v11862 = vpop.permute.xlu0 %11861
    %11863 = vrot.lane.b32.xlu0 %v9841, 48
    %v11864 = vpop.permute.xlu0 %11863
    %11865 = vrot.lane.b32.xlu0 %v11083, 48
    %v11866 = vpop.permute.xlu0 %11865
    %11867 = vrot.lane.b32.xlu0 %v11084, 48
    %v11868 = vpop.permute.xlu0 %11867
    %11869 = vrot.lane.b32.xlu0 %v11791, 48
    %v11870 = vpop.permute.xlu0 %11869
    %11871 = vrot.lane.b32.xlu0 %v11792, 48
    %v11872 = vpop.permute.xlu0 %11871
    %v11913 = vsel %vm10118, %v7396, %v10810
    %v11914 = vsel %vm10118, %v7397, %v10812
    %v11915 = vsel %vm10118, %v7404, %v10814
    %v11916 = vsel %vm10118, %v7405, %v10816
    %v11917 = vsel %vm10118, %v7412, %v10818
    %v11918 = vsel %vm10118, %v7413, %v10820
    %v11919 = vsel %vm10118, %v7420, %v10822
    %v11920 = vsel %vm10118, %v7421, %v10824
    %v11921 = vsel %vm10118, %v7428, %v10826
    %v11922 = vsel %vm10118, %v7429, %v10828
    %v11923 = vsel %vm10118, %v7436, %v10830
    %v11924 = vsel %vm10118, %v7437, %v10832
    %v11925 = vsel %vm10118, %v7444, %v10834
    %v11926 = vsel %vm10118, %v7445, %v10836
    %v11927 = vsel %vm10118, %v8710, %v10838
    %v11928 = vsel %vm10118, %v8711, %v10840
    %v11929 = vsel %vm10118, %v9418, %v10842
    %v11930 = vsel %vm10118, %v9419, %v10844
    %v11931 = vsel %vm10118, %v10741, %v10846
    %v11932 = vsel %vm10118, %v10742, %v10848
    %v11933 = vsel %vm10118, %v7476, %v10850
    %v11934 = vsel %vm10118, %v7477, %v10852
    %v11935 = vsel %vm10118, %v7484, %v10854
    %v11936 = vsel %vm10118, %v7485, %v10856
    %v11937 = vsel %vm10118, %v7492, %v10858
    %v11938 = vsel %vm10118, %v7493, %v10860
    %v11939 = vsel %vm10118, %v7500, %v10862
    %v11940 = vsel %vm10118, %v7501, %v10864
    %v11941 = vsel %vm10118, %v7508, %v10866
    %v11942 = vsel %vm10118, %v7509, %v10868
    %v11943 = vsel %vm10118, %v7516, %v10870
    %v11944 = vsel %vm10118, %v7517, %v10872
    %v11945 = vsel %vm10118, %v7524, %v10874
    %v11946 = vsel %vm10118, %v7525, %v10876
    %v11947 = vsel %vm10118, %v8718, %v10878
    %v11948 = vsel %vm10118, %v8719, %v10880
    %v11949 = vsel %vm10118, %v9426, %v10882
    %v11950 = vsel %vm10118, %v9427, %v10884
    %v11951 = vsel %vm10118, %v10749, %v10886
    %v11952 = vsel %vm10118, %v10750, %v10888
    %v11953 = vsel %vm10159, %v11913, %v10948
    %v11954 = vsel %vm10159, %v11914, %v10950
    %v11955 = vsel %vm10159, %v11915, %v10952
    %v11956 = vsel %vm10159, %v11916, %v10954
    %v11957 = vsel %vm10159, %v11917, %v10956
    %v11958 = vsel %vm10159, %v11918, %v10958
    %v11959 = vsel %vm10159, %v11919, %v10960
    %v11960 = vsel %vm10159, %v11920, %v10962
    %v11961 = vsel %vm10159, %v11921, %v10964
    %v11962 = vsel %vm10159, %v11922, %v10966
    %v11963 = vsel %vm10159, %v11923, %v10968
    %v11964 = vsel %vm10159, %v11924, %v10970
    %v11965 = vsel %vm10159, %v11925, %v10972
    %v11966 = vsel %vm10159, %v11926, %v10974
    %v11967 = vsel %vm10159, %v11927, %v10976
    %v11968 = vsel %vm10159, %v11928, %v10978
    %v11969 = vsel %vm10159, %v11929, %v10980
    %v11970 = vsel %vm10159, %v11930, %v10982
    %v11971 = vsel %vm10159, %v11931, %v10984
    %v11972 = vsel %vm10159, %v11932, %v10986
    %v11973 = vsel %vm10159, %v11933, %v10988
    %v11974 = vsel %vm10159, %v11934, %v10990
    %v11975 = vsel %vm10159, %v11935, %v10992
    %v11976 = vsel %vm10159, %v11936, %v10994
    %v11977 = vsel %vm10159, %v11937, %v10996
    %v11978 = vsel %vm10159, %v11938, %v10998
    %v11979 = vsel %vm10159, %v11939, %v11000
    %v11980 = vsel %vm10159, %v11940, %v11002
    %v11981 = vsel %vm10159, %v11941, %v11004
    %v11982 = vsel %vm10159, %v11942, %v11006
    %v11983 = vsel %vm10159, %v11943, %v11008
    %v11984 = vsel %vm10159, %v11944, %v11010
    %v11985 = vsel %vm10159, %v11945, %v11012
    %v11986 = vsel %vm10159, %v11946, %v11014
    %v11987 = vsel %vm10159, %v11947, %v11016
    %v11988 = vsel %vm10159, %v11948, %v11018
    %v11989 = vsel %vm10159, %v11949, %v11020
    %v11990 = vsel %vm10159, %v11950, %v11022
    %v11991 = vsel %vm10159, %v11951, %v11024
    %v11992 = vsel %vm10159, %v11952, %v11026
    %v11993 = vsel %vm10200, %v11953, %v11086
    %v11994 = vsel %vm10200, %v11954, %v11088
    %v11995 = vsel %vm10200, %v11955, %v11090
    %v11996 = vsel %vm10200, %v11956, %v11092
    %v11997 = vsel %vm10200, %v11957, %v11094
    %v11998 = vsel %vm10200, %v11958, %v11096
    %v11999 = vsel %vm10200, %v11959, %v11098
    %v12000 = vsel %vm10200, %v11960, %v11100
    %v12001 = vsel %vm10200, %v11961, %v11102
    %v12002 = vsel %vm10200, %v11962, %v11104
    %v12003 = vsel %vm10200, %v11963, %v11106
    %v12004 = vsel %vm10200, %v11964, %v11108
    %v12005 = vsel %vm10200, %v11965, %v11110
    %v12006 = vsel %vm10200, %v11966, %v11112
    %v12007 = vsel %vm10200, %v11967, %v11114
    %v12008 = vsel %vm10200, %v11968, %v11116
    %v12009 = vsel %vm10200, %v11969, %v11118
    %v12010 = vsel %vm10200, %v11970, %v11120
    %v12011 = vsel %vm10200, %v11971, %v11122
    %v12012 = vsel %vm10200, %v11972, %v11124
    %v12013 = vsel %vm10200, %v11973, %v11126
    %v12014 = vsel %vm10200, %v11974, %v11128
    %v12015 = vsel %vm10200, %v11975, %v11130
    %v12016 = vsel %vm10200, %v11976, %v11132
    %v12017 = vsel %vm10200, %v11977, %v11134
    %v12018 = vsel %vm10200, %v11978, %v11136
    %v12019 = vsel %vm10200, %v11979, %v11138
    %v12020 = vsel %vm10200, %v11980, %v11140
    %v12021 = vsel %vm10200, %v11981, %v11142
    %v12022 = vsel %vm10200, %v11982, %v11144
    %v12023 = vsel %vm10200, %v11983, %v11146
    %v12024 = vsel %vm10200, %v11984, %v11148
    %v12025 = vsel %vm10200, %v11985, %v11150
    %v12026 = vsel %vm10200, %v11986, %v11152
    %v12027 = vsel %vm10200, %v11987, %v11154
    %v12028 = vsel %vm10200, %v11988, %v11156
    %v12029 = vsel %vm10200, %v11989, %v11158
    %v12030 = vsel %vm10200, %v11990, %v11160
    %v12031 = vsel %vm10200, %v11991, %v11162
    %v12032 = vsel %vm10200, %v11992, %v11164
    %v12033 = vsel %vm10241, %v11993, %v11242
    %v12034 = vsel %vm10241, %v11994, %v11244
    %v12035 = vsel %vm10241, %v11995, %v11246
    %v12036 = vsel %vm10241, %v11996, %v11248
    %v12037 = vsel %vm10241, %v11997, %v11250
    %v12038 = vsel %vm10241, %v11998, %v11252
    %v12039 = vsel %vm10241, %v11999, %v11254
    %v12040 = vsel %vm10241, %v12000, %v11256
    %v12041 = vsel %vm10241, %v12001, %v11258
    %v12042 = vsel %vm10241, %v12002, %v11260
    %v12043 = vsel %vm10241, %v12003, %v11262
    %v12044 = vsel %vm10241, %v12004, %v11264
    %v12045 = vsel %vm10241, %v12005, %v11266
    %v12046 = vsel %vm10241, %v12006, %v11268
    %v12047 = vsel %vm10241, %v12007, %v11270
    %v12048 = vsel %vm10241, %v12008, %v11272
    %v12049 = vsel %vm10241, %v12009, %v11274
    %v12050 = vsel %vm10241, %v12010, %v11276
    %v12051 = vsel %vm10241, %v12011, %v11278
    %v12052 = vsel %vm10241, %v12012, %v11280
    %v12053 = vsel %vm10241, %v12013, %v11282
    %v12054 = vsel %vm10241, %v12014, %v11284
    %v12055 = vsel %vm10241, %v12015, %v11286
    %v12056 = vsel %vm10241, %v12016, %v11288
    %v12057 = vsel %vm10241, %v12017, %v11290
    %v12058 = vsel %vm10241, %v12018, %v11292
    %v12059 = vsel %vm10241, %v12019, %v11294
    %v12060 = vsel %vm10241, %v12020, %v11296
    %v12061 = vsel %vm10241, %v12021, %v11298
    %v12062 = vsel %vm10241, %v12022, %v11300
    %v12063 = vsel %vm10241, %v12023, %v11302
    %v12064 = vsel %vm10241, %v12024, %v11304
    %v12065 = vsel %vm10241, %v12025, %v11306
    %v12066 = vsel %vm10241, %v12026, %v11308
    %v12067 = vsel %vm10241, %v12027, %v11310
    %v12068 = vsel %vm10241, %v12028, %v11312
    %v12069 = vsel %vm10241, %v12029, %v11314
    %v12070 = vsel %vm10241, %v12030, %v11316
    %v12071 = vsel %vm10241, %v12031, %v11318
    %v12072 = vsel %vm10241, %v12032, %v11320
    %v12073 = vsel %vm10282, %v12033, %v11380
    %v12074 = vsel %vm10282, %v12034, %v11382
    %v12075 = vsel %vm10282, %v12035, %v11384
    %v12076 = vsel %vm10282, %v12036, %v11386
    %v12077 = vsel %vm10282, %v12037, %v11388
    %v12078 = vsel %vm10282, %v12038, %v11390
    %v12079 = vsel %vm10282, %v12039, %v11392
    %v12080 = vsel %vm10282, %v12040, %v11394
    %v12081 = vsel %vm10282, %v12041, %v11396
    %v12082 = vsel %vm10282, %v12042, %v11398
    %v12083 = vsel %vm10282, %v12043, %v11400
    %v12084 = vsel %vm10282, %v12044, %v11402
    %v12085 = vsel %vm10282, %v12045, %v11404
    %v12086 = vsel %vm10282, %v12046, %v11406
    %v12087 = vsel %vm10282, %v12047, %v11408
    %v12088 = vsel %vm10282, %v12048, %v11410
    %v12089 = vsel %vm10282, %v12049, %v11412
    %v12090 = vsel %vm10282, %v12050, %v11414
    %v12091 = vsel %vm10282, %v12051, %v11416
    %v12092 = vsel %vm10282, %v12052, %v11418
    %v12093 = vsel %vm10282, %v12053, %v11420
    %v12094 = vsel %vm10282, %v12054, %v11422
    %v12095 = vsel %vm10282, %v12055, %v11424
    %v12096 = vsel %vm10282, %v12056, %v11426
    %v12097 = vsel %vm10282, %v12057, %v11428
    %v12098 = vsel %vm10282, %v12058, %v11430
    %v12099 = vsel %vm10282, %v12059, %v11432
    %v12100 = vsel %vm10282, %v12060, %v11434
    %v12101 = vsel %vm10282, %v12061, %v11436
    %v12102 = vsel %vm10282, %v12062, %v11438
    %v12103 = vsel %vm10282, %v12063, %v11440
    %v12104 = vsel %vm10282, %v12064, %v11442
    %v12105 = vsel %vm10282, %v12065, %v11444
    %v12106 = vsel %vm10282, %v12066, %v11446
    %v12107 = vsel %vm10282, %v12067, %v11448
    %v12108 = vsel %vm10282, %v12068, %v11450
    %v12109 = vsel %vm10282, %v12069, %v11452
    %v12110 = vsel %vm10282, %v12070, %v11454
    %v12111 = vsel %vm10282, %v12071, %v11456
    %v12112 = vsel %vm10282, %v12072, %v11458
    %v12113 = vsel %vm10323, %v12073, %v11518
    %v12114 = vsel %vm10323, %v12074, %v11520
    %v12115 = vsel %vm10323, %v12075, %v11522
    %v12116 = vsel %vm10323, %v12076, %v11524
    %v12117 = vsel %vm10323, %v12077, %v11526
    %v12118 = vsel %vm10323, %v12078, %v11528
    %v12119 = vsel %vm10323, %v12079, %v11530
    %v12120 = vsel %vm10323, %v12080, %v11532
    %v12121 = vsel %vm10323, %v12081, %v11534
    %v12122 = vsel %vm10323, %v12082, %v11536
    %v12123 = vsel %vm10323, %v12083, %v11538
    %v12124 = vsel %vm10323, %v12084, %v11540
    %v12125 = vsel %vm10323, %v12085, %v11542
    %v12126 = vsel %vm10323, %v12086, %v11544
    %v12127 = vsel %vm10323, %v12087, %v11546
    %v12128 = vsel %vm10323, %v12088, %v11548
    %v12129 = vsel %vm10323, %v12089, %v11550
    %v12130 = vsel %vm10323, %v12090, %v11552
    %v12131 = vsel %vm10323, %v12091, %v11554
    %v12132 = vsel %vm10323, %v12092, %v11556
    %v12133 = vsel %vm10323, %v12093, %v11558
    %v12134 = vsel %vm10323, %v12094, %v11560
    %v12135 = vsel %vm10323, %v12095, %v11562
    %v12136 = vsel %vm10323, %v12096, %v11564
    %v12137 = vsel %vm10323, %v12097, %v11566
    %v12138 = vsel %vm10323, %v12098, %v11568
    %v12139 = vsel %vm10323, %v12099, %v11570
    %v12140 = vsel %vm10323, %v12100, %v11572
    %v12141 = vsel %vm10323, %v12101, %v11574
    %v12142 = vsel %vm10323, %v12102, %v11576
    %v12143 = vsel %vm10323, %v12103, %v11578
    %v12144 = vsel %vm10323, %v12104, %v11580
    %v12145 = vsel %vm10323, %v12105, %v11582
    %v12146 = vsel %vm10323, %v12106, %v11584
    %v12147 = vsel %vm10323, %v12107, %v11586
    %v12148 = vsel %vm10323, %v12108, %v11588
    %v12149 = vsel %vm10323, %v12109, %v11590
    %v12150 = vsel %vm10323, %v12110, %v11592
    %v12151 = vsel %vm10323, %v12111, %v11594
    %v12152 = vsel %vm10323, %v12112, %v11596
    %v12153 = vsel %vm10364, %v12113, %v11656
    %v12154 = vsel %vm10364, %v12114, %v11658
    %v12155 = vsel %vm10364, %v12115, %v11660
    %v12156 = vsel %vm10364, %v12116, %v11662
    %v12157 = vsel %vm10364, %v12117, %v11664
    %v12158 = vsel %vm10364, %v12118, %v11666
    %v12159 = vsel %vm10364, %v12119, %v11668
    %v12160 = vsel %vm10364, %v12120, %v11670
    %v12161 = vsel %vm10364, %v12121, %v11672
    %v12162 = vsel %vm10364, %v12122, %v11674
    %v12163 = vsel %vm10364, %v12123, %v11676
    %v12164 = vsel %vm10364, %v12124, %v11678
    %v12165 = vsel %vm10364, %v12125, %v11680
    %v12166 = vsel %vm10364, %v12126, %v11682
    %v12167 = vsel %vm10364, %v12127, %v11684
    %v12168 = vsel %vm10364, %v12128, %v11686
    %v12169 = vsel %vm10364, %v12129, %v11688
    %v12170 = vsel %vm10364, %v12130, %v11690
    %v12171 = vsel %vm10364, %v12131, %v11692
    %v12172 = vsel %vm10364, %v12132, %v11694
    %v12173 = vsel %vm10364, %v12133, %v11696
    %v12174 = vsel %vm10364, %v12134, %v11698
    %v12175 = vsel %vm10364, %v12135, %v11700
    %v12176 = vsel %vm10364, %v12136, %v11702
    %v12177 = vsel %vm10364, %v12137, %v11704
    %v12178 = vsel %vm10364, %v12138, %v11706
    %v12179 = vsel %vm10364, %v12139, %v11708
    %v12180 = vsel %vm10364, %v12140, %v11710
    %v12181 = vsel %vm10364, %v12141, %v11712
    %v12182 = vsel %vm10364, %v12142, %v11714
    %v12183 = vsel %vm10364, %v12143, %v11716
    %v12184 = vsel %vm10364, %v12144, %v11718
    %v12185 = vsel %vm10364, %v12145, %v11720
    %v12186 = vsel %vm10364, %v12146, %v11722
    %v12187 = vsel %vm10364, %v12147, %v11724
    %v12188 = vsel %vm10364, %v12148, %v11726
    %v12189 = vsel %vm10364, %v12149, %v11728
    %v12190 = vsel %vm10364, %v12150, %v11730
    %v12191 = vsel %vm10364, %v12151, %v11732
    %v12192 = vsel %vm10364, %v12152, %v11734
    %v12193 = vsel %vm10405, %v12153, %v11794
    %v12194 = vsel %vm10405, %v12154, %v11796
    %v12195 = vsel %vm10405, %v12155, %v11798
    %v12196 = vsel %vm10405, %v12156, %v11800
    %v12197 = vsel %vm10405, %v12157, %v11802
    %v12198 = vsel %vm10405, %v12158, %v11804
    %v12199 = vsel %vm10405, %v12159, %v11806
    %v12200 = vsel %vm10405, %v12160, %v11808
    %v12201 = vsel %vm10405, %v12161, %v11810
    %v12202 = vsel %vm10405, %v12162, %v11812
    %v12203 = vsel %vm10405, %v12163, %v11814
    %v12204 = vsel %vm10405, %v12164, %v11816
    %v12205 = vsel %vm10405, %v12165, %v11818
    %v12206 = vsel %vm10405, %v12166, %v11820
    %v12207 = vsel %vm10405, %v12167, %v11822
    %v12208 = vsel %vm10405, %v12168, %v11824
    %v12209 = vsel %vm10405, %v12169, %v11826
    %v12210 = vsel %vm10405, %v12170, %v11828
    %v12211 = vsel %vm10405, %v12171, %v11830
    %v12212 = vsel %vm10405, %v12172, %v11832
    %v12213 = vsel %vm10405, %v12173, %v11834
    %v12214 = vsel %vm10405, %v12174, %v11836
    %v12215 = vsel %vm10405, %v12175, %v11838
    %v12216 = vsel %vm10405, %v12176, %v11840
    %v12217 = vsel %vm10405, %v12177, %v11842
    %v12218 = vsel %vm10405, %v12178, %v11844
    %v12219 = vsel %vm10405, %v12179, %v11846
    %v12220 = vsel %vm10405, %v12180, %v11848
    %v12221 = vsel %vm10405, %v12181, %v11850
    %v12222 = vsel %vm10405, %v12182, %v11852
    %v12223 = vsel %vm10405, %v12183, %v11854
    %v12224 = vsel %vm10405, %v12184, %v11856
    %v12225 = vsel %vm10405, %v12185, %v11858
    %v12226 = vsel %vm10405, %v12186, %v11860
    %v12227 = vsel %vm10405, %v12187, %v11862
    %v12228 = vsel %vm10405, %v12188, %v11864
    %v12229 = vsel %vm10405, %v12189, %v11866
    %v12230 = vsel %vm10405, %v12190, %v11868
    %v12231 = vsel %vm10405, %v12191, %v11870
    %v12232 = vsel %vm10405, %v12192, %v11872
    %12273 = vrot.lane.b32.xlu0 %v12193, 96
    %v12274 = vpop.permute.xlu0 %12273
    %12275 = vrot.lane.b32.xlu0 %v12194, 96
    %v12276 = vpop.permute.xlu0 %12275
    %12277 = vrot.lane.b32.xlu0 %v12195, 96
    %v12278 = vpop.permute.xlu0 %12277
    %12279 = vrot.lane.b32.xlu0 %v12196, 96
    %v12280 = vpop.permute.xlu0 %12279
    %12281 = vrot.lane.b32.xlu0 %v12197, 96
    %v12282 = vpop.permute.xlu0 %12281
    %12283 = vrot.lane.b32.xlu0 %v12198, 96
    %v12284 = vpop.permute.xlu0 %12283
    %12285 = vrot.lane.b32.xlu0 %v12199, 96
    %v12286 = vpop.permute.xlu0 %12285
    %12287 = vrot.lane.b32.xlu0 %v12200, 96
    %v12288 = vpop.permute.xlu0 %12287
    %12289 = vrot.lane.b32.xlu0 %v12201, 96
    %v12290 = vpop.permute.xlu0 %12289
    %12291 = vrot.lane.b32.xlu0 %v12202, 96
    %v12292 = vpop.permute.xlu0 %12291
    %12293 = vrot.lane.b32.xlu0 %v12203, 96
    %v12294 = vpop.permute.xlu0 %12293
    %12295 = vrot.lane.b32.xlu0 %v12204, 96
    %v12296 = vpop.permute.xlu0 %12295
    %12297 = vrot.lane.b32.xlu0 %v12205, 96
    %v12298 = vpop.permute.xlu0 %12297
    %12299 = vrot.lane.b32.xlu0 %v12206, 96
    %v12300 = vpop.permute.xlu0 %12299
    %12301 = vrot.lane.b32.xlu0 %v12207, 96
    %v12302 = vpop.permute.xlu0 %12301
    %12303 = vrot.lane.b32.xlu0 %v12208, 96
    %v12304 = vpop.permute.xlu0 %12303
    %12305 = vrot.lane.b32.xlu0 %v12209, 96
    %v12306 = vpop.permute.xlu0 %12305
    %12307 = vrot.lane.b32.xlu0 %v12210, 96
    %v12308 = vpop.permute.xlu0 %12307
    %12309 = vrot.lane.b32.xlu0 %v12211, 96
    %v12310 = vpop.permute.xlu0 %12309
    %12311 = vrot.lane.b32.xlu0 %v12212, 96
    %v12312 = vpop.permute.xlu0 %12311
    %12313 = vrot.lane.b32.xlu0 %v12213, 96
    %v12314 = vpop.permute.xlu0 %12313
    %12315 = vrot.lane.b32.xlu0 %v12214, 96
    %v12316 = vpop.permute.xlu0 %12315
    %12317 = vrot.lane.b32.xlu0 %v12215, 96
    %v12318 = vpop.permute.xlu0 %12317
    %12319 = vrot.lane.b32.xlu0 %v12216, 96
    %v12320 = vpop.permute.xlu0 %12319
    %12321 = vrot.lane.b32.xlu0 %v12217, 96
    %v12322 = vpop.permute.xlu0 %12321
    %12323 = vrot.lane.b32.xlu0 %v12218, 96
    %v12324 = vpop.permute.xlu0 %12323
    %12325 = vrot.lane.b32.xlu0 %v12219, 96
    %v12326 = vpop.permute.xlu0 %12325
    %12327 = vrot.lane.b32.xlu0 %v12220, 96
    %v12328 = vpop.permute.xlu0 %12327
    %12329 = vrot.lane.b32.xlu0 %v12221, 96
    %v12330 = vpop.permute.xlu0 %12329
    %12331 = vrot.lane.b32.xlu0 %v12222, 96
    %v12332 = vpop.permute.xlu0 %12331
    %12333 = vrot.lane.b32.xlu0 %v12223, 96
    %v12334 = vpop.permute.xlu0 %12333
    %12335 = vrot.lane.b32.xlu0 %v12224, 96
    %v12336 = vpop.permute.xlu0 %12335
    %12337 = vrot.lane.b32.xlu0 %v12225, 96
    %v12338 = vpop.permute.xlu0 %12337
    %12339 = vrot.lane.b32.xlu0 %v12226, 96
    %v12340 = vpop.permute.xlu0 %12339
    %12341 = vrot.lane.b32.xlu0 %v12227, 96
    %v12342 = vpop.permute.xlu0 %12341
    %12343 = vrot.lane.b32.xlu0 %v12228, 96
    %v12344 = vpop.permute.xlu0 %12343
    %12345 = vrot.lane.b32.xlu0 %v12229, 96
    %v12346 = vpop.permute.xlu0 %12345
    %12347 = vrot.lane.b32.xlu0 %v12230, 96
    %v12348 = vpop.permute.xlu0 %12347
    %12349 = vrot.lane.b32.xlu0 %v12231, 96
    %v12350 = vpop.permute.xlu0 %12349
    %12351 = vrot.lane.b32.xlu0 %v12232, 96
    %v12352 = vpop.permute.xlu0 %12351
    %vm12393 = vcmask 785408
    %v12394 = vsel %vm12393, %v10693, %v12274
    %v12395 = vsel %vm12393, %v10694, %v12276
    %v12396 = vsel %vm12393, %v10695, %v12278
    %v12397 = vsel %vm12393, %v10696, %v12280
    %v12398 = vsel %vm12393, %v10697, %v12282
    %v12399 = vsel %vm12393, %v10698, %v12284
    %v12400 = vsel %vm12393, %v10699, %v12286
    %v12401 = vsel %vm12393, %v10700, %v12288
    %v12402 = vsel %vm12393, %v10701, %v12290
    %v12403 = vsel %vm12393, %v10702, %v12292
    %v12404 = vsel %vm12393, %v10703, %v12294
    %v12405 = vsel %vm12393, %v10704, %v12296
    %v12406 = vsel %vm12393, %v10705, %v12298
    %v12407 = vsel %vm12393, %v10706, %v12300
    %v12408 = vsel %vm12393, %v10707, %v12302
    %v12409 = vsel %vm12393, %v10708, %v12304
    %v12410 = vsel %vm12393, %v10709, %v12306
    %v12411 = vsel %vm12393, %v10710, %v12308
    %v12412 = vsel %vm12393, %v10711, %v12310
    %v12413 = vsel %vm12393, %v10712, %v12312
    %v12414 = vsel %vm12393, %v10713, %v12314
    %v12415 = vsel %vm12393, %v10714, %v12316
    %v12416 = vsel %vm12393, %v10715, %v12318
    %v12417 = vsel %vm12393, %v10716, %v12320
    %v12418 = vsel %vm12393, %v10717, %v12322
    %v12419 = vsel %vm12393, %v10718, %v12324
    %v12420 = vsel %vm12393, %v10719, %v12326
    %v12421 = vsel %vm12393, %v10720, %v12328
    %v12422 = vsel %vm12393, %v10721, %v12330
    %v12423 = vsel %vm12393, %v10722, %v12332
    %v12424 = vsel %vm12393, %v10723, %v12334
    %v12425 = vsel %vm12393, %v10724, %v12336
    %v12426 = vsel %vm12393, %v10725, %v12338
    %v12427 = vsel %vm12393, %v10726, %v12340
    %v12428 = vsel %vm12393, %v10727, %v12342
    %v12429 = vsel %vm12393, %v10728, %v12344
    %v12430 = vsel %vm12393, %v10729, %v12346
    %v12431 = vsel %vm12393, %v10730, %v12348
    %v12432 = vsel %vm12393, %v10731, %v12350
    %v12433 = vsel %vm12393, %v10732, %v12352
    %v12474 = vrot.slane %v12274, 6
    %v12475 = vrot.slane %v12276, 6
    %v12476 = vrot.slane %v12278, 6
    %v12477 = vrot.slane %v12280, 6
    %v12478 = vrot.slane %v12282, 6
    %v12479 = vrot.slane %v12284, 6
    %v12480 = vrot.slane %v12286, 6
    %v12481 = vrot.slane %v12288, 6
    %v12482 = vrot.slane %v12290, 6
    %v12483 = vrot.slane %v12292, 6
    %v12484 = vrot.slane %v12294, 6
    %v12485 = vrot.slane %v12296, 6
    %v12486 = vrot.slane %v12298, 6
    %v12487 = vrot.slane %v12300, 6
    %v12488 = vrot.slane %v12302, 6
    %v12489 = vrot.slane %v12304, 6
    %v12490 = vrot.slane %v12306, 6
    %v12491 = vrot.slane %v12308, 6
    %v12492 = vrot.slane %v12310, 6
    %v12493 = vrot.slane %v12312, 6
    %v12494 = vrot.slane %v12314, 6
    %v12495 = vrot.slane %v12316, 6
    %v12496 = vrot.slane %v12318, 6
    %v12497 = vrot.slane %v12320, 6
    %v12498 = vrot.slane %v12322, 6
    %v12499 = vrot.slane %v12324, 6
    %v12500 = vrot.slane %v12326, 6
    %v12501 = vrot.slane %v12328, 6
    %v12502 = vrot.slane %v12330, 6
    %v12503 = vrot.slane %v12332, 6
    %v12504 = vrot.slane %v12334, 6
    %v12505 = vrot.slane %v12336, 6
    %v12506 = vrot.slane %v12338, 6
    %v12507 = vrot.slane %v12340, 6
    %v12508 = vrot.slane %v12342, 6
    %v12509 = vrot.slane %v12344, 6
    %v12510 = vrot.slane %v12346, 6
    %v12511 = vrot.slane %v12348, 6
    %v12512 = vrot.slane %v12350, 6
    %v12513 = vrot.slane %v12352, 6
    %v12514 = vsel %vm3212, %v12394, %v12474
    %v12515 = vsel %vm3214, %v12394, %v12474
    %v12516 = vrot.slane %v12515, 2
    %vm12517 = vcmask 1045508
    %v12518 = vsel %vm12517, %v12394, %v12474
    %v12519 = vrot.slane %v12518, 4
    %vm12520 = vcmask 1045504
    %v12521 = vsel %vm12520, %v12474, %v12394
    %v12522 = vrot.slane %v12521, 6
    %v12523 = vsel %vm3212, %v12395, %v12475
    %v12524 = vsel %vm3212, %v12396, %v12476
    %v12525 = vsel %vm3214, %v12396, %v12476
    %v12526 = vrot.slane %v12525, 2
    %v12527 = vsel %vm12517, %v12396, %v12476
    %v12528 = vrot.slane %v12527, 4
    %v12529 = vsel %vm12520, %v12476, %v12396
    %v12530 = vrot.slane %v12529, 6
    %v12531 = vsel %vm3212, %v12397, %v12477
    %v12532 = vsel %vm3212, %v12398, %v12478
    %v12533 = vsel %vm3214, %v12398, %v12478
    %v12534 = vrot.slane %v12533, 2
    %v12535 = vsel %vm12517, %v12398, %v12478
    %v12536 = vrot.slane %v12535, 4
    %v12537 = vsel %vm12520, %v12478, %v12398
    %v12538 = vrot.slane %v12537, 6
    %v12539 = vsel %vm3212, %v12399, %v12479
    %v12540 = vsel %vm3212, %v12400, %v12480
    %v12541 = vsel %vm3214, %v12400, %v12480
    %v12542 = vrot.slane %v12541, 2
    %v12543 = vsel %vm12517, %v12400, %v12480
    %v12544 = vrot.slane %v12543, 4
    %v12545 = vsel %vm12520, %v12480, %v12400
    %v12546 = vrot.slane %v12545, 6
    %v12547 = vsel %vm3212, %v12401, %v12481
    %v12548 = vsel %vm3212, %v12402, %v12482
    %v12549 = vsel %vm3214, %v12402, %v12482
    %v12550 = vrot.slane %v12549, 2
    %v12551 = vsel %vm12517, %v12402, %v12482
    %v12552 = vrot.slane %v12551, 4
    %v12553 = vsel %vm12520, %v12482, %v12402
    %v12554 = vrot.slane %v12553, 6
    %v12555 = vsel %vm3212, %v12403, %v12483
    %v12556 = vsel %vm3212, %v12404, %v12484
    %v12557 = vsel %vm3214, %v12404, %v12484
    %v12558 = vrot.slane %v12557, 2
    %v12559 = vsel %vm12517, %v12404, %v12484
    %v12560 = vrot.slane %v12559, 4
    %v12561 = vsel %vm12520, %v12484, %v12404
    %v12562 = vrot.slane %v12561, 6
    %v12563 = vsel %vm3212, %v12405, %v12485
    %v12564 = vsel %vm3212, %v12406, %v12486
    %v12565 = vsel %vm3214, %v12406, %v12486
    %v12566 = vrot.slane %v12565, 2
    %v12567 = vsel %vm12517, %v12406, %v12486
    %v12568 = vrot.slane %v12567, 4
    %v12569 = vsel %vm12520, %v12486, %v12406
    %v12570 = vrot.slane %v12569, 6
    %v12571 = vsel %vm3212, %v12407, %v12487
    %v12572 = vsel %vm3212, %v12408, %v12488
    %v12573 = vsel %vm3214, %v12408, %v12488
    %v12574 = vrot.slane %v12573, 2
    %v12575 = vsel %vm12517, %v12408, %v12488
    %v12576 = vrot.slane %v12575, 4
    %v12577 = vsel %vm12520, %v12488, %v12408
    %v12578 = vrot.slane %v12577, 6
    %v12579 = vsel %vm3212, %v12409, %v12489
    %v12580 = vsel %vm3212, %v12410, %v12490
    %v12581 = vsel %vm3214, %v12410, %v12490
    %v12582 = vrot.slane %v12581, 2
    %v12583 = vsel %vm12517, %v12410, %v12490
    %v12584 = vrot.slane %v12583, 4
    %v12585 = vsel %vm12520, %v12490, %v12410
    %v12586 = vrot.slane %v12585, 6
    %v12587 = vsel %vm3212, %v12411, %v12491
    %v12588 = vsel %vm3212, %v12412, %v12492
    %v12589 = vsel %vm3214, %v12412, %v12492
    %v12590 = vrot.slane %v12589, 2
    %v12591 = vsel %vm12517, %v12412, %v12492
    %v12592 = vrot.slane %v12591, 4
    %v12593 = vsel %vm12520, %v12492, %v12412
    %v12594 = vrot.slane %v12593, 6
    %v12595 = vsel %vm3212, %v12413, %v12493
    %v12596 = vsel %vm3212, %v12414, %v12494
    %v12597 = vsel %vm3214, %v12414, %v12494
    %v12598 = vrot.slane %v12597, 2
    %v12599 = vsel %vm12517, %v12414, %v12494
    %v12600 = vrot.slane %v12599, 4
    %v12601 = vsel %vm12520, %v12494, %v12414
    %v12602 = vrot.slane %v12601, 6
    %v12603 = vsel %vm3212, %v12415, %v12495
    %v12604 = vsel %vm3212, %v12416, %v12496
    %v12605 = vsel %vm3214, %v12416, %v12496
    %v12606 = vrot.slane %v12605, 2
    %v12607 = vsel %vm12517, %v12416, %v12496
    %v12608 = vrot.slane %v12607, 4
    %v12609 = vsel %vm12520, %v12496, %v12416
    %v12610 = vrot.slane %v12609, 6
    %v12611 = vsel %vm3212, %v12417, %v12497
    %v12612 = vsel %vm3212, %v12418, %v12498
    %v12613 = vsel %vm3214, %v12418, %v12498
    %v12614 = vrot.slane %v12613, 2
    %v12615 = vsel %vm12517, %v12418, %v12498
    %v12616 = vrot.slane %v12615, 4
    %v12617 = vsel %vm12520, %v12498, %v12418
    %v12618 = vrot.slane %v12617, 6
    %v12619 = vsel %vm3212, %v12419, %v12499
    %v12620 = vsel %vm3212, %v12420, %v12500
    %v12621 = vsel %vm3214, %v12420, %v12500
    %v12622 = vrot.slane %v12621, 2
    %v12623 = vsel %vm12517, %v12420, %v12500
    %v12624 = vrot.slane %v12623, 4
    %v12625 = vsel %vm12520, %v12500, %v12420
    %v12626 = vrot.slane %v12625, 6
    %v12627 = vsel %vm3212, %v12421, %v12501
    %v12628 = vsel %vm3212, %v12422, %v12502
    %v12629 = vsel %vm3214, %v12422, %v12502
    %v12630 = vrot.slane %v12629, 2
    %v12631 = vsel %vm12517, %v12422, %v12502
    %v12632 = vrot.slane %v12631, 4
    %v12633 = vsel %vm12520, %v12502, %v12422
    %v12634 = vrot.slane %v12633, 6
    %v12635 = vsel %vm3212, %v12423, %v12503
    %v12636 = vsel %vm3212, %v12424, %v12504
    %v12637 = vsel %vm3214, %v12424, %v12504
    %v12638 = vrot.slane %v12637, 2
    %v12639 = vsel %vm12517, %v12424, %v12504
    %v12640 = vrot.slane %v12639, 4
    %v12641 = vsel %vm12520, %v12504, %v12424
    %v12642 = vrot.slane %v12641, 6
    %v12643 = vsel %vm3212, %v12425, %v12505
    %v12644 = vsel %vm3212, %v12426, %v12506
    %v12645 = vsel %vm3214, %v12426, %v12506
    %v12646 = vrot.slane %v12645, 2
    %v12647 = vsel %vm12517, %v12426, %v12506
    %v12648 = vrot.slane %v12647, 4
    %v12649 = vsel %vm12520, %v12506, %v12426
    %v12650 = vrot.slane %v12649, 6
    %v12651 = vsel %vm3212, %v12427, %v12507
    %v12652 = vsel %vm3212, %v12428, %v12508
    %v12653 = vsel %vm3214, %v12428, %v12508
    %v12654 = vrot.slane %v12653, 2
    %v12655 = vsel %vm12517, %v12428, %v12508
    %v12656 = vrot.slane %v12655, 4
    %v12657 = vsel %vm12520, %v12508, %v12428
    %v12658 = vrot.slane %v12657, 6
    %v12659 = vsel %vm3212, %v12429, %v12509
    %v12660 = vsel %vm3212, %v12430, %v12510
    %v12661 = vsel %vm3214, %v12430, %v12510
    %v12662 = vrot.slane %v12661, 2
    %v12663 = vsel %vm12517, %v12430, %v12510
    %v12664 = vrot.slane %v12663, 4
    %v12665 = vsel %vm12520, %v12510, %v12430
    %v12666 = vrot.slane %v12665, 6
    %v12667 = vsel %vm3212, %v12431, %v12511
    %v12668 = vsel %vm3212, %v12432, %v12512
    %v12669 = vsel %vm3214, %v12432, %v12512
    %v12670 = vrot.slane %v12669, 2
    %v12671 = vsel %vm12517, %v12432, %v12512
    %v12672 = vrot.slane %v12671, 4
    %v12673 = vsel %vm12520, %v12512, %v12432
    %v12674 = vrot.slane %v12673, 6
    %v12675 = vsel %vm3212, %v12433, %v12513
    %v12676 = vld [vmem:[%s3] sm:$0xff]
    %v12677 = vld [vmem:[%s3 + $0x8] sm:$0xff]
    %v12678 = vld [vmem:[%s3 + $0x10] sm:$0xff]
    %v12679 = vld [vmem:[%s3 + $0x18] sm:$0xff]
    %v12680 = vld [vmem:[%s3 + $0x20] sm:$0xff]
    %v12681 = vld [vmem:[%s3 + $0x28] sm:$0xff]
    %v12682 = vld [vmem:[%s3 + $0x30] sm:$0xff]
    %v12683 = vld [vmem:[%s3 + $0x38] sm:$0xff]
    %v12684 = vld [vmem:[%s3 + $0x40] sm:$0xff]
    %v12685 = vld [vmem:[%s3 + $0x48] sm:$0xff]
    %v12686 = vld [vmem:[%s3 + $0x50] sm:$0xff]
    %v12687 = vld [vmem:[%s3 + $0x58] sm:$0xff]
    %v12688 = vld [vmem:[%s3 + $0x60] sm:$0xff]
    %v12689 = vld [vmem:[%s3 + $0x68] sm:$0xff]
    %v12690 = vld [vmem:[%s3 + $0x70] sm:$0xff]
    %v12691 = vld [vmem:[%s3 + $0x78] sm:$0xff]
    %v12692 = vld [vmem:[%s3 + $0x80] sm:$0xff]
    %v12693 = vld [vmem:[%s3 + $0x88] sm:$0xff]
    %v12694 = vld [vmem:[%s3 + $0x90] sm:$0x3f]
    %v12695 = vld [vmem:[%s4] sm:$0x1]
    %v12697 = vperm.slane %v12695, 0
    %12699 = vst [vmem:[#allocation1] ss:$4 sm:$0xff] %v12514
    %s12700 = scalar_lea.vmem [#allocation1], 1
    %12701 = vst [vmem:[%s12700] ss:$4 sm:$0xff] %v12516
    %s12702 = scalar_lea.vmem [#allocation1], 2
    %12703 = vst [vmem:[%s12702] ss:$4 sm:$0xff] %v12519
    %s12704 = scalar_lea.vmem [#allocation1], 3
    %12705 = vst [vmem:[%s12704] ss:$4 sm:$0xff] %v12522
    %s12706 = scalar_lea.vmem [#allocation1], 32
    %12707 = vst [vmem:[%s12706] ss:$4 sm:$0xff] %v12523
    %s12708 = scalar_lea.vmem [#allocation1], 33
    %12709 = vst [vmem:[%s12708] ss:$4 sm:$0xff] %v12524
    %s12710 = scalar_lea.vmem [#allocation1], 34
    %12711 = vst [vmem:[%s12710] ss:$4 sm:$0xff] %v12526
    %s12712 = scalar_lea.vmem [#allocation1], 35
    %12713 = vst [vmem:[%s12712] ss:$4 sm:$0xff] %v12528
    %v12714 = vld.sshfl [vmem:[#allocation1] sm:$0xff pattern:$0x73625140]
    %v12715 = vld.sshfl [vmem:[#allocation1 + $0x8] sm:$0xff pattern:$0x73625140]
    %v12716 = vld.sshfl [vmem:[#allocation1 + $0x20] sm:$0xff pattern:$0x73625140]
    %v12717 = vld.sshfl [vmem:[#allocation1 + $0x28] sm:$0xff pattern:$0x73625140]
    %12718 = vst [vmem:[#allocation1] ss:$4 sm:$0xff] %v12530
    %12719 = vst [vmem:[%s12700] ss:$4 sm:$0xff] %v12531
    %12720 = vst [vmem:[%s12702] ss:$4 sm:$0xff] %v12532
    %12721 = vst [vmem:[%s12704] ss:$4 sm:$0xff] %v12534
    %12722 = vst [vmem:[%s12706] ss:$4 sm:$0xff] %v12536
    %12723 = vst [vmem:[%s12708] ss:$4 sm:$0xff] %v12538
    %12724 = vst [vmem:[%s12710] ss:$4 sm:$0xff] %v12539
    %12725 = vst [vmem:[%s12712] ss:$4 sm:$0xff] %v12540
    %v12726 = vld.sshfl [vmem:[#allocation1] sm:$0xff pattern:$0x73625140]
    %v12727 = vld.sshfl [vmem:[#allocation1 + $0x8] sm:$0xff pattern:$0x73625140]
    %v12728 = vld.sshfl [vmem:[#allocation1 + $0x20] sm:$0xff pattern:$0x73625140]
    %v12729 = vld.sshfl [vmem:[#allocation1 + $0x28] sm:$0xff pattern:$0x73625140]
    %12730 = vst [vmem:[#allocation1] ss:$4 sm:$0xff] %v12542
    %12731 = vst [vmem:[%s12700] ss:$4 sm:$0xff] %v12544
    %12732 = vst [vmem:[%s12702] ss:$4 sm:$0xff] %v12546
    %12733 = vst [vmem:[%s12704] ss:$4 sm:$0xff] %v12547
    %12734 = vst [vmem:[%s12706] ss:$4 sm:$0xff] %v12548
    %12735 = vst [vmem:[%s12708] ss:$4 sm:$0xff] %v12550
    %12736 = vst [vmem:[%s12710] ss:$4 sm:$0xff] %v12552
    %12737 = vst [vmem:[%s12712] ss:$4 sm:$0xff] %v12554
    %v12738 = vld.sshfl [vmem:[#allocation1] sm:$0xff pattern:$0x73625140]
    %v12739 = vld.sshfl [vmem:[#allocation1 + $0x8] sm:$0xff pattern:$0x73625140]
    %v12740 = vld.sshfl [vmem:[#allocation1 + $0x20] sm:$0xff pattern:$0x73625140]
    %v12741 = vld.sshfl [vmem:[#allocation1 + $0x28] sm:$0xff pattern:$0x73625140]
    %12742 = vst [vmem:[#allocation1] ss:$4 sm:$0xff] %v12555
    %12743 = vst [vmem:[%s12700] ss:$4 sm:$0xff] %v12556
    %12744 = vst [vmem:[%s12702] ss:$4 sm:$0xff] %v12558
    %12745 = vst [vmem:[%s12704] ss:$4 sm:$0xff] %v12560
    %12746 = vst [vmem:[%s12706] ss:$4 sm:$0xff] %v12562
    %12747 = vst [vmem:[%s12708] ss:$4 sm:$0xff] %v12563
    %12748 = vst [vmem:[%s12710] ss:$4 sm:$0xff] %v12564
    %12749 = vst [vmem:[%s12712] ss:$4 sm:$0xff] %v12566
    %v12750 = vld.sshfl [vmem:[#allocation1] sm:$0xff pattern:$0x73625140]
    %v12751 = vld.sshfl [vmem:[#allocation1 + $0x8] sm:$0xff pattern:$0x73625140]
    %v12752 = vld.sshfl [vmem:[#allocation1 + $0x20] sm:$0xff pattern:$0x73625140]
    %v12753 = vld.sshfl [vmem:[#allocation1 + $0x28] sm:$0xff pattern:$0x73625140]
    %12754 = vst [vmem:[#allocation1] ss:$4 sm:$0xff] %v12568
    %12755 = vst [vmem:[%s12700] ss:$4 sm:$0xff] %v12570
    %12756 = vst [vmem:[%s12702] ss:$4 sm:$0xff] %v12571
    %12757 = vst [vmem:[%s12704] ss:$4 sm:$0xff] %v12572
    %12758 = vst [vmem:[%s12706] ss:$4 sm:$0xff] %v12574
    %12759 = vst [vmem:[%s12708] ss:$4 sm:$0xff] %v12576
    %12760 = vst [vmem:[%s12710] ss:$4 sm:$0xff] %v12578
    %12761 = vst [vmem:[%s12712] ss:$4 sm:$0xff] %v12579
    %v12762 = vld.sshfl [vmem:[#allocation1] sm:$0xff pattern:$0x73625140]
    %v12763 = vld.sshfl [vmem:[#allocation1 + $0x8] sm:$0xff pattern:$0x73625140]
    %v12764 = vld.sshfl [vmem:[#allocation1 + $0x20] sm:$0xff pattern:$0x73625140]
    %v12765 = vld.sshfl [vmem:[#allocation1 + $0x28] sm:$0xff pattern:$0x73625140]
    %12766 = vst [vmem:[#allocation1] ss:$4 sm:$0xff] %v12580
    %12767 = vst [vmem:[%s12700] ss:$4 sm:$0xff] %v12582
    %12768 = vst [vmem:[%s12702] ss:$4 sm:$0xff] %v12584
    %12769 = vst [vmem:[%s12704] ss:$4 sm:$0xff] %v12586
    %12770 = vst [vmem:[%s12706] ss:$4 sm:$0xff] %v12587
    %12771 = vst [vmem:[%s12708] ss:$4 sm:$0xff] %v12588
    %12772 = vst [vmem:[%s12710] ss:$4 sm:$0xff] %v12590
    %12773 = vst [vmem:[%s12712] ss:$4 sm:$0xff] %v12592
    %v12774 = vld.sshfl [vmem:[#allocation1] sm:$0xff pattern:$0x73625140]
    %v12775 = vld.sshfl [vmem:[#allocation1 + $0x8] sm:$0xff pattern:$0x73625140]
    %v12776 = vld.sshfl [vmem:[#allocation1 + $0x20] sm:$0xff pattern:$0x73625140]
    %v12777 = vld.sshfl [vmem:[#allocation1 + $0x28] sm:$0xff pattern:$0x73625140]
    %12778 = vst [vmem:[#allocation1] ss:$4 sm:$0xff] %v12594
    %12779 = vst [vmem:[%s12700] ss:$4 sm:$0xff] %v12595
    %12780 = vst [vmem:[%s12702] ss:$4 sm:$0xff] %v12596
    %12781 = vst [vmem:[%s12704] ss:$4 sm:$0xff] %v12598
    %12782 = vst [vmem:[%s12706] ss:$4 sm:$0xff] %v12600
    %12783 = vst [vmem:[%s12708] ss:$4 sm:$0xff] %v12602
    %12784 = vst [vmem:[%s12710] ss:$4 sm:$0xff] %v12603
    %12785 = vst [vmem:[%s12712] ss:$4 sm:$0xff] %v12604
    %v12786 = vld.sshfl [vmem:[#allocation1] sm:$0xff pattern:$0x73625140]
    %v12787 = vld.sshfl [vmem:[#allocation1 + $0x8] sm:$0xff pattern:$0x73625140]
    %v12788 = vld.sshfl [vmem:[#allocation1 + $0x20] sm:$0xff pattern:$0x73625140]
    %v12789 = vld.sshfl [vmem:[#allocation1 + $0x28] sm:$0xff pattern:$0x73625140]
    %12790 = vst [vmem:[#allocation1] ss:$4 sm:$0xff] %v12606
    %12791 = vst [vmem:[%s12700] ss:$4 sm:$0xff] %v12608
    %12792 = vst [vmem:[%s12702] ss:$4 sm:$0xff] %v12610
    %12793 = vst [vmem:[%s12704] ss:$4 sm:$0xff] %v12611
    %12794 = vst [vmem:[%s12706] ss:$4 sm:$0xff] %v12612
    %12795 = vst [vmem:[%s12708] ss:$4 sm:$0xff] %v12614
    %12796 = vst [vmem:[%s12710] ss:$4 sm:$0xff] %v12616
    %12797 = vst [vmem:[%s12712] ss:$4 sm:$0xff] %v12618
    %v12798 = vld.sshfl [vmem:[#allocation1] sm:$0xff pattern:$0x73625140]
    %v12799 = vld.sshfl [vmem:[#allocation1 + $0x8] sm:$0xff pattern:$0x73625140]
    %v12800 = vld.sshfl [vmem:[#allocation1 + $0x20] sm:$0xff pattern:$0x73625140]
    %v12801 = vld.sshfl [vmem:[#allocation1 + $0x28] sm:$0xff pattern:$0x73625140]
    %12802 = vst [vmem:[#allocation1] ss:$4 sm:$0xff] %v12619
    %12803 = vst [vmem:[%s12700] ss:$4 sm:$0xff] %v12620
    %12804 = vst [vmem:[%s12702] ss:$4 sm:$0xff] %v12622
    %12805 = vst [vmem:[%s12704] ss:$4 sm:$0xff] %v12624
    %12806 = vst [vmem:[%s12706] ss:$4 sm:$0xff] %v12626
    %12807 = vst [vmem:[%s12708] ss:$4 sm:$0xff] %v12627
    %12808 = vst [vmem:[%s12710] ss:$4 sm:$0xff] %v12628
    %12809 = vst [vmem:[%s12712] ss:$4 sm:$0xff] %v12630
    %v12810 = vld.sshfl [vmem:[#allocation1] sm:$0xff pattern:$0x73625140]
    %v12811 = vld.sshfl [vmem:[#allocation1 + $0x8] sm:$0xff pattern:$0x73625140]
    %v12812 = vld.sshfl [vmem:[#allocation1 + $0x20] sm:$0xff pattern:$0x73625140]
    %v12813 = vld.sshfl [vmem:[#allocation1 + $0x28] sm:$0xff pattern:$0x73625140]
    %12814 = vst [vmem:[#allocation1] ss:$4 sm:$0xff] %v12632
    %12815 = vst [vmem:[%s12700] ss:$4 sm:$0xff] %v12634
    %12816 = vst [vmem:[%s12702] ss:$4 sm:$0xff] %v12635
    %12817 = vst [vmem:[%s12704] ss:$4 sm:$0xff] %v12636
    %12818 = vst [vmem:[%s12706] ss:$4 sm:$0xff] %v12638
    %12819 = vst [vmem:[%s12708] ss:$4 sm:$0xff] %v12640
    %12820 = vst [vmem:[%s12710] ss:$4 sm:$0xff] %v12642
    %12821 = vst [vmem:[%s12712] ss:$4 sm:$0xff] %v12643
    %v12822 = vld.sshfl [vmem:[#allocation1] sm:$0xff pattern:$0x73625140]
    %v12823 = vld.sshfl [vmem:[#allocation1 + $0x8] sm:$0xff pattern:$0x73625140]
    %v12824 = vld.sshfl [vmem:[#allocation1 + $0x20] sm:$0xff pattern:$0x73625140]
    %v12825 = vld.sshfl [vmem:[#allocation1 + $0x28] sm:$0xff pattern:$0x73625140]
    %12826 = vst [vmem:[#allocation1] ss:$4 sm:$0xff] %v12644
    %12827 = vst [vmem:[%s12700] ss:$4 sm:$0xff] %v12646
    %12828 = vst [vmem:[%s12702] ss:$4 sm:$0xff] %v12648
    %12829 = vst [vmem:[%s12704] ss:$4 sm:$0xff] %v12650
    %12830 = vst [vmem:[%s12706] ss:$4 sm:$0xff] %v12651
    %12831 = vst [vmem:[%s12708] ss:$4 sm:$0xff] %v12652
    %12832 = vst [vmem:[%s12710] ss:$4 sm:$0xff] %v12654
    %12833 = vst [vmem:[%s12712] ss:$4 sm:$0xff] %v12656
    %v12834 = vld.sshfl [vmem:[#allocation1] sm:$0xff pattern:$0x73625140]
    %v12835 = vld.sshfl [vmem:[#allocation1 + $0x8] sm:$0xff pattern:$0x73625140]
    %v12836 = vld.sshfl [vmem:[#allocation1 + $0x20] sm:$0xff pattern:$0x73625140]
    %v12837 = vld.sshfl [vmem:[#allocation1 + $0x28] sm:$0xff pattern:$0x73625140]
    %12838 = vst [vmem:[#allocation1] ss:$4 sm:$0xff] %v12658
    %12839 = vst [vmem:[%s12700] ss:$4 sm:$0xff] %v12659
    %12840 = vst [vmem:[%s12702] ss:$4 sm:$0xff] %v12660
    %12841 = vst [vmem:[%s12704] ss:$4 sm:$0xff] %v12662
    %12842 = vst [vmem:[%s12706] ss:$4 sm:$0xff] %v12664
    %12843 = vst [vmem:[%s12708] ss:$4 sm:$0xff] %v12666
    %12844 = vst [vmem:[%s12710] ss:$4 sm:$0xff] %v12667
    %12845 = vst [vmem:[%s12712] ss:$4 sm:$0xff] %v12668
    %v12846 = vld.sshfl [vmem:[#allocation1] sm:$0xff pattern:$0x73625140]
    %v12847 = vld.sshfl [vmem:[#allocation1 + $0x8] sm:$0xff pattern:$0x73625140]
    %v12848 = vld.sshfl [vmem:[#allocation1 + $0x20] sm:$0xff pattern:$0x73625140]
    %v12849 = vld.sshfl [vmem:[#allocation1 + $0x28] sm:$0xff pattern:$0x73625140]
    %12850 = vst [vmem:[#allocation1] ss:$4 sm:$0xff] %v12670
    %12851 = vst [vmem:[%s12700] ss:$4 sm:$0xff] %v12672
    %12852 = vst [vmem:[%s12702] ss:$4 sm:$0xff] %v12674
    %12853 = vst [vmem:[%s12704] ss:$4 sm:$0xff] %v12675
    %v12854 = vld.sshfl [vmem:[#allocation1] sm:$0xff pattern:$0x73625140]
    %v12855 = vld.sshfl [vmem:[#allocation1 + $0x8] sm:$0xff pattern:$0x73625140]
    %vm12881 = vcmask 179200
    %v12882 = vsel %vm12881, %v12715, 0
    %v12884 = vsel %vm12881, %v12717, 0
    %v12886 = vsel %vm12881, %v12727, 0
    %v12888 = vsel %vm12881, %v12729, 0
    %v12890 = vsel %vm12881, %v12739, 0
    %v12892 = vsel %vm12881, %v12741, 0
    %v12894 = vsel %vm12881, %v12751, 0
    %v12896 = vsel %vm12881, %v12753, 0
    %v12898 = vsel %vm12881, %v12763, 0
    %v12900 = vsel %vm12881, %v12765, 0
    %v12902 = vsel %vm12881, %v12775, 0
    %v12904 = vsel %vm12881, %v12777, 0
    %v12906 = vsel %vm12881, %v12787, 0
    %v12908 = vsel %vm12881, %v12789, 0
    %v12910 = vsel %vm12881, %v12799, 0
    %v12912 = vsel %vm12881, %v12801, 0
    %v12914 = vsel %vm12881, %v12811, 0
    %v12916 = vsel %vm12881, %v12813, 0
    %v12918 = vsel %vm12881, %v12823, 0
    %v12920 = vsel %vm12881, %v12825, 0
    %v12922 = vsel %vm12881, %v12835, 0
    %v12924 = vsel %vm12881, %v12837, 0
    %v12926 = vsel %vm12881, %v12847, 0
    %v12928 = vsel %vm12881, %v12849, 0
    %v12930 = vsel %vm12881, %v12855, 0
    %v12933 = vsel %vm12520, %v12694, 0
    %12935 = vmatpush.msra.mxu0 %v12691
    %12936 = vmatpush.msra.mxu0 %v12690
    %12937 = vmatpush.msra.mxu0 %v12689
    %12938 = vmatpush.msra.mxu0 %v12688
    %12939 = vmatpush.msra.mxu0 %v12687
    %12940 = vmatpush.msra.mxu0 %v12686
    %12941 = vmatpush.msra.mxu0 %v12685
    %12942 = vmatpush.msra.mxu0 %v12684
    %12943 = vmatpush.msra.mxu0 %v12683
    %12944 = vmatpush.msra.mxu0 %v12682
    %12945 = vmatpush.msra.mxu0 %v12681
    %12946 = vmatpush.msra.mxu0 %v12680
    %12947 = vmatpush.msra.mxu0 %v12679
    %12948 = vmatpush.msra.mxu0 %v12678
    %12949 = vmatpush.msra.mxu0 %v12677
    %12950 = vmatpush.msra.mxu0 %v12676
    %12951 = vmatmul.f32.gmra.mxu0 %v12714
    %v12952 = vpop.f32.mrf.mxu0
    %v12953 = vadd.f32 %v12697, %v12952
    %12954 = vmatmul.f32.gmra.mxu0 %v12716
    %v12955 = vpop.f32.mrf.mxu0
    %v12956 = vadd.f32 %v12697, %v12955
    %12957 = vmatmul.f32.gmra.mxu0 %v12726
    %v12958 = vpop.f32.mrf.mxu0
    %v12959 = vadd.f32 %v12697, %v12958
    %12960 = vmatmul.f32.gmra.mxu0 %v12728
    %v12961 = vpop.f32.mrf.mxu0
    %v12962 = vadd.f32 %v12697, %v12961
    %12963 = vmatmul.f32.gmra.mxu0 %v12738
    %v12964 = vpop.f32.mrf.mxu0
    %v12965 = vadd.f32 %v12697, %v12964
    %12966 = vmatmul.f32.gmra.mxu0 %v12740
    %v12967 = vpop.f32.mrf.mxu0
    %v12968 = vadd.f32 %v12697, %v12967
    %12969 = vmatmul.f32.gmra.mxu0 %v12750
    %v12970 = vpop.f32.mrf.mxu0
    %v12971 = vadd.f32 %v12697, %v12970
    %12972 = vmatmul.f32.gmra.mxu0 %v12752
    %v12973 = vpop.f32.mrf.mxu0
    %v12974 = vadd.f32 %v12697, %v12973
    %12975 = vmatmul.f32.gmra.mxu0 %v12762
    %v12976 = vpop.f32.mrf.mxu0
    %v12977 = vadd.f32 %v12697, %v12976
    %12978 = vmatmul.f32.gmra.mxu0 %v12764
    %v12979 = vpop.f32.mrf.mxu0
    %v12980 = vadd.f32 %v12697, %v12979
    %12981 = vmatmul.f32.gmra.mxu0 %v12774
    %v12982 = vpop.f32.mrf.mxu0
    %v12983 = vadd.f32 %v12697, %v12982
    %12984 = vmatmul.f32.gmra.mxu0 %v12776
    %v12985 = vpop.f32.mrf.mxu0
    %v12986 = vadd.f32 %v12697, %v12985
    %12987 = vmatmul.f32.gmra.mxu0 %v12786
    %v12988 = vpop.f32.mrf.mxu0
    %v12989 = vadd.f32 %v12697, %v12988
    %12990 = vmatmul.f32.gmra.mxu0 %v12788
    %v12991 = vpop.f32.mrf.mxu0
    %v12992 = vadd.f32 %v12697, %v12991
    %12993 = vmatmul.f32.gmra.mxu0 %v12798
    %v12994 = vpop.f32.mrf.mxu0
    %v12995 = vadd.f32 %v12697, %v12994
    %12996 = vmatmul.f32.gmra.mxu0 %v12800
    %v12997 = vpop.f32.mrf.mxu0
    %v12998 = vadd.f32 %v12697, %v12997
    %12999 = vmatmul.f32.gmra.mxu0 %v12810
    %v13000 = vpop.f32.mrf.mxu0
    %v13001 = vadd.f32 %v12697, %v13000
    %13002 = vmatmul.f32.gmra.mxu0 %v12812
    %v13003 = vpop.f32.mrf.mxu0
    %v13004 = vadd.f32 %v12697, %v13003
    %13005 = vmatmul.f32.gmra.mxu0 %v12822
    %v13006 = vpop.f32.mrf.mxu0
    %v13007 = vadd.f32 %v12697, %v13006
    %13008 = vmatmul.f32.gmra.mxu0 %v12824
    %v13009 = vpop.f32.mrf.mxu0
    %v13010 = vadd.f32 %v12697, %v13009
    %13011 = vmatmul.f32.gmra.mxu0 %v12834
    %v13012 = vpop.f32.mrf.mxu0
    %v13013 = vadd.f32 %v12697, %v13012
    %13014 = vmatmul.f32.gmra.mxu0 %v12836
    %v13015 = vpop.f32.mrf.mxu0
    %v13016 = vadd.f32 %v12697, %v13015
    %13017 = vmatmul.f32.gmra.mxu0 %v12846
    %v13018 = vpop.f32.mrf.mxu0
    %v13019 = vadd.f32 %v12697, %v13018
    %13020 = vmatmul.f32.gmra.mxu0 %v12848
    %v13021 = vpop.f32.mrf.mxu0
    %v13022 = vadd.f32 %v12697, %v13021
    %13023 = vmatmul.f32.gmra.mxu0 %v12854
    %v13024 = vpop.f32.mrf.mxu0
    %v13025 = vadd.f32 %v12697, %v13024
    %13026 = vdwg.mxu0
    %13027 = vmatpush.msra.mxu0 0.0
    %13028 = vmatpush.msra.mxu0 0.0
    %13029 = vmatpush.msra.mxu0 0.0
    %13030 = vmatpush.msra.mxu0 0.0
    %13031 = vmatpush.msra.mxu0 0.0
    %13032 = vmatpush.msra.mxu0 0.0
    %13033 = vmatpush.msra.mxu0 0.0
    %13034 = vmatpush.msra.mxu0 0.0
    %13035 = vmatpush.msra.mxu0 0.0
    %13036 = vmatpush.msra.mxu0 0.0
    %13037 = vmatpush.msra.mxu0 0.0
    %13038 = vmatpush.msra.mxu0 0.0
    %13039 = vmatpush.msra.mxu0 0.0
    %13040 = vmatpush.msra.mxu0 %v12933
    %13041 = vmatpush.msra.mxu0 %v12693
    %13042 = vmatpush.msra.mxu0 %v12692
    %13043 = vmatmul.f32.gmra.mxu0 %v12882
    %v13044 = vpop.f32.mrf.mxu0
    %v13045 = vadd.f32 %v12953, %v13044
    %13046 = vmatmul.f32.gmra.mxu0 %v12884
    %v13047 = vpop.f32.mrf.mxu0
    %v13048 = vadd.f32 %v12956, %v13047
    %13049 = vmatmul.f32.gmra.mxu0 %v12886
    %v13050 = vpop.f32.mrf.mxu0
    %v13051 = vadd.f32 %v12959, %v13050
    %13052 = vmatmul.f32.gmra.mxu0 %v12888
    %v13053 = vpop.f32.mrf.mxu0
    %v13054 = vadd.f32 %v12962, %v13053
    %13055 = vmatmul.f32.gmra.mxu0 %v12890
    %v13056 = vpop.f32.mrf.mxu0
    %v13057 = vadd.f32 %v12965, %v13056
    %13058 = vmatmul.f32.gmra.mxu0 %v12892
    %v13059 = vpop.f32.mrf.mxu0
    %v13060 = vadd.f32 %v12968, %v13059
    %13061 = vmatmul.f32.gmra.mxu0 %v12894
    %v13062 = vpop.f32.mrf.mxu0
    %v13063 = vadd.f32 %v12971, %v13062
    %13064 = vmatmul.f32.gmra.mxu0 %v12896
    %v13065 = vpop.f32.mrf.mxu0
    %v13066 = vadd.f32 %v12974, %v13065
    %13067 = vmatmul.f32.gmra.mxu0 %v12898
    %v13068 = vpop.f32.mrf.mxu0
    %v13069 = vadd.f32 %v12977, %v13068
    %13070 = vmatmul.f32.gmra.mxu0 %v12900
    %v13071 = vpop.f32.mrf.mxu0
    %v13072 = vadd.f32 %v12980, %v13071
    %13073 = vmatmul.f32.gmra.mxu0 %v12902
    %v13074 = vpop.f32.mrf.mxu0
    %v13075 = vadd.f32 %v12983, %v13074
    %13076 = vmatmul.f32.gmra.mxu0 %v12904
    %v13077 = vpop.f32.mrf.mxu0
    %v13078 = vadd.f32 %v12986, %v13077
    %13079 = vmatmul.f32.gmra.mxu0 %v12906
    %v13080 = vpop.f32.mrf.mxu0
    %v13081 = vadd.f32 %v12989, %v13080
    %13082 = vmatmul.f32.gmra.mxu0 %v12908
    %v13083 = vpop.f32.mrf.mxu0
    %v13084 = vadd.f32 %v12992, %v13083
    %13085 = vmatmul.f32.gmra.mxu0 %v12910
    %v13086 = vpop.f32.mrf.mxu0
    %v13087 = vadd.f32 %v12995, %v13086
    %13088 = vmatmul.f32.gmra.mxu0 %v12912
    %v13089 = vpop.f32.mrf.mxu0
    %v13090 = vadd.f32 %v12998, %v13089
    %13091 = vmatmul.f32.gmra.mxu0 %v12914
    %v13092 = vpop.f32.mrf.mxu0
    %v13093 = vadd.f32 %v13001, %v13092
    %13094 = vmatmul.f32.gmra.mxu0 %v12916
    %v13095 = vpop.f32.mrf.mxu0
    %v13096 = vadd.f32 %v13004, %v13095
    %13097 = vmatmul.f32.gmra.mxu0 %v12918
    %v13098 = vpop.f32.mrf.mxu0
    %v13099 = vadd.f32 %v13007, %v13098
    %13100 = vmatmul.f32.gmra.mxu0 %v12920
    %v13101 = vpop.f32.mrf.mxu0
    %v13102 = vadd.f32 %v13010, %v13101
    %13103 = vmatmul.f32.gmra.mxu0 %v12922
    %v13104 = vpop.f32.mrf.mxu0
    %v13105 = vadd.f32 %v13013, %v13104
    %13106 = vmatmul.f32.gmra.mxu0 %v12924
    %v13107 = vpop.f32.mrf.mxu0
    %v13108 = vadd.f32 %v13016, %v13107
    %13109 = vmatmul.f32.gmra.mxu0 %v12926
    %v13110 = vpop.f32.mrf.mxu0
    %v13111 = vadd.f32 %v13019, %v13110
    %13112 = vmatmul.f32.gmra.mxu0 %v12928
    %v13113 = vpop.f32.mrf.mxu0
    %v13114 = vadd.f32 %v13022, %v13113
    %13115 = vmatmul.f32.gmra.mxu0 %v12930
    %v13116 = vpop.f32.mrf.mxu0
    %v13117 = vadd.f32 %v13025, %v13116
    %13118 = vdwg.mxu0
    %v13119 = vmax.f32 %v13045, 0.0
    %v13120 = vmax.f32 %v13048, 0.0
    %v13121 = vmax.f32 %v13051, 0.0
    %v13122 = vmax.f32 %v13054, 0.0
    %v13123 = vmax.f32 %v13057, 0.0
    %v13124 = vmax.f32 %v13060, 0.0
    %v13125 = vmax.f32 %v13063, 0.0
    %v13126 = vmax.f32 %v13066, 0.0
    %v13127 = vmax.f32 %v13069, 0.0
    %v13128 = vmax.f32 %v13072, 0.0
    %v13129 = vmax.f32 %v13075, 0.0
    %v13130 = vmax.f32 %v13078, 0.0
    %v13131 = vmax.f32 %v13081, 0.0
    %v13132 = vmax.f32 %v13084, 0.0
    %v13133 = vmax.f32 %v13087, 0.0
    %v13134 = vmax.f32 %v13090, 0.0
    %v13135 = vmax.f32 %v13093, 0.0
    %v13136 = vmax.f32 %v13096, 0.0
    %v13137 = vmax.f32 %v13099, 0.0
    %v13138 = vmax.f32 %v13102, 0.0
    %v13139 = vmax.f32 %v13105, 0.0
    %v13140 = vmax.f32 %v13108, 0.0
    %v13141 = vmax.f32 %v13111, 0.0
    %v13142 = vmax.f32 %v13114, 0.0
    %v13143 = vmax.f32 %v13117, 0.0
    %v13169 = vrot.slane %v13119, 2
    %v13170 = vrot.slane %v13119, 4
    %v13171 = vrot.slane %v13119, 6
    %v13172 = vrot.slane %v13120, 2
    %v13173 = vrot.slane %v13120, 4
    %v13174 = vrot.slane %v13120, 6
    %v13175 = vrot.slane %v13121, 2
    %v13176 = vrot.slane %v13121, 4
    %v13177 = vrot.slane %v13121, 6
    %v13178 = vrot.slane %v13122, 2
    %v13179 = vrot.slane %v13122, 4
    %v13180 = vrot.slane %v13122, 6
    %v13181 = vrot.slane %v13123, 2
    %v13182 = vrot.slane %v13123, 4
    %v13183 = vrot.slane %v13123, 6
    %v13184 = vrot.slane %v13124, 2
    %v13185 = vrot.slane %v13124, 4
    %v13186 = vrot.slane %v13124, 6
    %v13187 = vrot.slane %v13125, 2
    %v13188 = vrot.slane %v13125, 4
    %v13189 = vrot.slane %v13125, 6
    %v13190 = vrot.slane %v13126, 2
    %v13191 = vrot.slane %v13126, 4
    %v13192 = vrot.slane %v13126, 6
    %v13193 = vrot.slane %v13127, 2
    %v13194 = vrot.slane %v13127, 4
    %v13195 = vrot.slane %v13127, 6
    %v13196 = vrot.slane %v13128, 2
    %v13197 = vrot.slane %v13128, 4
    %v13198 = vrot.slane %v13128, 6
    %v13199 = vrot.slane %v13129, 2
    %v13200 = vrot.slane %v13129, 4
    %v13201 = vrot.slane %v13129, 6
    %v13202 = vrot.slane %v13130, 2
    %v13203 = vrot.slane %v13130, 4
    %v13204 = vrot.slane %v13130, 6
    %v13205 = vrot.slane %v13131, 2
    %v13206 = vrot.slane %v13131, 4
    %v13207 = vrot.slane %v13131, 6
    %v13208 = vrot.slane %v13132, 2
    %v13209 = vrot.slane %v13132, 4
    %v13210 = vrot.slane %v13132, 6
    %v13211 = vrot.slane %v13133, 2
    %v13212 = vrot.slane %v13133, 4
    %v13213 = vrot.slane %v13133, 6
    %v13214 = vrot.slane %v13134, 2
    %v13215 = vrot.slane %v13134, 4
    %v13216 = vrot.slane %v13134, 6
    %v13217 = vrot.slane %v13135, 2
    %v13218 = vrot.slane %v13135, 4
    %v13219 = vrot.slane %v13135, 6
    %v13220 = vrot.slane %v13136, 2
    %v13221 = vrot.slane %v13136, 4
    %v13222 = vrot.slane %v13136, 6
    %v13223 = vrot.slane %v13137, 2
    %v13224 = vrot.slane %v13137, 4
    %v13225 = vrot.slane %v13137, 6
    %v13226 = vrot.slane %v13138, 2
    %v13227 = vrot.slane %v13138, 4
    %v13228 = vrot.slane %v13138, 6
    %v13229 = vrot.slane %v13139, 2
    %v13230 = vrot.slane %v13139, 4
    %v13231 = vrot.slane %v13139, 6
    %v13232 = vrot.slane %v13140, 2
    %v13233 = vrot.slane %v13140, 4
    %v13234 = vrot.slane %v13140, 6
    %v13235 = vrot.slane %v13141, 2
    %v13236 = vrot.slane %v13141, 4
    %v13237 = vrot.slane %v13141, 6
    %v13238 = vrot.slane %v13142, 2
    %v13239 = vrot.slane %v13142, 4
    %v13240 = vrot.slane %v13142, 6
    %v13241 = vrot.slane %v13143, 2
    %v13242 = vrot.slane %v13143, 4
    %v13243 = vrot.slane %v13143, 6
    %vm13319 = vcmask 123904
    %v13320 = vsel %vm13319, %v13119, -inf
    %v13321 = vsel %vm13319, %v13172, -inf
    %v13322 = vmax.f32 %v13320, %v13321
    %v13323 = vsel %vm13319, %v13169, -inf
    %v13324 = vsel %vm13319, %v13173, -inf
    %v13325 = vmax.f32 %v13323, %v13324
    %v13326 = vsel %vm13319, %v13170, -inf
    %v13327 = vsel %vm13319, %v13174, -inf
    %v13328 = vmax.f32 %v13326, %v13327
    %v13329 = vsel %vm13319, %v13171, -inf
    %v13330 = vsel %vm13319, %v13121, -inf
    %v13331 = vmax.f32 %v13329, %v13330
    %v13332 = vsel %vm13319, %v13120, -inf
    %v13333 = vsel %vm13319, %v13175, -inf
    %v13334 = vmax.f32 %v13332, %v13333
    %v13335 = vsel %vm13319, %v13176, -inf
    %v13336 = vsel %vm13319, %v13180, -inf
    %v13337 = vmax.f32 %v13335, %v13336
    %v13338 = vsel %vm13319, %v13177, -inf
    %v13339 = vsel %vm13319, %v13123, -inf
    %v13340 = vmax.f32 %v13338, %v13339
    %v13341 = vsel %vm13319, %v13122, -inf
    %v13342 = vsel %vm13319, %v13181, -inf
    %v13343 = vmax.f32 %v13341, %v13342
    %v13344 = vsel %vm13319, %v13178, -inf
    %v13345 = vsel %vm13319, %v13182, -inf
    %v13346 = vmax.f32 %v13344, %v13345
    %v13347 = vsel %vm13319, %v13179, -inf
    %v13348 = vsel %vm13319, %v13183, -inf
    %v13349 = vmax.f32 %v13347, %v13348
    %v13350 = vsel %vm13319, %v13124, -inf
    %v13351 = vsel %vm13319, %v13187, -inf
    %v13352 = vmax.f32 %v13350, %v13351
    %v13353 = vsel %vm13319, %v13184, -inf
    %v13354 = vsel %vm13319, %v13188, -inf
    %v13355 = vmax.f32 %v13353, %v13354
    %v13356 = vsel %vm13319, %v13185, -inf
    %v13357 = vsel %vm13319, %v13189, -inf
    %v13358 = vmax.f32 %v13356, %v13357
    %v13359 = vsel %vm13319, %v13186, -inf
    %v13360 = vsel %vm13319, %v13126, -inf
    %v13361 = vmax.f32 %v13359, %v13360
    %v13362 = vsel %vm13319, %v13125, -inf
    %v13363 = vsel %vm13319, %v13190, -inf
    %v13364 = vmax.f32 %v13362, %v13363
    %v13365 = vsel %vm13319, %v13191, -inf
    %v13366 = vsel %vm13319, %v13195, -inf
    %v13367 = vmax.f32 %v13365, %v13366
    %v13368 = vsel %vm13319, %v13192, -inf
    %v13369 = vsel %vm13319, %v13128, -inf
    %v13370 = vmax.f32 %v13368, %v13369
    %v13371 = vsel %vm13319, %v13127, -inf
    %v13372 = vsel %vm13319, %v13196, -inf
    %v13373 = vmax.f32 %v13371, %v13372
    %v13374 = vsel %vm13319, %v13193, -inf
    %v13375 = vsel %vm13319, %v13197, -inf
    %v13376 = vmax.f32 %v13374, %v13375
    %v13377 = vsel %vm13319, %v13194, -inf
    %v13378 = vsel %vm13319, %v13198, -inf
    %v13379 = vmax.f32 %v13377, %v13378
    %v13380 = vsel %vm13319, %v13129, -inf
    %v13381 = vsel %vm13319, %v13202, -inf
    %v13382 = vmax.f32 %v13380, %v13381
    %v13383 = vsel %vm13319, %v13199, -inf
    %v13384 = vsel %vm13319, %v13203, -inf
    %v13385 = vmax.f32 %v13383, %v13384
    %v13386 = vsel %vm13319, %v13200, -inf
    %v13387 = vsel %vm13319, %v13204, -inf
    %v13388 = vmax.f32 %v13386, %v13387
    %v13389 = vsel %vm13319, %v13201, -inf
    %v13390 = vsel %vm13319, %v13131, -inf
    %v13391 = vmax.f32 %v13389, %v13390
    %v13392 = vsel %vm13319, %v13130, -inf
    %v13393 = vsel %vm13319, %v13205, -inf
    %v13394 = vmax.f32 %v13392, %v13393
    %v13395 = vsel %vm13319, %v13206, -inf
    %v13396 = vsel %vm13319, %v13210, -inf
    %v13397 = vmax.f32 %v13395, %v13396
    %v13398 = vsel %vm13319, %v13207, -inf
    %v13399 = vsel %vm13319, %v13133, -inf
    %v13400 = vmax.f32 %v13398, %v13399
    %v13401 = vsel %vm13319, %v13132, -inf
    %v13402 = vsel %vm13319, %v13211, -inf
    %v13403 = vmax.f32 %v13401, %v13402
    %v13404 = vsel %vm13319, %v13208, -inf
    %v13405 = vsel %vm13319, %v13212, -inf
    %v13406 = vmax.f32 %v13404, %v13405
    %v13407 = vsel %vm13319, %v13209, -inf
    %v13408 = vsel %vm13319, %v13213, -inf
    %v13409 = vmax.f32 %v13407, %v13408
    %v13410 = vsel %vm13319, %v13134, -inf
    %v13411 = vsel %vm13319, %v13217, -inf
    %v13412 = vmax.f32 %v13410, %v13411
    %v13413 = vsel %vm13319, %v13214, -inf
    %v13414 = vsel %vm13319, %v13218, -inf
    %v13415 = vmax.f32 %v13413, %v13414
    %v13416 = vsel %vm13319, %v13215, -inf
    %v13417 = vsel %vm13319, %v13219, -inf
    %v13418 = vmax.f32 %v13416, %v13417
    %v13419 = vsel %vm13319, %v13216, -inf
    %v13420 = vsel %vm13319, %v13136, -inf
    %v13421 = vmax.f32 %v13419, %v13420
    %v13422 = vsel %vm13319, %v13135, -inf
    %v13423 = vsel %vm13319, %v13220, -inf
    %v13424 = vmax.f32 %v13422, %v13423
    %v13425 = vsel %vm13319, %v13221, -inf
    %v13426 = vsel %vm13319, %v13225, -inf
    %v13427 = vmax.f32 %v13425, %v13426
    %v13428 = vsel %vm13319, %v13222, -inf
    %v13429 = vsel %vm13319, %v13138, -inf
    %v13430 = vmax.f32 %v13428, %v13429
    %v13431 = vsel %vm13319, %v13137, -inf
    %v13432 = vsel %vm13319, %v13226, -inf
    %v13433 = vmax.f32 %v13431, %v13432
    %v13434 = vsel %vm13319, %v13223, -inf
    %v13435 = vsel %vm13319, %v13227, -inf
    %v13436 = vmax.f32 %v13434, %v13435
    %v13437 = vsel %vm13319, %v13224, -inf
    %v13438 = vsel %vm13319, %v13228, -inf
    %v13439 = vmax.f32 %v13437, %v13438
    %v13440 = vsel %vm13319, %v13139, -inf
    %v13441 = vsel %vm13319, %v13232, -inf
    %v13442 = vmax.f32 %v13440, %v13441
    %v13443 = vsel %vm13319, %v13229, -inf
    %v13444 = vsel %vm13319, %v13233, -inf
    %v13445 = vmax.f32 %v13443, %v13444
    %v13446 = vsel %vm13319, %v13230, -inf
    %v13447 = vsel %vm13319, %v13234, -inf
    %v13448 = vmax.f32 %v13446, %v13447
    %v13449 = vsel %vm13319, %v13231, -inf
    %v13450 = vsel %vm13319, %v13141, -inf
    %v13451 = vmax.f32 %v13449, %v13450
    %v13452 = vsel %vm13319, %v13140, -inf
    %v13453 = vsel %vm13319, %v13235, -inf
    %v13454 = vmax.f32 %v13452, %v13453
    %v13455 = vsel %vm13319, %v13236, -inf
    %v13456 = vsel %vm13319, %v13240, -inf
    %v13457 = vmax.f32 %v13455, %v13456
    %v13458 = vsel %vm13319, %v13237, -inf
    %v13459 = vsel %vm13319, %v13143, -inf
    %v13460 = vmax.f32 %v13458, %v13459
    %v13461 = vsel %vm13319, %v13142, -inf
    %v13462 = vsel %vm13319, %v13241, -inf
    %v13463 = vmax.f32 %v13461, %v13462
    %v13464 = vsel %vm13319, %v13238, -inf
    %v13465 = vsel %vm13319, %v13242, -inf
    %v13466 = vmax.f32 %v13464, %v13465
    %v13467 = vsel %vm13319, %v13239, -inf
    %v13468 = vsel %vm13319, %v13243, -inf
    %v13469 = vmax.f32 %v13467, %v13468
    %v13470 = vsel %vm13319, %v13322, -inf
    %v13471 = vrot.slane %v13470, 4
    %v13472 = vmax.f32 %v13470, %v13471
    %v13473 = vrot.slane %v13472, 2
    %v13474 = vmax.f32 %v13472, %v13473
    %v13475 = vrot.slane %v13474, 1
    %v13476 = vmax.f32 %v13474, %v13475
    %v13477 = vsel %vm13319, %v13325, -inf
    %v13478 = vrot.slane %v13477, 4
    %v13479 = vmax.f32 %v13477, %v13478
    %v13480 = vrot.slane %v13479, 2
    %v13481 = vmax.f32 %v13479, %v13480
    %v13482 = vrot.slane %v13481, 1
    %v13483 = vmax.f32 %v13481, %v13482
    %v13484 = vsel %vm13319, %v13328, -inf
    %v13485 = vrot.slane %v13484, 4
    %v13486 = vmax.f32 %v13484, %v13485
    %v13487 = vrot.slane %v13486, 2
    %v13488 = vmax.f32 %v13486, %v13487
    %v13489 = vrot.slane %v13488, 1
    %v13490 = vmax.f32 %v13488, %v13489
    %v13491 = vsel %vm13319, %v13331, -inf
    %v13492 = vrot.slane %v13491, 4
    %v13493 = vmax.f32 %v13491, %v13492
    %v13494 = vrot.slane %v13493, 2
    %v13495 = vmax.f32 %v13493, %v13494
    %v13496 = vrot.slane %v13495, 1
    %v13497 = vmax.f32 %v13495, %v13496
    %v13498 = vsel %vm13319, %v13334, -inf
    %v13499 = vrot.slane %v13498, 4
    %v13500 = vmax.f32 %v13498, %v13499
    %v13501 = vrot.slane %v13500, 2
    %v13502 = vmax.f32 %v13500, %v13501
    %v13503 = vrot.slane %v13502, 1
    %v13504 = vmax.f32 %v13502, %v13503
    %v13505 = vsel %vm13319, %v13337, -inf
    %v13506 = vrot.slane %v13505, 4
    %v13507 = vmax.f32 %v13505, %v13506
    %v13508 = vrot.slane %v13507, 2
    %v13509 = vmax.f32 %v13507, %v13508
    %v13510 = vrot.slane %v13509, 1
    %v13511 = vmax.f32 %v13509, %v13510
    %v13512 = vsel %vm13319, %v13340, -inf
    %v13513 = vrot.slane %v13512, 4
    %v13514 = vmax.f32 %v13512, %v13513
    %v13515 = vrot.slane %v13514, 2
    %v13516 = vmax.f32 %v13514, %v13515
    %v13517 = vrot.slane %v13516, 1
    %v13518 = vmax.f32 %v13516, %v13517
    %v13519 = vsel %vm13319, %v13343, -inf
    %v13520 = vrot.slane %v13519, 4
    %v13521 = vmax.f32 %v13519, %v13520
    %v13522 = vrot.slane %v13521, 2
    %v13523 = vmax.f32 %v13521, %v13522
    %v13524 = vrot.slane %v13523, 1
    %v13525 = vmax.f32 %v13523, %v13524
    %v13526 = vsel %vm13319, %v13346, -inf
    %v13527 = vrot.slane %v13526, 4
    %v13528 = vmax.f32 %v13526, %v13527
    %v13529 = vrot.slane %v13528, 2
    %v13530 = vmax.f32 %v13528, %v13529
    %v13531 = vrot.slane %v13530, 1
    %v13532 = vmax.f32 %v13530, %v13531
    %v13533 = vsel %vm13319, %v13349, -inf
    %v13534 = vrot.slane %v13533, 4
    %v13535 = vmax.f32 %v13533, %v13534
    %v13536 = vrot.slane %v13535, 2
    %v13537 = vmax.f32 %v13535, %v13536
    %v13538 = vrot.slane %v13537, 1
    %v13539 = vmax.f32 %v13537, %v13538
    %v13540 = vsel %vm13319, %v13352, -inf
    %v13541 = vrot.slane %v13540, 4
    %v13542 = vmax.f32 %v13540, %v13541
    %v13543 = vrot.slane %v13542, 2
    %v13544 = vmax.f32 %v13542, %v13543
    %v13545 = vrot.slane %v13544, 1
    %v13546 = vmax.f32 %v13544, %v13545
    %v13547 = vsel %vm13319, %v13355, -inf
    %v13548 = vrot.slane %v13547, 4
    %v13549 = vmax.f32 %v13547, %v13548
    %v13550 = vrot.slane %v13549, 2
    %v13551 = vmax.f32 %v13549, %v13550
    %v13552 = vrot.slane %v13551, 1
    %v13553 = vmax.f32 %v13551, %v13552
    %v13554 = vsel %vm13319, %v13358, -inf
    %v13555 = vrot.slane %v13554, 4
    %v13556 = vmax.f32 %v13554, %v13555
    %v13557 = vrot.slane %v13556, 2
    %v13558 = vmax.f32 %v13556, %v13557
    %v13559 = vrot.slane %v13558, 1
    %v13560 = vmax.f32 %v13558, %v13559
    %v13561 = vsel %vm13319, %v13361, -inf
    %v13562 = vrot.slane %v13561, 4
    %v13563 = vmax.f32 %v13561, %v13562
    %v13564 = vrot.slane %v13563, 2
    %v13565 = vmax.f32 %v13563, %v13564
    %v13566 = vrot.slane %v13565, 1
    %v13567 = vmax.f32 %v13565, %v13566
    %v13568 = vsel %vm13319, %v13364, -inf
    %v13569 = vrot.slane %v13568, 4
    %v13570 = vmax.f32 %v13568, %v13569
    %v13571 = vrot.slane %v13570, 2
    %v13572 = vmax.f32 %v13570, %v13571
    %v13573 = vrot.slane %v13572, 1
    %v13574 = vmax.f32 %v13572, %v13573
    %v13575 = vsel %vm13319, %v13367, -inf
    %v13576 = vrot.slane %v13575, 4
    %v13577 = vmax.f32 %v13575, %v13576
    %v13578 = vrot.slane %v13577, 2
    %v13579 = vmax.f32 %v13577, %v13578
    %v13580 = vrot.slane %v13579, 1
    %v13581 = vmax.f32 %v13579, %v13580
    %v13582 = vsel %vm13319, %v13370, -inf
    %v13583 = vrot.slane %v13582, 4
    %v13584 = vmax.f32 %v13582, %v13583
    %v13585 = vrot.slane %v13584, 2
    %v13586 = vmax.f32 %v13584, %v13585
    %v13587 = vrot.slane %v13586, 1
    %v13588 = vmax.f32 %v13586, %v13587
    %v13589 = vsel %vm13319, %v13373, -inf
    %v13590 = vrot.slane %v13589, 4
    %v13591 = vmax.f32 %v13589, %v13590
    %v13592 = vrot.slane %v13591, 2
    %v13593 = vmax.f32 %v13591, %v13592
    %v13594 = vrot.slane %v13593, 1
    %v13595 = vmax.f32 %v13593, %v13594
    %v13596 = vsel %vm13319, %v13376, -inf
    %v13597 = vrot.slane %v13596, 4
    %v13598 = vmax.f32 %v13596, %v13597
    %v13599 = vrot.slane %v13598, 2
    %v13600 = vmax.f32 %v13598, %v13599
    %v13601 = vrot.slane %v13600, 1
    %v13602 = vmax.f32 %v13600, %v13601
    %v13603 = vsel %vm13319, %v13379, -inf
    %v13604 = vrot.slane %v13603, 4
    %v13605 = vmax.f32 %v13603, %v13604
    %v13606 = vrot.slane %v13605, 2
    %v13607 = vmax.f32 %v13605, %v13606
    %v13608 = vrot.slane %v13607, 1
    %v13609 = vmax.f32 %v13607, %v13608
    %v13610 = vsel %vm13319, %v13382, -inf
    %v13611 = vrot.slane %v13610, 4
    %v13612 = vmax.f32 %v13610, %v13611
    %v13613 = vrot.slane %v13612, 2
    %v13614 = vmax.f32 %v13612, %v13613
    %v13615 = vrot.slane %v13614, 1
    %v13616 = vmax.f32 %v13614, %v13615
    %v13617 = vsel %vm13319, %v13385, -inf
    %v13618 = vrot.slane %v13617, 4
    %v13619 = vmax.f32 %v13617, %v13618
    %v13620 = vrot.slane %v13619, 2
    %v13621 = vmax.f32 %v13619, %v13620
    %v13622 = vrot.slane %v13621, 1
    %v13623 = vmax.f32 %v13621, %v13622
    %v13624 = vsel %vm13319, %v13388, -inf
    %v13625 = vrot.slane %v13624, 4
    %v13626 = vmax.f32 %v13624, %v13625
    %v13627 = vrot.slane %v13626, 2
    %v13628 = vmax.f32 %v13626, %v13627
    %v13629 = vrot.slane %v13628, 1
    %v13630 = vmax.f32 %v13628, %v13629
    %v13631 = vsel %vm13319, %v13391, -inf
    %v13632 = vrot.slane %v13631, 4
    %v13633 = vmax.f32 %v13631, %v13632
    %v13634 = vrot.slane %v13633, 2
    %v13635 = vmax.f32 %v13633, %v13634
    %v13636 = vrot.slane %v13635, 1
    %v13637 = vmax.f32 %v13635, %v13636
    %v13638 = vsel %vm13319, %v13394, -inf
    %v13639 = vrot.slane %v13638, 4
    %v13640 = vmax.f32 %v13638, %v13639
    %v13641 = vrot.slane %v13640, 2
    %v13642 = vmax.f32 %v13640, %v13641
    %v13643 = vrot.slane %v13642, 1
    %v13644 = vmax.f32 %v13642, %v13643
    %v13645 = vsel %vm13319, %v13397, -inf
    %v13646 = vrot.slane %v13645, 4
    %v13647 = vmax.f32 %v13645, %v13646
    %v13648 = vrot.slane %v13647, 2
    %v13649 = vmax.f32 %v13647, %v13648
    %v13650 = vrot.slane %v13649, 1
    %v13651 = vmax.f32 %v13649, %v13650
    %v13652 = vsel %vm13319, %v13400, -inf
    %v13653 = vrot.slane %v13652, 4
    %v13654 = vmax.f32 %v13652, %v13653
    %v13655 = vrot.slane %v13654, 2
    %v13656 = vmax.f32 %v13654, %v13655
    %v13657 = vrot.slane %v13656, 1
    %v13658 = vmax.f32 %v13656, %v13657
    %v13659 = vsel %vm13319, %v13403, -inf
    %v13660 = vrot.slane %v13659, 4
    %v13661 = vmax.f32 %v13659, %v13660
    %v13662 = vrot.slane %v13661, 2
    %v13663 = vmax.f32 %v13661, %v13662
    %v13664 = vrot.slane %v13663, 1
    %v13665 = vmax.f32 %v13663, %v13664
    %v13666 = vsel %vm13319, %v13406, -inf
    %v13667 = vrot.slane %v13666, 4
    %v13668 = vmax.f32 %v13666, %v13667
    %v13669 = vrot.slane %v13668, 2
    %v13670 = vmax.f32 %v13668, %v13669
    %v13671 = vrot.slane %v13670, 1
    %v13672 = vmax.f32 %v13670, %v13671
    %v13673 = vsel %vm13319, %v13409, -inf
    %v13674 = vrot.slane %v13673, 4
    %v13675 = vmax.f32 %v13673, %v13674
    %v13676 = vrot.slane %v13675, 2
    %v13677 = vmax.f32 %v13675, %v13676
    %v13678 = vrot.slane %v13677, 1
    %v13679 = vmax.f32 %v13677, %v13678
    %v13680 = vsel %vm13319, %v13412, -inf
    %v13681 = vrot.slane %v13680, 4
    %v13682 = vmax.f32 %v13680, %v13681
    %v13683 = vrot.slane %v13682, 2
    %v13684 = vmax.f32 %v13682, %v13683
    %v13685 = vrot.slane %v13684, 1
    %v13686 = vmax.f32 %v13684, %v13685
    %v13687 = vsel %vm13319, %v13415, -inf
    %v13688 = vrot.slane %v13687, 4
    %v13689 = vmax.f32 %v13687, %v13688
    %v13690 = vrot.slane %v13689, 2
    %v13691 = vmax.f32 %v13689, %v13690
    %v13692 = vrot.slane %v13691, 1
    %v13693 = vmax.f32 %v13691, %v13692
    %v13694 = vsel %vm13319, %v13418, -inf
    %v13695 = vrot.slane %v13694, 4
    %v13696 = vmax.f32 %v13694, %v13695
    %v13697 = vrot.slane %v13696, 2
    %v13698 = vmax.f32 %v13696, %v13697
    %v13699 = vrot.slane %v13698, 1
    %v13700 = vmax.f32 %v13698, %v13699
    %v13701 = vsel %vm13319, %v13421, -inf
    %v13702 = vrot.slane %v13701, 4
    %v13703 = vmax.f32 %v13701, %v13702
    %v13704 = vrot.slane %v13703, 2
    %v13705 = vmax.f32 %v13703, %v13704
    %v13706 = vrot.slane %v13705, 1
    %v13707 = vmax.f32 %v13705, %v13706
    %v13708 = vsel %vm13319, %v13424, -inf
    %v13709 = vrot.slane %v13708, 4
    %v13710 = vmax.f32 %v13708, %v13709
    %v13711 = vrot.slane %v13710, 2
    %v13712 = vmax.f32 %v13710, %v13711
    %v13713 = vrot.slane %v13712, 1
    %v13714 = vmax.f32 %v13712, %v13713
    %v13715 = vsel %vm13319, %v13427, -inf
    %v13716 = vrot.slane %v13715, 4
    %v13717 = vmax.f32 %v13715, %v13716
    %v13718 = vrot.slane %v13717, 2
    %v13719 = vmax.f32 %v13717, %v13718
    %v13720 = vrot.slane %v13719, 1
    %v13721 = vmax.f32 %v13719, %v13720
    %v13722 = vsel %vm13319, %v13430, -inf
    %v13723 = vrot.slane %v13722, 4
    %v13724 = vmax.f32 %v13722, %v13723
    %v13725 = vrot.slane %v13724, 2
    %v13726 = vmax.f32 %v13724, %v13725
    %v13727 = vrot.slane %v13726, 1
    %v13728 = vmax.f32 %v13726, %v13727
    %v13729 = vsel %vm13319, %v13433, -inf
    %v13730 = vrot.slane %v13729, 4
    %v13731 = vmax.f32 %v13729, %v13730
    %v13732 = vrot.slane %v13731, 2
    %v13733 = vmax.f32 %v13731, %v13732
    %v13734 = vrot.slane %v13733, 1
    %v13735 = vmax.f32 %v13733, %v13734
    %v13736 = vsel %vm13319, %v13436, -inf
    %v13737 = vrot.slane %v13736, 4
    %v13738 = vmax.f32 %v13736, %v13737
    %v13739 = vrot.slane %v13738, 2
    %v13740 = vmax.f32 %v13738, %v13739
    %v13741 = vrot.slane %v13740, 1
    %v13742 = vmax.f32 %v13740, %v13741
    %v13743 = vsel %vm13319, %v13439, -inf
    %v13744 = vrot.slane %v13743, 4
    %v13745 = vmax.f32 %v13743, %v13744
    %v13746 = vrot.slane %v13745, 2
    %v13747 = vmax.f32 %v13745, %v13746
    %v13748 = vrot.slane %v13747, 1
    %v13749 = vmax.f32 %v13747, %v13748
    %v13750 = vsel %vm13319, %v13442, -inf
    %v13751 = vrot.slane %v13750, 4
    %v13752 = vmax.f32 %v13750, %v13751
    %v13753 = vrot.slane %v13752, 2
    %v13754 = vmax.f32 %v13752, %v13753
    %v13755 = vrot.slane %v13754, 1
    %v13756 = vmax.f32 %v13754, %v13755
    %v13757 = vsel %vm13319, %v13445, -inf
    %v13758 = vrot.slane %v13757, 4
    %v13759 = vmax.f32 %v13757, %v13758
    %v13760 = vrot.slane %v13759, 2
    %v13761 = vmax.f32 %v13759, %v13760
    %v13762 = vrot.slane %v13761, 1
    %v13763 = vmax.f32 %v13761, %v13762
    %v13764 = vsel %vm13319, %v13448, -inf
    %v13765 = vrot.slane %v13764, 4
    %v13766 = vmax.f32 %v13764, %v13765
    %v13767 = vrot.slane %v13766, 2
    %v13768 = vmax.f32 %v13766, %v13767
    %v13769 = vrot.slane %v13768, 1
    %v13770 = vmax.f32 %v13768, %v13769
    %v13771 = vsel %vm13319, %v13451, -inf
    %v13772 = vrot.slane %v13771, 4
    %v13773 = vmax.f32 %v13771, %v13772
    %v13774 = vrot.slane %v13773, 2
    %v13775 = vmax.f32 %v13773, %v13774
    %v13776 = vrot.slane %v13775, 1
    %v13777 = vmax.f32 %v13775, %v13776
    %v13778 = vsel %vm13319, %v13454, -inf
    %v13779 = vrot.slane %v13778, 4
    %v13780 = vmax.f32 %v13778, %v13779
    %v13781 = vrot.slane %v13780, 2
    %v13782 = vmax.f32 %v13780, %v13781
    %v13783 = vrot.slane %v13782, 1
    %v13784 = vmax.f32 %v13782, %v13783
    %v13785 = vsel %vm13319, %v13457, -inf
    %v13786 = vrot.slane %v13785, 4
    %v13787 = vmax.f32 %v13785, %v13786
    %v13788 = vrot.slane %v13787, 2
    %v13789 = vmax.f32 %v13787, %v13788
    %v13790 = vrot.slane %v13789, 1
    %v13791 = vmax.f32 %v13789, %v13790
    %v13792 = vsel %vm13319, %v13460, -inf
    %v13793 = vrot.slane %v13792, 4
    %v13794 = vmax.f32 %v13792, %v13793
    %v13795 = vrot.slane %v13794, 2
    %v13796 = vmax.f32 %v13794, %v13795
    %v13797 = vrot.slane %v13796, 1
    %v13798 = vmax.f32 %v13796, %v13797
    %v13799 = vsel %vm13319, %v13463, -inf
    %v13800 = vrot.slane %v13799, 4
    %v13801 = vmax.f32 %v13799, %v13800
    %v13802 = vrot.slane %v13801, 2
    %v13803 = vmax.f32 %v13801, %v13802
    %v13804 = vrot.slane %v13803, 1
    %v13805 = vmax.f32 %v13803, %v13804
    %v13806 = vsel %vm13319, %v13466, -inf
    %v13807 = vrot.slane %v13806, 4
    %v13808 = vmax.f32 %v13806, %v13807
    %v13809 = vrot.slane %v13808, 2
    %v13810 = vmax.f32 %v13808, %v13809
    %v13811 = vrot.slane %v13810, 1
    %v13812 = vmax.f32 %v13810, %v13811
    %v13813 = vsel %vm13319, %v13469, -inf
    %v13814 = vrot.slane %v13813, 4
    %v13815 = vmax.f32 %v13813, %v13814
    %v13816 = vrot.slane %v13815, 2
    %v13817 = vmax.f32 %v13815, %v13816
    %v13818 = vrot.slane %v13817, 1
    %v13819 = vmax.f32 %v13817, %v13818
    %v13822 = vsel %vm7139, %v13651, %v13476
    %v13826 = vsel %vm7139, %v13658, %v13483
    %13827 = vrot.lane.b32.xlu0 %v13826, 16
    %v13828 = vpop.permute.xlu0 %13827
    %v13832 = vsel %vm7139, %v13665, %v13490
    %13833 = vrot.lane.b32.xlu0 %v13832, 32
    %v13834 = vpop.permute.xlu0 %13833
    %v13838 = vsel %vm7139, %v13672, %v13497
    %13839 = vrot.lane.b32.xlu0 %v13838, 48
    %v13840 = vpop.permute.xlu0 %13839
    %v13844 = vsel %vm7139, %v13679, %v13504
    %13845 = vrot.lane.b32.xlu0 %v13844, 64
    %v13846 = vpop.permute.xlu0 %13845
    %v13850 = vsel %vm7139, %v13686, %v13511
    %13851 = vrot.lane.b32.xlu0 %v13850, 80
    %v13852 = vpop.permute.xlu0 %13851
    %v13856 = vsel %vm7139, %v13693, %v13518
    %13857 = vrot.lane.b32.xlu0 %v13856, 96
    %v13858 = vpop.permute.xlu0 %13857
    %v13862 = vsel %vm7139, %v13700, %v13525
    %13863 = vrot.lane.b32.xlu0 %v13862, 112
    %v13864 = vpop.permute.xlu0 %13863
    %v13868 = vsel %vm7139, %v13707, %v13532
    %v13872 = vsel %vm7139, %v13714, %v13539
    %13873 = vrot.lane.b32.xlu0 %v13872, 16
    %v13874 = vpop.permute.xlu0 %13873
    %v13878 = vsel %vm7139, %v13721, %v13546
    %13879 = vrot.lane.b32.xlu0 %v13878, 32
    %v13880 = vpop.permute.xlu0 %13879
    %v13884 = vsel %vm7139, %v13728, %v13553
    %13885 = vrot.lane.b32.xlu0 %v13884, 48
    %v13886 = vpop.permute.xlu0 %13885
    %v13890 = vsel %vm7139, %v13735, %v13560
    %13891 = vrot.lane.b32.xlu0 %v13890, 64
    %v13892 = vpop.permute.xlu0 %13891
    %v13896 = vsel %vm7139, %v13742, %v13567
    %13897 = vrot.lane.b32.xlu0 %v13896, 80
    %v13898 = vpop.permute.xlu0 %13897
    %v13902 = vsel %vm7139, %v13749, %v13574
    %13903 = vrot.lane.b32.xlu0 %v13902, 96
    %v13904 = vpop.permute.xlu0 %13903
    %v13908 = vsel %vm7139, %v13756, %v13581
    %13909 = vrot.lane.b32.xlu0 %v13908, 112
    %v13910 = vpop.permute.xlu0 %13909
    %vm13912 = vcmask 130048
    %v13913 = vsel %vm13912, %v13822, %v13828
    %vm13914 = vcmask 261120
    %v13915 = vsel %vm13914, %v13913, %v13834
    %v13916 = vsel %vm10405, %v13915, %v13840
    %vm13917 = vcmask 523264
    %v13918 = vsel %vm13917, %v13916, %v13846
    %vm13919 = vcmask 654336
    %v13920 = vsel %vm13919, %v13918, %v13852
    %v13921 = vsel %vm12393, %v13920, %v13858
    %vm13922 = vcmask 916480
    %v13923 = vsel %vm13922, %v13921, %v13864
    %v13924 = vsel %vm13912, %v13868, %v13874
    %v13925 = vsel %vm13914, %v13924, %v13880
    %v13926 = vsel %vm10405, %v13925, %v13886
    %v13927 = vsel %vm13917, %v13926, %v13892
    %v13928 = vsel %vm13919, %v13927, %v13898
    %v13929 = vsel %vm12393, %v13928, %v13904
    %v13930 = vsel %vm13922, %v13929, %v13910
    %v13933 = vsel %vm7139, %v13763, %v13588
    %v13937 = vsel %vm7139, %v13770, %v13595
    %13938 = vrot.lane.b32.xlu0 %v13937, 16
    %v13939 = vpop.permute.xlu0 %13938
    %v13943 = vsel %vm7139, %v13777, %v13602
    %13944 = vrot.lane.b32.xlu0 %v13943, 32
    %v13945 = vpop.permute.xlu0 %13944
    %v13949 = vsel %vm7139, %v13784, %v13609
    %13950 = vrot.lane.b32.xlu0 %v13949, 48
    %v13951 = vpop.permute.xlu0 %13950
    %v13955 = vsel %vm7139, %v13791, %v13616
    %13956 = vrot.lane.b32.xlu0 %v13955, 64
    %v13957 = vpop.permute.xlu0 %13956
    %v13961 = vsel %vm7139, %v13798, %v13623
    %13962 = vrot.lane.b32.xlu0 %v13961, 80
    %v13963 = vpop.permute.xlu0 %13962
    %v13967 = vsel %vm7139, %v13805, %v13630
    %13968 = vrot.lane.b32.xlu0 %v13967, 96
    %v13969 = vpop.permute.xlu0 %13968
    %v13973 = vsel %vm7139, %v13812, %v13637
    %13974 = vrot.lane.b32.xlu0 %v13973, 112
    %v13975 = vpop.permute.xlu0 %13974
    %v13979 = vsel %vm7139, %v13819, %v13644
    %v13980 = vsel %vm13912, %v13933, %v13939
    %v13981 = vsel %vm13914, %v13980, %v13945
    %v13982 = vsel %vm10405, %v13981, %v13951
    %v13983 = vsel %vm13917, %v13982, %v13957
    %v13984 = vsel %vm13919, %v13983, %v13963
    %v13985 = vsel %vm12393, %v13984, %v13969
    %v13986 = vsel %vm13922, %v13985, %v13975
    %v13987 = vld [vmem:[%s5] sm:$0xff]
    %v13988 = vld [vmem:[%s5 + $0x8] sm:$0xff]
    %v13989 = vld [vmem:[%s5 + $0x10] sm:$0xff]
    %v13990 = vld [vmem:[%s5 + $0x18] sm:$0xff]
    %v13991 = vld [vmem:[%s5 + $0x20] sm:$0xff]
    %v13992 = vld [vmem:[%s5 + $0x28] sm:$0xff]
    %v13993 = vld [vmem:[%s5 + $0x30] sm:$0xff]
    %v13994 = vld [vmem:[%s5 + $0x38] sm:$0xff]
    %v13995 = vld [vmem:[%s5 + $0x40] sm:$0xff]
    %v13996 = vld [vmem:[%s5 + $0x48] sm:$0xff]
    %v13997 = vld [vmem:[%s5 + $0x50] sm:$0xff]
    %v13998 = vld [vmem:[%s5 + $0x58] sm:$0xff]
    %v13999 = vld [vmem:[%s5 + $0x60] sm:$0xff]
    %v14000 = vld [vmem:[%s5 + $0x68] sm:$0xff]
    %v14001 = vld [vmem:[%s5 + $0x70] sm:$0xff]
    %v14002 = vld [vmem:[%s5 + $0x78] sm:$0xff]
    %v14003 = vld [vmem:[%s5 + $0x80] sm:$0xff]
    %v14004 = vld [vmem:[%s5 + $0x88] sm:$0xff]
    %v14005 = vld [vmem:[%s5 + $0x90] sm:$0xff]
    %v14006 = vld [vmem:[%s5 + $0x98] sm:$0xff]
    %v14007 = vld [vmem:[%s5 + $0xa0] sm:$0xff]
    %v14008 = vld [vmem:[%s5 + $0xa8] sm:$0xff]
    %v14009 = vld [vmem:[%s5 + $0xb0] sm:$0xff]
    %v14010 = vld [vmem:[%s5 + $0xb8] sm:$0xff]
    %v14011 = vld [vmem:[%s5 + $0xc0] sm:$0xff]
    %v14012 = vld [vmem:[%s5 + $0xc8] sm:$0xff]
    %v14013 = vld [vmem:[%s5 + $0xd0] sm:$0xff]
    %v14014 = vld [vmem:[%s5 + $0xd8] sm:$0xff]
    %v14015 = vld [vmem:[%s5 + $0xe0] sm:$0xff]
    %v14016 = vld [vmem:[%s5 + $0xe8] sm:$0xff]
    %v14017 = vld [vmem:[%s5 + $0xf0] sm:$0xff]
    %v14018 = vld [vmem:[%s5 + $0xf8] sm:$0xff]
    %v14019 = vld [vmem:[%s5 + $0x100] sm:$0xff]
    %v14020 = vld [vmem:[%s5 + $0x108] sm:$0xff]
    %v14021 = vld [vmem:[%s5 + $0x110] sm:$0xff]
    %v14022 = vld [vmem:[%s5 + $0x118] sm:$0xff]
    %v14023 = vld [vmem:[%s5 + $0x120] sm:$0xff]
    %v14024 = vld [vmem:[%s5 + $0x128] sm:$0xff]
    %v14025 = vld [vmem:[%s5 + $0x130] sm:$0xff]
    %v14026 = vld [vmem:[%s5 + $0x138] sm:$0xff]
    %v14027 = vld [vmem:[%s5 + $0x140] sm:$0xff]
    %v14028 = vld [vmem:[%s5 + $0x148] sm:$0xff]
    %v14029 = vld [vmem:[%s5 + $0x150] sm:$0xff]
    %v14030 = vld [vmem:[%s5 + $0x158] sm:$0xff]
    %v14031 = vld [vmem:[%s5 + $0x160] sm:$0xff]
    %v14032 = vld [vmem:[%s5 + $0x168] sm:$0xff]
    %v14033 = vld [vmem:[%s5 + $0x170] sm:$0xff]
    %v14034 = vld [vmem:[%s5 + $0x178] sm:$0xff]
    %v14035 = vld [vmem:[%s5 + $0x180] sm:$0xff]
    %v14036 = vld [vmem:[%s5 + $0x188] sm:$0xff]
    %v14037 = vld [vmem:[%s6] sm:$0x1]
    %v14039 = vperm.slane %v14037, 0
    %v14041 = vsel %vm13912, %v13979, 0
    %14043 = vmatpush.msra.mxu0 %v14002
    %14044 = vmatpush.msra.mxu0 %v14001
    %14045 = vmatpush.msra.mxu0 %v14000
    %14046 = vmatpush.msra.mxu0 %v13999
    %14047 = vmatpush.msra.mxu0 %v13998
    %14048 = vmatpush.msra.mxu0 %v13997
    %14049 = vmatpush.msra.mxu0 %v13996
    %14050 = vmatpush.msra.mxu0 %v13995
    %14051 = vmatpush.msra.mxu0 %v13994
    %14052 = vmatpush.msra.mxu0 %v13993
    %14053 = vmatpush.msra.mxu0 %v13992
    %14054 = vmatpush.msra.mxu0 %v13991
    %14055 = vmatpush.msra.mxu0 %v13990
    %14056 = vmatpush.msra.mxu0 %v13989
    %14057 = vmatpush.msra.mxu0 %v13988
    %14058 = vmatpush.msra.mxu0 %v13987
    %14059 = vmatmul.f32.gmra.mxu0 %v13923
    %v14060 = vpop.f32.mrf.mxu0
    %v14061 = vadd.f32 %v14039, %v14060
    %14062 = vdwg.mxu0
    %14063 = vmatpush.msra.mxu0 %v14018
    %14064 = vmatpush.msra.mxu0 %v14017
    %14065 = vmatpush.msra.mxu0 %v14016
    %14066 = vmatpush.msra.mxu0 %v14015
    %14067 = vmatpush.msra.mxu0 %v14014
    %14068 = vmatpush.msra.mxu0 %v14013
    %14069 = vmatpush.msra.mxu0 %v14012
    %14070 = vmatpush.msra.mxu0 %v14011
    %14071 = vmatpush.msra.mxu0 %v14010
    %14072 = vmatpush.msra.mxu0 %v14009
    %14073 = vmatpush.msra.mxu0 %v14008
    %14074 = vmatpush.msra.mxu0 %v14007
    %14075 = vmatpush.msra.mxu0 %v14006
    %14076 = vmatpush.msra.mxu0 %v14005
    %14077 = vmatpush.msra.mxu0 %v14004
    %14078 = vmatpush.msra.mxu0 %v14003
    %14079 = vmatmul.f32.gmra.mxu0 %v13930
    %v14080 = vpop.f32.mrf.mxu0
    %v14081 = vadd.f32 %v14061, %v14080
    %14082 = vdwg.mxu0
    %14083 = vmatpush.msra.mxu0 %v14034
    %14084 = vmatpush.msra.mxu0 %v14033
    %14085 = vmatpush.msra.mxu0 %v14032
    %14086 = vmatpush.msra.mxu0 %v14031
    %14087 = vmatpush.msra.mxu0 %v14030
    %14088 = vmatpush.msra.mxu0 %v14029
    %14089 = vmatpush.msra.mxu0 %v14028
    %14090 = vmatpush.msra.mxu0 %v14027
    %14091 = vmatpush.msra.mxu0 %v14026
    %14092 = vmatpush.msra.mxu0 %v14025
    %14093 = vmatpush.msra.mxu0 %v14024
    %14094 = vmatpush.msra.mxu0 %v14023
    %14095 = vmatpush.msra.mxu0 %v14022
    %14096 = vmatpush.msra.mxu0 %v14021
    %14097 = vmatpush.msra.mxu0 %v14020
    %14098 = vmatpush.msra.mxu0 %v14019
    %14099 = vmatmul.f32.gmra.mxu0 %v13986
    %v14100 = vpop.f32.mrf.mxu0
    %v14101 = vadd.f32 %v14081, %v14100
    %14102 = vdwg.mxu0
    %14103 = vmatpush.msra.mxu0 0.0
    %14104 = vmatpush.msra.mxu0 0.0
    %14105 = vmatpush.msra.mxu0 0.0
    %14106 = vmatpush.msra.mxu0 0.0
    %14107 = vmatpush.msra.mxu0 0.0
    %14108 = vmatpush.msra.mxu0 0.0
    %14109 = vmatpush.msra.mxu0 0.0
    %14110 = vmatpush.msra.mxu0 0.0
    %14111 = vmatpush.msra.mxu0 0.0
    %14112 = vmatpush.msra.mxu0 0.0
    %14113 = vmatpush.msra.mxu0 0.0
    %14114 = vmatpush.msra.mxu0 0.0
    %14115 = vmatpush.msra.mxu0 0.0
    %14116 = vmatpush.msra.mxu0 0.0
    %14117 = vmatpush.msra.mxu0 %v14036
    %14118 = vmatpush.msra.mxu0 %v14035
    %14119 = vmatmul.f32.gmra.mxu0 %v14041
    %v14120 = vpop.f32.mrf.mxu0
    %v14121 = vadd.f32 %v14101, %v14120
    %14122 = vdwg.mxu0
    %v14123 = vmax.f32 %v14121, 0.0
    %v14124 = vld [vmem:[%s7] sm:$0xff]
    %v14125 = vld [vmem:[%s7 + $0x8] sm:$0xff]
    %v14126 = vld [vmem:[%s7 + $0x10] sm:$0xff]
    %v14127 = vld [vmem:[%s7 + $0x18] sm:$0xff]
    %v14128 = vld [vmem:[%s7 + $0x20] sm:$0xff]
    %v14129 = vld [vmem:[%s7 + $0x28] sm:$0xff]
    %v14130 = vld [vmem:[%s7 + $0x30] sm:$0xff]
    %v14131 = vld [vmem:[%s7 + $0x38] sm:$0xff]
    %v14132 = vld [vmem:[%s7 + $0x40] sm:$0xff]
    %v14133 = vld [vmem:[%s7 + $0x48] sm:$0xff]
    %v14134 = vld [vmem:[%s7 + $0x50] sm:$0xff]
    %v14135 = vld [vmem:[%s7 + $0x58] sm:$0xff]
    %v14136 = vld [vmem:[%s7 + $0x60] sm:$0xff]
    %v14137 = vld [vmem:[%s7 + $0x68] sm:$0xff]
    %v14138 = vld [vmem:[%s7 + $0x70] sm:$0xff]
    %v14139 = vld [vmem:[%s7 + $0x78] sm:$0xff]
    %v14140 = vld [vmem:[%s8] sm:$0x1]
    %v14142 = vperm.slane %v14140, 0
    %14144 = vmatpush.msra.mxu0 %v14139
    %14145 = vmatpush.msra.mxu0 %v14138
    %14146 = vmatpush.msra.mxu0 %v14137
    %14147 = vmatpush.msra.mxu0 %v14136
    %14148 = vmatpush.msra.mxu0 %v14135
    %14149 = vmatpush.msra.mxu0 %v14134
    %14150 = vmatpush.msra.mxu0 %v14133
    %14151 = vmatpush.msra.mxu0 %v14132
    %14152 = vmatpush.msra.mxu0 %v14131
    %14153 = vmatpush.msra.mxu0 %v14130
    %14154 = vmatpush.msra.mxu0 %v14129
    %14155 = vmatpush.msra.mxu0 %v14128
    %14156 = vmatpush.msra.mxu0 %v14127
    %14157 = vmatpush.msra.mxu0 %v14126
    %14158 = vmatpush.msra.mxu0 %v14125
    %14159 = vmatpush.msra.mxu0 %v14124
    %14160 = vmatmul.f32.gmra.mxu0 %v14123
    %v14161 = vpop.f32.mrf.mxu0
    %v14162 = vadd.f32 %v14142, %v14161
    %14163 = vdwg.mxu0
    %v14164 = vmax.f32 %v14162, 0.0
    %v14165 = vld [vmem:[%s9] sm:$0xff]
    %v14166 = vld [vmem:[%s9 + $0x8] sm:$0xff]
    %v14167 = vld [vmem:[%s9 + $0x10] sm:$0xff]
    %v14168 = vld [vmem:[%s9 + $0x18] sm:$0xff]
    %v14169 = vld [vmem:[%s9 + $0x20] sm:$0xff]
    %v14170 = vld [vmem:[%s9 + $0x28] sm:$0xff]
    %v14171 = vld [vmem:[%s9 + $0x30] sm:$0xff]
    %v14172 = vld [vmem:[%s9 + $0x38] sm:$0xff]
    %v14173 = vld [vmem:[%s9 + $0x40] sm:$0xff]
    %v14174 = vld [vmem:[%s9 + $0x48] sm:$0xff]
    %v14175 = vld [vmem:[%s9 + $0x50] sm:$0xff]
    %v14176 = vld [vmem:[%s9 + $0x58] sm:$0xff]
    %v14177 = vld [vmem:[%s9 + $0x60] sm:$0xff]
    %v14178 = vld [vmem:[%s9 + $0x68] sm:$0xff]
    %v14179 = vld [vmem:[%s9 + $0x70] sm:$0xff]
    %v14180 = vld [vmem:[%s9 + $0x78] sm:$0xff]
    %v14181 = vld [vmem:[%s10] sm:$0x1]
    %v14183 = vperm.slane %v14181, 0
    %14185 = vmatpush.msra.mxu0 %v14180
    %14186 = vmatpush.msra.mxu0 %v14179
    %14187 = vmatpush.msra.mxu0 %v14178
    %14188 = vmatpush.msra.mxu0 %v14177
    %14189 = vmatpush.msra.mxu0 %v14176
    %14190 = vmatpush.msra.mxu0 %v14175
    %14191 = vmatpush.msra.mxu0 %v14174
    %14192 = vmatpush.msra.mxu0 %v14173
    %14193 = vmatpush.msra.mxu0 %v14172
    %14194 = vmatpush.msra.mxu0 %v14171
    %14195 = vmatpush.msra.mxu0 %v14170
    %14196 = vmatpush.msra.mxu0 %v14169
    %14197 = vmatpush.msra.mxu0 %v14168
    %14198 = vmatpush.msra.mxu0 %v14167
    %14199 = vmatpush.msra.mxu0 %v14166
    %14200 = vmatpush.msra.mxu0 %v14165
    %14201 = vmatmul.f32.gmra.mxu0 %v14164
    %v14202 = vpop.f32.mrf.mxu0
    %v14203 = vadd.f32 %v14183, %v14202
    %14204 = vdwg.mxu0
    %14205 = vst [vmem:[#allocation2] sm:$0x3] %v14203
    // Predicated region
    $region46: #{lenet_forward.1} parent=1 // pred_check
      _
    $region47: #{lenet_forward.1} parent=1 // pred_check_branch
      %14207 = sbr.rel (0) target = $region49
    $region48: #{lenet_forward.1} parent=1 // pred_region
      %14209 = vsyncadd [#allocation3], 0
      %s14211 = sshll.u32 [#allocation2], 4
      %s14212 = int_to_ptr.vmem [resolvable:$true] %s14211
      %s14213 = sshll.u32 %s11, 4
      %s14214 = int_to_ptr.hbm [resolvable:$true] %s14213
      %14216 = dma.vmem_to_hbm [thread:$0]  %s14212, 32, %s14214, [#allocation3]
    $region49: #{lenet_forward.1} parent=1 // pred_fallthru
      _
    // Predicated region
    $region50: #{lenet_forward.1} parent=1 // pred_check
      _
    $region51: #{lenet_forward.1} parent=1 // pred_check_branch
      %14218 = sbr.rel (0) target = $region53
    $region52: #{lenet_forward.1} parent=1 // pred_region
      %14220 = dma.done [#allocation3], 32
    $region53: #{lenet_forward.1} parent=1 // pred_fallthru
      _
    %14221 = vsyncpa [#allocation3], 1

</llo_original>
